<compile_context>
chip_gen: v5e
topology: v5e:2x2
jax: 0.10.0
libtpu: 0.0.40
codegen_flags: <defaults>
</compile_context>

<pallas_src>
import jax
import jax.numpy as jnp
from jax.experimental import pallas as pl
from jax.experimental.pallas import tpu as pltpu

FFM_SCALES = (1.0, 5.0, 10.0, 30.0)
LN_EPS = 1e-5  # torch.nn.LayerNorm default eps


def _layernorm(h, gamma, beta):
    # single-pass statistics; clamp var >= 0 against cancellation
    mu = jnp.mean(h, axis=-1, keepdims=True)
    var = jnp.maximum(jnp.mean(h * h, axis=-1, keepdims=True) - mu * mu, 0.0)
    return (h - mu) * jax.lax.rsqrt(var + LN_EPS) * gamma + beta


# --------------------------------------------------------------------------
# Optional single-buffering of constant-index blocks (pl.Buffered(1)).
# Probed once via an AOT compile of a tiny kernel; falls back cleanly.
# --------------------------------------------------------------------------
_SINGLE_BUFFER_MODE = None


def _probe_kernel(x_ref, o_ref):
    o_ref[...] = x_ref[...]


def _single_buffer_mode():
    global _SINGLE_BUFFER_MODE
    if _SINGLE_BUFFER_MODE is not None:
        return _SINGLE_BUFFER_MODE or None
    try:
        mode = pl.Buffered(1)
        probe = pl.pallas_call(
            _probe_kernel,
            out_shape=jax.ShapeDtypeStruct((8, 128), jnp.float32),
            grid=(1,),
            in_specs=[pl.BlockSpec((8, 128), lambda i: (0, 0),
                                   pipeline_mode=mode)],
            out_specs=pl.BlockSpec((8, 128), lambda i: (0, 0)))
        jax.jit(probe).lower(
            jax.ShapeDtypeStruct((8, 128), jnp.float32)).compile()
        _SINGLE_BUFFER_MODE = mode
    except Exception:
        _SINGLE_BUFFER_MODE = False
    return _SINGLE_BUFFER_MODE or None


def _vmem_budget_bytes():
    try:
        phys = int(pltpu.get_tpu_info().vmem_capacity_bytes)
    except Exception:
        phys = 64 * 1024 * 1024          # v7x per-TensorCore VMEM (smallest)
    return max(3 * phys // 4, 32 * 1024 * 1024)


def _auto_tile_n(n_pad, gnn_dim, f_dim, num_graphs, vmem_budget):
    # VMEM model of the dominant kernel (kernel 2): bf16 A row block is
    # double-buffered; bf16 h1 and f32 w2l/w2r are single-buffered residents.
    fixed = (2 * n_pad * gnn_dim            # resident h1 (bf16)
             + 8 * gnn_dim * gnn_dim        # w2l + w2r (f32)
             + 8 * num_graphs * (gnn_dim + 2 * f_dim)   # pooled output slabs
             + (2 << 20))                   # LN params / bffm / headroom
    per_row = (4 * n_pad                    # bf16 A row block, x2 buffers
               + 8 * num_graphs + 24        # pool^T / coords blocks
               + 12 * gnn_dim + 12 * f_dim)  # f32 intermediates
    cap = max((vmem_budget - fixed) // per_row, 128)
    cap = min(cap, 1024, n_pad)
    tile, t = 128, 256
    while t <= cap:
        if n_pad % t == 0:
            tile = t
        t += 128
    return tile


# --------------- kernel 1: SAGEConv1 + LN + ReLU (row-tiled) ----------------
def _sage1_kernel(a_ref, xf_ref, w1l_ref, w1r_ref, b1_ref, g1_ref, be1_ref,
                  h1_ref):
    tile_n = a_ref.shape[0]
    row0 = pl.multiple_of(pl.program_id(0) * tile_n, tile_n)
    # mean neighbor aggregation: bf16 operands, f32 accumulation on the MXU
    aggr = jnp.dot(a_ref[...], xf_ref[...], preferred_element_type=jnp.float32)
    # root rows: slice the already-resident full x block (no second DMA)
    x_root = xf_ref[pl.ds(row0, tile_n), :].astype(jnp.float32)
    h = (jnp.dot(aggr, w1l_ref[...], preferred_element_type=jnp.float32)
         + jnp.dot(x_root, w1r_ref[...], preferred_element_type=jnp.float32)
         + b1_ref[...])
    h = jnp.maximum(_layernorm(h, g1_ref[...], be1_ref[...]), 0.0)
    h1_ref[...] = h.astype(h1_ref.dtype)


# ---- kernel 2: SAGEConv2 + LN + ReLU + FFM + per-core pooled partial sums --
def _sage2_pool_kernel(a_ref, h1f_ref, coords_ref, poolT_ref,
                       w2l_ref, w2r_ref, b2_ref, g2_ref, be2_ref, bffm_ref,
                       ph_ref, psin_ref, pcos_ref):
    tile_n = a_ref.shape[0]
    c, j = pl.program_id(0), pl.program_id(1)
    row_blk = c * pl.num_programs(1) + j
    row0 = pl.multiple_of(row_blk * tile_n, tile_n)

    @pl.when(j == 0)
    def _init():
        ph_ref[...] = jnp.zeros_like(ph_ref)
        psin_ref[...] = jnp.zeros_like(psin_ref)
        pcos_ref[...] = jnp.zeros_like(pcos_ref)

    # SAGEConv 2 on this row tile (bf16 aggregation, f32 accumulation)
    aggr = jnp.dot(a_ref[...], h1f_ref[...],
                   preferred_element_type=jnp.float32)
    h_root = h1f_ref[pl.ds(row0, tile_n), :].astype(jnp.float32)
    h2 = (jnp.dot(aggr, w2l_ref[...], preferred_element_type=jnp.float32)
          + jnp.dot(h_root, w2r_ref[...], preferred_element_type=jnp.float32)
          + b2_ref[...])
    h2 = jnp.maximum(_layernorm(h2, g2_ref[...], be2_ref[...]), 0.0)

    # Multi-scale Fourier features: one lane-dense matmul; sin/cos halves,
    # no in-kernel feature concat.
    proj = jnp.dot(coords_ref[...], bffm_ref[...],
                   preferred_element_type=jnp.float32)

    # Partial global mean pool for this tile, accumulated into this core's
    # output slab (pool^T pre-transposed -> plain MXU matmul).
    p = poolT_ref[...]
    ph_ref[...] += jnp.dot(p, h2, preferred_element_type=jnp.float32)[None]
    psin_ref[...] += jnp.dot(p, jnp.sin(proj),
                             preferred_element_type=jnp.float32)[None]
    pcos_ref[...] += jnp.dot(p, jnp.cos(proj),
                             preferred_element_type=jnp.float32)[None]


# ------------ kernel 3: reduce core slabs + fc + LayerNorm (tiny) -----------
def _fc_ln_kernel(ph_ref, psin_ref, pcos_ref, fcw_h_ref, fcw_sin_ref,
                  fcw_cos_ref, fcb_ref, gfc_ref, befc_ref, out_ref):
    pooled_h = jnp.sum(ph_ref[...], axis=0)
    pooled_sin = jnp.sum(psin_ref[...], axis=0)
    pooled_cos = jnp.sum(pcos_ref[...], axis=0)
    out = (jnp.dot(pooled_h, fcw_h_ref[...],
                   preferred_element_type=jnp.float32)
           + jnp.dot(pooled_sin, fcw_sin_ref[...],
                     preferred_element_type=jnp.float32)
           + jnp.dot(pooled_cos, fcw_cos_ref[...],
                     preferred_element_type=jnp.float32)
           + fcb_ref[...])
    out_ref[...] = _layernorm(out, gfc_ref[...], befc_ref[...])


def graph_encoder_forward(x, edge_index, node_coords, batch, params,
                          num_graphs, *, tile_n=None):
    n, in_dim = x.shape
    gnn_dim = params["w1l"].shape[1]
    out_dim = params["fcw"].shape[1]
    ffm_dim = params["bffm"].shape[1]
    n_scales = len(FFM_SCALES)
    f_dim = n_scales * ffm_dim            # width of the sin (and cos) half

    # ---- pad node axis to a multiple of 256 (zero rows pool to nothing) ----
    n_pad = ((n + 255) // 256) * 256
    pad = n_pad - n
    x_p = jnp.pad(x, ((0, pad), (0, 0)))
    coords_p = jnp.pad(node_coords, ((0, pad), (0, 0)))
    batch_p = jnp.pad(batch.astype(jnp.int32), (0, pad), constant_values=-1)

    # ---- dense graph operators (plain-JAX glue; densified sparse ops) ----
    src, dst = edge_index[0], edge_index[1]
    adj = jnp.zeros((n_pad, n_pad), jnp.float32).at[dst, src].add(1.0)
    deg = jnp.maximum(adj.sum(axis=1, keepdims=True), 1.0)
    adj = (adj / deg).astype(jnp.bfloat16)         # bf16 stream, f32 accum
    onehot = jax.nn.one_hot(batch_p, num_graphs, dtype=jnp.float32)  # (Np, G)
    counts = jnp.maximum(onehot.sum(axis=0), 1.0)
    pool_t = (onehot / counts[None, :]).T          # (G, Np)
    x_bf = x_p.astype(jnp.bfloat16)

    # ---- VMEM-budgeted row tile ----
    vmem_budget = _vmem_budget_bytes()
    if tile_n is None:
        tile_n = _auto_tile_n(n_pad, gnn_dim, f_dim, num_graphs, vmem_budget)
    assert tile_n % 128 == 0 and n_pad % tile_n == 0
    num_tiles = n_pad // tile_n
    core_split = 2 if num_tiles % 2 == 0 else 1    # v7x megacore for kernel 2
    tiles_per_core = num_tiles // core_split

    # ---- host-side weight re-layout (pure permutation, identical math) ----
    bffm_all = jnp.concatenate([s * params["bffm"] for s in FFM_SCALES],
                               axis=1)                            # (3, f_dim)
    fcw = params["fcw"]
    fcw_h = fcw[:gnn_dim]
    fcw_rest = fcw[gnn_dim:].reshape(n_scales, 2, ffm_dim, out_dim)
    fcw_sin = fcw_rest[:, 0].reshape(f_dim, out_dim)
    fcw_cos = fcw_rest[:, 1].reshape(f_dim, out_dim)

    sb_mode = _single_buffer_mode()

    def const_spec(arr):
        nd = arr.ndim
        idx = lambda *_, _nd=nd: (0,) * _nd
        if sb_mode is None:
            return pl.BlockSpec(arr.shape, idx)
        return pl.BlockSpec(arr.shape, idx, pipeline_mode=sb_mode)

    # ------------------------- kernel 1 call --------------------------------
    cost1 = pl.CostEstimate(
        flops=2 * n_pad * n_pad * in_dim + 4 * n_pad * in_dim * gnn_dim,
        transcendentals=n_pad,
        bytes_accessed=(2 * n_pad * n_pad + 2 * n_pad * in_dim
                        + 8 * in_dim * gnn_dim + 2 * n_pad * gnn_dim))
    h1 = pl.pallas_call(
        _sage1_kernel,
        out_shape=jax.ShapeDtypeStruct((n_pad, gnn_dim), jnp.bfloat16),
        grid=(num_tiles,),
        in_specs=[
            pl.BlockSpec((tile_n, n_pad), lambda i: (i, 0)),   # A row block
            const_spec(x_bf),                                  # x (full, bf16)
            const_spec(params["w1l"]), const_spec(params["w1r"]),
            const_spec(params["b1"]), const_spec(params["g1"]),
            const_spec(params["be1"]),
        ],
        out_specs=pl.BlockSpec((tile_n, gnn_dim), lambda i: (i, 0)),
        compiler_params=pltpu.CompilerParams(
            dimension_semantics=("parallel",),
            vmem_limit_bytes=vmem_budget),
        cost_estimate=cost1,
    )(adj, x_bf, params["w1l"], params["w1r"], params["b1"], params["g1"],
      params["be1"])

    # ------------------------- kernel 2 call --------------------------------
    def row_map(c, j):
        return (c * tiles_per_core + j, 0)

    def pool_map(c, j):
        return (0, c * tiles_per_core + j)

    cost2 = pl.CostEstimate(
        flops=(2 * n_pad * n_pad * gnn_dim + 4 * n_pad * gnn_dim * gnn_dim
               + 6 * n_pad * f_dim
               + 2 * n_pad * num_graphs * (gnn_dim + 2 * f_dim)),
        transcendentals=n_pad * (2 * f_dim + 1),
        bytes_accessed=(2 * n_pad * n_pad + 2 * n_pad * gnn_dim
                        + 8 * gnn_dim * gnn_dim + 4 * n_pad * num_graphs
                        + 4 * core_split * num_graphs * (gnn_dim + 2 * f_dim)))
    ph, psin, pcos = pl.pallas_call(
        _sage2_pool_kernel,
        out_shape=(
            jax.ShapeDtypeStruct((core_split, num_graphs, gnn_dim),
                                 jnp.float32),
            jax.ShapeDtypeStruct((core_split, num_graphs, f_dim), jnp.float32),
            jax.ShapeDtypeStruct((core_split, num_graphs, f_dim), jnp.float32),
        ),
        grid=(core_split, tiles_per_core),
        in_specs=[
            pl.BlockSpec((tile_n, n_pad), row_map),            # A row block
            const_spec(h1),                                    # h1 (full, bf16)
            pl.BlockSpec((tile_n, 3), row_map),                # coords rows
            pl.BlockSpec((num_graphs, tile_n), pool_map),      # pool^T cols
            const_spec(params["w2l"]), const_spec(params["w2r"]),
            const_spec(params["b2"]), const_spec(params["g2"]),
            const_spec(params["be2"]), const_spec(bffm_all),
        ],
        out_specs=(
            pl.BlockSpec((1, num_graphs, gnn_dim), lambda c, j: (c, 0, 0)),
            pl.BlockSpec((1, num_graphs, f_dim), lambda c, j: (c, 0, 0)),
            pl.BlockSpec((1, num_graphs, f_dim), lambda c, j: (c, 0, 0)),
        ),
        compiler_params=pltpu.CompilerParams(
            dimension_semantics=("parallel", "arbitrary"),
            vmem_limit_bytes=vmem_budget),
        cost_estimate=cost2,
    )(adj, h1, coords_p, pool_t,
      params["w2l"], params["w2r"], params["b2"], params["g2"], params["be2"],
      bffm_all)

    # ------------------------- kernel 3 call (tiny) --------------------------
    out = pl.pallas_call(
        _fc_ln_kernel,
        out_shape=jax.ShapeDtypeStruct((num_graphs, out_dim), jnp.float32),
    )(ph, psin, pcos, fcw_h, fcw_sin, fcw_cos, params["fcb"], params["gfc"],
      params["befc"])
    return out


# ------------------- plain-JAX reference (PyTorch semantics) ----------------
def reference_forward(x, edge_index, node_coords, batch, params, num_graphs,
                      *, bf16_match=False):
    n = x.shape[0]

    def mm(a, b):
        prec = None if a.dtype == jnp.bfloat16 else jax.lax.Precision.HIGHEST
        return jnp.dot(a, b, preferred_element_type=jnp.float32,
                       precision=prec)

    def cast(a):
        return a.astype(jnp.bfloat16) if bf16_match else a

    def ln(h, g, b):
        mu = h.mean(-1, keepdims=True)
        var = ((h - mu) ** 2).mean(-1, keepdims=True)
        return (h - mu) / jnp.sqrt(var + LN_EPS) * g + b

    src, dst = edge_index[0], edge_index[1]
    adj = jnp.zeros((n, n), jnp.float32).at[dst, src].add(1.0)
    adj = adj / jnp.maximum(adj.sum(1, keepdims=True), 1.0)
    adj_c, x_c = cast(adj), cast(x)

    h = (mm(mm(adj_c, x_c), params["w1l"]) + params["b1"]
         + mm(x_c.astype(jnp.float32), params["w1r"]))
    h = jax.nn.relu(ln(h, params["g1"], params["be1"]))
    h_c = cast(h)
    h = (mm(mm(adj_c, h_c), params["w2l"]) + params["b2"]
         + mm(h_c.astype(jnp.float32), params["w2r"]))
    h = jax.nn.relu(ln(h, params["g2"], params["be2"]))

    feats = []
    for s in FFM_SCALES:
        proj = mm(node_coords * s, params["bffm"])
        feats += [jnp.sin(proj), jnp.cos(proj)]
    h_cat = jnp.concatenate([h] + feats, axis=1)
    onehot = jax.nn.one_hot(batch, num_graphs, dtype=jnp.float32)
    pool = onehot.T / jnp.maximum(onehot.sum(0), 1.0)[:, None]
    out = mm(mm(pool, h_cat), params["fcw"]) + params["fcb"]
    return ln(out, params["gfc"], params["befc"])


if __name__ == "__main__":
    key = jax.random.PRNGKey(0)
    N, G, E = 400, 3, 1600
    IN_DIM, FFM_DIM, GNN_DIM, OUT_DIM = 6, 32, 256, 64
    FFM_OUT = len(FFM_SCALES) * 2 * FFM_DIM      # 256 -> fc input dim = 512

    ks = jax.random.split(key, 20)
    x = jax.random.normal(ks[0], (N, IN_DIM), jnp.float32)
    node_coords = jax.random.normal(ks[1], (N, 3), jnp.float32)
    edge_index = jax.random.randint(ks[2], (2, E), 0, N)
    batch = jnp.minimum(jnp.arange(N) * G // N, G - 1).astype(jnp.int32)

    def init(k, shape, scale=0.05):
        return scale * jax.random.normal(k, shape, jnp.float32)

    params = dict(
        # SAGEConv 1: lin_l (neighbors, with bias), lin_r (root, no bias)
        w1l=init(ks[3], (IN_DIM, GNN_DIM)),
        w1r=init(ks[4], (IN_DIM, GNN_DIM)),
        b1=init(ks[5], (1, GNN_DIM), 0.02),
        g1=1.0 + init(ks[6], (1, GNN_DIM), 0.1),
        be1=init(ks[7], (1, GNN_DIM), 0.05),
        # SAGEConv 2
        w2l=init(ks[8], (GNN_DIM, GNN_DIM)),
        w2r=init(ks[9], (GNN_DIM, GNN_DIM)),
        b2=init(ks[10], (1, GNN_DIM), 0.02),
        g2=1.0 + init(ks[11], (1, GNN_DIM), 0.1),
        be2=init(ks[12], (1, GNN_DIM), 0.05),
        # MultiScaleFourierEncoder.B (non-trainable randn)
        bffm=jax.random.normal(ks[13], (3, FFM_DIM), jnp.float32),
        # final fc + LayerNorm
        fcw=init(ks[14], (GNN_DIM + FFM_OUT, OUT_DIM)),
        fcb=init(ks[15], (1, OUT_DIM), 0.02),
        gfc=1.0 + init(ks[16], (1, OUT_DIM), 0.1),
        befc=init(ks[17], (1, OUT_DIM), 0.05),
    )

    # N=400 -> padded to 512; tile_n=128 -> 4 row tiles split as 2 "core"
    # slabs x 2 tiles: exercises padding, per-core pooled accumulation and
    # the finalize kernel.
    fwd = jax.jit(lambda a, b, c, d, p: graph_encoder_forward(
        a, b, c, d, p, G, tile_n=128))
    out = fwd(x, edge_index, node_coords, batch, params)
    jax.block_until_ready(out)
    assert out.shape == (G, OUT_DIM) and out.dtype == jnp.float32

    # Check against the module's math with the kernel's bf16 rounding points.
    ref_bf = reference_forward(x, edge_index, node_coords, batch, params, G,
                               bf16_match=True)
    assert jnp.allclose(out, ref_bf, rtol=2e-2, atol=2e-2), (
        float(jnp.max(jnp.abs(out - ref_bf))))
    # Sanity bound against the pure-f32 PyTorch-semantics reference
    # (bf16 A / h1 is the deliberate precision trade-off from the perf review).
    ref_f32 = reference_forward(x, edge_index, node_coords, batch, params, G)
    assert jnp.allclose(out, ref_f32, rtol=1e-1, atol=1e-1), (
        float(jnp.max(jnp.abs(out - ref_f32))))
    print("KERNEL_OK")
</pallas_src>

<mosaic_0001>
module attributes {stable_mosaic.version = 11 : i64} {
  func.func @_sage1_kernel(%arg0: i32, %arg1: memref<128x512xbf16, #tpu.memory_space<vmem>>, %arg2: memref<512x6xbf16, #tpu.memory_space<vmem>>, %arg3: memref<6x256xf32, #tpu.memory_space<vmem>>, %arg4: memref<6x256xf32, #tpu.memory_space<vmem>>, %arg5: memref<1x256xf32, #tpu.memory_space<vmem>>, %arg6: memref<1x256xf32, #tpu.memory_space<vmem>>, %arg7: memref<1x256xf32, #tpu.memory_space<vmem>>, %arg8: memref<128x256xbf16, #tpu.memory_space<vmem>>) attributes {dimension_semantics = [#tpu.dimension_semantics<parallel>], iteration_bounds = array<i64: 4>, scalar_prefetch = 0 : i64, scratch_operands = 0 : i64, tpu.core_type = #tpu.core_type<tc>, window_params = [{transform_indices = @transform_0, window_bounds = array<i64: 128, 512>}, {pipeline_mode = #tpu.pipeline_mode<synchronous>, transform_indices = @transform_1, window_bounds = array<i64: 512, 6>}, {pipeline_mode = #tpu.pipeline_mode<synchronous>, transform_indices = @transform_2, window_bounds = array<i64: 6, 256>}, {pipeline_mode = #tpu.pipeline_mode<synchronous>, transform_indices = @transform_3, window_bounds = array<i64: 6, 256>}, {pipeline_mode = #tpu.pipeline_mode<synchronous>, transform_indices = @transform_4, window_bounds = array<i64: 1, 256>}, {pipeline_mode = #tpu.pipeline_mode<synchronous>, transform_indices = @transform_5, window_bounds = array<i64: 1, 256>}, {pipeline_mode = #tpu.pipeline_mode<synchronous>, transform_indices = @transform_6, window_bounds = array<i64: 1, 256>}, {transform_indices = @transform_7, window_bounds = array<i64: 128, 256>}]} {
    %c128_i32 = arith.constant 128 : i32
    %0 = arith.muli %arg0, %c128_i32 : i32
    %1 = tpu.assume_multiple %0, 128 : i32
    %c0 = arith.constant 0 : index
    %c0_0 = arith.constant 0 : index
    %2 = vector.load %arg1[%c0, %c0_0] : memref<128x512xbf16, #tpu.memory_space<vmem>>, vector<128x512xbf16>
    %c0_1 = arith.constant 0 : index
    %c0_2 = arith.constant 0 : index
    %3 = vector.load %arg2[%c0_1, %c0_2] : memref<512x6xbf16, #tpu.memory_space<vmem>>, vector<512x6xbf16>
    %cst = arith.constant dense<0.000000e+00> : vector<128x6xf32>
    %4 = tpu.matmul %2, %3, %cst {dimension_numbers = #tpu.dot_dimension_numbers<[1], [0], [0], [1], [0, 0, 1, 1], [], []>} : vector<128x512xbf16>, vector<512x6xbf16>, vector<128x6xf32> -> vector<128x6xf32>
    %5 = arith.index_cast %1 : i32 to index
    %c0_3 = arith.constant 0 : index
    %6 = vector.load %arg2[%5, %c0_3] : memref<512x6xbf16, #tpu.memory_space<vmem>>, vector<128x6xbf16>
    %7 = arith.extf %6 : vector<128x6xbf16> to vector<128x6xf32>
    %c0_4 = arith.constant 0 : index
    %c0_5 = arith.constant 0 : index
    %8 = vector.load %arg3[%c0_4, %c0_5] : memref<6x256xf32, #tpu.memory_space<vmem>>, vector<6x256xf32>
    %cst_6 = arith.constant dense<0.000000e+00> : vector<128x256xf32>
    %9 = tpu.matmul %4, %8, %cst_6 {dimension_numbers = #tpu.dot_dimension_numbers<[1], [0], [0], [1], [0, 0, 1, 1], [], []>} : vector<128x6xf32>, vector<6x256xf32>, vector<128x256xf32> -> vector<128x256xf32>
    %c0_7 = arith.constant 0 : index
    %c0_8 = arith.constant 0 : index
    %10 = vector.load %arg4[%c0_7, %c0_8] : memref<6x256xf32, #tpu.memory_space<vmem>>, vector<6x256xf32>
    %cst_9 = arith.constant dense<0.000000e+00> : vector<128x256xf32>
    %11 = tpu.matmul %7, %10, %cst_9 {dimension_numbers = #tpu.dot_dimension_numbers<[1], [0], [0], [1], [0, 0, 1, 1], [], []>} : vector<128x6xf32>, vector<6x256xf32>, vector<128x256xf32> -> vector<128x256xf32>
    %12 = arith.addf %9, %11 : vector<128x256xf32>
    %c0_10 = arith.constant 0 : index
    %c0_11 = arith.constant 0 : index
    %13 = vector.load %arg5[%c0_10, %c0_11] : memref<1x256xf32, #tpu.memory_space<vmem>>, vector<1x256xf32>
    %14 = vector.broadcast %13 : vector<1x256xf32> to vector<128x256xf32>
    %15 = arith.addf %12, %14 : vector<128x256xf32>
    %c0_12 = arith.constant 0 : index
    %c0_13 = arith.constant 0 : index
    %16 = vector.load %arg6[%c0_12, %c0_13] : memref<1x256xf32, #tpu.memory_space<vmem>>, vector<1x256xf32>
    %c0_14 = arith.constant 0 : index
    %c0_15 = arith.constant 0 : index
    %17 = vector.load %arg7[%c0_14, %c0_15] : memref<1x256xf32, #tpu.memory_space<vmem>>, vector<1x256xf32>
    %cst_16 = arith.constant dense<0.000000e+00> : vector<128xf32>
    %18 = vector.multi_reduction <add>, %15, %cst_16 [1] : vector<128x256xf32> to vector<128xf32>
    %19 = vector.shape_cast %18 : vector<128xf32> to vector<128x1xf32>
    %cst_17 = arith.constant 2.560000e+02 : f32
    %20 = vector.broadcast %cst_17 : f32 to vector<128x1xf32>
    %21 = arith.divf %19, %20 : vector<128x1xf32>
    %22 = arith.mulf %15, %15 : vector<128x256xf32>
    %cst_18 = arith.constant dense<0.000000e+00> : vector<128xf32>
    %23 = vector.multi_reduction <add>, %22, %cst_18 [1] : vector<128x256xf32> to vector<128xf32>
    %24 = vector.shape_cast %23 : vector<128xf32> to vector<128x1xf32>
    %cst_19 = arith.constant 2.560000e+02 : f32
    %25 = vector.broadcast %cst_19 : f32 to vector<128x1xf32>
    %26 = arith.divf %24, %25 : vector<128x1xf32>
    %27 = arith.mulf %21, %21 : vector<128x1xf32>
    %28 = arith.subf %26, %27 : vector<128x1xf32>
    %cst_20 = arith.constant 0.000000e+00 : f32
    %29 = vector.broadcast %cst_20 : f32 to vector<128x1xf32>
    %30 = arith.maximumf %28, %29 : vector<128x1xf32>
    %31 = vector.broadcast %21 : vector<128x1xf32> to vector<128x256xf32>
    %32 = arith.subf %15, %31 : vector<128x256xf32>
    %cst_21 = arith.constant 9.99999974E-6 : f32
    %33 = vector.broadcast %cst_21 : f32 to vector<128x1xf32>
    %34 = arith.addf %30, %33 : vector<128x1xf32>
    %35 = math.rsqrt %34 : vector<128x1xf32>
    %36 = vector.broadcast %35 : vector<128x1xf32> to vector<128x256xf32>
    %37 = arith.mulf %32, %36 : vector<128x256xf32>
    %38 = vector.broadcast %16 : vector<1x256xf32> to vector<128x256xf32>
    %39 = arith.mulf %37, %38 : vector<128x256xf32>
    %40 = vector.broadcast %17 : vector<1x256xf32> to vector<128x256xf32>
    %41 = arith.addf %39, %40 : vector<128x256xf32>
    %cst_22 = arith.constant 0.000000e+00 : f32
    %42 = vector.broadcast %cst_22 : f32 to vector<128x256xf32>
    %43 = arith.maximumf %41, %42 : vector<128x256xf32>
    %44 = arith.truncf %43 : vector<128x256xf32> to vector<128x256xbf16>
    %c0_23 = arith.constant 0 : index
    %c0_24 = arith.constant 0 : index
    %45 = vector.load %arg8[%c0_23, %c0_24] : memref<128x256xbf16, #tpu.memory_space<vmem>>, vector<128x256xbf16>
    tpu.vector_store %arg8[%c0_23, %c0_24], %44 {strides = array<i32>} : memref<128x256xbf16, #tpu.memory_space<vmem>>, vector<128x256xbf16>,
    return
  }
  func.func @transform_0(%arg0: i32) -> (i32, i32) {
    %c0_i32 = arith.constant 0 : i32
    %c0_i32_0 = arith.constant 0 : i32
    return %arg0, %c0_i32 : i32, i32
  }
  func.func @transform_1(%arg0: i32) -> (i32, i32) {
    %c0_i32 = arith.constant 0 : i32
    %c0_i32_0 = arith.constant 0 : i32
    %c0_i32_1 = arith.constant 0 : i32
    return %c0_i32, %c0_i32_0 : i32, i32
  }
  func.func @transform_2(%arg0: i32) -> (i32, i32) {
    %c0_i32 = arith.constant 0 : i32
    %c0_i32_0 = arith.constant 0 : i32
    %c0_i32_1 = arith.constant 0 : i32
    return %c0_i32, %c0_i32_0 : i32, i32
  }
  func.func @transform_3(%arg0: i32) -> (i32, i32) {
    %c0_i32 = arith.constant 0 : i32
    %c0_i32_0 = arith.constant 0 : i32
    %c0_i32_1 = arith.constant 0 : i32
    return %c0_i32, %c0_i32_0 : i32, i32
  }
  func.func @transform_4(%arg0: i32) -> (i32, i32) {
    %c0_i32 = arith.constant 0 : i32
    %c0_i32_0 = arith.constant 0 : i32
    %c0_i32_1 = arith.constant 0 : i32
    return %c0_i32, %c0_i32_0 : i32, i32
  }
  func.func @transform_5(%arg0: i32) -> (i32, i32) {
    %c0_i32 = arith.constant 0 : i32
    %c0_i32_0 = arith.constant 0 : i32
    %c0_i32_1 = arith.constant 0 : i32
    return %c0_i32, %c0_i32_0 : i32, i32
  }
  func.func @transform_6(%arg0: i32) -> (i32, i32) {
    %c0_i32 = arith.constant 0 : i32
    %c0_i32_0 = arith.constant 0 : i32
    %c0_i32_1 = arith.constant 0 : i32
    return %c0_i32, %c0_i32_0 : i32, i32
  }
  func.func @transform_7(%arg0: i32) -> (i32, i32) {
    %c0_i32 = arith.constant 0 : i32
    %c0_i32_0 = arith.constant 0 : i32
    return %arg0, %c0_i32 : i32, i32
  }
}

module attributes {stable_mosaic.version = 11 : i64} {
  func.func @_sage2_pool_kernel(%arg0: i32, %arg1: i32, %arg2: memref<128x512xbf16, #tpu.memory_space<vmem>>, %arg3: memref<512x256xbf16, #tpu.memory_space<vmem>>, %arg4: memref<128x3xf32, #tpu.memory_space<vmem>>, %arg5: memref<3x128xf32, #tpu.memory_space<vmem>>, %arg6: memref<256x256xf32, #tpu.memory_space<vmem>>, %arg7: memref<256x256xf32, #tpu.memory_space<vmem>>, %arg8: memref<1x256xf32, #tpu.memory_space<vmem>>, %arg9: memref<1x256xf32, #tpu.memory_space<vmem>>, %arg10: memref<1x256xf32, #tpu.memory_space<vmem>>, %arg11: memref<3x128xf32, #tpu.memory_space<vmem>>, %arg12: memref<1x3x256xf32, #tpu.memory_space<vmem>>, %arg13: memref<1x3x128xf32, #tpu.memory_space<vmem>>, %arg14: memref<1x3x128xf32, #tpu.memory_space<vmem>>) attributes {dimension_semantics = [#tpu.dimension_semantics<parallel>, #tpu.dimension_semantics<arbitrary>], iteration_bounds = array<i64: 2, 2>, scalar_prefetch = 0 : i64, scratch_operands = 0 : i64, tpu.core_type = #tpu.core_type<tc>, window_params = [{transform_indices = @transform_0, window_bounds = array<i64: 128, 512>}, {pipeline_mode = #tpu.pipeline_mode<synchronous>, transform_indices = @transform_1, window_bounds = array<i64: 512, 256>}, {transform_indices = @transform_2, window_bounds = array<i64: 128, 3>}, {transform_indices = @transform_3, window_bounds = array<i64: 3, 128>}, {pipeline_mode = #tpu.pipeline_mode<synchronous>, transform_indices = @transform_4, window_bounds = array<i64: 256, 256>}, {pipeline_mode = #tpu.pipeline_mode<synchronous>, transform_indices = @transform_5, window_bounds = array<i64: 256, 256>}, {pipeline_mode = #tpu.pipeline_mode<synchronous>, transform_indices = @transform_6, window_bounds = array<i64: 1, 256>}, {pipeline_mode = #tpu.pipeline_mode<synchronous>, transform_indices = @transform_7, window_bounds = array<i64: 1, 256>}, {pipeline_mode = #tpu.pipeline_mode<synchronous>, transform_indices = @transform_8, window_bounds = array<i64: 1, 256>}, {pipeline_mode = #tpu.pipeline_mode<synchronous>, transform_indices = @transform_9, window_bounds = array<i64: 3, 128>}, {transform_indices = @transform_10, window_bounds = array<i64: 1, 3, 256>}, {transform_indices = @transform_11, window_bounds = array<i64: 1, 3, 128>}, {transform_indices = @transform_12, window_bounds = array<i64: 1, 3, 128>}]} {
    %c2_i32 = arith.constant 2 : i32
    %0 = arith.muli %arg0, %c2_i32 : i32
    %1 = arith.addi %0, %arg1 : i32
    %c128_i32 = arith.constant 128 : i32
    %2 = arith.muli %1, %c128_i32 : i32
    %3 = tpu.assume_multiple %2, 128 : i32
    %c0_i32 = arith.constant 0 : i32
    %4 = arith.cmpi eq, %arg1, %c0_i32 : i32
    %5 = arith.extui %4 : i1 to i32
    %c0_i32_0 = arith.constant 0 : i32
    %6 = arith.cmpi ne, %5, %c0_i32_0 : i32
    scf.if %6 {
      %cst_52 = arith.constant 0.000000e+00 : f32
      %70 = vector.broadcast %cst_52 : f32 to vector<1x3x256xf32>
      %c0_53 = arith.constant 0 : index
      %c0_54 = arith.constant 0 : index
      %c0_55 = arith.constant 0 : index
      %71 = vector.load %arg12[%c0_53, %c0_54, %c0_55] : memref<1x3x256xf32, #tpu.memory_space<vmem>>, vector<1x3x256xf32>
      tpu.vector_store %arg12[%c0_53, %c0_54, %c0_55], %70 {strides = array<i32>} : memref<1x3x256xf32, #tpu.memory_space<vmem>>, vector<1x3x256xf32>,
      %cst_56 = arith.constant 0.000000e+00 : f32
      %72 = vector.broadcast %cst_56 : f32 to vector<1x3x128xf32>
      %c0_57 = arith.constant 0 : index
      %c0_58 = arith.constant 0 : index
      %c0_59 = arith.constant 0 : index
      %73 = vector.load %arg13[%c0_57, %c0_58, %c0_59] : memref<1x3x128xf32, #tpu.memory_space<vmem>>, vector<1x3x128xf32>
      tpu.vector_store %arg13[%c0_57, %c0_58, %c0_59], %72 {strides = array<i32>} : memref<1x3x128xf32, #tpu.memory_space<vmem>>, vector<1x3x128xf32>,
      %cst_60 = arith.constant 0.000000e+00 : f32
      %74 = vector.broadcast %cst_60 : f32 to vector<1x3x128xf32>
      %c0_61 = arith.constant 0 : index
      %c0_62 = arith.constant 0 : index
      %c0_63 = arith.constant 0 : index
      %75 = vector.load %arg14[%c0_61, %c0_62, %c0_63] : memref<1x3x128xf32, #tpu.memory_space<vmem>>, vector<1x3x128xf32>
      tpu.vector_store %arg14[%c0_61, %c0_62, %c0_63], %74 {strides = array<i32>} : memref<1x3x128xf32, #tpu.memory_space<vmem>>, vector<1x3x128xf32>,
    } else {
    }
    %c0 = arith.constant 0 : index
    %c0_1 = arith.constant 0 : index
    %7 = vector.load %arg2[%c0, %c0_1] : memref<128x512xbf16, #tpu.memory_space<vmem>>, vector<128x512xbf16>
    %c0_2 = arith.constant 0 : index
    %c0_3 = arith.constant 0 : index
    %8 = vector.load %arg3[%c0_2, %c0_3] : memref<512x256xbf16, #tpu.memory_space<vmem>>, vector<512x256xbf16>
    %cst = arith.constant dense<0.000000e+00> : vector<128x256xf32>
    %9 = tpu.matmul %7, %8, %cst {dimension_numbers = #tpu.dot_dimension_numbers<[1], [0], [0], [1], [0, 0, 1, 1], [], []>} : vector<128x512xbf16>, vector<512x256xbf16>, vector<128x256xf32> -> vector<128x256xf32>
    %10 = arith.index_cast %3 : i32 to index
    %c0_4 = arith.constant 0 : index
    %11 = vector.load %arg3[%10, %c0_4] : memref<512x256xbf16, #tpu.memory_space<vmem>>, vector<128x256xbf16>
    %12 = arith.extf %11 : vector<128x256xbf16> to vector<128x256xf32>
    %c0_5 = arith.constant 0 : index
    %c0_6 = arith.constant 0 : index
    %13 = vector.load %arg6[%c0_5, %c0_6] : memref<256x256xf32, #tpu.memory_space<vmem>>, vector<256x256xf32>
    %cst_7 = arith.constant dense<0.000000e+00> : vector<128x256xf32>
    %14 = tpu.matmul %9, %13, %cst_7 {dimension_numbers = #tpu.dot_dimension_numbers<[1], [0], [0], [1], [0, 0, 1, 1], [], []>} : vector<128x256xf32>, vector<256x256xf32>, vector<128x256xf32> -> vector<128x256xf32>
    %c0_8 = arith.constant 0 : index
    %c0_9 = arith.constant 0 : index
    %15 = vector.load %arg7[%c0_8, %c0_9] : memref<256x256xf32, #tpu.memory_space<vmem>>, vector<256x256xf32>
    %cst_10 = arith.constant dense<0.000000e+00> : vector<128x256xf32>
    %16 = tpu.matmul %12, %15, %cst_10 {dimension_numbers = #tpu.dot_dimension_numbers<[1], [0], [0], [1], [0, 0, 1, 1], [], []>} : vector<128x256xf32>, vector<256x256xf32>, vector<128x256xf32> -> vector<128x256xf32>
    %17 = arith.addf %14, %16 : vector<128x256xf32>
    %c0_11 = arith.constant 0 : index
    %c0_12 = arith.constant 0 : index
    %18 = vector.load %arg8[%c0_11, %c0_12] : memref<1x256xf32, #tpu.memory_space<vmem>>, vector<1x256xf32>
    %19 = vector.broadcast %18 : vector<1x256xf32> to vector<128x256xf32>
    %20 = arith.addf %17, %19 : vector<128x256xf32>
    %c0_13 = arith.constant 0 : index
    %c0_14 = arith.constant 0 : index
    %21 = vector.load %arg9[%c0_13, %c0_14] : memref<1x256xf32, #tpu.memory_space<vmem>>, vector<1x256xf32>
    %c0_15 = arith.constant 0 : index
    %c0_16 = arith.constant 0 : index
    %22 = vector.load %arg10[%c0_15, %c0_16] : memref<1x256xf32, #tpu.memory_space<vmem>>, vector<1x256xf32>
    %cst_17 = arith.constant dense<0.000000e+00> : vector<128xf32>
    %23 = vector.multi_reduction <add>, %20, %cst_17 [1] : vector<128x256xf32> to vector<128xf32>
    %24 = vector.shape_cast %23 : vector<128xf32> to vector<128x1xf32>
    %cst_18 = arith.constant 2.560000e+02 : f32
    %25 = vector.broadcast %cst_18 : f32 to vector<128x1xf32>
    %26 = arith.divf %24, %25 : vector<128x1xf32>
    %27 = arith.mulf %20, %20 : vector<128x256xf32>
    %cst_19 = arith.constant dense<0.000000e+00> : vector<128xf32>
    %28 = vector.multi_reduction <add>, %27, %cst_19 [1] : vector<128x256xf32> to vector<128xf32>
    %29 = vector.shape_cast %28 : vector<128xf32> to vector<128x1xf32>
    %cst_20 = arith.constant 2.560000e+02 : f32
    %30 = vector.broadcast %cst_20 : f32 to vector<128x1xf32>
    %31 = arith.divf %29, %30 : vector<128x1xf32>
    %32 = arith.mulf %26, %26 : vector<128x1xf32>
    %33 = arith.subf %31, %32 : vector<128x1xf32>
    %cst_21 = arith.constant 0.000000e+00 : f32
    %34 = vector.broadcast %cst_21 : f32 to vector<128x1xf32>
    %35 = arith.maximumf %33, %34 : vector<128x1xf32>
    %36 = vector.broadcast %26 : vector<128x1xf32> to vector<128x256xf32>
    %37 = arith.subf %20, %36 : vector<128x256xf32>
    %cst_22 = arith.constant 9.99999974E-6 : f32
    %38 = vector.broadcast %cst_22 : f32 to vector<128x1xf32>
    %39 = arith.addf %35, %38 : vector<128x1xf32>
    %40 = math.rsqrt %39 : vector<128x1xf32>
    %41 = vector.broadcast %40 : vector<128x1xf32> to vector<128x256xf32>
    %42 = arith.mulf %37, %41 : vector<128x256xf32>
    %43 = vector.broadcast %21 : vector<1x256xf32> to vector<128x256xf32>
    %44 = arith.mulf %42, %43 : vector<128x256xf32>
    %45 = vector.broadcast %22 : vector<1x256xf32> to vector<128x256xf32>
    %46 = arith.addf %44, %45 : vector<128x256xf32>
    %cst_23 = arith.constant 0.000000e+00 : f32
    %47 = vector.broadcast %cst_23 : f32 to vector<128x256xf32>
    %48 = arith.maximumf %46, %47 : vector<128x256xf32>
    %c0_24 = arith.constant 0 : index
    %c0_25 = arith.constant 0 : index
    %49 = vector.load %arg4[%c0_24, %c0_25] : memref<128x3xf32, #tpu.memory_space<vmem>>, vector<128x3xf32>
    %c0_26 = arith.constant 0 : index
    %c0_27 = arith.constant 0 : index
    %50 = vector.load %arg11[%c0_26, %c0_27] : memref<3x128xf32, #tpu.memory_space<vmem>>, vector<3x128xf32>
    %cst_28 = arith.constant dense<0.000000e+00> : vector<128x128xf32>
    %51 = tpu.matmul %49, %50, %cst_28 {dimension_numbers = #tpu.dot_dimension_numbers<[1], [0], [0], [1], [0, 0, 1, 1], [], []>} : vector<128x3xf32>, vector<3x128xf32>, vector<128x128xf32> -> vector<128x128xf32>
    %c0_29 = arith.constant 0 : index
    %c0_30 = arith.constant 0 : index
    %52 = vector.load %arg5[%c0_29, %c0_30] : memref<3x128xf32, #tpu.memory_space<vmem>>, vector<3x128xf32>
    %c0_31 = arith.constant 0 : index
    %c0_32 = arith.constant 0 : index
    %c0_33 = arith.constant 0 : index
    %53 = vector.load %arg12[%c0_31, %c0_32, %c0_33] : memref<1x3x256xf32, #tpu.memory_space<vmem>>, vector<1x3x256xf32>
    %cst_34 = arith.constant dense<0.000000e+00> : vector<3x256xf32>
    %54 = tpu.matmul %52, %48, %cst_34 {dimension_numbers = #tpu.dot_dimension_numbers<[1], [0], [0], [1], [0, 0, 1, 1], [], []>} : vector<3x128xf32>, vector<128x256xf32>, vector<3x256xf32> -> vector<3x256xf32>
    %55 = vector.shape_cast %54 : vector<3x256xf32> to vector<1x3x256xf32>
    %56 = arith.addf %53, %55 : vector<1x3x256xf32>
    %c0_35 = arith.constant 0 : index
    %c0_36 = arith.constant 0 : index
    %c0_37 = arith.constant 0 : index
    %57 = vector.load %arg12[%c0_35, %c0_36, %c0_37] : memref<1x3x256xf32, #tpu.memory_space<vmem>>, vector<1x3x256xf32>
    tpu.vector_store %arg12[%c0_35, %c0_36, %c0_37], %56 {strides = array<i32>} : memref<1x3x256xf32, #tpu.memory_space<vmem>>, vector<1x3x256xf32>,
    %c0_38 = arith.constant 0 : index
    %c0_39 = arith.constant 0 : index
    %c0_40 = arith.constant 0 : index
    %58 = vector.load %arg13[%c0_38, %c0_39, %c0_40] : memref<1x3x128xf32, #tpu.memory_space<vmem>>, vector<1x3x128xf32>
    %59 = math.sin %51 : vector<128x128xf32>
    %cst_41 = arith.constant dense<0.000000e+00> : vector<3x128xf32>
    %60 = tpu.matmul %52, %59, %cst_41 {dimension_numbers = #tpu.dot_dimension_numbers<[1], [0], [0], [1], [0, 0, 1, 1], [], []>} : vector<3x128xf32>, vector<128x128xf32>, vector<3x128xf32> -> vector<3x128xf32>
    %61 = vector.shape_cast %60 : vector<3x128xf32> to vector<1x3x128xf32>
    %62 = arith.addf %58, %61 : vector<1x3x128xf32>
    %c0_42 = arith.constant 0 : index
    %c0_43 = arith.constant 0 : index
    %c0_44 = arith.constant 0 : index
    %63 = vector.load %arg13[%c0_42, %c0_43, %c0_44] : memref<1x3x128xf32, #tpu.memory_space<vmem>>, vector<1x3x128xf32>
    tpu.vector_store %arg13[%c0_42, %c0_43, %c0_44], %62 {strides = array<i32>} : memref<1x3x128xf32, #tpu.memory_space<vmem>>, vector<1x3x128xf32>,
    %c0_45 = arith.constant 0 : index
    %c0_46 = arith.constant 0 : index
    %c0_47 = arith.constant 0 : index
    %64 = vector.load %arg14[%c0_45, %c0_46, %c0_47] : memref<1x3x128xf32, #tpu.memory_space<vmem>>, vector<1x3x128xf32>
    %65 = math.cos %51 : vector<128x128xf32>
    %cst_48 = arith.constant dense<0.000000e+00> : vector<3x128xf32>
    %66 = tpu.matmul %52, %65, %cst_48 {dimension_numbers = #tpu.dot_dimension_numbers<[1], [0], [0], [1], [0, 0, 1, 1], [], []>} : vector<3x128xf32>, vector<128x128xf32>, vector<3x128xf32> -> vector<3x128xf32>
    %67 = vector.shape_cast %66 : vector<3x128xf32> to vector<1x3x128xf32>
    %68 = arith.addf %64, %67 : vector<1x3x128xf32>
    %c0_49 = arith.constant 0 : index
    %c0_50 = arith.constant 0 : index
    %c0_51 = arith.constant 0 : index
    %69 = vector.load %arg14[%c0_49, %c0_50, %c0_51] : memref<1x3x128xf32, #tpu.memory_space<vmem>>, vector<1x3x128xf32>
    tpu.vector_store %arg14[%c0_49, %c0_50, %c0_51], %68 {strides = array<i32>} : memref<1x3x128xf32, #tpu.memory_space<vmem>>, vector<1x3x128xf32>,
    return
  }
  func.func @transform_0(%arg0: i32, %arg1: i32) -> (i32, i32) {
    %c2_i32 = arith.constant 2 : i32
    %0 = arith.muli %arg0, %c2_i32 : i32
    %1 = arith.addi %0, %arg1 : i32
    %c0_i32 = arith.constant 0 : i32
    %c0_i32_0 = arith.constant 0 : i32
    return %1, %c0_i32 : i32, i32
  }
  func.func @transform_1(%arg0: i32, %arg1: i32) -> (i32, i32) {
    %c0_i32 = arith.constant 0 : i32
    %c0_i32_0 = arith.constant 0 : i32
    %c0_i32_1 = arith.constant 0 : i32
    return %c0_i32, %c0_i32_0 : i32, i32
  }
  func.func @transform_2(%arg0: i32, %arg1: i32) -> (i32, i32) {
    %c2_i32 = arith.constant 2 : i32
    %0 = arith.muli %arg0, %c2_i32 : i32
    %1 = arith.addi %0, %arg1 : i32
    %c0_i32 = arith.constant 0 : i32
    %c0_i32_0 = arith.constant 0 : i32
    return %1, %c0_i32 : i32, i32
  }
  func.func @transform_3(%arg0: i32, %arg1: i32) -> (i32, i32) {
    %c2_i32 = arith.constant 2 : i32
    %0 = arith.muli %arg0, %c2_i32 : i32
    %1 = arith.addi %0, %arg1 : i32
    %c0_i32 = arith.constant 0 : i32
    %c0_i32_0 = arith.constant 0 : i32
    return %c0_i32, %1 : i32, i32
  }
  func.func @transform_4(%arg0: i32, %arg1: i32) -> (i32, i32) {
    %c0_i32 = arith.constant 0 : i32
    %c0_i32_0 = arith.constant 0 : i32
    %c0_i32_1 = arith.constant 0 : i32
    return %c0_i32, %c0_i32_0 : i32, i32
  }
  func.func @transform_5(%arg0: i32, %arg1: i32) -> (i32, i32) {
    %c0_i32 = arith.constant 0 : i32
    %c0_i32_0 = arith.constant 0 : i32
    %c0_i32_1 = arith.constant 0 : i32
    return %c0_i32, %c0_i32_0 : i32, i32
  }
  func.func @transform_6(%arg0: i32, %arg1: i32) -> (i32, i32) {
    %c0_i32 = arith.constant 0 : i32
    %c0_i32_0 = arith.constant 0 : i32
    %c0_i32_1 = arith.constant 0 : i32
    return %c0_i32, %c0_i32_0 : i32, i32
  }
  func.func @transform_7(%arg0: i32, %arg1: i32) -> (i32, i32) {
    %c0_i32 = arith.constant 0 : i32
    %c0_i32_0 = arith.constant 0 : i32
    %c0_i32_1 = arith.constant 0 : i32
    return %c0_i32, %c0_i32_0 : i32, i32
  }
  func.func @transform_8(%arg0: i32, %arg1: i32) -> (i32, i32) {
    %c0_i32 = arith.constant 0 : i32
    %c0_i32_0 = arith.constant 0 : i32
    %c0_i32_1 = arith.constant 0 : i32
    return %c0_i32, %c0_i32_0 : i32, i32
  }
  func.func @transform_9(%arg0: i32, %arg1: i32) -> (i32, i32) {
    %c0_i32 = arith.constant 0 : i32
    %c0_i32_0 = arith.constant 0 : i32
    %c0_i32_1 = arith.constant 0 : i32
    return %c0_i32, %c0_i32_0 : i32, i32
  }
  func.func @transform_10(%arg0: i32, %arg1: i32) -> (i32, i32, i32) {
    %c0_i32 = arith.constant 0 : i32
    %c0_i32_0 = arith.constant 0 : i32
    %c0_i32_1 = arith.constant 0 : i32
    return %arg0, %c0_i32, %c0_i32_0 : i32, i32, i32
  }
  func.func @transform_11(%arg0: i32, %arg1: i32) -> (i32, i32, i32) {
    %c0_i32 = arith.constant 0 : i32
    %c0_i32_0 = arith.constant 0 : i32
    %c0_i32_1 = arith.constant 0 : i32
    return %arg0, %c0_i32, %c0_i32_0 : i32, i32, i32
  }
  func.func @transform_12(%arg0: i32, %arg1: i32) -> (i32, i32, i32) {
    %c0_i32 = arith.constant 0 : i32
    %c0_i32_0 = arith.constant 0 : i32
    %c0_i32_1 = arith.constant 0 : i32
    return %arg0, %c0_i32, %c0_i32_0 : i32, i32, i32
  }
}

module attributes {stable_mosaic.version = 11 : i64} {
  func.func @_fc_ln_kernel(%arg0: memref<2x3x256xf32, #tpu.memory_space<vmem>>, %arg1: memref<2x3x128xf32, #tpu.memory_space<vmem>>, %arg2: memref<2x3x128xf32, #tpu.memory_space<vmem>>, %arg3: memref<256x64xf32, #tpu.memory_space<vmem>>, %arg4: memref<128x64xf32, #tpu.memory_space<vmem>>, %arg5: memref<128x64xf32, #tpu.memory_space<vmem>>, %arg6: memref<1x64xf32, #tpu.memory_space<vmem>>, %arg7: memref<1x64xf32, #tpu.memory_space<vmem>>, %arg8: memref<1x64xf32, #tpu.memory_space<vmem>>, %arg9: memref<3x64xf32, #tpu.memory_space<vmem>>) attributes {dimension_semantics = [], scalar_prefetch = 0 : i64, scratch_operands = 0 : i64, tpu.core_type = #tpu.core_type<tc>} {
    %c0 = arith.constant 0 : index
    %c0_0 = arith.constant 0 : index
    %c0_1 = arith.constant 0 : index
    %0 = vector.load %arg0[%c0, %c0_0, %c0_1] : memref<2x3x256xf32, #tpu.memory_space<vmem>>, vector<2x3x256xf32>
    %cst = arith.constant dense<0.000000e+00> : vector<3x256xf32>
    %1 = vector.multi_reduction <add>, %0, %cst [0] : vector<2x3x256xf32> to vector<3x256xf32>
    %c0_2 = arith.constant 0 : index
    %c0_3 = arith.constant 0 : index
    %c0_4 = arith.constant 0 : index
    %2 = vector.load %arg1[%c0_2, %c0_3, %c0_4] : memref<2x3x128xf32, #tpu.memory_space<vmem>>, vector<2x3x128xf32>
    %cst_5 = arith.constant dense<0.000000e+00> : vector<3x128xf32>
    %3 = vector.multi_reduction <add>, %2, %cst_5 [0] : vector<2x3x128xf32> to vector<3x128xf32>
    %c0_6 = arith.constant 0 : index
    %c0_7 = arith.constant 0 : index
    %c0_8 = arith.constant 0 : index
    %4 = vector.load %arg2[%c0_6, %c0_7, %c0_8] : memref<2x3x128xf32, #tpu.memory_space<vmem>>, vector<2x3x128xf32>
    %cst_9 = arith.constant dense<0.000000e+00> : vector<3x128xf32>
    %5 = vector.multi_reduction <add>, %4, %cst_9 [0] : vector<2x3x128xf32> to vector<3x128xf32>
    %c0_10 = arith.constant 0 : index
    %c0_11 = arith.constant 0 : index
    %6 = vector.load %arg3[%c0_10, %c0_11] : memref<256x64xf32, #tpu.memory_space<vmem>>, vector<256x64xf32>
    %cst_12 = arith.constant dense<0.000000e+00> : vector<3x64xf32>
    %7 = tpu.matmul %1, %6, %cst_12 {dimension_numbers = #tpu.dot_dimension_numbers<[1], [0], [0], [1], [0, 0, 1, 1], [], []>} : vector<3x256xf32>, vector<256x64xf32>, vector<3x64xf32> -> vector<3x64xf32>
    %c0_13 = arith.constant 0 : index
    %c0_14 = arith.constant 0 : index
    %8 = vector.load %arg4[%c0_13, %c0_14] : memref<128x64xf32, #tpu.memory_space<vmem>>, vector<128x64xf32>
    %cst_15 = arith.constant dense<0.000000e+00> : vector<3x64xf32>
    %9 = tpu.matmul %3, %8, %cst_15 {dimension_numbers = #tpu.dot_dimension_numbers<[1], [0], [0], [1], [0, 0, 1, 1], [], []>} : vector<3x128xf32>, vector<128x64xf32>, vector<3x64xf32> -> vector<3x64xf32>
    %10 = arith.addf %7, %9 : vector<3x64xf32>
    %c0_16 = arith.constant 0 : index
    %c0_17 = arith.constant 0 : index
    %11 = vector.load %arg5[%c0_16, %c0_17] : memref<128x64xf32, #tpu.memory_space<vmem>>, vector<128x64xf32>
    %cst_18 = arith.constant dense<0.000000e+00> : vector<3x64xf32>
    %12 = tpu.matmul %5, %11, %cst_18 {dimension_numbers = #tpu.dot_dimension_numbers<[1], [0], [0], [1], [0, 0, 1, 1], [], []>} : vector<3x128xf32>, vector<128x64xf32>, vector<3x64xf32> -> vector<3x64xf32>
    %13 = arith.addf %10, %12 : vector<3x64xf32>
    %c0_19 = arith.constant 0 : index
    %c0_20 = arith.constant 0 : index
    %14 = vector.load %arg6[%c0_19, %c0_20] : memref<1x64xf32, #tpu.memory_space<vmem>>, vector<1x64xf32>
    %15 = vector.broadcast %14 : vector<1x64xf32> to vector<3x64xf32>
    %16 = arith.addf %13, %15 : vector<3x64xf32>
    %c0_21 = arith.constant 0 : index
    %c0_22 = arith.constant 0 : index
    %17 = vector.load %arg7[%c0_21, %c0_22] : memref<1x64xf32, #tpu.memory_space<vmem>>, vector<1x64xf32>
    %c0_23 = arith.constant 0 : index
    %c0_24 = arith.constant 0 : index
    %18 = vector.load %arg8[%c0_23, %c0_24] : memref<1x64xf32, #tpu.memory_space<vmem>>, vector<1x64xf32>
    %cst_25 = arith.constant dense<0.000000e+00> : vector<3xf32>
    %19 = vector.multi_reduction <add>, %16, %cst_25 [1] : vector<3x64xf32> to vector<3xf32>
    %20 = vector.shape_cast %19 : vector<3xf32> to vector<3x1xf32>
    %cst_26 = arith.constant 6.400000e+01 : f32
    %21 = vector.broadcast %cst_26 : f32 to vector<3x1xf32>
    %22 = arith.divf %20, %21 : vector<3x1xf32>
    %23 = arith.mulf %16, %16 : vector<3x64xf32>
    %cst_27 = arith.constant dense<0.000000e+00> : vector<3xf32>
    %24 = vector.multi_reduction <add>, %23, %cst_27 [1] : vector<3x64xf32> to vector<3xf32>
    %25 = vector.shape_cast %24 : vector<3xf32> to vector<3x1xf32>
    %cst_28 = arith.constant 6.400000e+01 : f32
    %26 = vector.broadcast %cst_28 : f32 to vector<3x1xf32>
    %27 = arith.divf %25, %26 : vector<3x1xf32>
    %28 = arith.mulf %22, %22 : vector<3x1xf32>
    %29 = arith.subf %27, %28 : vector<3x1xf32>
    %cst_29 = arith.constant 0.000000e+00 : f32
    %30 = vector.broadcast %cst_29 : f32 to vector<3x1xf32>
    %31 = arith.maximumf %29, %30 : vector<3x1xf32>
    %32 = vector.broadcast %22 : vector<3x1xf32> to vector<3x64xf32>
    %33 = arith.subf %16, %32 : vector<3x64xf32>
    %cst_30 = arith.constant 9.99999974E-6 : f32
    %34 = vector.broadcast %cst_30 : f32 to vector<3x1xf32>
    %35 = arith.addf %31, %34 : vector<3x1xf32>
    %36 = math.rsqrt %35 : vector<3x1xf32>
    %37 = vector.broadcast %36 : vector<3x1xf32> to vector<3x64xf32>
    %38 = arith.mulf %33, %37 : vector<3x64xf32>
    %39 = vector.broadcast %17 : vector<1x64xf32> to vector<3x64xf32>
    %40 = arith.mulf %38, %39 : vector<3x64xf32>
    %41 = vector.broadcast %18 : vector<1x64xf32> to vector<3x64xf32>
    %42 = arith.addf %40, %41 : vector<3x64xf32>
    %c0_31 = arith.constant 0 : index
    %c0_32 = arith.constant 0 : index
    %43 = vector.load %arg9[%c0_31, %c0_32] : memref<3x64xf32, #tpu.memory_space<vmem>>, vector<3x64xf32>
    tpu.vector_store %arg9[%c0_31, %c0_32], %42 {strides = array<i32>} : memref<3x64xf32, #tpu.memory_space<vmem>>, vector<3x64xf32>,
    return
  }
}

</mosaic_0001>

<llo_original>
// kernel: _lambda_.3
$region0: #{_lambda_.3}
  #allocation0 [shape = 'u32[]', space=smem, size = 0x4, offset = 0x4, fixed_abs, tag = 'smem constant byte address 0x4 - core index']
  #allocation1 [shape = 'u32[72,128]{1,0:T(1,128)}', space=vmem, size = 0x9000, scoped, tag = 'internal scratch']
  %s0 = inlined_call_operand.vmem [shape: bf16[512,512], index: 0, kind: input, shape index: {}]
  %s1 = inlined_call_operand.vmem [shape: bf16[512,6], index: 1, kind: input, shape index: {}]
  %s2 = inlined_call_operand.vmem [shape: f32[6,256], index: 2, kind: input, shape index: {}]
  %s3 = inlined_call_operand.vmem [shape: f32[6,256], index: 3, kind: input, shape index: {}]
  %s4 = inlined_call_operand.vmem [shape: f32[1,256], index: 4, kind: input, shape index: {}]
  %s5 = inlined_call_operand.vmem [shape: f32[1,256], index: 5, kind: input, shape index: {}]
  %s6 = inlined_call_operand.vmem [shape: f32[1,256], index: 6, kind: input, shape index: {}]
  %s7 = inlined_call_operand.vmem [shape: bf16[512,256], index: 7, kind: output, shape index: {}]
  %s8 = sld [smem:[#allocation0]]
  $region61: #{_lambda_.3} parent=0
    _
  %s10 = ssub.s32 1, %s8
  %s11 = scalar_select 0, %s10, %s8
  loop: start=0, step=1, limit=6
  $region2: #{_lambda_.3} parent=0 // loop_pre_header
    _
  $region3: #{_lambda_.3} parent=0 // loop_header
    %s13 = sphi 0, %s17
    %p14 = scmp.ge.s32.totalorder %s13, 6
    %s23 = sphi 0, %s25
    %s26 = sphi 0, %s23
    %s27 = sphi 0, %s26
    %s43 = sphi 0, %s27
    %s47 = sphi 0, %s47
    %s49 = sphi 0, %s47
    %s50 = sphi 0, %s49
    %s64 = sphi 0, %s50
    %s68 = sphi 0, %s68
    %s70 = sphi 0, %s68
    %s71 = sphi 0, %s70
    %s85 = sphi 0, %s71
    %s89 = sphi 0, %s89
    %s91 = sphi 0, %s89
    %s92 = sphi 0, %s91
    %s106 = sphi 0, %s92
    %s110 = sphi 0, %s110
    %s112 = sphi 0, %s110
    %s113 = sphi 0, %s112
    %s127 = sphi 0, %s113
    %s131 = sphi 0, %s131
    %s133 = sphi 0, %s131
    %s134 = sphi 0, %s133
    %s148 = sphi 0, %s134
    %s152 = sphi 0, %s152
    %s154 = sphi 0, %s152
    %s155 = sphi 0, %s154
    %s169 = sphi 0, %s155
    %s175 = sphi 0, %s177
    %s178 = sphi 0, %s175
    %s179 = sphi 0, %s178
    %s195 = sphi 0, %s179
  $region4: #{_lambda_.3} parent=0 // loop_header_branch
    %16 = sbr.rel (%p14) target = $region8
  $region5: #{_lambda_.3} parent=0 // loop_body
    %s18 = ssub.s32 %s13, 1
    %s19 = ssub.s32 %s13, 2
    %s20 = sadd.s32 %s13, 1
    %s21 = ssub.s32 %s13, %s20
    %p22 = scmp.eq.s32.totalorder %s21, 0
    %s24 = sadd.s32 %s23, 1
    %s25 = scalar_select %p22, %s23, %s24
    %p28 = pneg %p22
    %p29 = scmp.eq.s32.totalorder %s13, 3
    %p30 = por %p28, %p29
    %p31 = scmp.ne.s32.totalorder %s23, %s26
    %p32 = scmp.eq.s32.totalorder %s13, 0
    %p33 = por %p31, %p32
    %p34 = scmp.ne.s32.totalorder %s23, %s26
    %p35 = scmp.eq.s32.totalorder %s18, 3
    %p36 = por %p34, %p35
    %p37 = scmp.ne.s32.totalorder %s26, %s27
    %p38 = scmp.eq.s32.totalorder %s18, 0
    %p39 = por %p37, %p38
    %p40 = scmp.ne.s32.totalorder %s26, %s27
    %p41 = scmp.eq.s32.totalorder %s19, 3
    %p42 = por %p40, %p41
    %p44 = scmp.ne.s32.totalorder %s27, %s43
    %p45 = scmp.eq.s32.totalorder %s19, 0
    %p46 = por %p44, %p45
    %s48 = sadd.s32 %s47, 1
    %p51 = scmp.eq.s32.totalorder %s13, 3
    %p52 = scmp.ne.s32.totalorder %s47, %s49
    %p53 = scmp.eq.s32.totalorder %s13, 0
    %p54 = por %p52, %p53
    %p55 = scmp.ne.s32.totalorder %s47, %s49
    %p56 = scmp.eq.s32.totalorder %s18, 3
    %p57 = por %p55, %p56
    %p58 = scmp.ne.s32.totalorder %s49, %s50
    %p59 = scmp.eq.s32.totalorder %s18, 0
    %p60 = por %p58, %p59
    %p61 = scmp.ne.s32.totalorder %s49, %s50
    %p62 = scmp.eq.s32.totalorder %s19, 3
    %p63 = por %p61, %p62
    %p65 = scmp.ne.s32.totalorder %s50, %s64
    %p66 = scmp.eq.s32.totalorder %s19, 0
    %p67 = por %p65, %p66
    %s69 = sadd.s32 %s68, 1
    %p72 = scmp.eq.s32.totalorder %s13, 3
    %p73 = scmp.ne.s32.totalorder %s68, %s70
    %p74 = scmp.eq.s32.totalorder %s13, 0
    %p75 = por %p73, %p74
    %p76 = scmp.ne.s32.totalorder %s68, %s70
    %p77 = scmp.eq.s32.totalorder %s18, 3
    %p78 = por %p76, %p77
    %p79 = scmp.ne.s32.totalorder %s70, %s71
    %p80 = scmp.eq.s32.totalorder %s18, 0
    %p81 = por %p79, %p80
    %p82 = scmp.ne.s32.totalorder %s70, %s71
    %p83 = scmp.eq.s32.totalorder %s19, 3
    %p84 = por %p82, %p83
    %p86 = scmp.ne.s32.totalorder %s71, %s85
    %p87 = scmp.eq.s32.totalorder %s19, 0
    %p88 = por %p86, %p87
    %s90 = sadd.s32 %s89, 1
    %p93 = scmp.eq.s32.totalorder %s13, 3
    %p94 = scmp.ne.s32.totalorder %s89, %s91
    %p95 = scmp.eq.s32.totalorder %s13, 0
    %p96 = por %p94, %p95
    %p97 = scmp.ne.s32.totalorder %s89, %s91
    %p98 = scmp.eq.s32.totalorder %s18, 3
    %p99 = por %p97, %p98
    %p100 = scmp.ne.s32.totalorder %s91, %s92
    %p101 = scmp.eq.s32.totalorder %s18, 0
    %p102 = por %p100, %p101
    %p103 = scmp.ne.s32.totalorder %s91, %s92
    %p104 = scmp.eq.s32.totalorder %s19, 3
    %p105 = por %p103, %p104
    %p107 = scmp.ne.s32.totalorder %s92, %s106
    %p108 = scmp.eq.s32.totalorder %s19, 0
    %p109 = por %p107, %p108
    %s111 = sadd.s32 %s110, 1
    %p114 = scmp.eq.s32.totalorder %s13, 3
    %p115 = scmp.ne.s32.totalorder %s110, %s112
    %p116 = scmp.eq.s32.totalorder %s13, 0
    %p117 = por %p115, %p116
    %p118 = scmp.ne.s32.totalorder %s110, %s112
    %p119 = scmp.eq.s32.totalorder %s18, 3
    %p120 = por %p118, %p119
    %p121 = scmp.ne.s32.totalorder %s112, %s113
    %p122 = scmp.eq.s32.totalorder %s18, 0
    %p123 = por %p121, %p122
    %p124 = scmp.ne.s32.totalorder %s112, %s113
    %p125 = scmp.eq.s32.totalorder %s19, 3
    %p126 = por %p124, %p125
    %p128 = scmp.ne.s32.totalorder %s113, %s127
    %p129 = scmp.eq.s32.totalorder %s19, 0
    %p130 = por %p128, %p129
    %s132 = sadd.s32 %s131, 1
    %p135 = scmp.eq.s32.totalorder %s13, 3
    %p136 = scmp.ne.s32.totalorder %s131, %s133
    %p137 = scmp.eq.s32.totalorder %s13, 0
    %p138 = por %p136, %p137
    %p139 = scmp.ne.s32.totalorder %s131, %s133
    %p140 = scmp.eq.s32.totalorder %s18, 3
    %p141 = por %p139, %p140
    %p142 = scmp.ne.s32.totalorder %s133, %s134
    %p143 = scmp.eq.s32.totalorder %s18, 0
    %p144 = por %p142, %p143
    %p145 = scmp.ne.s32.totalorder %s133, %s134
    %p146 = scmp.eq.s32.totalorder %s19, 3
    %p147 = por %p145, %p146
    %p149 = scmp.ne.s32.totalorder %s134, %s148
    %p150 = scmp.eq.s32.totalorder %s19, 0
    %p151 = por %p149, %p150
    %s153 = sadd.s32 %s152, 1
    %p156 = scmp.eq.s32.totalorder %s13, 3
    %p157 = scmp.ne.s32.totalorder %s152, %s154
    %p158 = scmp.eq.s32.totalorder %s13, 0
    %p159 = por %p157, %p158
    %p160 = scmp.ne.s32.totalorder %s152, %s154
    %p161 = scmp.eq.s32.totalorder %s18, 3
    %p162 = por %p160, %p161
    %p163 = scmp.ne.s32.totalorder %s154, %s155
    %p164 = scmp.eq.s32.totalorder %s18, 0
    %p165 = por %p163, %p164
    %p166 = scmp.ne.s32.totalorder %s154, %s155
    %p167 = scmp.eq.s32.totalorder %s19, 3
    %p168 = por %p166, %p167
    %p170 = scmp.ne.s32.totalorder %s155, %s169
    %p171 = scmp.eq.s32.totalorder %s19, 0
    %p172 = por %p170, %p171
    %s173 = ssub.s32 %s13, %s20
    %p174 = scmp.eq.s32.totalorder %s173, 0
    %s176 = sadd.s32 %s175, 1
    %s177 = scalar_select %p174, %s175, %s176
    %p180 = pneg %p174
    %p181 = scmp.eq.s32.totalorder %s13, 3
    %p182 = por %p180, %p181
    %p183 = scmp.ne.s32.totalorder %s175, %s178
    %p184 = scmp.eq.s32.totalorder %s13, 0
    %p185 = por %p183, %p184
    %p186 = scmp.ne.s32.totalorder %s175, %s178
    %p187 = scmp.eq.s32.totalorder %s18, 3
    %p188 = por %p186, %p187
    %p189 = scmp.ne.s32.totalorder %s178, %s179
    %p190 = scmp.eq.s32.totalorder %s18, 0
    %p191 = por %p189, %p190
    %p192 = scmp.ne.s32.totalorder %s178, %s179
    %p193 = scmp.eq.s32.totalorder %s19, 3
    %p194 = por %p192, %p193
    %p196 = scmp.ne.s32.totalorder %s179, %s195
    %p197 = scmp.eq.s32.totalorder %s19, 0
    %p198 = por %p196, %p197
    %p199 = scmp.le.s32.totalorder 1, %s13
    %p200 = scmp.lt.s32.totalorder %s13, 5
    %p201 = pnand %p199, %p200
    %p202 = pneg %p201
    // Predicated region
    $region9: #{_lambda_.3} parent=5 // pred_check
      _
    $region10: #{_lambda_.3} parent=5 // pred_check_branch
      %204 = sbr.rel (%p201) target = $region12
    $region11: #{_lambda_.3} parent=5 // pred_region
      %s205 = ssub.s32 %s13, 1
      // Predicated region
      $region13: #{_lambda_.3} parent=11 // pred_check
        %p206 = pneg %p60
      $region14: #{_lambda_.3} parent=11 // pred_check_branch
        %208 = sbr.rel (%p206) target = $region16
      $region15: #{_lambda_.3} parent=11 // pred_region
        _
      $region16: #{_lambda_.3} parent=11 // pred_fallthru
        _
      // Predicated region
      $region17: #{_lambda_.3} parent=11 // pred_check
        %p209 = pneg %p81
      $region18: #{_lambda_.3} parent=11 // pred_check_branch
        %211 = sbr.rel (%p209) target = $region20
      $region19: #{_lambda_.3} parent=11 // pred_region
        _
      $region20: #{_lambda_.3} parent=11 // pred_fallthru
        _
      // Predicated region
      $region21: #{_lambda_.3} parent=11 // pred_check
        %p212 = pneg %p102
      $region22: #{_lambda_.3} parent=11 // pred_check_branch
        %214 = sbr.rel (%p212) target = $region24
      $region23: #{_lambda_.3} parent=11 // pred_region
        _
      $region24: #{_lambda_.3} parent=11 // pred_fallthru
        _
      // Predicated region
      $region25: #{_lambda_.3} parent=11 // pred_check
        %p215 = pneg %p123
      $region26: #{_lambda_.3} parent=11 // pred_check_branch
        %217 = sbr.rel (%p215) target = $region28
      $region27: #{_lambda_.3} parent=11 // pred_region
        _
      $region28: #{_lambda_.3} parent=11 // pred_fallthru
        _
      // Predicated region
      $region29: #{_lambda_.3} parent=11 // pred_check
        %p218 = pneg %p144
      $region30: #{_lambda_.3} parent=11 // pred_check_branch
        %220 = sbr.rel (%p218) target = $region32
      $region31: #{_lambda_.3} parent=11 // pred_region
        _
      $region32: #{_lambda_.3} parent=11 // pred_fallthru
        _
      // Predicated region
      $region33: #{_lambda_.3} parent=11 // pred_check
        %p221 = pneg %p165
      $region34: #{_lambda_.3} parent=11 // pred_check_branch
        %223 = sbr.rel (%p221) target = $region36
      $region35: #{_lambda_.3} parent=11 // pred_region
        _
      $region36: #{_lambda_.3} parent=11 // pred_fallthru
        _
    $region12: #{_lambda_.3} parent=5 // pred_fallthru
      _
    %p224 = scmp.lt.s32.totalorder %s13, 4
    // Predicated region
    $region37: #{_lambda_.3} parent=5 // pred_check
      %p225 = pneg %p224
    $region38: #{_lambda_.3} parent=5 // pred_check_branch
      %227 = sbr.rel (%p225) target = $region40
    $region39: #{_lambda_.3} parent=5 // pred_region
      // Predicated region
      $region41: #{_lambda_.3} parent=39 // pred_check
        %p228 = pneg %p33
      $region42: #{_lambda_.3} parent=39 // pred_check_branch
        %230 = sbr.rel (%p228) target = $region44
      $region43: #{_lambda_.3} parent=39 // pred_region
        %s231 = smul.u32 16, %s13
        %p232 = scmp.lt.s32.totalorder %s231, 63
        %s233 = scalar_select %p232, %s231, 63
        %s234 = smul.addr %s233, 4
        %s235 = smul.addr %s234, 4
        %s236 = scalar_lea.vmem %s0, %s235
        %s237 = smul.u32 16, %s13
      $region44: #{_lambda_.3} parent=39 // pred_fallthru
        _
    $region40: #{_lambda_.3} parent=5 // pred_fallthru
      _
    %p238 = scmp.le.s32.totalorder 1, %s13
    %p239 = scmp.lt.s32.totalorder %s13, 5
    %p240 = pnand %p238, %p239
    %p241 = pneg %p240
    // Predicated region
    $region45: #{_lambda_.3} parent=5 // pred_check
      _
    $region46: #{_lambda_.3} parent=5 // pred_check_branch
      %243 = sbr.rel (%p240) target = $region48
    $region47: #{_lambda_.3} parent=5 // pred_region
      %s244 = ssub.s32 %s13, 1
      %s245 = smul.u32 16, %s18
      %p246 = scmp.lt.s32.totalorder %s245, 63
      %s247 = scalar_select %p246, %s245, 63
      %s248 = smul.addr %s247, 4
      %s249 = smul.addr %s248, 4
      %s250 = scalar_lea.vmem %s0, %s249
      %p251 = pneg %p39
      %p252 = pneg %p36
      %p253 = pneg %p60
      %p254 = pneg %p57
      %p255 = pneg %p81
      %p256 = pneg %p78
      %p257 = pneg %p102
      %p258 = pneg %p99
      %p259 = pneg %p123
      %p260 = pneg %p120
      %p261 = pneg %p144
      %p262 = pneg %p141
      %p263 = pneg %p165
      %p264 = pneg %p162
      %p265 = pneg %p191
      %p266 = pneg %p188
      %s267 = smul.u32 16, %s18
      %p268 = scmp.lt.s32.totalorder %s267, 63
      %s269 = scalar_select %p268, %s267, 63
      %s270 = smul.addr %s269, 2
      %s271 = smul.addr %s270, 4
      %s272 = scalar_lea.vmem %s7, %s271
      %s273 = smul.u32 16, %s18
      %p274 = scmp.lt.s32.totalorder %s273, 63
      %s275 = scalar_select %p274, %s273, 63
      %s276 = smul.addr %s275, 4
      %s277 = smul.addr %s276, 4
      %s278 = scalar_lea.vmem %s0, %s277
      %s279 = smul.u32 16, %s18
      %s280 = smul.u32 16, %s18
      %p281 = scmp.lt.s32.totalorder %s280, 63
      %s282 = scalar_select %p281, %s280, 63
      %s283 = smul.addr %s282, 2
      %s284 = smul.addr %s283, 4
      %s285 = scalar_lea.vmem %s7, %s284
      %s286 = smul.u32 16, %s18
      %s287 = smul.u32 %s18, 128
      %v288 = vld [vmem:[%s278] sm:$0xff]
      %v289 = vld [vmem:[%s278 + $0x8] sm:$0xff]
      %v290 = vld [vmem:[%s278 + $0x10] sm:$0xff]
      %v291 = vld [vmem:[%s278 + $0x18] sm:$0xff]
      %v292 = vld [vmem:[%s278 + $0x20] sm:$0xff]
      %v293 = vld [vmem:[%s278 + $0x28] sm:$0xff]
      %v294 = vld [vmem:[%s278 + $0x30] sm:$0xff]
      %v295 = vld [vmem:[%s278 + $0x38] sm:$0xff]
      %v296 = vld [vmem:[%s278 + $0x40] sm:$0xff]
      %v297 = vld [vmem:[%s278 + $0x48] sm:$0xff]
      %v298 = vld [vmem:[%s278 + $0x50] sm:$0xff]
      %v299 = vld [vmem:[%s278 + $0x58] sm:$0xff]
      %v300 = vld [vmem:[%s278 + $0x60] sm:$0xff]
      %v301 = vld [vmem:[%s278 + $0x68] sm:$0xff]
      %v302 = vld [vmem:[%s278 + $0x70] sm:$0xff]
      %v303 = vld [vmem:[%s278 + $0x78] sm:$0xff]
      %v304 = vld [vmem:[%s278 + $0x80] sm:$0xff]
      %v305 = vld [vmem:[%s278 + $0x88] sm:$0xff]
      %v306 = vld [vmem:[%s278 + $0x90] sm:$0xff]
      %v307 = vld [vmem:[%s278 + $0x98] sm:$0xff]
      %v308 = vld [vmem:[%s278 + $0xa0] sm:$0xff]
      %v309 = vld [vmem:[%s278 + $0xa8] sm:$0xff]
      %v310 = vld [vmem:[%s278 + $0xb0] sm:$0xff]
      %v311 = vld [vmem:[%s278 + $0xb8] sm:$0xff]
      %v312 = vld [vmem:[%s278 + $0xc0] sm:$0xff]
      %v313 = vld [vmem:[%s278 + $0xc8] sm:$0xff]
      %v314 = vld [vmem:[%s278 + $0xd0] sm:$0xff]
      %v315 = vld [vmem:[%s278 + $0xd8] sm:$0xff]
      %v316 = vld [vmem:[%s278 + $0xe0] sm:$0xff]
      %v317 = vld [vmem:[%s278 + $0xe8] sm:$0xff]
      %v318 = vld [vmem:[%s278 + $0xf0] sm:$0xff]
      %v319 = vld [vmem:[%s278 + $0xf8] sm:$0xff]
      %v320 = vld [vmem:[%s1] sm:$0xf]
      %v321 = vld [vmem:[%s1 + $0x4] sm:$0xf]
      %v322 = vld [vmem:[%s1 + $0x8] sm:$0xf]
      %v323 = vld [vmem:[%s1 + $0xc] sm:$0xf]
      %v324 = vld [vmem:[%s1 + $0x10] sm:$0xf]
      %v325 = vld [vmem:[%s1 + $0x14] sm:$0xf]
      %v326 = vld [vmem:[%s1 + $0x18] sm:$0xf]
      %v327 = vld [vmem:[%s1 + $0x1c] sm:$0xf]
      %v328 = vld [vmem:[%s1 + $0x20] sm:$0xf]
      %v329 = vld [vmem:[%s1 + $0x24] sm:$0xf]
      %v330 = vld [vmem:[%s1 + $0x28] sm:$0xf]
      %v331 = vld [vmem:[%s1 + $0x2c] sm:$0xf]
      %v332 = vld [vmem:[%s1 + $0x30] sm:$0xf]
      %v333 = vld [vmem:[%s1 + $0x34] sm:$0xf]
      %v334 = vld [vmem:[%s1 + $0x38] sm:$0xf]
      %v335 = vld [vmem:[%s1 + $0x3c] sm:$0xf]
      %v336 = vld [vmem:[%s1 + $0x40] sm:$0xf]
      %v337 = vld [vmem:[%s1 + $0x44] sm:$0xf]
      %v338 = vld [vmem:[%s1 + $0x48] sm:$0xf]
      %v339 = vld [vmem:[%s1 + $0x4c] sm:$0xf]
      %v340 = vld [vmem:[%s1 + $0x50] sm:$0xf]
      %v341 = vld [vmem:[%s1 + $0x54] sm:$0xf]
      %v342 = vld [vmem:[%s1 + $0x58] sm:$0xf]
      %v343 = vld [vmem:[%s1 + $0x5c] sm:$0xf]
      %v344 = vld [vmem:[%s1 + $0x60] sm:$0xf]
      %v345 = vld [vmem:[%s1 + $0x64] sm:$0xf]
      %v346 = vld [vmem:[%s1 + $0x68] sm:$0xf]
      %v347 = vld [vmem:[%s1 + $0x6c] sm:$0xf]
      %v348 = vld [vmem:[%s1 + $0x70] sm:$0xf]
      %v349 = vld [vmem:[%s1 + $0x74] sm:$0xf]
      %v350 = vld [vmem:[%s1 + $0x78] sm:$0xf]
      %v351 = vld [vmem:[%s1 + $0x7c] sm:$0xf]
      %v352 = vld [vmem:[%s1 + $0x80] sm:$0xf]
      %v353 = vld [vmem:[%s1 + $0x84] sm:$0xf]
      %v354 = vld [vmem:[%s1 + $0x88] sm:$0xf]
      %v355 = vld [vmem:[%s1 + $0x8c] sm:$0xf]
      %v356 = vld [vmem:[%s1 + $0x90] sm:$0xf]
      %v357 = vld [vmem:[%s1 + $0x94] sm:$0xf]
      %v358 = vld [vmem:[%s1 + $0x98] sm:$0xf]
      %v359 = vld [vmem:[%s1 + $0x9c] sm:$0xf]
      %v360 = vld [vmem:[%s1 + $0xa0] sm:$0xf]
      %v361 = vld [vmem:[%s1 + $0xa4] sm:$0xf]
      %v362 = vld [vmem:[%s1 + $0xa8] sm:$0xf]
      %v363 = vld [vmem:[%s1 + $0xac] sm:$0xf]
      %v364 = vld [vmem:[%s1 + $0xb0] sm:$0xf]
      %v365 = vld [vmem:[%s1 + $0xb4] sm:$0xf]
      %v366 = vld [vmem:[%s1 + $0xb8] sm:$0xf]
      %v367 = vld [vmem:[%s1 + $0xbc] sm:$0xf]
      %v368 = vld [vmem:[%s1 + $0xc0] sm:$0xf]
      %v369 = vld [vmem:[%s1 + $0xc4] sm:$0xf]
      %v370 = vld [vmem:[%s1 + $0xc8] sm:$0xf]
      %v371 = vld [vmem:[%s1 + $0xcc] sm:$0xf]
      %v372 = vld [vmem:[%s1 + $0xd0] sm:$0xf]
      %v373 = vld [vmem:[%s1 + $0xd4] sm:$0xf]
      %v374 = vld [vmem:[%s1 + $0xd8] sm:$0xf]
      %v375 = vld [vmem:[%s1 + $0xdc] sm:$0xf]
      %v376 = vld [vmem:[%s1 + $0xe0] sm:$0xf]
      %v377 = vld [vmem:[%s1 + $0xe4] sm:$0xf]
      %v378 = vld [vmem:[%s1 + $0xe8] sm:$0xf]
      %v379 = vld [vmem:[%s1 + $0xec] sm:$0xf]
      %v380 = vld [vmem:[%s1 + $0xf0] sm:$0xf]
      %v381 = vld [vmem:[%s1 + $0xf4] sm:$0xf]
      %v382 = vld [vmem:[%s1 + $0xf8] sm:$0xf]
      %v383 = vld [vmem:[%s1 + $0xfc] sm:$0xf]
      %v416 = vunpack.c.l.b16 %v288
      %v417 = vunpack.c.h.b16 %v288
      %v418 = vunpack.c.l.b16 %v289
      %v419 = vunpack.c.h.b16 %v289
      %v420 = vunpack.c.l.b16 %v290
      %v421 = vunpack.c.h.b16 %v290
      %v422 = vunpack.c.l.b16 %v291
      %v423 = vunpack.c.h.b16 %v291
      %v424 = vunpack.c.l.b16 %v292
      %v425 = vunpack.c.h.b16 %v292
      %v426 = vunpack.c.l.b16 %v293
      %v427 = vunpack.c.h.b16 %v293
      %v428 = vunpack.c.l.b16 %v294
      %v429 = vunpack.c.h.b16 %v294
      %v430 = vunpack.c.l.b16 %v295
      %v431 = vunpack.c.h.b16 %v295
      %v432 = vunpack.c.l.b16 %v296
      %v433 = vunpack.c.h.b16 %v296
      %v434 = vunpack.c.l.b16 %v297
      %v435 = vunpack.c.h.b16 %v297
      %v436 = vunpack.c.l.b16 %v298
      %v437 = vunpack.c.h.b16 %v298
      %v438 = vunpack.c.l.b16 %v299
      %v439 = vunpack.c.h.b16 %v299
      %v440 = vunpack.c.l.b16 %v300
      %v441 = vunpack.c.h.b16 %v300
      %v442 = vunpack.c.l.b16 %v301
      %v443 = vunpack.c.h.b16 %v301
      %v444 = vunpack.c.l.b16 %v302
      %v445 = vunpack.c.h.b16 %v302
      %v446 = vunpack.c.l.b16 %v303
      %v447 = vunpack.c.h.b16 %v303
      %v448 = vunpack.c.l.b16 %v304
      %v449 = vunpack.c.h.b16 %v304
      %v450 = vunpack.c.l.b16 %v305
      %v451 = vunpack.c.h.b16 %v305
      %v452 = vunpack.c.l.b16 %v306
      %v453 = vunpack.c.h.b16 %v306
      %v454 = vunpack.c.l.b16 %v307
      %v455 = vunpack.c.h.b16 %v307
      %v456 = vunpack.c.l.b16 %v308
      %v457 = vunpack.c.h.b16 %v308
      %v458 = vunpack.c.l.b16 %v309
      %v459 = vunpack.c.h.b16 %v309
      %v460 = vunpack.c.l.b16 %v310
      %v461 = vunpack.c.h.b16 %v310
      %v462 = vunpack.c.l.b16 %v311
      %v463 = vunpack.c.h.b16 %v311
      %v464 = vunpack.c.l.b16 %v312
      %v465 = vunpack.c.h.b16 %v312
      %v466 = vunpack.c.l.b16 %v313
      %v467 = vunpack.c.h.b16 %v313
      %v468 = vunpack.c.l.b16 %v314
      %v469 = vunpack.c.h.b16 %v314
      %v470 = vunpack.c.l.b16 %v315
      %v471 = vunpack.c.h.b16 %v315
      %v472 = vunpack.c.l.b16 %v316
      %v473 = vunpack.c.h.b16 %v316
      %v474 = vunpack.c.l.b16 %v317
      %v475 = vunpack.c.h.b16 %v317
      %v476 = vunpack.c.l.b16 %v318
      %v477 = vunpack.c.h.b16 %v318
      %v478 = vunpack.c.l.b16 %v319
      %v479 = vunpack.c.h.b16 %v319
      %v480 = vpack.c.b16 %v420, %v416
      %v481 = vpack.c.b16 %v421, %v417
      %v482 = vpack.c.b16 %v422, %v418
      %v483 = vpack.c.b16 %v423, %v419
      %v484 = vpack.c.b16 %v428, %v424
      %v485 = vpack.c.b16 %v429, %v425
      %v486 = vpack.c.b16 %v430, %v426
      %v487 = vpack.c.b16 %v431, %v427
      %v488 = vpack.c.b16 %v436, %v432
      %v489 = vpack.c.b16 %v437, %v433
      %v490 = vpack.c.b16 %v438, %v434
      %v491 = vpack.c.b16 %v439, %v435
      %v492 = vpack.c.b16 %v444, %v440
      %v493 = vpack.c.b16 %v445, %v441
      %v494 = vpack.c.b16 %v446, %v442
      %v495 = vpack.c.b16 %v447, %v443
      %v496 = vpack.c.b16 %v452, %v448
      %v497 = vpack.c.b16 %v453, %v449
      %v498 = vpack.c.b16 %v454, %v450
      %v499 = vpack.c.b16 %v455, %v451
      %v500 = vpack.c.b16 %v460, %v456
      %v501 = vpack.c.b16 %v461, %v457
      %v502 = vpack.c.b16 %v462, %v458
      %v503 = vpack.c.b16 %v463, %v459
      %v504 = vpack.c.b16 %v468, %v464
      %v505 = vpack.c.b16 %v469, %v465
      %v506 = vpack.c.b16 %v470, %v466
      %v507 = vpack.c.b16 %v471, %v467
      %v508 = vpack.c.b16 %v476, %v472
      %v509 = vpack.c.b16 %v477, %v473
      %v510 = vpack.c.b16 %v478, %v474
      %v511 = vpack.c.b16 %v479, %v475
      %v608 = vunpack.c.l.b16 %v320
      %v609 = vunpack.c.l.b16 %v321
      %v610 = vunpack.c.l.b16 %v322
      %v611 = vunpack.c.l.b16 %v323
      %v612 = vunpack.c.l.b16 %v324
      %v613 = vunpack.c.l.b16 %v325
      %v614 = vunpack.c.l.b16 %v326
      %v615 = vunpack.c.l.b16 %v327
      %v616 = vunpack.c.l.b16 %v328
      %v617 = vunpack.c.l.b16 %v329
      %v618 = vunpack.c.l.b16 %v330
      %v619 = vunpack.c.l.b16 %v331
      %v620 = vunpack.c.l.b16 %v332
      %v621 = vunpack.c.l.b16 %v333
      %v622 = vunpack.c.l.b16 %v334
      %v623 = vunpack.c.l.b16 %v335
      %v624 = vunpack.c.l.b16 %v336
      %v625 = vunpack.c.l.b16 %v337
      %v626 = vunpack.c.l.b16 %v338
      %v627 = vunpack.c.l.b16 %v339
      %v628 = vunpack.c.l.b16 %v340
      %v629 = vunpack.c.l.b16 %v341
      %v630 = vunpack.c.l.b16 %v342
      %v631 = vunpack.c.l.b16 %v343
      %v632 = vunpack.c.l.b16 %v344
      %v633 = vunpack.c.l.b16 %v345
      %v634 = vunpack.c.l.b16 %v346
      %v635 = vunpack.c.l.b16 %v347
      %v636 = vunpack.c.l.b16 %v348
      %v637 = vunpack.c.l.b16 %v349
      %v638 = vunpack.c.l.b16 %v350
      %v639 = vunpack.c.l.b16 %v351
      %v640 = vunpack.c.l.b16 %v352
      %v641 = vunpack.c.l.b16 %v353
      %v642 = vunpack.c.l.b16 %v354
      %v643 = vunpack.c.l.b16 %v355
      %v644 = vunpack.c.l.b16 %v356
      %v645 = vunpack.c.l.b16 %v357
      %v646 = vunpack.c.l.b16 %v358
      %v647 = vunpack.c.l.b16 %v359
      %v648 = vunpack.c.l.b16 %v360
      %v649 = vunpack.c.l.b16 %v361
      %v650 = vunpack.c.l.b16 %v362
      %v651 = vunpack.c.l.b16 %v363
      %v652 = vunpack.c.l.b16 %v364
      %v653 = vunpack.c.l.b16 %v365
      %v654 = vunpack.c.l.b16 %v366
      %v655 = vunpack.c.l.b16 %v367
      %v656 = vunpack.c.l.b16 %v368
      %v657 = vunpack.c.l.b16 %v369
      %v658 = vunpack.c.l.b16 %v370
      %v659 = vunpack.c.l.b16 %v371
      %v660 = vunpack.c.l.b16 %v372
      %v661 = vunpack.c.l.b16 %v373
      %v662 = vunpack.c.l.b16 %v374
      %v663 = vunpack.c.l.b16 %v375
      %v664 = vunpack.c.l.b16 %v376
      %v665 = vunpack.c.l.b16 %v377
      %v666 = vunpack.c.l.b16 %v378
      %v667 = vunpack.c.l.b16 %v379
      %v668 = vunpack.c.l.b16 %v380
      %v669 = vunpack.c.l.b16 %v381
      %v670 = vunpack.c.l.b16 %v382
      %v671 = vunpack.c.l.b16 %v383
      %v672 = vpack.c.b16 %v609, %v608
      %v673 = vpack.c.b16 %v611, %v610
      %v674 = vpack.c.b16 %v613, %v612
      %v675 = vpack.c.b16 %v615, %v614
      %v676 = vpack.c.b16 %v617, %v616
      %v677 = vpack.c.b16 %v619, %v618
      %v678 = vpack.c.b16 %v621, %v620
      %v679 = vpack.c.b16 %v623, %v622
      %v680 = vpack.c.b16 %v625, %v624
      %v681 = vpack.c.b16 %v627, %v626
      %v682 = vpack.c.b16 %v629, %v628
      %v683 = vpack.c.b16 %v631, %v630
      %v684 = vpack.c.b16 %v633, %v632
      %v685 = vpack.c.b16 %v635, %v634
      %v686 = vpack.c.b16 %v637, %v636
      %v687 = vpack.c.b16 %v639, %v638
      %v688 = vpack.c.b16 %v641, %v640
      %v689 = vpack.c.b16 %v643, %v642
      %v690 = vpack.c.b16 %v645, %v644
      %v691 = vpack.c.b16 %v647, %v646
      %v692 = vpack.c.b16 %v649, %v648
      %v693 = vpack.c.b16 %v651, %v650
      %v694 = vpack.c.b16 %v653, %v652
      %v695 = vpack.c.b16 %v655, %v654
      %v696 = vpack.c.b16 %v657, %v656
      %v697 = vpack.c.b16 %v659, %v658
      %v698 = vpack.c.b16 %v661, %v660
      %v699 = vpack.c.b16 %v663, %v662
      %v700 = vpack.c.b16 %v665, %v664
      %v701 = vpack.c.b16 %v667, %v666
      %v702 = vpack.c.b16 %v669, %v668
      %v703 = vpack.c.b16 %v671, %v670
      %736 = vmatpush.bf16.msra.mxu0 %v679
      %737 = vmatpush.bf16.msra.mxu0 %v678
      %738 = vmatpush.bf16.msra.mxu0 %v677
      %739 = vmatpush.bf16.msra.mxu0 %v676
      %740 = vmatpush.bf16.msra.mxu0 %v675
      %741 = vmatpush.bf16.msra.mxu0 %v674
      %742 = vmatpush.bf16.msra.mxu0 %v673
      %743 = vmatpush.bf16.msra.mxu0 %v672
      %744 = vmatmul.bf16.gmra.mxu0 %v480
      %v745 = vpop.f32.mrf.mxu0
      %v746 = vadd.f32 0.0, %v745
      %v747 = vpop.f32.mrf.mxu0
      %v748 = vadd.f32 0.0, %v747
      %749 = vmatmul.bf16.gmra.mxu0 %v484
      %v750 = vpop.f32.mrf.mxu0
      %v751 = vadd.f32 0.0, %v750
      %v752 = vpop.f32.mrf.mxu0
      %v753 = vadd.f32 0.0, %v752
      %754 = vmatmul.bf16.gmra.mxu0 %v488
      %v755 = vpop.f32.mrf.mxu0
      %v756 = vadd.f32 0.0, %v755
      %v757 = vpop.f32.mrf.mxu0
      %v758 = vadd.f32 0.0, %v757
      %759 = vmatmul.bf16.gmra.mxu0 %v492
      %v760 = vpop.f32.mrf.mxu0
      %v761 = vadd.f32 0.0, %v760
      %v762 = vpop.f32.mrf.mxu0
      %v763 = vadd.f32 0.0, %v762
      %764 = vmatmul.bf16.gmra.mxu0 %v496
      %v765 = vpop.f32.mrf.mxu0
      %v766 = vadd.f32 0.0, %v765
      %v767 = vpop.f32.mrf.mxu0
      %v768 = vadd.f32 0.0, %v767
      %769 = vmatmul.bf16.gmra.mxu0 %v500
      %v770 = vpop.f32.mrf.mxu0
      %v771 = vadd.f32 0.0, %v770
      %v772 = vpop.f32.mrf.mxu0
      %v773 = vadd.f32 0.0, %v772
      %774 = vmatmul.bf16.gmra.mxu0 %v504
      %v775 = vpop.f32.mrf.mxu0
      %v776 = vadd.f32 0.0, %v775
      %v777 = vpop.f32.mrf.mxu0
      %v778 = vadd.f32 0.0, %v777
      %779 = vmatmul.bf16.gmra.mxu0 %v508
      %v780 = vpop.f32.mrf.mxu0
      %v781 = vadd.f32 0.0, %v780
      %v782 = vpop.f32.mrf.mxu0
      %v783 = vadd.f32 0.0, %v782
      %784 = vdwg.mxu0
      %785 = vmatpush.bf16.msra.mxu0 %v687
      %786 = vmatpush.bf16.msra.mxu0 %v686
      %787 = vmatpush.bf16.msra.mxu0 %v685
      %788 = vmatpush.bf16.msra.mxu0 %v684
      %789 = vmatpush.bf16.msra.mxu0 %v683
      %790 = vmatpush.bf16.msra.mxu0 %v682
      %791 = vmatpush.bf16.msra.mxu0 %v681
      %792 = vmatpush.bf16.msra.mxu0 %v680
      %793 = vmatmul.bf16.gmra.mxu0 %v481
      %v794 = vpop.f32.mrf.mxu0
      %v795 = vadd.f32 %v746, %v794
      %v796 = vpop.f32.mrf.mxu0
      %v797 = vadd.f32 %v748, %v796
      %798 = vmatmul.bf16.gmra.mxu0 %v485
      %v799 = vpop.f32.mrf.mxu0
      %v800 = vadd.f32 %v751, %v799
      %v801 = vpop.f32.mrf.mxu0
      %v802 = vadd.f32 %v753, %v801
      %803 = vmatmul.bf16.gmra.mxu0 %v489
      %v804 = vpop.f32.mrf.mxu0
      %v805 = vadd.f32 %v756, %v804
      %v806 = vpop.f32.mrf.mxu0
      %v807 = vadd.f32 %v758, %v806
      %808 = vmatmul.bf16.gmra.mxu0 %v493
      %v809 = vpop.f32.mrf.mxu0
      %v810 = vadd.f32 %v761, %v809
      %v811 = vpop.f32.mrf.mxu0
      %v812 = vadd.f32 %v763, %v811
      %813 = vmatmul.bf16.gmra.mxu0 %v497
      %v814 = vpop.f32.mrf.mxu0
      %v815 = vadd.f32 %v766, %v814
      %v816 = vpop.f32.mrf.mxu0
      %v817 = vadd.f32 %v768, %v816
      %818 = vmatmul.bf16.gmra.mxu0 %v501
      %v819 = vpop.f32.mrf.mxu0
      %v820 = vadd.f32 %v771, %v819
      %v821 = vpop.f32.mrf.mxu0
      %v822 = vadd.f32 %v773, %v821
      %823 = vmatmul.bf16.gmra.mxu0 %v505
      %v824 = vpop.f32.mrf.mxu0
      %v825 = vadd.f32 %v776, %v824
      %v826 = vpop.f32.mrf.mxu0
      %v827 = vadd.f32 %v778, %v826
      %828 = vmatmul.bf16.gmra.mxu0 %v509
      %v829 = vpop.f32.mrf.mxu0
      %v830 = vadd.f32 %v781, %v829
      %v831 = vpop.f32.mrf.mxu0
      %v832 = vadd.f32 %v783, %v831
      %833 = vdwg.mxu0
      %834 = vmatpush.bf16.msra.mxu0 %v695
      %835 = vmatpush.bf16.msra.mxu0 %v694
      %836 = vmatpush.bf16.msra.mxu0 %v693
      %837 = vmatpush.bf16.msra.mxu0 %v692
      %838 = vmatpush.bf16.msra.mxu0 %v691
      %839 = vmatpush.bf16.msra.mxu0 %v690
      %840 = vmatpush.bf16.msra.mxu0 %v689
      %841 = vmatpush.bf16.msra.mxu0 %v688
      %842 = vmatmul.bf16.gmra.mxu0 %v482
      %v843 = vpop.f32.mrf.mxu0
      %v844 = vadd.f32 %v795, %v843
      %v845 = vpop.f32.mrf.mxu0
      %v846 = vadd.f32 %v797, %v845
      %847 = vmatmul.bf16.gmra.mxu0 %v486
      %v848 = vpop.f32.mrf.mxu0
      %v849 = vadd.f32 %v800, %v848
      %v850 = vpop.f32.mrf.mxu0
      %v851 = vadd.f32 %v802, %v850
      %852 = vmatmul.bf16.gmra.mxu0 %v490
      %v853 = vpop.f32.mrf.mxu0
      %v854 = vadd.f32 %v805, %v853
      %v855 = vpop.f32.mrf.mxu0
      %v856 = vadd.f32 %v807, %v855
      %857 = vmatmul.bf16.gmra.mxu0 %v494
      %v858 = vpop.f32.mrf.mxu0
      %v859 = vadd.f32 %v810, %v858
      %v860 = vpop.f32.mrf.mxu0
      %v861 = vadd.f32 %v812, %v860
      %862 = vmatmul.bf16.gmra.mxu0 %v498
      %v863 = vpop.f32.mrf.mxu0
      %v864 = vadd.f32 %v815, %v863
      %v865 = vpop.f32.mrf.mxu0
      %v866 = vadd.f32 %v817, %v865
      %867 = vmatmul.bf16.gmra.mxu0 %v502
      %v868 = vpop.f32.mrf.mxu0
      %v869 = vadd.f32 %v820, %v868
      %v870 = vpop.f32.mrf.mxu0
      %v871 = vadd.f32 %v822, %v870
      %872 = vmatmul.bf16.gmra.mxu0 %v506
      %v873 = vpop.f32.mrf.mxu0
      %v874 = vadd.f32 %v825, %v873
      %v875 = vpop.f32.mrf.mxu0
      %v876 = vadd.f32 %v827, %v875
      %877 = vmatmul.bf16.gmra.mxu0 %v510
      %v878 = vpop.f32.mrf.mxu0
      %v879 = vadd.f32 %v830, %v878
      %v880 = vpop.f32.mrf.mxu0
      %v881 = vadd.f32 %v832, %v880
      %882 = vdwg.mxu0
      %883 = vmatpush.bf16.msra.mxu0 %v703
      %884 = vmatpush.bf16.msra.mxu0 %v702
      %885 = vmatpush.bf16.msra.mxu0 %v701
      %886 = vmatpush.bf16.msra.mxu0 %v700
      %887 = vmatpush.bf16.msra.mxu0 %v699
      %888 = vmatpush.bf16.msra.mxu0 %v698
      %889 = vmatpush.bf16.msra.mxu0 %v697
      %890 = vmatpush.bf16.msra.mxu0 %v696
      %891 = vmatmul.bf16.gmra.mxu0 %v483
      %v892 = vpop.f32.mrf.mxu0
      %v893 = vadd.f32 %v844, %v892
      %v894 = vpop.f32.mrf.mxu0
      %v895 = vadd.f32 %v846, %v894
      %896 = vmatmul.bf16.gmra.mxu0 %v487
      %v897 = vpop.f32.mrf.mxu0
      %v898 = vadd.f32 %v849, %v897
      %v899 = vpop.f32.mrf.mxu0
      %v900 = vadd.f32 %v851, %v899
      %901 = vmatmul.bf16.gmra.mxu0 %v491
      %v902 = vpop.f32.mrf.mxu0
      %v903 = vadd.f32 %v854, %v902
      %v904 = vpop.f32.mrf.mxu0
      %v905 = vadd.f32 %v856, %v904
      %906 = vmatmul.bf16.gmra.mxu0 %v495
      %v907 = vpop.f32.mrf.mxu0
      %v908 = vadd.f32 %v859, %v907
      %v909 = vpop.f32.mrf.mxu0
      %v910 = vadd.f32 %v861, %v909
      %911 = vmatmul.bf16.gmra.mxu0 %v499
      %v912 = vpop.f32.mrf.mxu0
      %v913 = vadd.f32 %v864, %v912
      %v914 = vpop.f32.mrf.mxu0
      %v915 = vadd.f32 %v866, %v914
      %916 = vmatmul.bf16.gmra.mxu0 %v503
      %v917 = vpop.f32.mrf.mxu0
      %v918 = vadd.f32 %v869, %v917
      %v919 = vpop.f32.mrf.mxu0
      %v920 = vadd.f32 %v871, %v919
      %921 = vmatmul.bf16.gmra.mxu0 %v507
      %v922 = vpop.f32.mrf.mxu0
      %v923 = vadd.f32 %v874, %v922
      %v924 = vpop.f32.mrf.mxu0
      %v925 = vadd.f32 %v876, %v924
      %926 = vmatmul.bf16.gmra.mxu0 %v511
      %v927 = vpop.f32.mrf.mxu0
      %v928 = vadd.f32 %v879, %v927
      %v929 = vpop.f32.mrf.mxu0
      %v930 = vadd.f32 %v881, %v929
      %931 = vdwg.mxu0
      %s932 = sshra.s32 %s287, 3
      %s933 = sand.u32 %s287, 7
      %s934 = smul.addr %s932, 4
      %s935 = scalar_lea.vmem %s1, %s934
      %v936 = vld [vmem:[%s935] sm:$0xf]
      %v937 = vld [vmem:[%s935 + $0x4] sm:$0xf]
      %v938 = vld [vmem:[%s935 + $0x8] sm:$0xf]
      %v939 = vld [vmem:[%s935 + $0xc] sm:$0xf]
      %v940 = vld [vmem:[%s935 + $0x10] sm:$0xf]
      %v941 = vld [vmem:[%s935 + $0x14] sm:$0xf]
      %v942 = vld [vmem:[%s935 + $0x18] sm:$0xf]
      %v943 = vld [vmem:[%s935 + $0x1c] sm:$0xf]
      %v944 = vld [vmem:[%s935 + $0x20] sm:$0xf]
      %v945 = vld [vmem:[%s935 + $0x24] sm:$0xf]
      %v946 = vld [vmem:[%s935 + $0x28] sm:$0xf]
      %v947 = vld [vmem:[%s935 + $0x2c] sm:$0xf]
      %v948 = vld [vmem:[%s935 + $0x30] sm:$0xf]
      %v949 = vld [vmem:[%s935 + $0x34] sm:$0xf]
      %v950 = vld [vmem:[%s935 + $0x38] sm:$0xf]
      %v951 = vld [vmem:[%s935 + $0x3c] sm:$0xf]
      %v952 = vunpack.c.l.bf16 %v936
      %v953 = vunpack.c.l.bf16 %v937
      %v954 = vunpack.c.l.bf16 %v938
      %v955 = vunpack.c.l.bf16 %v939
      %v956 = vunpack.c.l.bf16 %v940
      %v957 = vunpack.c.l.bf16 %v941
      %v958 = vunpack.c.l.bf16 %v942
      %v959 = vunpack.c.l.bf16 %v943
      %v960 = vunpack.c.l.bf16 %v944
      %v961 = vunpack.c.l.bf16 %v945
      %v962 = vunpack.c.l.bf16 %v946
      %v963 = vunpack.c.l.bf16 %v947
      %v964 = vunpack.c.l.bf16 %v948
      %v965 = vunpack.c.l.bf16 %v949
      %v966 = vunpack.c.l.bf16 %v950
      %v967 = vunpack.c.l.bf16 %v951
      %v968 = vld [vmem:[%s2] sm:$0x3f]
      %v969 = vld [vmem:[%s2 + $0x8] sm:$0x3f]
      %v970 = vld [vmem:[%s3] sm:$0x3f]
      %v971 = vld [vmem:[%s3 + $0x8] sm:$0x3f]
      %vm972 = vcmask 48128
      %v974 = vsel %vm972, %v952, 0
      %v977 = vsel %vm972, %v953, 0
      %v980 = vsel %vm972, %v954, 0
      %v983 = vsel %vm972, %v955, 0
      %v986 = vsel %vm972, %v956, 0
      %v989 = vsel %vm972, %v957, 0
      %v992 = vsel %vm972, %v958, 0
      %v995 = vsel %vm972, %v959, 0
      %v998 = vsel %vm972, %v960, 0
      %v1001 = vsel %vm972, %v961, 0
      %v1004 = vsel %vm972, %v962, 0
      %v1007 = vsel %vm972, %v963, 0
      %v1010 = vsel %vm972, %v964, 0
      %v1013 = vsel %vm972, %v965, 0
      %v1016 = vsel %vm972, %v966, 0
      %v1019 = vsel %vm972, %v967, 0
      %vm1021 = vcmask 1045504
      %v1023 = vsel %vm1021, %v970, 0
      %v1026 = vsel %vm1021, %v971, 0
      %1028 = vmatpush.msra.mxu0 0.0
      %1029 = vmatpush.msra.mxu0 0.0
      %1030 = vmatpush.msra.mxu0 0.0
      %1031 = vmatpush.msra.mxu0 0.0
      %1032 = vmatpush.msra.mxu0 0.0
      %1033 = vmatpush.msra.mxu0 0.0
      %1034 = vmatpush.msra.mxu0 0.0
      %1035 = vmatpush.msra.mxu0 0.0
      %1036 = vmatpush.msra.mxu0 0.0
      %1037 = vmatpush.msra.mxu0 0.0
      %1038 = vmatpush.msra.mxu0 0.0
      %1039 = vmatpush.msra.mxu0 0.0
      %1040 = vmatpush.msra.mxu0 0.0
      %1041 = vmatpush.msra.mxu0 0.0
      %1042 = vmatpush.msra.mxu0 0.0
      %1043 = vmatpush.msra.mxu0 %v1023
      %1044 = vmatmul.f32.gmra.mxu0 %v974
      %v1045 = vpop.f32.mrf.mxu0
      %v1046 = vadd.f32 0.0, %v1045
      %1047 = vmatmul.f32.gmra.mxu0 %v977
      %v1048 = vpop.f32.mrf.mxu0
      %v1049 = vadd.f32 0.0, %v1048
      %1050 = vmatmul.f32.gmra.mxu0 %v980
      %v1051 = vpop.f32.mrf.mxu0
      %v1052 = vadd.f32 0.0, %v1051
      %1053 = vmatmul.f32.gmra.mxu0 %v983
      %v1054 = vpop.f32.mrf.mxu0
      %v1055 = vadd.f32 0.0, %v1054
      %1056 = vmatmul.f32.gmra.mxu0 %v986
      %v1057 = vpop.f32.mrf.mxu0
      %v1058 = vadd.f32 0.0, %v1057
      %1059 = vmatmul.f32.gmra.mxu0 %v989
      %v1060 = vpop.f32.mrf.mxu0
      %v1061 = vadd.f32 0.0, %v1060
      %1062 = vmatmul.f32.gmra.mxu0 %v992
      %v1063 = vpop.f32.mrf.mxu0
      %v1064 = vadd.f32 0.0, %v1063
      %1065 = vmatmul.f32.gmra.mxu0 %v995
      %v1066 = vpop.f32.mrf.mxu0
      %v1067 = vadd.f32 0.0, %v1066
      %1068 = vmatmul.f32.gmra.mxu0 %v998
      %v1069 = vpop.f32.mrf.mxu0
      %v1070 = vadd.f32 0.0, %v1069
      %1071 = vmatmul.f32.gmra.mxu0 %v1001
      %v1072 = vpop.f32.mrf.mxu0
      %v1073 = vadd.f32 0.0, %v1072
      %1074 = vmatmul.f32.gmra.mxu0 %v1004
      %v1075 = vpop.f32.mrf.mxu0
      %v1076 = vadd.f32 0.0, %v1075
      %1077 = vmatmul.f32.gmra.mxu0 %v1007
      %v1078 = vpop.f32.mrf.mxu0
      %v1079 = vadd.f32 0.0, %v1078
      %1080 = vmatmul.f32.gmra.mxu0 %v1010
      %v1081 = vpop.f32.mrf.mxu0
      %v1082 = vadd.f32 0.0, %v1081
      %1083 = vmatmul.f32.gmra.mxu0 %v1013
      %v1084 = vpop.f32.mrf.mxu0
      %v1085 = vadd.f32 0.0, %v1084
      %1086 = vmatmul.f32.gmra.mxu0 %v1016
      %v1087 = vpop.f32.mrf.mxu0
      %v1088 = vadd.f32 0.0, %v1087
      %1089 = vmatmul.f32.gmra.mxu0 %v1019
      %v1090 = vpop.f32.mrf.mxu0
      %v1091 = vadd.f32 0.0, %v1090
      %1092 = vdwg.mxu0
      %1093 = vmatpush.msra.mxu0 0.0
      %1094 = vmatpush.msra.mxu0 0.0
      %1095 = vmatpush.msra.mxu0 0.0
      %1096 = vmatpush.msra.mxu0 0.0
      %1097 = vmatpush.msra.mxu0 0.0
      %1098 = vmatpush.msra.mxu0 0.0
      %1099 = vmatpush.msra.mxu0 0.0
      %1100 = vmatpush.msra.mxu0 0.0
      %1101 = vmatpush.msra.mxu0 0.0
      %1102 = vmatpush.msra.mxu0 0.0
      %1103 = vmatpush.msra.mxu0 0.0
      %1104 = vmatpush.msra.mxu0 0.0
      %1105 = vmatpush.msra.mxu0 0.0
      %1106 = vmatpush.msra.mxu0 0.0
      %1107 = vmatpush.msra.mxu0 0.0
      %1108 = vmatpush.msra.mxu0 %v1026
      %1109 = vmatmul.f32.gmra.mxu0 %v974
      %v1110 = vpop.f32.mrf.mxu0
      %v1111 = vadd.f32 0.0, %v1110
      %1112 = vmatmul.f32.gmra.mxu0 %v977
      %v1113 = vpop.f32.mrf.mxu0
      %v1114 = vadd.f32 0.0, %v1113
      %1115 = vmatmul.f32.gmra.mxu0 %v980
      %v1116 = vpop.f32.mrf.mxu0
      %v1117 = vadd.f32 0.0, %v1116
      %1118 = vmatmul.f32.gmra.mxu0 %v983
      %v1119 = vpop.f32.mrf.mxu0
      %v1120 = vadd.f32 0.0, %v1119
      %1121 = vmatmul.f32.gmra.mxu0 %v986
      %v1122 = vpop.f32.mrf.mxu0
      %v1123 = vadd.f32 0.0, %v1122
      %1124 = vmatmul.f32.gmra.mxu0 %v989
      %v1125 = vpop.f32.mrf.mxu0
      %v1126 = vadd.f32 0.0, %v1125
      %1127 = vmatmul.f32.gmra.mxu0 %v992
      %v1128 = vpop.f32.mrf.mxu0
      %v1129 = vadd.f32 0.0, %v1128
      %1130 = vmatmul.f32.gmra.mxu0 %v995
      %v1131 = vpop.f32.mrf.mxu0
      %v1132 = vadd.f32 0.0, %v1131
      %1133 = vmatmul.f32.gmra.mxu0 %v998
      %v1134 = vpop.f32.mrf.mxu0
      %v1135 = vadd.f32 0.0, %v1134
      %1136 = vmatmul.f32.gmra.mxu0 %v1001
      %v1137 = vpop.f32.mrf.mxu0
      %v1138 = vadd.f32 0.0, %v1137
      %1139 = vmatmul.f32.gmra.mxu0 %v1004
      %v1140 = vpop.f32.mrf.mxu0
      %v1141 = vadd.f32 0.0, %v1140
      %1142 = vmatmul.f32.gmra.mxu0 %v1007
      %v1143 = vpop.f32.mrf.mxu0
      %v1144 = vadd.f32 0.0, %v1143
      %1145 = vmatmul.f32.gmra.mxu0 %v1010
      %v1146 = vpop.f32.mrf.mxu0
      %v1147 = vadd.f32 0.0, %v1146
      %1148 = vmatmul.f32.gmra.mxu0 %v1013
      %v1149 = vpop.f32.mrf.mxu0
      %v1150 = vadd.f32 0.0, %v1149
      %1151 = vmatmul.f32.gmra.mxu0 %v1016
      %v1152 = vpop.f32.mrf.mxu0
      %v1153 = vadd.f32 0.0, %v1152
      %1154 = vmatmul.f32.gmra.mxu0 %v1019
      %v1155 = vpop.f32.mrf.mxu0
      %v1156 = vadd.f32 0.0, %v1155
      %1157 = vdwg.mxu0
      %v1159 = vsel %vm972, %v893, 0
      %v1162 = vsel %vm972, %v895, 0
      %v1165 = vsel %vm972, %v898, 0
      %v1168 = vsel %vm972, %v900, 0
      %v1171 = vsel %vm972, %v903, 0
      %v1174 = vsel %vm972, %v905, 0
      %v1177 = vsel %vm972, %v908, 0
      %v1180 = vsel %vm972, %v910, 0
      %v1183 = vsel %vm972, %v913, 0
      %v1186 = vsel %vm972, %v915, 0
      %v1189 = vsel %vm972, %v918, 0
      %v1192 = vsel %vm972, %v920, 0
      %v1195 = vsel %vm972, %v923, 0
      %v1198 = vsel %vm972, %v925, 0
      %v1201 = vsel %vm972, %v928, 0
      %v1204 = vsel %vm972, %v930, 0
      %v1207 = vsel %vm1021, %v968, 0
      %v1210 = vsel %vm1021, %v969, 0
      %1212 = vmatpush.msra.mxu0 0.0
      %1213 = vmatpush.msra.mxu0 0.0
      %1214 = vmatpush.msra.mxu0 0.0
      %1215 = vmatpush.msra.mxu0 0.0
      %1216 = vmatpush.msra.mxu0 0.0
      %1217 = vmatpush.msra.mxu0 0.0
      %1218 = vmatpush.msra.mxu0 0.0
      %1219 = vmatpush.msra.mxu0 0.0
      %1220 = vmatpush.msra.mxu0 0.0
      %1221 = vmatpush.msra.mxu0 0.0
      %1222 = vmatpush.msra.mxu0 0.0
      %1223 = vmatpush.msra.mxu0 0.0
      %1224 = vmatpush.msra.mxu0 0.0
      %1225 = vmatpush.msra.mxu0 0.0
      %1226 = vmatpush.msra.mxu0 0.0
      %1227 = vmatpush.msra.mxu0 %v1207
      %1228 = vmatmul.f32.gmra.mxu0 %v1159
      %v1229 = vpop.f32.mrf.mxu0
      %v1230 = vadd.f32 %v1046, %v1229
      %1231 = vmatmul.f32.gmra.mxu0 %v1162
      %v1232 = vpop.f32.mrf.mxu0
      %v1233 = vadd.f32 %v1049, %v1232
      %1234 = vmatmul.f32.gmra.mxu0 %v1165
      %v1235 = vpop.f32.mrf.mxu0
      %v1236 = vadd.f32 %v1052, %v1235
      %1237 = vmatmul.f32.gmra.mxu0 %v1168
      %v1238 = vpop.f32.mrf.mxu0
      %v1239 = vadd.f32 %v1055, %v1238
      %1240 = vmatmul.f32.gmra.mxu0 %v1171
      %v1241 = vpop.f32.mrf.mxu0
      %v1242 = vadd.f32 %v1058, %v1241
      %1243 = vmatmul.f32.gmra.mxu0 %v1174
      %v1244 = vpop.f32.mrf.mxu0
      %v1245 = vadd.f32 %v1061, %v1244
      %1246 = vmatmul.f32.gmra.mxu0 %v1177
      %v1247 = vpop.f32.mrf.mxu0
      %v1248 = vadd.f32 %v1064, %v1247
      %1249 = vmatmul.f32.gmra.mxu0 %v1180
      %v1250 = vpop.f32.mrf.mxu0
      %v1251 = vadd.f32 %v1067, %v1250
      %1252 = vmatmul.f32.gmra.mxu0 %v1183
      %v1253 = vpop.f32.mrf.mxu0
      %v1254 = vadd.f32 %v1070, %v1253
      %1255 = vmatmul.f32.gmra.mxu0 %v1186
      %v1256 = vpop.f32.mrf.mxu0
      %v1257 = vadd.f32 %v1073, %v1256
      %1258 = vmatmul.f32.gmra.mxu0 %v1189
      %v1259 = vpop.f32.mrf.mxu0
      %v1260 = vadd.f32 %v1076, %v1259
      %1261 = vmatmul.f32.gmra.mxu0 %v1192
      %v1262 = vpop.f32.mrf.mxu0
      %v1263 = vadd.f32 %v1079, %v1262
      %1264 = vmatmul.f32.gmra.mxu0 %v1195
      %v1265 = vpop.f32.mrf.mxu0
      %v1266 = vadd.f32 %v1082, %v1265
      %1267 = vmatmul.f32.gmra.mxu0 %v1198
      %v1268 = vpop.f32.mrf.mxu0
      %v1269 = vadd.f32 %v1085, %v1268
      %1270 = vmatmul.f32.gmra.mxu0 %v1201
      %v1271 = vpop.f32.mrf.mxu0
      %v1272 = vadd.f32 %v1088, %v1271
      %1273 = vmatmul.f32.gmra.mxu0 %v1204
      %v1274 = vpop.f32.mrf.mxu0
      %v1275 = vadd.f32 %v1091, %v1274
      %1276 = vdwg.mxu0
      %1277 = vmatpush.msra.mxu0 0.0
      %1278 = vmatpush.msra.mxu0 0.0
      %1279 = vmatpush.msra.mxu0 0.0
      %1280 = vmatpush.msra.mxu0 0.0
      %1281 = vmatpush.msra.mxu0 0.0
      %1282 = vmatpush.msra.mxu0 0.0
      %1283 = vmatpush.msra.mxu0 0.0
      %1284 = vmatpush.msra.mxu0 0.0
      %1285 = vmatpush.msra.mxu0 0.0
      %1286 = vmatpush.msra.mxu0 0.0
      %1287 = vmatpush.msra.mxu0 0.0
      %1288 = vmatpush.msra.mxu0 0.0
      %1289 = vmatpush.msra.mxu0 0.0
      %1290 = vmatpush.msra.mxu0 0.0
      %1291 = vmatpush.msra.mxu0 0.0
      %1292 = vmatpush.msra.mxu0 %v1210
      %1293 = vmatmul.f32.gmra.mxu0 %v1159
      %v1294 = vpop.f32.mrf.mxu0
      %v1295 = vadd.f32 %v1111, %v1294
      %1296 = vmatmul.f32.gmra.mxu0 %v1162
      %v1297 = vpop.f32.mrf.mxu0
      %v1298 = vadd.f32 %v1114, %v1297
      %1299 = vmatmul.f32.gmra.mxu0 %v1165
      %v1300 = vpop.f32.mrf.mxu0
      %v1301 = vadd.f32 %v1117, %v1300
      %1302 = vmatmul.f32.gmra.mxu0 %v1168
      %v1303 = vpop.f32.mrf.mxu0
      %v1304 = vadd.f32 %v1120, %v1303
      %1305 = vmatmul.f32.gmra.mxu0 %v1171
      %v1306 = vpop.f32.mrf.mxu0
      %v1307 = vadd.f32 %v1123, %v1306
      %1308 = vmatmul.f32.gmra.mxu0 %v1174
      %v1309 = vpop.f32.mrf.mxu0
      %v1310 = vadd.f32 %v1126, %v1309
      %1311 = vmatmul.f32.gmra.mxu0 %v1177
      %v1312 = vpop.f32.mrf.mxu0
      %v1313 = vadd.f32 %v1129, %v1312
      %1314 = vmatmul.f32.gmra.mxu0 %v1180
      %v1315 = vpop.f32.mrf.mxu0
      %v1316 = vadd.f32 %v1132, %v1315
      %1317 = vmatmul.f32.gmra.mxu0 %v1183
      %v1318 = vpop.f32.mrf.mxu0
      %v1319 = vadd.f32 %v1135, %v1318
      %1320 = vmatmul.f32.gmra.mxu0 %v1186
      %v1321 = vpop.f32.mrf.mxu0
      %v1322 = vadd.f32 %v1138, %v1321
      %1323 = vmatmul.f32.gmra.mxu0 %v1189
      %v1324 = vpop.f32.mrf.mxu0
      %v1325 = vadd.f32 %v1141, %v1324
      %1326 = vmatmul.f32.gmra.mxu0 %v1192
      %v1327 = vpop.f32.mrf.mxu0
      %v1328 = vadd.f32 %v1144, %v1327
      %1329 = vmatmul.f32.gmra.mxu0 %v1195
      %v1330 = vpop.f32.mrf.mxu0
      %v1331 = vadd.f32 %v1147, %v1330
      %1332 = vmatmul.f32.gmra.mxu0 %v1198
      %v1333 = vpop.f32.mrf.mxu0
      %v1334 = vadd.f32 %v1150, %v1333
      %1335 = vmatmul.f32.gmra.mxu0 %v1201
      %v1336 = vpop.f32.mrf.mxu0
      %v1337 = vadd.f32 %v1153, %v1336
      %1338 = vmatmul.f32.gmra.mxu0 %v1204
      %v1339 = vpop.f32.mrf.mxu0
      %v1340 = vadd.f32 %v1156, %v1339
      %1341 = vdwg.mxu0
      %v1342 = vld [vmem:[%s4] sm:$0x3]
      %v1344 = vperm.slane %v1342, 0
      %v1345 = vperm.slane %v1342, 1
      %v1348 = vadd.f32 %v1230, %v1344
      %v1349 = vadd.f32 %v1295, %v1345
      %v1350 = vadd.f32 %v1233, %v1344
      %v1351 = vadd.f32 %v1298, %v1345
      %v1352 = vadd.f32 %v1236, %v1344
      %v1353 = vadd.f32 %v1301, %v1345
      %v1354 = vadd.f32 %v1239, %v1344
      %v1355 = vadd.f32 %v1304, %v1345
      %v1356 = vadd.f32 %v1242, %v1344
      %v1357 = vadd.f32 %v1307, %v1345
      %v1358 = vadd.f32 %v1245, %v1344
      %v1359 = vadd.f32 %v1310, %v1345
      %v1360 = vadd.f32 %v1248, %v1344
      %v1361 = vadd.f32 %v1313, %v1345
      %v1362 = vadd.f32 %v1251, %v1344
      %v1363 = vadd.f32 %v1316, %v1345
      %v1364 = vadd.f32 %v1254, %v1344
      %v1365 = vadd.f32 %v1319, %v1345
      %v1366 = vadd.f32 %v1257, %v1344
      %v1367 = vadd.f32 %v1322, %v1345
      %v1368 = vadd.f32 %v1260, %v1344
      %v1369 = vadd.f32 %v1325, %v1345
      %v1370 = vadd.f32 %v1263, %v1344
      %v1371 = vadd.f32 %v1328, %v1345
      %v1372 = vadd.f32 %v1266, %v1344
      %v1373 = vadd.f32 %v1331, %v1345
      %v1374 = vadd.f32 %v1269, %v1344
      %v1375 = vadd.f32 %v1334, %v1345
      %v1376 = vadd.f32 %v1272, %v1344
      %v1377 = vadd.f32 %v1337, %v1345
      %v1378 = vadd.f32 %v1275, %v1344
      %v1379 = vadd.f32 %v1340, %v1345
      %v1380 = vld [vmem:[%s5] sm:$0x3]
      %v1381 = vld [vmem:[%s6] sm:$0x3]
      %v1382 = vadd.f32 %v1348, %v1349
      %1383 = vadd.xlane.f32.xlu0 %v1382
      %v1384 = vpop.xlane.xlu0 %1383
      %v1385 = vadd.f32 %v1350, %v1351
      %1386 = vadd.xlane.f32.xlu0 %v1385
      %v1387 = vpop.xlane.xlu0 %1386
      %v1388 = vadd.f32 %v1352, %v1353
      %1389 = vadd.xlane.f32.xlu0 %v1388
      %v1390 = vpop.xlane.xlu0 %1389
      %v1391 = vadd.f32 %v1354, %v1355
      %1392 = vadd.xlane.f32.xlu0 %v1391
      %v1393 = vpop.xlane.xlu0 %1392
      %v1394 = vadd.f32 %v1356, %v1357
      %1395 = vadd.xlane.f32.xlu0 %v1394
      %v1396 = vpop.xlane.xlu0 %1395
      %v1397 = vadd.f32 %v1358, %v1359
      %1398 = vadd.xlane.f32.xlu0 %v1397
      %v1399 = vpop.xlane.xlu0 %1398
      %v1400 = vadd.f32 %v1360, %v1361
      %1401 = vadd.xlane.f32.xlu0 %v1400
      %v1402 = vpop.xlane.xlu0 %1401
      %v1403 = vadd.f32 %v1362, %v1363
      %1404 = vadd.xlane.f32.xlu0 %v1403
      %v1405 = vpop.xlane.xlu0 %1404
      %v1406 = vadd.f32 %v1364, %v1365
      %1407 = vadd.xlane.f32.xlu0 %v1406
      %v1408 = vpop.xlane.xlu0 %1407
      %v1409 = vadd.f32 %v1366, %v1367
      %1410 = vadd.xlane.f32.xlu0 %v1409
      %v1411 = vpop.xlane.xlu0 %1410
      %v1412 = vadd.f32 %v1368, %v1369
      %1413 = vadd.xlane.f32.xlu0 %v1412
      %v1414 = vpop.xlane.xlu0 %1413
      %v1415 = vadd.f32 %v1370, %v1371
      %1416 = vadd.xlane.f32.xlu0 %v1415
      %v1417 = vpop.xlane.xlu0 %1416
      %v1418 = vadd.f32 %v1372, %v1373
      %1419 = vadd.xlane.f32.xlu0 %v1418
      %v1420 = vpop.xlane.xlu0 %1419
      %v1421 = vadd.f32 %v1374, %v1375
      %1422 = vadd.xlane.f32.xlu0 %v1421
      %v1423 = vpop.xlane.xlu0 %1422
      %v1424 = vadd.f32 %v1376, %v1377
      %1425 = vadd.xlane.f32.xlu0 %v1424
      %v1426 = vpop.xlane.xlu0 %1425
      %v1427 = vadd.f32 %v1378, %v1379
      %1428 = vadd.xlane.f32.xlu0 %v1427
      %v1429 = vpop.xlane.xlu0 %1428
      %v1430 = vrcp.pop 256.0
      %v1431 = vmul.f32 256.0, %v1430
      %v1432 = vsub.f32 1.0, %v1431
      %v1433 = vmul.f32 %v1430, %v1432
      %v1434 = vadd.f32 %v1430, %v1433
      %vm1435 = vweird.f32 %v1430
      %v1436 = vsel %vm1435, %v1430, %v1434
      %v1437 = vmul.f32 %v1384, %v1436
      %v1438 = vmul.f32 %v1387, %v1436
      %v1439 = vmul.f32 %v1390, %v1436
      %v1440 = vmul.f32 %v1393, %v1436
      %v1441 = vmul.f32 %v1396, %v1436
      %v1442 = vmul.f32 %v1399, %v1436
      %v1443 = vmul.f32 %v1402, %v1436
      %v1444 = vmul.f32 %v1405, %v1436
      %v1445 = vmul.f32 %v1408, %v1436
      %v1446 = vmul.f32 %v1411, %v1436
      %v1447 = vmul.f32 %v1414, %v1436
      %v1448 = vmul.f32 %v1417, %v1436
      %v1449 = vmul.f32 %v1420, %v1436
      %v1450 = vmul.f32 %v1423, %v1436
      %v1451 = vmul.f32 %v1426, %v1436
      %v1452 = vmul.f32 %v1429, %v1436
      %v1453 = vmul.f32 %v1348, %v1348
      %v1454 = vmul.f32 %v1349, %v1349
      %v1455 = vmul.f32 %v1350, %v1350
      %v1456 = vmul.f32 %v1351, %v1351
      %v1457 = vmul.f32 %v1352, %v1352
      %v1458 = vmul.f32 %v1353, %v1353
      %v1459 = vmul.f32 %v1354, %v1354
      %v1460 = vmul.f32 %v1355, %v1355
      %v1461 = vmul.f32 %v1356, %v1356
      %v1462 = vmul.f32 %v1357, %v1357
      %v1463 = vmul.f32 %v1358, %v1358
      %v1464 = vmul.f32 %v1359, %v1359
      %v1465 = vmul.f32 %v1360, %v1360
      %v1466 = vmul.f32 %v1361, %v1361
      %v1467 = vmul.f32 %v1362, %v1362
      %v1468 = vmul.f32 %v1363, %v1363
      %v1469 = vmul.f32 %v1364, %v1364
      %v1470 = vmul.f32 %v1365, %v1365
      %v1471 = vmul.f32 %v1366, %v1366
      %v1472 = vmul.f32 %v1367, %v1367
      %v1473 = vmul.f32 %v1368, %v1368
      %v1474 = vmul.f32 %v1369, %v1369
      %v1475 = vmul.f32 %v1370, %v1370
      %v1476 = vmul.f32 %v1371, %v1371
      %v1477 = vmul.f32 %v1372, %v1372
      %v1478 = vmul.f32 %v1373, %v1373
      %v1479 = vmul.f32 %v1374, %v1374
      %v1480 = vmul.f32 %v1375, %v1375
      %v1481 = vmul.f32 %v1376, %v1376
      %v1482 = vmul.f32 %v1377, %v1377
      %v1483 = vmul.f32 %v1378, %v1378
      %v1484 = vmul.f32 %v1379, %v1379
      %v1485 = vadd.f32 %v1453, %v1454
      %1486 = vadd.xlane.f32.xlu0 %v1485
      %v1487 = vpop.xlane.xlu0 %1486
      %v1488 = vadd.f32 %v1455, %v1456
      %1489 = vadd.xlane.f32.xlu0 %v1488
      %v1490 = vpop.xlane.xlu0 %1489
      %v1491 = vadd.f32 %v1457, %v1458
      %1492 = vadd.xlane.f32.xlu0 %v1491
      %v1493 = vpop.xlane.xlu0 %1492
      %v1494 = vadd.f32 %v1459, %v1460
      %1495 = vadd.xlane.f32.xlu0 %v1494
      %v1496 = vpop.xlane.xlu0 %1495
      %v1497 = vadd.f32 %v1461, %v1462
      %1498 = vadd.xlane.f32.xlu0 %v1497
      %v1499 = vpop.xlane.xlu0 %1498
      %v1500 = vadd.f32 %v1463, %v1464
      %1501 = vadd.xlane.f32.xlu0 %v1500
      %v1502 = vpop.xlane.xlu0 %1501
      %v1503 = vadd.f32 %v1465, %v1466
      %1504 = vadd.xlane.f32.xlu0 %v1503
      %v1505 = vpop.xlane.xlu0 %1504
      %v1506 = vadd.f32 %v1467, %v1468
      %1507 = vadd.xlane.f32.xlu0 %v1506
      %v1508 = vpop.xlane.xlu0 %1507
      %v1509 = vadd.f32 %v1469, %v1470
      %1510 = vadd.xlane.f32.xlu0 %v1509
      %v1511 = vpop.xlane.xlu0 %1510
      %v1512 = vadd.f32 %v1471, %v1472
      %1513 = vadd.xlane.f32.xlu0 %v1512
      %v1514 = vpop.xlane.xlu0 %1513
      %v1515 = vadd.f32 %v1473, %v1474
      %1516 = vadd.xlane.f32.xlu0 %v1515
      %v1517 = vpop.xlane.xlu0 %1516
      %v1518 = vadd.f32 %v1475, %v1476
      %1519 = vadd.xlane.f32.xlu0 %v1518
      %v1520 = vpop.xlane.xlu0 %1519
      %v1521 = vadd.f32 %v1477, %v1478
      %1522 = vadd.xlane.f32.xlu0 %v1521
      %v1523 = vpop.xlane.xlu0 %1522
      %v1524 = vadd.f32 %v1479, %v1480
      %1525 = vadd.xlane.f32.xlu0 %v1524
      %v1526 = vpop.xlane.xlu0 %1525
      %v1527 = vadd.f32 %v1481, %v1482
      %1528 = vadd.xlane.f32.xlu0 %v1527
      %v1529 = vpop.xlane.xlu0 %1528
      %v1530 = vadd.f32 %v1483, %v1484
      %1531 = vadd.xlane.f32.xlu0 %v1530
      %v1532 = vpop.xlane.xlu0 %1531
      %v1533 = vmul.f32 %v1487, %v1436
      %v1534 = vmul.f32 %v1490, %v1436
      %v1535 = vmul.f32 %v1493, %v1436
      %v1536 = vmul.f32 %v1496, %v1436
      %v1537 = vmul.f32 %v1499, %v1436
      %v1538 = vmul.f32 %v1502, %v1436
      %v1539 = vmul.f32 %v1505, %v1436
      %v1540 = vmul.f32 %v1508, %v1436
      %v1541 = vmul.f32 %v1511, %v1436
      %v1542 = vmul.f32 %v1514, %v1436
      %v1543 = vmul.f32 %v1517, %v1436
      %v1544 = vmul.f32 %v1520, %v1436
      %v1545 = vmul.f32 %v1523, %v1436
      %v1546 = vmul.f32 %v1526, %v1436
      %v1547 = vmul.f32 %v1529, %v1436
      %v1548 = vmul.f32 %v1532, %v1436
      %v1549 = vmul.f32 %v1437, %v1437
      %v1550 = vmul.f32 %v1438, %v1438
      %v1551 = vmul.f32 %v1439, %v1439
      %v1552 = vmul.f32 %v1440, %v1440
      %v1553 = vmul.f32 %v1441, %v1441
      %v1554 = vmul.f32 %v1442, %v1442
      %v1555 = vmul.f32 %v1443, %v1443
      %v1556 = vmul.f32 %v1444, %v1444
      %v1557 = vmul.f32 %v1445, %v1445
      %v1558 = vmul.f32 %v1446, %v1446
      %v1559 = vmul.f32 %v1447, %v1447
      %v1560 = vmul.f32 %v1448, %v1448
      %v1561 = vmul.f32 %v1449, %v1449
      %v1562 = vmul.f32 %v1450, %v1450
      %v1563 = vmul.f32 %v1451, %v1451
      %v1564 = vmul.f32 %v1452, %v1452
      %v1565 = vsub.f32 %v1533, %v1549
      %v1566 = vsub.f32 %v1534, %v1550
      %v1567 = vsub.f32 %v1535, %v1551
      %v1568 = vsub.f32 %v1536, %v1552
      %v1569 = vsub.f32 %v1537, %v1553
      %v1570 = vsub.f32 %v1538, %v1554
      %v1571 = vsub.f32 %v1539, %v1555
      %v1572 = vsub.f32 %v1540, %v1556
      %v1573 = vsub.f32 %v1541, %v1557
      %v1574 = vsub.f32 %v1542, %v1558
      %v1575 = vsub.f32 %v1543, %v1559
      %v1576 = vsub.f32 %v1544, %v1560
      %v1577 = vsub.f32 %v1545, %v1561
      %v1578 = vsub.f32 %v1546, %v1562
      %v1579 = vsub.f32 %v1547, %v1563
      %v1580 = vsub.f32 %v1548, %v1564
      %v1581 = vmax.f32 %v1565, 0.0
      %v1582 = vmax.f32 %v1566, 0.0
      %v1583 = vmax.f32 %v1567, 0.0
      %v1584 = vmax.f32 %v1568, 0.0
      %v1585 = vmax.f32 %v1569, 0.0
      %v1586 = vmax.f32 %v1570, 0.0
      %v1587 = vmax.f32 %v1571, 0.0
      %v1588 = vmax.f32 %v1572, 0.0
      %v1589 = vmax.f32 %v1573, 0.0
      %v1590 = vmax.f32 %v1574, 0.0
      %v1591 = vmax.f32 %v1575, 0.0
      %v1592 = vmax.f32 %v1576, 0.0
      %v1593 = vmax.f32 %v1577, 0.0
      %v1594 = vmax.f32 %v1578, 0.0
      %v1595 = vmax.f32 %v1579, 0.0
      %v1596 = vmax.f32 %v1580, 0.0
      %v1597 = vsub.f32 %v1348, %v1437
      %v1598 = vsub.f32 %v1349, %v1437
      %v1599 = vsub.f32 %v1350, %v1438
      %v1600 = vsub.f32 %v1351, %v1438
      %v1601 = vsub.f32 %v1352, %v1439
      %v1602 = vsub.f32 %v1353, %v1439
      %v1603 = vsub.f32 %v1354, %v1440
      %v1604 = vsub.f32 %v1355, %v1440
      %v1605 = vsub.f32 %v1356, %v1441
      %v1606 = vsub.f32 %v1357, %v1441
      %v1607 = vsub.f32 %v1358, %v1442
      %v1608 = vsub.f32 %v1359, %v1442
      %v1609 = vsub.f32 %v1360, %v1443
      %v1610 = vsub.f32 %v1361, %v1443
      %v1611 = vsub.f32 %v1362, %v1444
      %v1612 = vsub.f32 %v1363, %v1444
      %v1613 = vsub.f32 %v1364, %v1445
      %v1614 = vsub.f32 %v1365, %v1445
      %v1615 = vsub.f32 %v1366, %v1446
      %v1616 = vsub.f32 %v1367, %v1446
      %v1617 = vsub.f32 %v1368, %v1447
      %v1618 = vsub.f32 %v1369, %v1447
      %v1619 = vsub.f32 %v1370, %v1448
      %v1620 = vsub.f32 %v1371, %v1448
      %v1621 = vsub.f32 %v1372, %v1449
      %v1622 = vsub.f32 %v1373, %v1449
      %v1623 = vsub.f32 %v1374, %v1450
      %v1624 = vsub.f32 %v1375, %v1450
      %v1625 = vsub.f32 %v1376, %v1451
      %v1626 = vsub.f32 %v1377, %v1451
      %v1627 = vsub.f32 %v1378, %v1452
      %v1628 = vsub.f32 %v1379, %v1452
      %v1629 = vadd.f32 %v1581, 1e-05
      %v1630 = vadd.f32 %v1582, 1e-05
      %v1631 = vadd.f32 %v1583, 1e-05
      %v1632 = vadd.f32 %v1584, 1e-05
      %v1633 = vadd.f32 %v1585, 1e-05
      %v1634 = vadd.f32 %v1586, 1e-05
      %v1635 = vadd.f32 %v1587, 1e-05
      %v1636 = vadd.f32 %v1588, 1e-05
      %v1637 = vadd.f32 %v1589, 1e-05
      %v1638 = vadd.f32 %v1590, 1e-05
      %v1639 = vadd.f32 %v1591, 1e-05
      %v1640 = vadd.f32 %v1592, 1e-05
      %v1641 = vadd.f32 %v1593, 1e-05
      %v1642 = vadd.f32 %v1594, 1e-05
      %v1643 = vadd.f32 %v1595, 1e-05
      %v1644 = vadd.f32 %v1596, 1e-05
      %v1645 = vrsqrt.pop %v1629
      %v1646 = vmul.f32 %v1645, %v1629
      %v1647 = vmul.f32 %v1646, %v1645
      %v1648 = vmul.f32 0.5, %v1647
      %v1649 = vsub.f32 1.5, %v1648
      %v1650 = vmul.f32 %v1645, %v1649
      %vm1651 = vweird.f32 %v1629
      %vm1652 = vweird.f32 %v1645
      %vm1653 = vmor %vm1651, %vm1652
      %v1654 = vsel %vm1653, %v1645, %v1650
      %v1655 = vrsqrt.pop %v1630
      %v1656 = vmul.f32 %v1655, %v1630
      %v1657 = vmul.f32 %v1656, %v1655
      %v1658 = vmul.f32 0.5, %v1657
      %v1659 = vsub.f32 1.5, %v1658
      %v1660 = vmul.f32 %v1655, %v1659
      %vm1661 = vweird.f32 %v1630
      %vm1662 = vweird.f32 %v1655
      %vm1663 = vmor %vm1661, %vm1662
      %v1664 = vsel %vm1663, %v1655, %v1660
      %v1665 = vrsqrt.pop %v1631
      %v1666 = vmul.f32 %v1665, %v1631
      %v1667 = vmul.f32 %v1666, %v1665
      %v1668 = vmul.f32 0.5, %v1667
      %v1669 = vsub.f32 1.5, %v1668
      %v1670 = vmul.f32 %v1665, %v1669
      %vm1671 = vweird.f32 %v1631
      %vm1672 = vweird.f32 %v1665
      %vm1673 = vmor %vm1671, %vm1672
      %v1674 = vsel %vm1673, %v1665, %v1670
      %v1675 = vrsqrt.pop %v1632
      %v1676 = vmul.f32 %v1675, %v1632
      %v1677 = vmul.f32 %v1676, %v1675
      %v1678 = vmul.f32 0.5, %v1677
      %v1679 = vsub.f32 1.5, %v1678
      %v1680 = vmul.f32 %v1675, %v1679
      %vm1681 = vweird.f32 %v1632
      %vm1682 = vweird.f32 %v1675
      %vm1683 = vmor %vm1681, %vm1682
      %v1684 = vsel %vm1683, %v1675, %v1680
      %v1685 = vrsqrt.pop %v1633
      %v1686 = vmul.f32 %v1685, %v1633
      %v1687 = vmul.f32 %v1686, %v1685
      %v1688 = vmul.f32 0.5, %v1687
      %v1689 = vsub.f32 1.5, %v1688
      %v1690 = vmul.f32 %v1685, %v1689
      %vm1691 = vweird.f32 %v1633
      %vm1692 = vweird.f32 %v1685
      %vm1693 = vmor %vm1691, %vm1692
      %v1694 = vsel %vm1693, %v1685, %v1690
      %v1695 = vrsqrt.pop %v1634
      %v1696 = vmul.f32 %v1695, %v1634
      %v1697 = vmul.f32 %v1696, %v1695
      %v1698 = vmul.f32 0.5, %v1697
      %v1699 = vsub.f32 1.5, %v1698
      %v1700 = vmul.f32 %v1695, %v1699
      %vm1701 = vweird.f32 %v1634
      %vm1702 = vweird.f32 %v1695
      %vm1703 = vmor %vm1701, %vm1702
      %v1704 = vsel %vm1703, %v1695, %v1700
      %v1705 = vrsqrt.pop %v1635
      %v1706 = vmul.f32 %v1705, %v1635
      %v1707 = vmul.f32 %v1706, %v1705
      %v1708 = vmul.f32 0.5, %v1707
      %v1709 = vsub.f32 1.5, %v1708
      %v1710 = vmul.f32 %v1705, %v1709
      %vm1711 = vweird.f32 %v1635
      %vm1712 = vweird.f32 %v1705
      %vm1713 = vmor %vm1711, %vm1712
      %v1714 = vsel %vm1713, %v1705, %v1710
      %v1715 = vrsqrt.pop %v1636
      %v1716 = vmul.f32 %v1715, %v1636
      %v1717 = vmul.f32 %v1716, %v1715
      %v1718 = vmul.f32 0.5, %v1717
      %v1719 = vsub.f32 1.5, %v1718
      %v1720 = vmul.f32 %v1715, %v1719
      %vm1721 = vweird.f32 %v1636
      %vm1722 = vweird.f32 %v1715
      %vm1723 = vmor %vm1721, %vm1722
      %v1724 = vsel %vm1723, %v1715, %v1720
      %v1725 = vrsqrt.pop %v1637
      %v1726 = vmul.f32 %v1725, %v1637
      %v1727 = vmul.f32 %v1726, %v1725
      %v1728 = vmul.f32 0.5, %v1727
      %v1729 = vsub.f32 1.5, %v1728
      %v1730 = vmul.f32 %v1725, %v1729
      %vm1731 = vweird.f32 %v1637
      %vm1732 = vweird.f32 %v1725
      %vm1733 = vmor %vm1731, %vm1732
      %v1734 = vsel %vm1733, %v1725, %v1730
      %v1735 = vrsqrt.pop %v1638
      %v1736 = vmul.f32 %v1735, %v1638
      %v1737 = vmul.f32 %v1736, %v1735
      %v1738 = vmul.f32 0.5, %v1737
      %v1739 = vsub.f32 1.5, %v1738
      %v1740 = vmul.f32 %v1735, %v1739
      %vm1741 = vweird.f32 %v1638
      %vm1742 = vweird.f32 %v1735
      %vm1743 = vmor %vm1741, %vm1742
      %v1744 = vsel %vm1743, %v1735, %v1740
      %v1745 = vrsqrt.pop %v1639
      %v1746 = vmul.f32 %v1745, %v1639
      %v1747 = vmul.f32 %v1746, %v1745
      %v1748 = vmul.f32 0.5, %v1747
      %v1749 = vsub.f32 1.5, %v1748
      %v1750 = vmul.f32 %v1745, %v1749
      %vm1751 = vweird.f32 %v1639
      %vm1752 = vweird.f32 %v1745
      %vm1753 = vmor %vm1751, %vm1752
      %v1754 = vsel %vm1753, %v1745, %v1750
      %v1755 = vrsqrt.pop %v1640
      %v1756 = vmul.f32 %v1755, %v1640
      %v1757 = vmul.f32 %v1756, %v1755
      %v1758 = vmul.f32 0.5, %v1757
      %v1759 = vsub.f32 1.5, %v1758
      %v1760 = vmul.f32 %v1755, %v1759
      %vm1761 = vweird.f32 %v1640
      %vm1762 = vweird.f32 %v1755
      %vm1763 = vmor %vm1761, %vm1762
      %v1764 = vsel %vm1763, %v1755, %v1760
      %v1765 = vrsqrt.pop %v1641
      %v1766 = vmul.f32 %v1765, %v1641
      %v1767 = vmul.f32 %v1766, %v1765
      %v1768 = vmul.f32 0.5, %v1767
      %v1769 = vsub.f32 1.5, %v1768
      %v1770 = vmul.f32 %v1765, %v1769
      %vm1771 = vweird.f32 %v1641
      %vm1772 = vweird.f32 %v1765
      %vm1773 = vmor %vm1771, %vm1772
      %v1774 = vsel %vm1773, %v1765, %v1770
      %v1775 = vrsqrt.pop %v1642
      %v1776 = vmul.f32 %v1775, %v1642
      %v1777 = vmul.f32 %v1776, %v1775
      %v1778 = vmul.f32 0.5, %v1777
      %v1779 = vsub.f32 1.5, %v1778
      %v1780 = vmul.f32 %v1775, %v1779
      %vm1781 = vweird.f32 %v1642
      %vm1782 = vweird.f32 %v1775
      %vm1783 = vmor %vm1781, %vm1782
      %v1784 = vsel %vm1783, %v1775, %v1780
      %v1785 = vrsqrt.pop %v1643
      %v1786 = vmul.f32 %v1785, %v1643
      %v1787 = vmul.f32 %v1786, %v1785
      %v1788 = vmul.f32 0.5, %v1787
      %v1789 = vsub.f32 1.5, %v1788
      %v1790 = vmul.f32 %v1785, %v1789
      %vm1791 = vweird.f32 %v1643
      %vm1792 = vweird.f32 %v1785
      %vm1793 = vmor %vm1791, %vm1792
      %v1794 = vsel %vm1793, %v1785, %v1790
      %v1795 = vrsqrt.pop %v1644
      %v1796 = vmul.f32 %v1795, %v1644
      %v1797 = vmul.f32 %v1796, %v1795
      %v1798 = vmul.f32 0.5, %v1797
      %v1799 = vsub.f32 1.5, %v1798
      %v1800 = vmul.f32 %v1795, %v1799
      %vm1801 = vweird.f32 %v1644
      %vm1802 = vweird.f32 %v1795
      %vm1803 = vmor %vm1801, %vm1802
      %v1804 = vsel %vm1803, %v1795, %v1800
      %v1805 = vmul.f32 %v1597, %v1654
      %v1806 = vmul.f32 %v1598, %v1654
      %v1807 = vmul.f32 %v1599, %v1664
      %v1808 = vmul.f32 %v1600, %v1664
      %v1809 = vmul.f32 %v1601, %v1674
      %v1810 = vmul.f32 %v1602, %v1674
      %v1811 = vmul.f32 %v1603, %v1684
      %v1812 = vmul.f32 %v1604, %v1684
      %v1813 = vmul.f32 %v1605, %v1694
      %v1814 = vmul.f32 %v1606, %v1694
      %v1815 = vmul.f32 %v1607, %v1704
      %v1816 = vmul.f32 %v1608, %v1704
      %v1817 = vmul.f32 %v1609, %v1714
      %v1818 = vmul.f32 %v1610, %v1714
      %v1819 = vmul.f32 %v1611, %v1724
      %v1820 = vmul.f32 %v1612, %v1724
      %v1821 = vmul.f32 %v1613, %v1734
      %v1822 = vmul.f32 %v1614, %v1734
      %v1823 = vmul.f32 %v1615, %v1744
      %v1824 = vmul.f32 %v1616, %v1744
      %v1825 = vmul.f32 %v1617, %v1754
      %v1826 = vmul.f32 %v1618, %v1754
      %v1827 = vmul.f32 %v1619, %v1764
      %v1828 = vmul.f32 %v1620, %v1764
      %v1829 = vmul.f32 %v1621, %v1774
      %v1830 = vmul.f32 %v1622, %v1774
      %v1831 = vmul.f32 %v1623, %v1784
      %v1832 = vmul.f32 %v1624, %v1784
      %v1833 = vmul.f32 %v1625, %v1794
      %v1834 = vmul.f32 %v1626, %v1794
      %v1835 = vmul.f32 %v1627, %v1804
      %v1836 = vmul.f32 %v1628, %v1804
      %v1838 = vperm.slane %v1380, 0
      %v1839 = vperm.slane %v1380, 1
      %v1842 = vmul.f32 %v1805, %v1838
      %v1843 = vmul.f32 %v1806, %v1839
      %v1844 = vmul.f32 %v1807, %v1838
      %v1845 = vmul.f32 %v1808, %v1839
      %v1846 = vmul.f32 %v1809, %v1838
      %v1847 = vmul.f32 %v1810, %v1839
      %v1848 = vmul.f32 %v1811, %v1838
      %v1849 = vmul.f32 %v1812, %v1839
      %v1850 = vmul.f32 %v1813, %v1838
      %v1851 = vmul.f32 %v1814, %v1839
      %v1852 = vmul.f32 %v1815, %v1838
      %v1853 = vmul.f32 %v1816, %v1839
      %v1854 = vmul.f32 %v1817, %v1838
      %v1855 = vmul.f32 %v1818, %v1839
      %v1856 = vmul.f32 %v1819, %v1838
      %v1857 = vmul.f32 %v1820, %v1839
      %v1858 = vmul.f32 %v1821, %v1838
      %v1859 = vmul.f32 %v1822, %v1839
      %v1860 = vmul.f32 %v1823, %v1838
      %v1861 = vmul.f32 %v1824, %v1839
      %v1862 = vmul.f32 %v1825, %v1838
      %v1863 = vmul.f32 %v1826, %v1839
      %v1864 = vmul.f32 %v1827, %v1838
      %v1865 = vmul.f32 %v1828, %v1839
      %v1866 = vmul.f32 %v1829, %v1838
      %v1867 = vmul.f32 %v1830, %v1839
      %v1868 = vmul.f32 %v1831, %v1838
      %v1869 = vmul.f32 %v1832, %v1839
      %v1870 = vmul.f32 %v1833, %v1838
      %v1871 = vmul.f32 %v1834, %v1839
      %v1872 = vmul.f32 %v1835, %v1838
      %v1873 = vmul.f32 %v1836, %v1839
      %v1875 = vperm.slane %v1381, 0
      %v1876 = vperm.slane %v1381, 1
      %v1879 = vadd.f32 %v1842, %v1875
      %v1880 = vadd.f32 %v1843, %v1876
      %v1881 = vadd.f32 %v1844, %v1875
      %v1882 = vadd.f32 %v1845, %v1876
      %v1883 = vadd.f32 %v1846, %v1875
      %v1884 = vadd.f32 %v1847, %v1876
      %v1885 = vadd.f32 %v1848, %v1875
      %v1886 = vadd.f32 %v1849, %v1876
      %v1887 = vadd.f32 %v1850, %v1875
      %v1888 = vadd.f32 %v1851, %v1876
      %v1889 = vadd.f32 %v1852, %v1875
      %v1890 = vadd.f32 %v1853, %v1876
      %v1891 = vadd.f32 %v1854, %v1875
      %v1892 = vadd.f32 %v1855, %v1876
      %v1893 = vadd.f32 %v1856, %v1875
      %v1894 = vadd.f32 %v1857, %v1876
      %v1895 = vadd.f32 %v1858, %v1875
      %v1896 = vadd.f32 %v1859, %v1876
      %v1897 = vadd.f32 %v1860, %v1875
      %v1898 = vadd.f32 %v1861, %v1876
      %v1899 = vadd.f32 %v1862, %v1875
      %v1900 = vadd.f32 %v1863, %v1876
      %v1901 = vadd.f32 %v1864, %v1875
      %v1902 = vadd.f32 %v1865, %v1876
      %v1903 = vadd.f32 %v1866, %v1875
      %v1904 = vadd.f32 %v1867, %v1876
      %v1905 = vadd.f32 %v1868, %v1875
      %v1906 = vadd.f32 %v1869, %v1876
      %v1907 = vadd.f32 %v1870, %v1875
      %v1908 = vadd.f32 %v1871, %v1876
      %v1909 = vadd.f32 %v1872, %v1875
      %v1910 = vadd.f32 %v1873, %v1876
      %v1911 = vmax.f32 %v1879, 0.0
      %v1912 = vmax.f32 %v1880, 0.0
      %v1913 = vmax.f32 %v1881, 0.0
      %v1914 = vmax.f32 %v1882, 0.0
      %v1915 = vmax.f32 %v1883, 0.0
      %v1916 = vmax.f32 %v1884, 0.0
      %v1917 = vmax.f32 %v1885, 0.0
      %v1918 = vmax.f32 %v1886, 0.0
      %v1919 = vmax.f32 %v1887, 0.0
      %v1920 = vmax.f32 %v1888, 0.0
      %v1921 = vmax.f32 %v1889, 0.0
      %v1922 = vmax.f32 %v1890, 0.0
      %v1923 = vmax.f32 %v1891, 0.0
      %v1924 = vmax.f32 %v1892, 0.0
      %v1925 = vmax.f32 %v1893, 0.0
      %v1926 = vmax.f32 %v1894, 0.0
      %v1927 = vmax.f32 %v1895, 0.0
      %v1928 = vmax.f32 %v1896, 0.0
      %v1929 = vmax.f32 %v1897, 0.0
      %v1930 = vmax.f32 %v1898, 0.0
      %v1931 = vmax.f32 %v1899, 0.0
      %v1932 = vmax.f32 %v1900, 0.0
      %v1933 = vmax.f32 %v1901, 0.0
      %v1934 = vmax.f32 %v1902, 0.0
      %v1935 = vmax.f32 %v1903, 0.0
      %v1936 = vmax.f32 %v1904, 0.0
      %v1937 = vmax.f32 %v1905, 0.0
      %v1938 = vmax.f32 %v1906, 0.0
      %v1939 = vmax.f32 %v1907, 0.0
      %v1940 = vmax.f32 %v1908, 0.0
      %v1941 = vmax.f32 %v1909, 0.0
      %v1942 = vmax.f32 %v1910, 0.0
      %v1943 = vpack.c.bf16 %v1912, %v1911
      %v1944 = vpack.c.bf16 %v1914, %v1913
      %v1945 = vpack.c.bf16 %v1916, %v1915
      %v1946 = vpack.c.bf16 %v1918, %v1917
      %v1947 = vpack.c.bf16 %v1920, %v1919
      %v1948 = vpack.c.bf16 %v1922, %v1921
      %v1949 = vpack.c.bf16 %v1924, %v1923
      %v1950 = vpack.c.bf16 %v1926, %v1925
      %v1951 = vpack.c.bf16 %v1928, %v1927
      %v1952 = vpack.c.bf16 %v1930, %v1929
      %v1953 = vpack.c.bf16 %v1932, %v1931
      %v1954 = vpack.c.bf16 %v1934, %v1933
      %v1955 = vpack.c.bf16 %v1936, %v1935
      %v1956 = vpack.c.bf16 %v1938, %v1937
      %v1957 = vpack.c.bf16 %v1940, %v1939
      %v1958 = vpack.c.bf16 %v1942, %v1941
      %1959 = vst [vmem:[%s285] sm:$0xff] %v1943
      %1960 = vst [vmem:[%s285 + $0x8] sm:$0xff] %v1944
      %1961 = vst [vmem:[%s285 + $0x10] sm:$0xff] %v1945
      %1962 = vst [vmem:[%s285 + $0x18] sm:$0xff] %v1946
      %1963 = vst [vmem:[%s285 + $0x20] sm:$0xff] %v1947
      %1964 = vst [vmem:[%s285 + $0x28] sm:$0xff] %v1948
      %1965 = vst [vmem:[%s285 + $0x30] sm:$0xff] %v1949
      %1966 = vst [vmem:[%s285 + $0x38] sm:$0xff] %v1950
      %1967 = vst [vmem:[%s285 + $0x40] sm:$0xff] %v1951
      %1968 = vst [vmem:[%s285 + $0x48] sm:$0xff] %v1952
      %1969 = vst [vmem:[%s285 + $0x50] sm:$0xff] %v1953
      %1970 = vst [vmem:[%s285 + $0x58] sm:$0xff] %v1954
      %1971 = vst [vmem:[%s285 + $0x60] sm:$0xff] %v1955
      %1972 = vst [vmem:[%s285 + $0x68] sm:$0xff] %v1956
      %1973 = vst [vmem:[%s285 + $0x70] sm:$0xff] %v1957
      %1974 = vst [vmem:[%s285 + $0x78] sm:$0xff] %v1958
      %s1975 = smul.u32 16, %s18
      %p1976 = scmp.lt.s32.totalorder %s1975, 63
      %s1977 = scalar_select %p1976, %s1975, 63
      %s1978 = smul.addr %s1977, 2
      %s1979 = smul.addr %s1978, 4
      %s1980 = scalar_lea.vmem %s7, %s1979
      // Predicated region
      $region49: #{_lambda_.3} parent=47 // pred_check
        %p1981 = pneg %p188
      $region50: #{_lambda_.3} parent=47 // pred_check_branch
        %1983 = sbr.rel (%p1981) target = $region52
      $region51: #{_lambda_.3} parent=47 // pred_region
        %s1984 = smul.u32 16, %s18
      $region52: #{_lambda_.3} parent=47 // pred_fallthru
        _
    $region48: #{_lambda_.3} parent=5 // pred_fallthru
      _
    %p1985 = scmp.le.s32.totalorder 2, %s13
    // Predicated region
    $region53: #{_lambda_.3} parent=5 // pred_check
      %p1986 = pneg %p1985
    $region54: #{_lambda_.3} parent=5 // pred_check_branch
      %1988 = sbr.rel (%p1986) target = $region56
    $region55: #{_lambda_.3} parent=5 // pred_region
      %s1989 = ssub.s32 %s13, 2
      // Predicated region
      $region57: #{_lambda_.3} parent=55 // pred_check
        %p1990 = pneg %p194
      $region58: #{_lambda_.3} parent=55 // pred_check_branch
        %1992 = sbr.rel (%p1990) target = $region60
      $region59: #{_lambda_.3} parent=55 // pred_region
        %s1993 = smul.u32 16, %s19
        %p1994 = scmp.lt.s32.totalorder %s1993, 63
        %s1995 = scalar_select %p1994, %s1993, 63
        %s1996 = smul.addr %s1995, 2
        %s1997 = smul.addr %s1996, 4
        %s1998 = scalar_lea.vmem %s7, %s1997
      $region60: #{_lambda_.3} parent=55 // pred_fallthru
        _
    $region56: #{_lambda_.3} parent=5 // pred_fallthru
      _
  $region6: #{_lambda_.3} parent=0 // loop_footer
    %s17 = sadd.s32 1, %s13
  $region7: #{_lambda_.3} parent=0 // loop_footer_branch
    %12 = sbr.rel target = $region3
  $region8: #{_lambda_.3} parent=0 // loop_exit
    _

// kernel: _lambda_.5
$region0: #{_lambda_.5}
  #allocation0 [shape = 'u32[]', space=smem, size = 0x4, offset = 0x4, fixed_abs, tag = 'smem constant byte address 0x4 - core index']
  #allocation1 [shape = 'u32[72,128]{1,0:T(1,128)}', space=vmem, size = 0x9000, scoped, tag = 'internal scratch']
  %s0 = inlined_call_operand.vmem [shape: f32[2,3,256], index: 0, kind: input, shape index: {}]
  %s1 = inlined_call_operand.vmem [shape: f32[2,3,128], index: 1, kind: input, shape index: {}]
  %s2 = inlined_call_operand.vmem [shape: f32[2,3,128], index: 2, kind: input, shape index: {}]
  %s3 = inlined_call_operand.vmem [shape: f32[256,64], index: 3, kind: input, shape index: {}]
  %s4 = inlined_call_operand.vmem [shape: f32[128,64], index: 4, kind: input, shape index: {}]
  %s5 = inlined_call_operand.vmem [shape: f32[128,64], index: 5, kind: input, shape index: {}]
  %s6 = inlined_call_operand.vmem [shape: f32[1,64], index: 6, kind: input, shape index: {}]
  %s7 = inlined_call_operand.vmem [shape: f32[1,64], index: 7, kind: input, shape index: {}]
  %s8 = inlined_call_operand.vmem [shape: f32[1,64], index: 8, kind: input, shape index: {}]
  %s9 = inlined_call_operand.hbm [shape: f32[3,64], index: 9, kind: output, shape index: {}]
  %s10 = sld [smem:[#allocation0]]
  $region46: #{_lambda_.5} parent=0
    _
  %s12 = ssub.s32 1, %s10
  %s13 = scalar_select 0, %s12, %s10
  $region1: #{_lambda_.5} parent=0
    #allocation2 [shape = 'u8[2048]{0}', space=vmem, size = 0x800, scoped, tag = 'output window, operand 0, single buffered']
    #allocation3 [shape = 's32[1]{0}', space=sflag, size = 0x4, scoped, tag = 'scoped memory for _lambda_.5']
    %14 = vsyncpa [#allocation3], 0
    // Predicated region
    $region2: #{_lambda_.5} parent=1 // pred_check
      _
    $region3: #{_lambda_.5} parent=1 // pred_check_branch
      %16 = sbr.rel (0) target = $region5
    $region4: #{_lambda_.5} parent=1 // pred_region
      _
    $region5: #{_lambda_.5} parent=1 // pred_fallthru
      _
    // Predicated region
    $region6: #{_lambda_.5} parent=1 // pred_check
      _
    $region7: #{_lambda_.5} parent=1 // pred_check_branch
      %18 = sbr.rel (0) target = $region9
    $region8: #{_lambda_.5} parent=1 // pred_region
      _
    $region9: #{_lambda_.5} parent=1 // pred_fallthru
      _
    // Predicated region
    $region10: #{_lambda_.5} parent=1 // pred_check
      _
    $region11: #{_lambda_.5} parent=1 // pred_check_branch
      %20 = sbr.rel (0) target = $region13
    $region12: #{_lambda_.5} parent=1 // pred_region
      _
    $region13: #{_lambda_.5} parent=1 // pred_fallthru
      _
    // Predicated region
    $region14: #{_lambda_.5} parent=1 // pred_check
      _
    $region15: #{_lambda_.5} parent=1 // pred_check_branch
      %22 = sbr.rel (0) target = $region17
    $region16: #{_lambda_.5} parent=1 // pred_region
      _
    $region17: #{_lambda_.5} parent=1 // pred_fallthru
      _
    // Predicated region
    $region18: #{_lambda_.5} parent=1 // pred_check
      _
    $region19: #{_lambda_.5} parent=1 // pred_check_branch
      %24 = sbr.rel (0) target = $region21
    $region20: #{_lambda_.5} parent=1 // pred_region
      _
    $region21: #{_lambda_.5} parent=1 // pred_fallthru
      _
    // Predicated region
    $region22: #{_lambda_.5} parent=1 // pred_check
      _
    $region23: #{_lambda_.5} parent=1 // pred_check_branch
      %26 = sbr.rel (0) target = $region25
    $region24: #{_lambda_.5} parent=1 // pred_region
      _
    $region25: #{_lambda_.5} parent=1 // pred_fallthru
      _
    // Predicated region
    $region26: #{_lambda_.5} parent=1 // pred_check
      _
    $region27: #{_lambda_.5} parent=1 // pred_check_branch
      %28 = sbr.rel (0) target = $region29
    $region28: #{_lambda_.5} parent=1 // pred_region
      _
    $region29: #{_lambda_.5} parent=1 // pred_fallthru
      _
    // Predicated region
    $region30: #{_lambda_.5} parent=1 // pred_check
      _
    $region31: #{_lambda_.5} parent=1 // pred_check_branch
      %30 = sbr.rel (0) target = $region33
    $region32: #{_lambda_.5} parent=1 // pred_region
      _
    $region33: #{_lambda_.5} parent=1 // pred_fallthru
      _
    // Predicated region
    $region34: #{_lambda_.5} parent=1 // pred_check
      _
    $region35: #{_lambda_.5} parent=1 // pred_check_branch
      %32 = sbr.rel (0) target = $region37
    $region36: #{_lambda_.5} parent=1 // pred_region
      _
    $region37: #{_lambda_.5} parent=1 // pred_fallthru
      _
    %v33 = vld [vmem:[%s0] sm:$0x77]
    %v34 = vld [vmem:[%s0 + $0x8] sm:$0x77]
    %37 = vst [vmem:[#allocation1] ss:$2 sm:$0xff] %v33
    %v38 = vld.sshfl [vmem:[#allocation1] sm:$0xff pattern:$0x75316420]
    %v39 = vld.sshfl [vmem:[#allocation1 + $0x8] sm:$0xff pattern:$0x75316420]
    %s40 = scalar_lea.vmem [#allocation1], 16
    %41 = vst [vmem:[%s40] ss:$2 sm:$0xff] %v34
    %v42 = vld.sshfl [vmem:[#allocation1 + $0x10] sm:$0xff pattern:$0x75316420]
    %v43 = vld.sshfl [vmem:[#allocation1 + $0x18] sm:$0xff pattern:$0x75316420]
    %vm48 = vcmask 1042432
    %v49 = vsel %vm48, %v38, 0.0
    %v50 = vsel %vm48, %v42, 0.0
    %v51 = vadd.f32 %v49, %v50
    %v52 = vsel %vm48, %v39, 0.0
    %v53 = vsel %vm48, %v43, 0.0
    %v54 = vadd.f32 %v52, %v53
    %v55 = vld [vmem:[%s1] sm:$0x7]
    %v56 = vld [vmem:[%s1 + $0x4] sm:$0x7]
    %v57 = vsel %vm48, %v55, 0.0
    %v58 = vsel %vm48, %v56, 0.0
    %v59 = vadd.f32 %v57, %v58
    %v60 = vld [vmem:[%s2] sm:$0x7]
    %v61 = vld [vmem:[%s2 + $0x4] sm:$0x7]
    %v62 = vsel %vm48, %v60, 0.0
    %v63 = vsel %vm48, %v61, 0.0
    %v64 = vadd.f32 %v62, %v63
    %v65 = vld [vmem:[%s3] sm:$0xff]
    %v66 = vld [vmem:[%s3 + $0x8] sm:$0xff]
    %v67 = vld [vmem:[%s3 + $0x10] sm:$0xff]
    %v68 = vld [vmem:[%s3 + $0x18] sm:$0xff]
    %v69 = vld [vmem:[%s3 + $0x20] sm:$0xff]
    %v70 = vld [vmem:[%s3 + $0x28] sm:$0xff]
    %v71 = vld [vmem:[%s3 + $0x30] sm:$0xff]
    %v72 = vld [vmem:[%s3 + $0x38] sm:$0xff]
    %v73 = vld [vmem:[%s3 + $0x40] sm:$0xff]
    %v74 = vld [vmem:[%s3 + $0x48] sm:$0xff]
    %v75 = vld [vmem:[%s3 + $0x50] sm:$0xff]
    %v76 = vld [vmem:[%s3 + $0x58] sm:$0xff]
    %v77 = vld [vmem:[%s3 + $0x60] sm:$0xff]
    %v78 = vld [vmem:[%s3 + $0x68] sm:$0xff]
    %v79 = vld [vmem:[%s3 + $0x70] sm:$0xff]
    %v80 = vld [vmem:[%s3 + $0x78] sm:$0xff]
    %v81 = vld [vmem:[%s3 + $0x80] sm:$0xff]
    %v82 = vld [vmem:[%s3 + $0x88] sm:$0xff]
    %v83 = vld [vmem:[%s3 + $0x90] sm:$0xff]
    %v84 = vld [vmem:[%s3 + $0x98] sm:$0xff]
    %v85 = vld [vmem:[%s3 + $0xa0] sm:$0xff]
    %v86 = vld [vmem:[%s3 + $0xa8] sm:$0xff]
    %v87 = vld [vmem:[%s3 + $0xb0] sm:$0xff]
    %v88 = vld [vmem:[%s3 + $0xb8] sm:$0xff]
    %v89 = vld [vmem:[%s3 + $0xc0] sm:$0xff]
    %v90 = vld [vmem:[%s3 + $0xc8] sm:$0xff]
    %v91 = vld [vmem:[%s3 + $0xd0] sm:$0xff]
    %v92 = vld [vmem:[%s3 + $0xd8] sm:$0xff]
    %v93 = vld [vmem:[%s3 + $0xe0] sm:$0xff]
    %v94 = vld [vmem:[%s3 + $0xe8] sm:$0xff]
    %v95 = vld [vmem:[%s3 + $0xf0] sm:$0xff]
    %v96 = vld [vmem:[%s3 + $0xf8] sm:$0xff]
    %v97 = vld [vmem:[%s4] sm:$0xff]
    %v98 = vld [vmem:[%s4 + $0x8] sm:$0xff]
    %v99 = vld [vmem:[%s4 + $0x10] sm:$0xff]
    %v100 = vld [vmem:[%s4 + $0x18] sm:$0xff]
    %v101 = vld [vmem:[%s4 + $0x20] sm:$0xff]
    %v102 = vld [vmem:[%s4 + $0x28] sm:$0xff]
    %v103 = vld [vmem:[%s4 + $0x30] sm:$0xff]
    %v104 = vld [vmem:[%s4 + $0x38] sm:$0xff]
    %v105 = vld [vmem:[%s4 + $0x40] sm:$0xff]
    %v106 = vld [vmem:[%s4 + $0x48] sm:$0xff]
    %v107 = vld [vmem:[%s4 + $0x50] sm:$0xff]
    %v108 = vld [vmem:[%s4 + $0x58] sm:$0xff]
    %v109 = vld [vmem:[%s4 + $0x60] sm:$0xff]
    %v110 = vld [vmem:[%s4 + $0x68] sm:$0xff]
    %v111 = vld [vmem:[%s4 + $0x70] sm:$0xff]
    %v112 = vld [vmem:[%s4 + $0x78] sm:$0xff]
    %113 = vmatpush.msra.mxu0 %v112
    %114 = vmatpush.msra.mxu0 %v111
    %115 = vmatpush.msra.mxu0 %v110
    %116 = vmatpush.msra.mxu0 %v109
    %117 = vmatpush.msra.mxu0 %v108
    %118 = vmatpush.msra.mxu0 %v107
    %119 = vmatpush.msra.mxu0 %v106
    %120 = vmatpush.msra.mxu0 %v105
    %121 = vmatpush.msra.mxu0 %v104
    %122 = vmatpush.msra.mxu0 %v103
    %123 = vmatpush.msra.mxu0 %v102
    %124 = vmatpush.msra.mxu0 %v101
    %125 = vmatpush.msra.mxu0 %v100
    %126 = vmatpush.msra.mxu0 %v99
    %127 = vmatpush.msra.mxu0 %v98
    %128 = vmatpush.msra.mxu0 %v97
    %129 = vmatmul.f32.gmra.mxu0 %v59
    %v130 = vpop.f32.mrf.mxu0
    %v131 = vadd.f32 0.0, %v130
    %132 = vdwg.mxu0
    %133 = vmatpush.msra.mxu0 %v80
    %134 = vmatpush.msra.mxu0 %v79
    %135 = vmatpush.msra.mxu0 %v78
    %136 = vmatpush.msra.mxu0 %v77
    %137 = vmatpush.msra.mxu0 %v76
    %138 = vmatpush.msra.mxu0 %v75
    %139 = vmatpush.msra.mxu0 %v74
    %140 = vmatpush.msra.mxu0 %v73
    %141 = vmatpush.msra.mxu0 %v72
    %142 = vmatpush.msra.mxu0 %v71
    %143 = vmatpush.msra.mxu0 %v70
    %144 = vmatpush.msra.mxu0 %v69
    %145 = vmatpush.msra.mxu0 %v68
    %146 = vmatpush.msra.mxu0 %v67
    %147 = vmatpush.msra.mxu0 %v66
    %148 = vmatpush.msra.mxu0 %v65
    %149 = vmatmul.f32.gmra.mxu0 %v51
    %v150 = vpop.f32.mrf.mxu0
    %v151 = vadd.f32 %v131, %v150
    %152 = vdwg.mxu0
    %153 = vmatpush.msra.mxu0 %v96
    %154 = vmatpush.msra.mxu0 %v95
    %155 = vmatpush.msra.mxu0 %v94
    %156 = vmatpush.msra.mxu0 %v93
    %157 = vmatpush.msra.mxu0 %v92
    %158 = vmatpush.msra.mxu0 %v91
    %159 = vmatpush.msra.mxu0 %v90
    %160 = vmatpush.msra.mxu0 %v89
    %161 = vmatpush.msra.mxu0 %v88
    %162 = vmatpush.msra.mxu0 %v87
    %163 = vmatpush.msra.mxu0 %v86
    %164 = vmatpush.msra.mxu0 %v85
    %165 = vmatpush.msra.mxu0 %v84
    %166 = vmatpush.msra.mxu0 %v83
    %167 = vmatpush.msra.mxu0 %v82
    %168 = vmatpush.msra.mxu0 %v81
    %169 = vmatmul.f32.gmra.mxu0 %v54
    %v170 = vpop.f32.mrf.mxu0
    %v171 = vadd.f32 %v151, %v170
    %172 = vdwg.mxu0
    %v173 = vld [vmem:[%s5] sm:$0xff]
    %v174 = vld [vmem:[%s5 + $0x8] sm:$0xff]
    %v175 = vld [vmem:[%s5 + $0x10] sm:$0xff]
    %v176 = vld [vmem:[%s5 + $0x18] sm:$0xff]
    %v177 = vld [vmem:[%s5 + $0x20] sm:$0xff]
    %v178 = vld [vmem:[%s5 + $0x28] sm:$0xff]
    %v179 = vld [vmem:[%s5 + $0x30] sm:$0xff]
    %v180 = vld [vmem:[%s5 + $0x38] sm:$0xff]
    %v181 = vld [vmem:[%s5 + $0x40] sm:$0xff]
    %v182 = vld [vmem:[%s5 + $0x48] sm:$0xff]
    %v183 = vld [vmem:[%s5 + $0x50] sm:$0xff]
    %v184 = vld [vmem:[%s5 + $0x58] sm:$0xff]
    %v185 = vld [vmem:[%s5 + $0x60] sm:$0xff]
    %v186 = vld [vmem:[%s5 + $0x68] sm:$0xff]
    %v187 = vld [vmem:[%s5 + $0x70] sm:$0xff]
    %v188 = vld [vmem:[%s5 + $0x78] sm:$0xff]
    %189 = vmatpush.msra.mxu0 %v188
    %190 = vmatpush.msra.mxu0 %v187
    %191 = vmatpush.msra.mxu0 %v186
    %192 = vmatpush.msra.mxu0 %v185
    %193 = vmatpush.msra.mxu0 %v184
    %194 = vmatpush.msra.mxu0 %v183
    %195 = vmatpush.msra.mxu0 %v182
    %196 = vmatpush.msra.mxu0 %v181
    %197 = vmatpush.msra.mxu0 %v180
    %198 = vmatpush.msra.mxu0 %v179
    %199 = vmatpush.msra.mxu0 %v178
    %200 = vmatpush.msra.mxu0 %v177
    %201 = vmatpush.msra.mxu0 %v176
    %202 = vmatpush.msra.mxu0 %v175
    %203 = vmatpush.msra.mxu0 %v174
    %204 = vmatpush.msra.mxu0 %v173
    %205 = vmatmul.f32.gmra.mxu0 %v64
    %v206 = vpop.f32.mrf.mxu0
    %v207 = vadd.f32 0.0, %v206
    %208 = vdwg.mxu0
    %v209 = vadd.f32 %v171, %v207
    %v210 = vld [vmem:[%s6] sm:$0x1]
    %v212 = vperm.slane %v210, 0
    %v214 = vadd.f32 %v209, %v212
    %v215 = vld [vmem:[%s7] sm:$0x1]
    %v216 = vld [vmem:[%s8] sm:$0x1]
    %vm217 = vcmask 518144
    %v218 = vsel %vm217, %v214, 0.0
    %219 = vadd.xlane.f32.xlu0 %v218
    %v220 = vpop.xlane.xlu0 %219
    %v221 = vrcp.pop 64.0
    %v222 = vmul.f32 64.0, %v221
    %v223 = vsub.f32 1.0, %v222
    %v224 = vmul.f32 %v221, %v223
    %v225 = vadd.f32 %v221, %v224
    %vm226 = vweird.f32 %v221
    %v227 = vsel %vm226, %v221, %v225
    %v228 = vmul.f32 %v220, %v227
    %v229 = vmul.f32 %v214, %v214
    %v230 = vsel %vm217, %v229, 0.0
    %231 = vadd.xlane.f32.xlu0 %v230
    %v232 = vpop.xlane.xlu0 %231
    %v233 = vmul.f32 %v232, %v227
    %v234 = vmul.f32 %v228, %v228
    %v235 = vsub.f32 %v233, %v234
    %v236 = vmax.f32 %v235, 0.0
    %v237 = vsub.f32 %v214, %v228
    %v238 = vadd.f32 %v236, 1e-05
    %v239 = vrsqrt.pop %v238
    %v240 = vmul.f32 %v239, %v238
    %v241 = vmul.f32 %v240, %v239
    %v242 = vmul.f32 0.5, %v241
    %v243 = vsub.f32 1.5, %v242
    %v244 = vmul.f32 %v239, %v243
    %vm245 = vweird.f32 %v238
    %vm246 = vweird.f32 %v239
    %vm247 = vmor %vm245, %vm246
    %v248 = vsel %vm247, %v239, %v244
    %v249 = vmul.f32 %v237, %v248
    %v251 = vperm.slane %v215, 0
    %v253 = vmul.f32 %v249, %v251
    %v255 = vperm.slane %v216, 0
    %v257 = vadd.f32 %v253, %v255
    %258 = vst.msk [vmem:[#allocation2] sm:$0x7] %vm217, %v257
    // Predicated region
    $region38: #{_lambda_.5} parent=1 // pred_check
      _
    $region39: #{_lambda_.5} parent=1 // pred_check_branch
      %260 = sbr.rel (0) target = $region41
    $region40: #{_lambda_.5} parent=1 // pred_region
      %262 = vsyncadd [#allocation3], 0
      %s264 = sshll.u32 [#allocation2], 4
      %s265 = int_to_ptr.vmem [resolvable:$true] %s264
      %s266 = sshll.u32 %s9, 4
      %s267 = int_to_ptr.hbm [resolvable:$true] %s266
      %269 = dma.vmem_to_hbm [thread:$0]  %s265, 64, %s267, [#allocation3]
    $region41: #{_lambda_.5} parent=1 // pred_fallthru
      _
    // Predicated region
    $region42: #{_lambda_.5} parent=1 // pred_check
      _
    $region43: #{_lambda_.5} parent=1 // pred_check_branch
      %271 = sbr.rel (0) target = $region45
    $region44: #{_lambda_.5} parent=1 // pred_region
      %273 = dma.done [#allocation3], 64
    $region45: #{_lambda_.5} parent=1 // pred_fallthru
      _
    %274 = vsyncpa [#allocation3], 1

// kernel: _lambda_.4
$region0: #{_lambda_.4}
  #allocation0 [shape = 'u32[]', space=smem, size = 0x4, offset = 0x4, fixed_abs, tag = 'smem constant byte address 0x4 - core index']
  #allocation1 [shape = 'u32[72,128]{1,0:T(1,128)}', space=vmem, size = 0x9000, scoped, tag = 'internal scratch']
  %s0 = inlined_call_operand.vmem [shape: bf16[512,512], index: 0, kind: input, shape index: {}]
  %s1 = inlined_call_operand.vmem [shape: bf16[512,256], index: 1, kind: input, shape index: {}]
  %s2 = inlined_call_operand.vmem [shape: f32[512,3], index: 2, kind: input, shape index: {}]
  %s3 = inlined_call_operand.vmem [shape: f32[3,512], index: 3, kind: input, shape index: {}]
  %s4 = inlined_call_operand.vmem [shape: f32[256,256], index: 4, kind: input, shape index: {}]
  %s5 = inlined_call_operand.vmem [shape: f32[256,256], index: 5, kind: input, shape index: {}]
  %s6 = inlined_call_operand.vmem [shape: f32[1,256], index: 6, kind: input, shape index: {}]
  %s7 = inlined_call_operand.vmem [shape: f32[1,256], index: 7, kind: input, shape index: {}]
  %s8 = inlined_call_operand.vmem [shape: f32[1,256], index: 8, kind: input, shape index: {}]
  %s9 = inlined_call_operand.vmem [shape: f32[3,128], index: 9, kind: input, shape index: {}]
  %s10 = inlined_call_operand.vmem [shape: f32[2,3,256], index: 10, kind: output, shape index: {0}]
  %s11 = inlined_call_operand.vmem [shape: f32[2,3,128], index: 11, kind: output, shape index: {1}]
  %s12 = inlined_call_operand.vmem [shape: f32[2,3,128], index: 12, kind: output, shape index: {2}]
  %13 = xla_tuple %s10, %s11, %s12
  %s14 = sld [smem:[#allocation0]]
  $region93: #{_lambda_.4} parent=0
    _
  %s16 = ssub.s32 1, %s14
  %s17 = scalar_select 0, %s16, %s14
  loop: start=0, step=1, limit=6
  $region2: #{_lambda_.4} parent=0 // loop_pre_header
    _
  $region3: #{_lambda_.4} parent=0 // loop_header
    %s19 = sphi 0, %s23
    %p20 = scmp.ge.s32.totalorder %s19, 6
    %s26 = sphi 0, %s38
    %s27 = sphi 0, %s34
    %s28 = sphi 0, %s26
    %s29 = sphi 0, %s27
    %s30 = sphi 0, %s28
    %s31 = sphi 0, %s29
    %s45 = sphi 0, %s47
    %s48 = sphi 0, %s45
    %s49 = sphi 0, %s48
    %s65 = sphi 0, %s49
    %s69 = sphi 0, %s69
    %s71 = sphi 0, %s69
    %s72 = sphi 0, %s71
    %s86 = sphi 0, %s72
    %s96 = sphi 0, %s98
    %s99 = sphi 0, %s96
    %s100 = sphi 0, %s99
    %s116 = sphi 0, %s100
    %s126 = sphi 0, %s128
    %s129 = sphi 0, %s126
    %s130 = sphi 0, %s129
    %s146 = sphi 0, %s130
    %s150 = sphi 0, %s150
    %s152 = sphi 0, %s150
    %s153 = sphi 0, %s152
    %s167 = sphi 0, %s153
    %s171 = sphi 0, %s171
    %s173 = sphi 0, %s171
    %s174 = sphi 0, %s173
    %s188 = sphi 0, %s174
    %s192 = sphi 0, %s192
    %s194 = sphi 0, %s192
    %s195 = sphi 0, %s194
    %s209 = sphi 0, %s195
    %s213 = sphi 0, %s213
    %s215 = sphi 0, %s213
    %s216 = sphi 0, %s215
    %s230 = sphi 0, %s216
    %s234 = sphi 0, %s234
    %s236 = sphi 0, %s234
    %s237 = sphi 0, %s236
    %s251 = sphi 0, %s237
    %s255 = sphi 0, %s255
    %s257 = sphi 0, %s255
    %s258 = sphi 0, %s257
    %s272 = sphi 0, %s258
    %s278 = sphi 0, %s280
    %s281 = sphi 0, %s278
    %s282 = sphi 0, %s281
    %s298 = sphi 0, %s282
    %s304 = sphi 0, %s306
    %s307 = sphi 0, %s304
    %s308 = sphi 0, %s307
    %s324 = sphi 0, %s308
    %s330 = sphi 0, %s332
    %s333 = sphi 0, %s330
    %s334 = sphi 0, %s333
    %s350 = sphi 0, %s334
  $region4: #{_lambda_.4} parent=0 // loop_header_branch
    %22 = sbr.rel (%p20) target = $region8
  $region5: #{_lambda_.4} parent=0 // loop_body
    %s24 = ssub.s32 %s19, 1
    %s25 = ssub.s32 %s19, 2
    %s32 = sadd.s32 1, %s27
    %p33 = scmp.ge.s32.totalorder %s32, 2
    %s34 = scalar_select %p33, 0, %s32
    %s35 = sadd.s32 1, %s26
    %s36 = scalar_select %p33, %s35, %s26
    %p37 = scmp.ge.s32.totalorder %s36, 2
    %s38 = scalar_select %p37, 0, %s36
    %s39 = smul.u32 %s26, 2
    %s40 = sadd.s32 %s39, %s27
    %s41 = smul.u32 %s38, 2
    %s42 = sadd.s32 %s41, %s34
    %s43 = ssub.s32 %s40, %s42
    %p44 = scmp.eq.s32.totalorder %s43, 0
    %s46 = sadd.s32 %s45, 1
    %s47 = scalar_select %p44, %s45, %s46
    %p50 = pneg %p44
    %p51 = scmp.eq.s32.totalorder %s19, 3
    %p52 = por %p50, %p51
    %p53 = scmp.ne.s32.totalorder %s45, %s48
    %p54 = scmp.eq.s32.totalorder %s19, 0
    %p55 = por %p53, %p54
    %p56 = scmp.ne.s32.totalorder %s45, %s48
    %p57 = scmp.eq.s32.totalorder %s24, 3
    %p58 = por %p56, %p57
    %p59 = scmp.ne.s32.totalorder %s48, %s49
    %p60 = scmp.eq.s32.totalorder %s24, 0
    %p61 = por %p59, %p60
    %p62 = scmp.ne.s32.totalorder %s48, %s49
    %p63 = scmp.eq.s32.totalorder %s25, 3
    %p64 = por %p62, %p63
    %p66 = scmp.ne.s32.totalorder %s49, %s65
    %p67 = scmp.eq.s32.totalorder %s25, 0
    %p68 = por %p66, %p67
    %s70 = sadd.s32 %s69, 1
    %p73 = scmp.eq.s32.totalorder %s19, 3
    %p74 = scmp.ne.s32.totalorder %s69, %s71
    %p75 = scmp.eq.s32.totalorder %s19, 0
    %p76 = por %p74, %p75
    %p77 = scmp.ne.s32.totalorder %s69, %s71
    %p78 = scmp.eq.s32.totalorder %s24, 3
    %p79 = por %p77, %p78
    %p80 = scmp.ne.s32.totalorder %s71, %s72
    %p81 = scmp.eq.s32.totalorder %s24, 0
    %p82 = por %p80, %p81
    %p83 = scmp.ne.s32.totalorder %s71, %s72
    %p84 = scmp.eq.s32.totalorder %s25, 3
    %p85 = por %p83, %p84
    %p87 = scmp.ne.s32.totalorder %s72, %s86
    %p88 = scmp.eq.s32.totalorder %s25, 0
    %p89 = por %p87, %p88
    %s90 = smul.u32 %s26, 2
    %s91 = sadd.s32 %s90, %s27
    %s92 = smul.u32 %s38, 2
    %s93 = sadd.s32 %s92, %s34
    %s94 = ssub.s32 %s91, %s93
    %p95 = scmp.eq.s32.totalorder %s94, 0
    %s97 = sadd.s32 %s96, 1
    %s98 = scalar_select %p95, %s96, %s97
    %p101 = pneg %p95
    %p102 = scmp.eq.s32.totalorder %s19, 3
    %p103 = por %p101, %p102
    %p104 = scmp.ne.s32.totalorder %s96, %s99
    %p105 = scmp.eq.s32.totalorder %s19, 0
    %p106 = por %p104, %p105
    %p107 = scmp.ne.s32.totalorder %s96, %s99
    %p108 = scmp.eq.s32.totalorder %s24, 3
    %p109 = por %p107, %p108
    %p110 = scmp.ne.s32.totalorder %s99, %s100
    %p111 = scmp.eq.s32.totalorder %s24, 0
    %p112 = por %p110, %p111
    %p113 = scmp.ne.s32.totalorder %s99, %s100
    %p114 = scmp.eq.s32.totalorder %s25, 3
    %p115 = por %p113, %p114
    %p117 = scmp.ne.s32.totalorder %s100, %s116
    %p118 = scmp.eq.s32.totalorder %s25, 0
    %p119 = por %p117, %p118
    %s120 = smul.u32 %s26, 2
    %s121 = sadd.s32 %s120, %s27
    %s122 = smul.u32 %s38, 2
    %s123 = sadd.s32 %s122, %s34
    %s124 = ssub.s32 %s121, %s123
    %p125 = scmp.eq.s32.totalorder %s124, 0
    %s127 = sadd.s32 %s126, 1
    %s128 = scalar_select %p125, %s126, %s127
    %p131 = pneg %p125
    %p132 = scmp.eq.s32.totalorder %s19, 3
    %p133 = por %p131, %p132
    %p134 = scmp.ne.s32.totalorder %s126, %s129
    %p135 = scmp.eq.s32.totalorder %s19, 0
    %p136 = por %p134, %p135
    %p137 = scmp.ne.s32.totalorder %s126, %s129
    %p138 = scmp.eq.s32.totalorder %s24, 3
    %p139 = por %p137, %p138
    %p140 = scmp.ne.s32.totalorder %s129, %s130
    %p141 = scmp.eq.s32.totalorder %s24, 0
    %p142 = por %p140, %p141
    %p143 = scmp.ne.s32.totalorder %s129, %s130
    %p144 = scmp.eq.s32.totalorder %s25, 3
    %p145 = por %p143, %p144
    %p147 = scmp.ne.s32.totalorder %s130, %s146
    %p148 = scmp.eq.s32.totalorder %s25, 0
    %p149 = por %p147, %p148
    %s151 = sadd.s32 %s150, 1
    %p154 = scmp.eq.s32.totalorder %s19, 3
    %p155 = scmp.ne.s32.totalorder %s150, %s152
    %p156 = scmp.eq.s32.totalorder %s19, 0
    %p157 = por %p155, %p156
    %p158 = scmp.ne.s32.totalorder %s150, %s152
    %p159 = scmp.eq.s32.totalorder %s24, 3
    %p160 = por %p158, %p159
    %p161 = scmp.ne.s32.totalorder %s152, %s153
    %p162 = scmp.eq.s32.totalorder %s24, 0
    %p163 = por %p161, %p162
    %p164 = scmp.ne.s32.totalorder %s152, %s153
    %p165 = scmp.eq.s32.totalorder %s25, 3
    %p166 = por %p164, %p165
    %p168 = scmp.ne.s32.totalorder %s153, %s167
    %p169 = scmp.eq.s32.totalorder %s25, 0
    %p170 = por %p168, %p169
    %s172 = sadd.s32 %s171, 1
    %p175 = scmp.eq.s32.totalorder %s19, 3
    %p176 = scmp.ne.s32.totalorder %s171, %s173
    %p177 = scmp.eq.s32.totalorder %s19, 0
    %p178 = por %p176, %p177
    %p179 = scmp.ne.s32.totalorder %s171, %s173
    %p180 = scmp.eq.s32.totalorder %s24, 3
    %p181 = por %p179, %p180
    %p182 = scmp.ne.s32.totalorder %s173, %s174
    %p183 = scmp.eq.s32.totalorder %s24, 0
    %p184 = por %p182, %p183
    %p185 = scmp.ne.s32.totalorder %s173, %s174
    %p186 = scmp.eq.s32.totalorder %s25, 3
    %p187 = por %p185, %p186
    %p189 = scmp.ne.s32.totalorder %s174, %s188
    %p190 = scmp.eq.s32.totalorder %s25, 0
    %p191 = por %p189, %p190
    %s193 = sadd.s32 %s192, 1
    %p196 = scmp.eq.s32.totalorder %s19, 3
    %p197 = scmp.ne.s32.totalorder %s192, %s194
    %p198 = scmp.eq.s32.totalorder %s19, 0
    %p199 = por %p197, %p198
    %p200 = scmp.ne.s32.totalorder %s192, %s194
    %p201 = scmp.eq.s32.totalorder %s24, 3
    %p202 = por %p200, %p201
    %p203 = scmp.ne.s32.totalorder %s194, %s195
    %p204 = scmp.eq.s32.totalorder %s24, 0
    %p205 = por %p203, %p204
    %p206 = scmp.ne.s32.totalorder %s194, %s195
    %p207 = scmp.eq.s32.totalorder %s25, 3
    %p208 = por %p206, %p207
    %p210 = scmp.ne.s32.totalorder %s195, %s209
    %p211 = scmp.eq.s32.totalorder %s25, 0
    %p212 = por %p210, %p211
    %s214 = sadd.s32 %s213, 1
    %p217 = scmp.eq.s32.totalorder %s19, 3
    %p218 = scmp.ne.s32.totalorder %s213, %s215
    %p219 = scmp.eq.s32.totalorder %s19, 0
    %p220 = por %p218, %p219
    %p221 = scmp.ne.s32.totalorder %s213, %s215
    %p222 = scmp.eq.s32.totalorder %s24, 3
    %p223 = por %p221, %p222
    %p224 = scmp.ne.s32.totalorder %s215, %s216
    %p225 = scmp.eq.s32.totalorder %s24, 0
    %p226 = por %p224, %p225
    %p227 = scmp.ne.s32.totalorder %s215, %s216
    %p228 = scmp.eq.s32.totalorder %s25, 3
    %p229 = por %p227, %p228
    %p231 = scmp.ne.s32.totalorder %s216, %s230
    %p232 = scmp.eq.s32.totalorder %s25, 0
    %p233 = por %p231, %p232
    %s235 = sadd.s32 %s234, 1
    %p238 = scmp.eq.s32.totalorder %s19, 3
    %p239 = scmp.ne.s32.totalorder %s234, %s236
    %p240 = scmp.eq.s32.totalorder %s19, 0
    %p241 = por %p239, %p240
    %p242 = scmp.ne.s32.totalorder %s234, %s236
    %p243 = scmp.eq.s32.totalorder %s24, 3
    %p244 = por %p242, %p243
    %p245 = scmp.ne.s32.totalorder %s236, %s237
    %p246 = scmp.eq.s32.totalorder %s24, 0
    %p247 = por %p245, %p246
    %p248 = scmp.ne.s32.totalorder %s236, %s237
    %p249 = scmp.eq.s32.totalorder %s25, 3
    %p250 = por %p248, %p249
    %p252 = scmp.ne.s32.totalorder %s237, %s251
    %p253 = scmp.eq.s32.totalorder %s25, 0
    %p254 = por %p252, %p253
    %s256 = sadd.s32 %s255, 1
    %p259 = scmp.eq.s32.totalorder %s19, 3
    %p260 = scmp.ne.s32.totalorder %s255, %s257
    %p261 = scmp.eq.s32.totalorder %s19, 0
    %p262 = por %p260, %p261
    %p263 = scmp.ne.s32.totalorder %s255, %s257
    %p264 = scmp.eq.s32.totalorder %s24, 3
    %p265 = por %p263, %p264
    %p266 = scmp.ne.s32.totalorder %s257, %s258
    %p267 = scmp.eq.s32.totalorder %s24, 0
    %p268 = por %p266, %p267
    %p269 = scmp.ne.s32.totalorder %s257, %s258
    %p270 = scmp.eq.s32.totalorder %s25, 3
    %p271 = por %p269, %p270
    %p273 = scmp.ne.s32.totalorder %s258, %s272
    %p274 = scmp.eq.s32.totalorder %s25, 0
    %p275 = por %p273, %p274
    %s276 = ssub.s32 %s26, %s38
    %p277 = scmp.eq.s32.totalorder %s276, 0
    %s279 = sadd.s32 %s278, 1
    %s280 = scalar_select %p277, %s278, %s279
    %p283 = pneg %p277
    %p284 = scmp.eq.s32.totalorder %s19, 3
    %p285 = por %p283, %p284
    %p286 = scmp.ne.s32.totalorder %s278, %s281
    %p287 = scmp.eq.s32.totalorder %s19, 0
    %p288 = por %p286, %p287
    %p289 = scmp.ne.s32.totalorder %s278, %s281
    %p290 = scmp.eq.s32.totalorder %s24, 3
    %p291 = por %p289, %p290
    %p292 = scmp.ne.s32.totalorder %s281, %s282
    %p293 = scmp.eq.s32.totalorder %s24, 0
    %p294 = por %p292, %p293
    %p295 = scmp.ne.s32.totalorder %s281, %s282
    %p296 = scmp.eq.s32.totalorder %s25, 3
    %p297 = por %p295, %p296
    %p299 = scmp.ne.s32.totalorder %s282, %s298
    %p300 = scmp.eq.s32.totalorder %s25, 0
    %p301 = por %p299, %p300
    %s302 = ssub.s32 %s26, %s38
    %p303 = scmp.eq.s32.totalorder %s302, 0
    %s305 = sadd.s32 %s304, 1
    %s306 = scalar_select %p303, %s304, %s305
    %p309 = pneg %p303
    %p310 = scmp.eq.s32.totalorder %s19, 3
    %p311 = por %p309, %p310
    %p312 = scmp.ne.s32.totalorder %s304, %s307
    %p313 = scmp.eq.s32.totalorder %s19, 0
    %p314 = por %p312, %p313
    %p315 = scmp.ne.s32.totalorder %s304, %s307
    %p316 = scmp.eq.s32.totalorder %s24, 3
    %p317 = por %p315, %p316
    %p318 = scmp.ne.s32.totalorder %s307, %s308
    %p319 = scmp.eq.s32.totalorder %s24, 0
    %p320 = por %p318, %p319
    %p321 = scmp.ne.s32.totalorder %s307, %s308
    %p322 = scmp.eq.s32.totalorder %s25, 3
    %p323 = por %p321, %p322
    %p325 = scmp.ne.s32.totalorder %s308, %s324
    %p326 = scmp.eq.s32.totalorder %s25, 0
    %p327 = por %p325, %p326
    %s328 = ssub.s32 %s26, %s38
    %p329 = scmp.eq.s32.totalorder %s328, 0
    %s331 = sadd.s32 %s330, 1
    %s332 = scalar_select %p329, %s330, %s331
    %p335 = pneg %p329
    %p336 = scmp.eq.s32.totalorder %s19, 3
    %p337 = por %p335, %p336
    %p338 = scmp.ne.s32.totalorder %s330, %s333
    %p339 = scmp.eq.s32.totalorder %s19, 0
    %p340 = por %p338, %p339
    %p341 = scmp.ne.s32.totalorder %s330, %s333
    %p342 = scmp.eq.s32.totalorder %s24, 3
    %p343 = por %p341, %p342
    %p344 = scmp.ne.s32.totalorder %s333, %s334
    %p345 = scmp.eq.s32.totalorder %s24, 0
    %p346 = por %p344, %p345
    %p347 = scmp.ne.s32.totalorder %s333, %s334
    %p348 = scmp.eq.s32.totalorder %s25, 3
    %p349 = por %p347, %p348
    %p351 = scmp.ne.s32.totalorder %s334, %s350
    %p352 = scmp.eq.s32.totalorder %s25, 0
    %p353 = por %p351, %p352
    %p354 = scmp.le.s32.totalorder 1, %s19
    %p355 = scmp.lt.s32.totalorder %s19, 5
    %p356 = pnand %p354, %p355
    %p357 = pneg %p356
    // Predicated region
    $region9: #{_lambda_.4} parent=5 // pred_check
      _
    $region10: #{_lambda_.4} parent=5 // pred_check_branch
      %359 = sbr.rel (%p356) target = $region12
    $region11: #{_lambda_.4} parent=5 // pred_region
      %s360 = ssub.s32 %s19, 1
      // Predicated region
      $region13: #{_lambda_.4} parent=11 // pred_check
        %p361 = pneg %p82
      $region14: #{_lambda_.4} parent=11 // pred_check_branch
        %363 = sbr.rel (%p361) target = $region16
      $region15: #{_lambda_.4} parent=11 // pred_region
        _
      $region16: #{_lambda_.4} parent=11 // pred_fallthru
        _
      // Predicated region
      $region17: #{_lambda_.4} parent=11 // pred_check
        %p364 = pneg %p163
      $region18: #{_lambda_.4} parent=11 // pred_check_branch
        %366 = sbr.rel (%p364) target = $region20
      $region19: #{_lambda_.4} parent=11 // pred_region
        _
      $region20: #{_lambda_.4} parent=11 // pred_fallthru
        _
      // Predicated region
      $region21: #{_lambda_.4} parent=11 // pred_check
        %p367 = pneg %p184
      $region22: #{_lambda_.4} parent=11 // pred_check_branch
        %369 = sbr.rel (%p367) target = $region24
      $region23: #{_lambda_.4} parent=11 // pred_region
        _
      $region24: #{_lambda_.4} parent=11 // pred_fallthru
        _
      // Predicated region
      $region25: #{_lambda_.4} parent=11 // pred_check
        %p370 = pneg %p205
      $region26: #{_lambda_.4} parent=11 // pred_check_branch
        %372 = sbr.rel (%p370) target = $region28
      $region27: #{_lambda_.4} parent=11 // pred_region
        _
      $region28: #{_lambda_.4} parent=11 // pred_fallthru
        _
      // Predicated region
      $region29: #{_lambda_.4} parent=11 // pred_check
        %p373 = pneg %p226
      $region30: #{_lambda_.4} parent=11 // pred_check_branch
        %375 = sbr.rel (%p373) target = $region32
      $region31: #{_lambda_.4} parent=11 // pred_region
        _
      $region32: #{_lambda_.4} parent=11 // pred_fallthru
        _
      // Predicated region
      $region33: #{_lambda_.4} parent=11 // pred_check
        %p376 = pneg %p247
      $region34: #{_lambda_.4} parent=11 // pred_check_branch
        %378 = sbr.rel (%p376) target = $region36
      $region35: #{_lambda_.4} parent=11 // pred_region
        _
      $region36: #{_lambda_.4} parent=11 // pred_fallthru
        _
      // Predicated region
      $region37: #{_lambda_.4} parent=11 // pred_check
        %p379 = pneg %p268
      $region38: #{_lambda_.4} parent=11 // pred_check_branch
        %381 = sbr.rel (%p379) target = $region40
      $region39: #{_lambda_.4} parent=11 // pred_region
        _
      $region40: #{_lambda_.4} parent=11 // pred_fallthru
        _
    $region12: #{_lambda_.4} parent=5 // pred_fallthru
      _
    %p382 = scmp.lt.s32.totalorder %s19, 4
    // Predicated region
    $region41: #{_lambda_.4} parent=5 // pred_check
      %p383 = pneg %p382
    $region42: #{_lambda_.4} parent=5 // pred_check_branch
      %385 = sbr.rel (%p383) target = $region44
    $region43: #{_lambda_.4} parent=5 // pred_region
      // Predicated region
      $region45: #{_lambda_.4} parent=43 // pred_check
        %p386 = pneg %p55
      $region46: #{_lambda_.4} parent=43 // pred_check_branch
        %388 = sbr.rel (%p386) target = $region48
      $region47: #{_lambda_.4} parent=43 // pred_region
        %s389 = smul.u32 %s26, 2
        %s390 = sadd.s32 %s389, %s27
        %s391 = smul.u32 16, %s390
        %p392 = scmp.lt.s32.totalorder %s391, 63
        %s393 = scalar_select %p392, %s391, 63
        %s394 = smul.addr %s393, 4
        %s395 = smul.addr %s394, 4
        %s396 = scalar_lea.vmem %s0, %s395
        %s397 = smul.u32 %s26, 2
        %s398 = sadd.s32 %s397, %s27
        %s399 = smul.u32 16, %s398
      $region48: #{_lambda_.4} parent=43 // pred_fallthru
        _
      // Predicated region
      $region49: #{_lambda_.4} parent=43 // pred_check
        %p400 = pneg %p106
      $region50: #{_lambda_.4} parent=43 // pred_check_branch
        %402 = sbr.rel (%p400) target = $region52
      $region51: #{_lambda_.4} parent=43 // pred_region
        %s403 = smul.u32 %s26, 2
        %s404 = sadd.s32 %s403, %s27
        %s405 = smul.u32 16, %s404
        %p406 = scmp.lt.s32.totalorder %s405, 63
        %s407 = scalar_select %p406, %s405, 63
        %s408 = smul.addr %s407, 8
        %s409 = scalar_lea.vmem %s2, %s408
        %s410 = smul.u32 %s26, 2
        %s411 = sadd.s32 %s410, %s27
        %s412 = smul.u32 16, %s411
      $region52: #{_lambda_.4} parent=43 // pred_fallthru
        _
      // Predicated region
      $region53: #{_lambda_.4} parent=43 // pred_check
        %p413 = pneg %p136
      $region54: #{_lambda_.4} parent=43 // pred_check_branch
        %415 = sbr.rel (%p413) target = $region56
      $region55: #{_lambda_.4} parent=43 // pred_region
        %s416 = smul.u32 %s26, 2
        %s417 = sadd.s32 %s416, %s27
        %p418 = scmp.lt.s32.totalorder %s417, 3
        %s419 = scalar_select %p418, %s417, 3
        %s420 = smul.addr %s419, 4
        %s421 = scalar_lea.vmem %s3, %s420
        %s422 = smul.u32 %s26, 2
        %s423 = sadd.s32 %s422, %s27
      $region56: #{_lambda_.4} parent=43 // pred_fallthru
        _
    $region44: #{_lambda_.4} parent=5 // pred_fallthru
      _
    %p424 = scmp.le.s32.totalorder 1, %s19
    %p425 = scmp.lt.s32.totalorder %s19, 5
    %p426 = pnand %p424, %p425
    %p427 = pneg %p426
    // Predicated region
    $region57: #{_lambda_.4} parent=5 // pred_check
      _
    $region58: #{_lambda_.4} parent=5 // pred_check_branch
      %429 = sbr.rel (%p426) target = $region60
    $region59: #{_lambda_.4} parent=5 // pred_region
      %s430 = ssub.s32 %s19, 1
      %s431 = smul.u32 %s28, 2
      %s432 = sadd.s32 %s431, %s29
      %s433 = smul.u32 16, %s432
      %p434 = scmp.lt.s32.totalorder %s433, 63
      %s435 = scalar_select %p434, %s433, 63
      %s436 = smul.addr %s435, 4
      %s437 = smul.addr %s436, 4
      %s438 = scalar_lea.vmem %s0, %s437
      %p439 = pneg %p61
      %p440 = pneg %p58
      %p441 = pneg %p82
      %p442 = pneg %p79
      %s443 = smul.u32 %s28, 2
      %s444 = sadd.s32 %s443, %s29
      %s445 = smul.u32 16, %s444
      %p446 = scmp.lt.s32.totalorder %s445, 63
      %s447 = scalar_select %p446, %s445, 63
      %s448 = smul.addr %s447, 8
      %s449 = scalar_lea.vmem %s2, %s448
      %p450 = pneg %p112
      %p451 = pneg %p109
      %s452 = smul.u32 %s28, 2
      %s453 = sadd.s32 %s452, %s29
      %p454 = scmp.lt.s32.totalorder %s453, 3
      %s455 = scalar_select %p454, %s453, 3
      %s456 = smul.addr %s455, 4
      %s457 = scalar_lea.vmem %s3, %s456
      %p458 = pneg %p142
      %p459 = pneg %p139
      %p460 = pneg %p163
      %p461 = pneg %p160
      %p462 = pneg %p184
      %p463 = pneg %p181
      %p464 = pneg %p205
      %p465 = pneg %p202
      %p466 = pneg %p226
      %p467 = pneg %p223
      %p468 = pneg %p247
      %p469 = pneg %p244
      %p470 = pneg %p268
      %p471 = pneg %p265
      %p472 = pneg %p294
      %p473 = pneg %p291
      %p474 = scmp.lt.s32.totalorder %s28, 1
      %s475 = scalar_select %p474, %s28, 1
      %s476 = smul.addr %s475, 2
      %s477 = smul.addr %s476, 4
      %s478 = scalar_lea.vmem %s10, %s477
      %p479 = pneg %p320
      %p480 = pneg %p317
      %p481 = scmp.lt.s32.totalorder %s28, 1
      %s482 = scalar_select %p481, %s28, 1
      %s483 = smul.addr %s482, 4
      %s484 = scalar_lea.vmem %s11, %s483
      %p485 = pneg %p346
      %p486 = pneg %p343
      %p487 = scmp.lt.s32.totalorder %s28, 1
      %s488 = scalar_select %p487, %s28, 1
      %s489 = smul.addr %s488, 4
      %s490 = scalar_lea.vmem %s12, %s489
      %s491 = smul.u32 %s28, 2
      %s492 = sadd.s32 %s491, %s29
      %s493 = smul.u32 16, %s492
      %p494 = scmp.lt.s32.totalorder %s493, 63
      %s495 = scalar_select %p494, %s493, 63
      %s496 = smul.addr %s495, 4
      %s497 = smul.addr %s496, 4
      %s498 = scalar_lea.vmem %s0, %s497
      %s499 = smul.u32 %s28, 2
      %s500 = sadd.s32 %s499, %s29
      %s501 = smul.u32 16, %s500
      %s502 = smul.u32 %s28, 2
      %s503 = sadd.s32 %s502, %s29
      %s504 = smul.u32 16, %s503
      %p505 = scmp.lt.s32.totalorder %s504, 63
      %s506 = scalar_select %p505, %s504, 63
      %s507 = smul.addr %s506, 8
      %s508 = scalar_lea.vmem %s2, %s507
      %s509 = smul.u32 %s28, 2
      %s510 = sadd.s32 %s509, %s29
      %s511 = smul.u32 16, %s510
      %s512 = smul.u32 %s28, 2
      %s513 = sadd.s32 %s512, %s29
      %p514 = scmp.lt.s32.totalorder %s513, 3
      %s515 = scalar_select %p514, %s513, 3
      %s516 = smul.addr %s515, 4
      %s517 = scalar_lea.vmem %s3, %s516
      %s518 = smul.u32 %s28, 2
      %s519 = sadd.s32 %s518, %s29
      %p520 = scmp.lt.s32.totalorder %s28, 1
      %s521 = scalar_select %p520, %s28, 1
      %s522 = smul.addr %s521, 2
      %s523 = smul.addr %s522, 4
      %s524 = scalar_lea.vmem %s10, %s523
      %p525 = scmp.lt.s32.totalorder %s28, 1
      %s526 = scalar_select %p525, %s28, 1
      %s527 = smul.addr %s526, 4
      %s528 = scalar_lea.vmem %s11, %s527
      %p529 = scmp.lt.s32.totalorder %s28, 1
      %s530 = scalar_select %p529, %s28, 1
      %s531 = smul.addr %s530, 4
      %s532 = scalar_lea.vmem %s12, %s531
      %s533 = smul.u32 %s28, 2
      %s534 = sadd.s32 %s533, %s29
      %s535 = smul.u32 %s534, 128
      %p536 = scmp.eq.s32.totalorder %s29, 0
      // Predicated region
      $region61: #{_lambda_.4} parent=59 // pred_check
        %p537 = pneg %p536
      $region62: #{_lambda_.4} parent=59 // pred_check_branch
        %539 = sbr.rel (%p537) target = $region64
      $region63: #{_lambda_.4} parent=59 // pred_region
        %540 = vst [vmem:[%s524] sm:$0x77] 0.0
        %541 = vst [vmem:[%s528] sm:$0x7] 0.0
        %542 = vst [vmem:[%s532] sm:$0x7] 0.0
      $region64: #{_lambda_.4} parent=59 // pred_fallthru
        _
      %v543 = vld [vmem:[%s498] sm:$0xff]
      %v544 = vld [vmem:[%s498 + $0x8] sm:$0xff]
      %v545 = vld [vmem:[%s498 + $0x10] sm:$0xff]
      %v546 = vld [vmem:[%s498 + $0x18] sm:$0xff]
      %v547 = vld [vmem:[%s498 + $0x20] sm:$0xff]
      %v548 = vld [vmem:[%s498 + $0x28] sm:$0xff]
      %v549 = vld [vmem:[%s498 + $0x30] sm:$0xff]
      %v550 = vld [vmem:[%s498 + $0x38] sm:$0xff]
      %v551 = vld [vmem:[%s498 + $0x40] sm:$0xff]
      %v552 = vld [vmem:[%s498 + $0x48] sm:$0xff]
      %v553 = vld [vmem:[%s498 + $0x50] sm:$0xff]
      %v554 = vld [vmem:[%s498 + $0x58] sm:$0xff]
      %v555 = vld [vmem:[%s498 + $0x60] sm:$0xff]
      %v556 = vld [vmem:[%s498 + $0x68] sm:$0xff]
      %v557 = vld [vmem:[%s498 + $0x70] sm:$0xff]
      %v558 = vld [vmem:[%s498 + $0x78] sm:$0xff]
      %v559 = vld [vmem:[%s498 + $0x80] sm:$0xff]
      %v560 = vld [vmem:[%s498 + $0x88] sm:$0xff]
      %v561 = vld [vmem:[%s498 + $0x90] sm:$0xff]
      %v562 = vld [vmem:[%s498 + $0x98] sm:$0xff]
      %v563 = vld [vmem:[%s498 + $0xa0] sm:$0xff]
      %v564 = vld [vmem:[%s498 + $0xa8] sm:$0xff]
      %v565 = vld [vmem:[%s498 + $0xb0] sm:$0xff]
      %v566 = vld [vmem:[%s498 + $0xb8] sm:$0xff]
      %v567 = vld [vmem:[%s498 + $0xc0] sm:$0xff]
      %v568 = vld [vmem:[%s498 + $0xc8] sm:$0xff]
      %v569 = vld [vmem:[%s498 + $0xd0] sm:$0xff]
      %v570 = vld [vmem:[%s498 + $0xd8] sm:$0xff]
      %v571 = vld [vmem:[%s498 + $0xe0] sm:$0xff]
      %v572 = vld [vmem:[%s498 + $0xe8] sm:$0xff]
      %v573 = vld [vmem:[%s498 + $0xf0] sm:$0xff]
      %v574 = vld [vmem:[%s498 + $0xf8] sm:$0xff]
      %v575 = vld [vmem:[%s1] sm:$0xff]
      %v576 = vld [vmem:[%s1 + $0x8] sm:$0xff]
      %v577 = vld [vmem:[%s1 + $0x10] sm:$0xff]
      %v578 = vld [vmem:[%s1 + $0x18] sm:$0xff]
      %v579 = vld [vmem:[%s1 + $0x20] sm:$0xff]
      %v580 = vld [vmem:[%s1 + $0x28] sm:$0xff]
      %v581 = vld [vmem:[%s1 + $0x30] sm:$0xff]
      %v582 = vld [vmem:[%s1 + $0x38] sm:$0xff]
      %v583 = vld [vmem:[%s1 + $0x40] sm:$0xff]
      %v584 = vld [vmem:[%s1 + $0x48] sm:$0xff]
      %v585 = vld [vmem:[%s1 + $0x50] sm:$0xff]
      %v586 = vld [vmem:[%s1 + $0x58] sm:$0xff]
      %v587 = vld [vmem:[%s1 + $0x60] sm:$0xff]
      %v588 = vld [vmem:[%s1 + $0x68] sm:$0xff]
      %v589 = vld [vmem:[%s1 + $0x70] sm:$0xff]
      %v590 = vld [vmem:[%s1 + $0x78] sm:$0xff]
      %v591 = vld [vmem:[%s1 + $0x80] sm:$0xff]
      %v592 = vld [vmem:[%s1 + $0x88] sm:$0xff]
      %v593 = vld [vmem:[%s1 + $0x90] sm:$0xff]
      %v594 = vld [vmem:[%s1 + $0x98] sm:$0xff]
      %v595 = vld [vmem:[%s1 + $0xa0] sm:$0xff]
      %v596 = vld [vmem:[%s1 + $0xa8] sm:$0xff]
      %v597 = vld [vmem:[%s1 + $0xb0] sm:$0xff]
      %v598 = vld [vmem:[%s1 + $0xb8] sm:$0xff]
      %v599 = vld [vmem:[%s1 + $0xc0] sm:$0xff]
      %v600 = vld [vmem:[%s1 + $0xc8] sm:$0xff]
      %v601 = vld [vmem:[%s1 + $0xd0] sm:$0xff]
      %v602 = vld [vmem:[%s1 + $0xd8] sm:$0xff]
      %v603 = vld [vmem:[%s1 + $0xe0] sm:$0xff]
      %v604 = vld [vmem:[%s1 + $0xe8] sm:$0xff]
      %v605 = vld [vmem:[%s1 + $0xf0] sm:$0xff]
      %v606 = vld [vmem:[%s1 + $0xf8] sm:$0xff]
      %v607 = vld [vmem:[%s1 + $0x100] sm:$0xff]
      %v608 = vld [vmem:[%s1 + $0x108] sm:$0xff]
      %v609 = vld [vmem:[%s1 + $0x110] sm:$0xff]
      %v610 = vld [vmem:[%s1 + $0x118] sm:$0xff]
      %v611 = vld [vmem:[%s1 + $0x120] sm:$0xff]
      %v612 = vld [vmem:[%s1 + $0x128] sm:$0xff]
      %v613 = vld [vmem:[%s1 + $0x130] sm:$0xff]
      %v614 = vld [vmem:[%s1 + $0x138] sm:$0xff]
      %v615 = vld [vmem:[%s1 + $0x140] sm:$0xff]
      %v616 = vld [vmem:[%s1 + $0x148] sm:$0xff]
      %v617 = vld [vmem:[%s1 + $0x150] sm:$0xff]
      %v618 = vld [vmem:[%s1 + $0x158] sm:$0xff]
      %v619 = vld [vmem:[%s1 + $0x160] sm:$0xff]
      %v620 = vld [vmem:[%s1 + $0x168] sm:$0xff]
      %v621 = vld [vmem:[%s1 + $0x170] sm:$0xff]
      %v622 = vld [vmem:[%s1 + $0x178] sm:$0xff]
      %v623 = vld [vmem:[%s1 + $0x180] sm:$0xff]
      %v624 = vld [vmem:[%s1 + $0x188] sm:$0xff]
      %v625 = vld [vmem:[%s1 + $0x190] sm:$0xff]
      %v626 = vld [vmem:[%s1 + $0x198] sm:$0xff]
      %v627 = vld [vmem:[%s1 + $0x1a0] sm:$0xff]
      %v628 = vld [vmem:[%s1 + $0x1a8] sm:$0xff]
      %v629 = vld [vmem:[%s1 + $0x1b0] sm:$0xff]
      %v630 = vld [vmem:[%s1 + $0x1b8] sm:$0xff]
      %v631 = vld [vmem:[%s1 + $0x1c0] sm:$0xff]
      %v632 = vld [vmem:[%s1 + $0x1c8] sm:$0xff]
      %v633 = vld [vmem:[%s1 + $0x1d0] sm:$0xff]
      %v634 = vld [vmem:[%s1 + $0x1d8] sm:$0xff]
      %v635 = vld [vmem:[%s1 + $0x1e0] sm:$0xff]
      %v636 = vld [vmem:[%s1 + $0x1e8] sm:$0xff]
      %v637 = vld [vmem:[%s1 + $0x1f0] sm:$0xff]
      %v638 = vld [vmem:[%s1 + $0x1f8] sm:$0xff]
      %v671 = vunpack.c.l.b16 %v543
      %v672 = vunpack.c.h.b16 %v543
      %v673 = vunpack.c.l.b16 %v544
      %v674 = vunpack.c.h.b16 %v544
      %v675 = vunpack.c.l.b16 %v545
      %v676 = vunpack.c.h.b16 %v545
      %v677 = vunpack.c.l.b16 %v546
      %v678 = vunpack.c.h.b16 %v546
      %v679 = vunpack.c.l.b16 %v547
      %v680 = vunpack.c.h.b16 %v547
      %v681 = vunpack.c.l.b16 %v548
      %v682 = vunpack.c.h.b16 %v548
      %v683 = vunpack.c.l.b16 %v549
      %v684 = vunpack.c.h.b16 %v549
      %v685 = vunpack.c.l.b16 %v550
      %v686 = vunpack.c.h.b16 %v550
      %v687 = vunpack.c.l.b16 %v551
      %v688 = vunpack.c.h.b16 %v551
      %v689 = vunpack.c.l.b16 %v552
      %v690 = vunpack.c.h.b16 %v552
      %v691 = vunpack.c.l.b16 %v553
      %v692 = vunpack.c.h.b16 %v553
      %v693 = vunpack.c.l.b16 %v554
      %v694 = vunpack.c.h.b16 %v554
      %v695 = vunpack.c.l.b16 %v555
      %v696 = vunpack.c.h.b16 %v555
      %v697 = vunpack.c.l.b16 %v556
      %v698 = vunpack.c.h.b16 %v556
      %v699 = vunpack.c.l.b16 %v557
      %v700 = vunpack.c.h.b16 %v557
      %v701 = vunpack.c.l.b16 %v558
      %v702 = vunpack.c.h.b16 %v558
      %v703 = vunpack.c.l.b16 %v559
      %v704 = vunpack.c.h.b16 %v559
      %v705 = vunpack.c.l.b16 %v560
      %v706 = vunpack.c.h.b16 %v560
      %v707 = vunpack.c.l.b16 %v561
      %v708 = vunpack.c.h.b16 %v561
      %v709 = vunpack.c.l.b16 %v562
      %v710 = vunpack.c.h.b16 %v562
      %v711 = vunpack.c.l.b16 %v563
      %v712 = vunpack.c.h.b16 %v563
      %v713 = vunpack.c.l.b16 %v564
      %v714 = vunpack.c.h.b16 %v564
      %v715 = vunpack.c.l.b16 %v565
      %v716 = vunpack.c.h.b16 %v565
      %v717 = vunpack.c.l.b16 %v566
      %v718 = vunpack.c.h.b16 %v566
      %v719 = vunpack.c.l.b16 %v567
      %v720 = vunpack.c.h.b16 %v567
      %v721 = vunpack.c.l.b16 %v568
      %v722 = vunpack.c.h.b16 %v568
      %v723 = vunpack.c.l.b16 %v569
      %v724 = vunpack.c.h.b16 %v569
      %v725 = vunpack.c.l.b16 %v570
      %v726 = vunpack.c.h.b16 %v570
      %v727 = vunpack.c.l.b16 %v571
      %v728 = vunpack.c.h.b16 %v571
      %v729 = vunpack.c.l.b16 %v572
      %v730 = vunpack.c.h.b16 %v572
      %v731 = vunpack.c.l.b16 %v573
      %v732 = vunpack.c.h.b16 %v573
      %v733 = vunpack.c.l.b16 %v574
      %v734 = vunpack.c.h.b16 %v574
      %v735 = vpack.c.b16 %v675, %v671
      %v736 = vpack.c.b16 %v676, %v672
      %v737 = vpack.c.b16 %v677, %v673
      %v738 = vpack.c.b16 %v678, %v674
      %v739 = vpack.c.b16 %v683, %v679
      %v740 = vpack.c.b16 %v684, %v680
      %v741 = vpack.c.b16 %v685, %v681
      %v742 = vpack.c.b16 %v686, %v682
      %v743 = vpack.c.b16 %v691, %v687
      %v744 = vpack.c.b16 %v692, %v688
      %v745 = vpack.c.b16 %v693, %v689
      %v746 = vpack.c.b16 %v694, %v690
      %v747 = vpack.c.b16 %v699, %v695
      %v748 = vpack.c.b16 %v700, %v696
      %v749 = vpack.c.b16 %v701, %v697
      %v750 = vpack.c.b16 %v702, %v698
      %v751 = vpack.c.b16 %v707, %v703
      %v752 = vpack.c.b16 %v708, %v704
      %v753 = vpack.c.b16 %v709, %v705
      %v754 = vpack.c.b16 %v710, %v706
      %v755 = vpack.c.b16 %v715, %v711
      %v756 = vpack.c.b16 %v716, %v712
      %v757 = vpack.c.b16 %v717, %v713
      %v758 = vpack.c.b16 %v718, %v714
      %v759 = vpack.c.b16 %v723, %v719
      %v760 = vpack.c.b16 %v724, %v720
      %v761 = vpack.c.b16 %v725, %v721
      %v762 = vpack.c.b16 %v726, %v722
      %v763 = vpack.c.b16 %v731, %v727
      %v764 = vpack.c.b16 %v732, %v728
      %v765 = vpack.c.b16 %v733, %v729
      %v766 = vpack.c.b16 %v734, %v730
      %v863 = vunpack.c.l.b16 %v575
      %v864 = vunpack.c.h.b16 %v575
      %v865 = vunpack.c.l.b16 %v576
      %v866 = vunpack.c.h.b16 %v576
      %v867 = vunpack.c.l.b16 %v577
      %v868 = vunpack.c.h.b16 %v577
      %v869 = vunpack.c.l.b16 %v578
      %v870 = vunpack.c.h.b16 %v578
      %v871 = vunpack.c.l.b16 %v579
      %v872 = vunpack.c.h.b16 %v579
      %v873 = vunpack.c.l.b16 %v580
      %v874 = vunpack.c.h.b16 %v580
      %v875 = vunpack.c.l.b16 %v581
      %v876 = vunpack.c.h.b16 %v581
      %v877 = vunpack.c.l.b16 %v582
      %v878 = vunpack.c.h.b16 %v582
      %v879 = vunpack.c.l.b16 %v583
      %v880 = vunpack.c.h.b16 %v583
      %v881 = vunpack.c.l.b16 %v584
      %v882 = vunpack.c.h.b16 %v584
      %v883 = vunpack.c.l.b16 %v585
      %v884 = vunpack.c.h.b16 %v585
      %v885 = vunpack.c.l.b16 %v586
      %v886 = vunpack.c.h.b16 %v586
      %v887 = vunpack.c.l.b16 %v587
      %v888 = vunpack.c.h.b16 %v587
      %v889 = vunpack.c.l.b16 %v588
      %v890 = vunpack.c.h.b16 %v588
      %v891 = vunpack.c.l.b16 %v589
      %v892 = vunpack.c.h.b16 %v589
      %v893 = vunpack.c.l.b16 %v590
      %v894 = vunpack.c.h.b16 %v590
      %v895 = vunpack.c.l.b16 %v591
      %v896 = vunpack.c.h.b16 %v591
      %v897 = vunpack.c.l.b16 %v592
      %v898 = vunpack.c.h.b16 %v592
      %v899 = vunpack.c.l.b16 %v593
      %v900 = vunpack.c.h.b16 %v593
      %v901 = vunpack.c.l.b16 %v594
      %v902 = vunpack.c.h.b16 %v594
      %v903 = vunpack.c.l.b16 %v595
      %v904 = vunpack.c.h.b16 %v595
      %v905 = vunpack.c.l.b16 %v596
      %v906 = vunpack.c.h.b16 %v596
      %v907 = vunpack.c.l.b16 %v597
      %v908 = vunpack.c.h.b16 %v597
      %v909 = vunpack.c.l.b16 %v598
      %v910 = vunpack.c.h.b16 %v598
      %v911 = vunpack.c.l.b16 %v599
      %v912 = vunpack.c.h.b16 %v599
      %v913 = vunpack.c.l.b16 %v600
      %v914 = vunpack.c.h.b16 %v600
      %v915 = vunpack.c.l.b16 %v601
      %v916 = vunpack.c.h.b16 %v601
      %v917 = vunpack.c.l.b16 %v602
      %v918 = vunpack.c.h.b16 %v602
      %v919 = vunpack.c.l.b16 %v603
      %v920 = vunpack.c.h.b16 %v603
      %v921 = vunpack.c.l.b16 %v604
      %v922 = vunpack.c.h.b16 %v604
      %v923 = vunpack.c.l.b16 %v605
      %v924 = vunpack.c.h.b16 %v605
      %v925 = vunpack.c.l.b16 %v606
      %v926 = vunpack.c.h.b16 %v606
      %v927 = vunpack.c.l.b16 %v607
      %v928 = vunpack.c.h.b16 %v607
      %v929 = vunpack.c.l.b16 %v608
      %v930 = vunpack.c.h.b16 %v608
      %v931 = vunpack.c.l.b16 %v609
      %v932 = vunpack.c.h.b16 %v609
      %v933 = vunpack.c.l.b16 %v610
      %v934 = vunpack.c.h.b16 %v610
      %v935 = vunpack.c.l.b16 %v611
      %v936 = vunpack.c.h.b16 %v611
      %v937 = vunpack.c.l.b16 %v612
      %v938 = vunpack.c.h.b16 %v612
      %v939 = vunpack.c.l.b16 %v613
      %v940 = vunpack.c.h.b16 %v613
      %v941 = vunpack.c.l.b16 %v614
      %v942 = vunpack.c.h.b16 %v614
      %v943 = vunpack.c.l.b16 %v615
      %v944 = vunpack.c.h.b16 %v615
      %v945 = vunpack.c.l.b16 %v616
      %v946 = vunpack.c.h.b16 %v616
      %v947 = vunpack.c.l.b16 %v617
      %v948 = vunpack.c.h.b16 %v617
      %v949 = vunpack.c.l.b16 %v618
      %v950 = vunpack.c.h.b16 %v618
      %v951 = vunpack.c.l.b16 %v619
      %v952 = vunpack.c.h.b16 %v619
      %v953 = vunpack.c.l.b16 %v620
      %v954 = vunpack.c.h.b16 %v620
      %v955 = vunpack.c.l.b16 %v621
      %v956 = vunpack.c.h.b16 %v621
      %v957 = vunpack.c.l.b16 %v622
      %v958 = vunpack.c.h.b16 %v622
      %v959 = vunpack.c.l.b16 %v623
      %v960 = vunpack.c.h.b16 %v623
      %v961 = vunpack.c.l.b16 %v624
      %v962 = vunpack.c.h.b16 %v624
      %v963 = vunpack.c.l.b16 %v625
      %v964 = vunpack.c.h.b16 %v625
      %v965 = vunpack.c.l.b16 %v626
      %v966 = vunpack.c.h.b16 %v626
      %v967 = vunpack.c.l.b16 %v627
      %v968 = vunpack.c.h.b16 %v627
      %v969 = vunpack.c.l.b16 %v628
      %v970 = vunpack.c.h.b16 %v628
      %v971 = vunpack.c.l.b16 %v629
      %v972 = vunpack.c.h.b16 %v629
      %v973 = vunpack.c.l.b16 %v630
      %v974 = vunpack.c.h.b16 %v630
      %v975 = vunpack.c.l.b16 %v631
      %v976 = vunpack.c.h.b16 %v631
      %v977 = vunpack.c.l.b16 %v632
      %v978 = vunpack.c.h.b16 %v632
      %v979 = vunpack.c.l.b16 %v633
      %v980 = vunpack.c.h.b16 %v633
      %v981 = vunpack.c.l.b16 %v634
      %v982 = vunpack.c.h.b16 %v634
      %v983 = vunpack.c.l.b16 %v635
      %v984 = vunpack.c.h.b16 %v635
      %v985 = vunpack.c.l.b16 %v636
      %v986 = vunpack.c.h.b16 %v636
      %v987 = vunpack.c.l.b16 %v637
      %v988 = vunpack.c.h.b16 %v637
      %v989 = vunpack.c.l.b16 %v638
      %v990 = vunpack.c.h.b16 %v638
      %v991 = vpack.c.b16 %v865, %v863
      %v992 = vpack.c.b16 %v866, %v864
      %v993 = vpack.c.b16 %v869, %v867
      %v994 = vpack.c.b16 %v870, %v868
      %v995 = vpack.c.b16 %v873, %v871
      %v996 = vpack.c.b16 %v874, %v872
      %v997 = vpack.c.b16 %v877, %v875
      %v998 = vpack.c.b16 %v878, %v876
      %v999 = vpack.c.b16 %v881, %v879
      %v1000 = vpack.c.b16 %v882, %v880
      %v1001 = vpack.c.b16 %v885, %v883
      %v1002 = vpack.c.b16 %v886, %v884
      %v1003 = vpack.c.b16 %v889, %v887
      %v1004 = vpack.c.b16 %v890, %v888
      %v1005 = vpack.c.b16 %v893, %v891
      %v1006 = vpack.c.b16 %v894, %v892
      %v1007 = vpack.c.b16 %v897, %v895
      %v1008 = vpack.c.b16 %v898, %v896
      %v1009 = vpack.c.b16 %v901, %v899
      %v1010 = vpack.c.b16 %v902, %v900
      %v1011 = vpack.c.b16 %v905, %v903
      %v1012 = vpack.c.b16 %v906, %v904
      %v1013 = vpack.c.b16 %v909, %v907
      %v1014 = vpack.c.b16 %v910, %v908
      %v1015 = vpack.c.b16 %v913, %v911
      %v1016 = vpack.c.b16 %v914, %v912
      %v1017 = vpack.c.b16 %v917, %v915
      %v1018 = vpack.c.b16 %v918, %v916
      %v1019 = vpack.c.b16 %v921, %v919
      %v1020 = vpack.c.b16 %v922, %v920
      %v1021 = vpack.c.b16 %v925, %v923
      %v1022 = vpack.c.b16 %v926, %v924
      %v1023 = vpack.c.b16 %v929, %v927
      %v1024 = vpack.c.b16 %v930, %v928
      %v1025 = vpack.c.b16 %v933, %v931
      %v1026 = vpack.c.b16 %v934, %v932
      %v1027 = vpack.c.b16 %v937, %v935
      %v1028 = vpack.c.b16 %v938, %v936
      %v1029 = vpack.c.b16 %v941, %v939
      %v1030 = vpack.c.b16 %v942, %v940
      %v1031 = vpack.c.b16 %v945, %v943
      %v1032 = vpack.c.b16 %v946, %v944
      %v1033 = vpack.c.b16 %v949, %v947
      %v1034 = vpack.c.b16 %v950, %v948
      %v1035 = vpack.c.b16 %v953, %v951
      %v1036 = vpack.c.b16 %v954, %v952
      %v1037 = vpack.c.b16 %v957, %v955
      %v1038 = vpack.c.b16 %v958, %v956
      %v1039 = vpack.c.b16 %v961, %v959
      %v1040 = vpack.c.b16 %v962, %v960
      %v1041 = vpack.c.b16 %v965, %v963
      %v1042 = vpack.c.b16 %v966, %v964
      %v1043 = vpack.c.b16 %v969, %v967
      %v1044 = vpack.c.b16 %v970, %v968
      %v1045 = vpack.c.b16 %v973, %v971
      %v1046 = vpack.c.b16 %v974, %v972
      %v1047 = vpack.c.b16 %v977, %v975
      %v1048 = vpack.c.b16 %v978, %v976
      %v1049 = vpack.c.b16 %v981, %v979
      %v1050 = vpack.c.b16 %v982, %v980
      %v1051 = vpack.c.b16 %v985, %v983
      %v1052 = vpack.c.b16 %v986, %v984
      %v1053 = vpack.c.b16 %v989, %v987
      %v1054 = vpack.c.b16 %v990, %v988
      %1119 = vmatpush.bf16.msra.mxu0 %v1005
      %1120 = vmatpush.bf16.msra.mxu0 %v1003
      %1121 = vmatpush.bf16.msra.mxu0 %v1001
      %1122 = vmatpush.bf16.msra.mxu0 %v999
      %1123 = vmatpush.bf16.msra.mxu0 %v997
      %1124 = vmatpush.bf16.msra.mxu0 %v995
      %1125 = vmatpush.bf16.msra.mxu0 %v993
      %1126 = vmatpush.bf16.msra.mxu0 %v991
      %1127 = vmatmul.bf16.gmra.mxu0 %v735
      %v1128 = vpop.f32.mrf.mxu0
      %v1129 = vadd.f32 0.0, %v1128
      %v1130 = vpop.f32.mrf.mxu0
      %v1131 = vadd.f32 0.0, %v1130
      %1132 = vmatmul.bf16.gmra.mxu0 %v739
      %v1133 = vpop.f32.mrf.mxu0
      %v1134 = vadd.f32 0.0, %v1133
      %v1135 = vpop.f32.mrf.mxu0
      %v1136 = vadd.f32 0.0, %v1135
      %1137 = vmatmul.bf16.gmra.mxu0 %v743
      %v1138 = vpop.f32.mrf.mxu0
      %v1139 = vadd.f32 0.0, %v1138
      %v1140 = vpop.f32.mrf.mxu0
      %v1141 = vadd.f32 0.0, %v1140
      %1142 = vmatmul.bf16.gmra.mxu0 %v747
      %v1143 = vpop.f32.mrf.mxu0
      %v1144 = vadd.f32 0.0, %v1143
      %v1145 = vpop.f32.mrf.mxu0
      %v1146 = vadd.f32 0.0, %v1145
      %1147 = vmatmul.bf16.gmra.mxu0 %v751
      %v1148 = vpop.f32.mrf.mxu0
      %v1149 = vadd.f32 0.0, %v1148
      %v1150 = vpop.f32.mrf.mxu0
      %v1151 = vadd.f32 0.0, %v1150
      %1152 = vmatmul.bf16.gmra.mxu0 %v755
      %v1153 = vpop.f32.mrf.mxu0
      %v1154 = vadd.f32 0.0, %v1153
      %v1155 = vpop.f32.mrf.mxu0
      %v1156 = vadd.f32 0.0, %v1155
      %1157 = vmatmul.bf16.gmra.mxu0 %v759
      %v1158 = vpop.f32.mrf.mxu0
      %v1159 = vadd.f32 0.0, %v1158
      %v1160 = vpop.f32.mrf.mxu0
      %v1161 = vadd.f32 0.0, %v1160
      %1162 = vmatmul.bf16.gmra.mxu0 %v763
      %v1163 = vpop.f32.mrf.mxu0
      %v1164 = vadd.f32 0.0, %v1163
      %v1165 = vpop.f32.mrf.mxu0
      %v1166 = vadd.f32 0.0, %v1165
      %1167 = vdwg.mxu0
      %1168 = vmatpush.bf16.msra.mxu0 %v1021
      %1169 = vmatpush.bf16.msra.mxu0 %v1019
      %1170 = vmatpush.bf16.msra.mxu0 %v1017
      %1171 = vmatpush.bf16.msra.mxu0 %v1015
      %1172 = vmatpush.bf16.msra.mxu0 %v1013
      %1173 = vmatpush.bf16.msra.mxu0 %v1011
      %1174 = vmatpush.bf16.msra.mxu0 %v1009
      %1175 = vmatpush.bf16.msra.mxu0 %v1007
      %1176 = vmatmul.bf16.gmra.mxu0 %v736
      %v1177 = vpop.f32.mrf.mxu0
      %v1178 = vadd.f32 %v1129, %v1177
      %v1179 = vpop.f32.mrf.mxu0
      %v1180 = vadd.f32 %v1131, %v1179
      %1181 = vmatmul.bf16.gmra.mxu0 %v740
      %v1182 = vpop.f32.mrf.mxu0
      %v1183 = vadd.f32 %v1134, %v1182
      %v1184 = vpop.f32.mrf.mxu0
      %v1185 = vadd.f32 %v1136, %v1184
      %1186 = vmatmul.bf16.gmra.mxu0 %v744
      %v1187 = vpop.f32.mrf.mxu0
      %v1188 = vadd.f32 %v1139, %v1187
      %v1189 = vpop.f32.mrf.mxu0
      %v1190 = vadd.f32 %v1141, %v1189
      %1191 = vmatmul.bf16.gmra.mxu0 %v748
      %v1192 = vpop.f32.mrf.mxu0
      %v1193 = vadd.f32 %v1144, %v1192
      %v1194 = vpop.f32.mrf.mxu0
      %v1195 = vadd.f32 %v1146, %v1194
      %1196 = vmatmul.bf16.gmra.mxu0 %v752
      %v1197 = vpop.f32.mrf.mxu0
      %v1198 = vadd.f32 %v1149, %v1197
      %v1199 = vpop.f32.mrf.mxu0
      %v1200 = vadd.f32 %v1151, %v1199
      %1201 = vmatmul.bf16.gmra.mxu0 %v756
      %v1202 = vpop.f32.mrf.mxu0
      %v1203 = vadd.f32 %v1154, %v1202
      %v1204 = vpop.f32.mrf.mxu0
      %v1205 = vadd.f32 %v1156, %v1204
      %1206 = vmatmul.bf16.gmra.mxu0 %v760
      %v1207 = vpop.f32.mrf.mxu0
      %v1208 = vadd.f32 %v1159, %v1207
      %v1209 = vpop.f32.mrf.mxu0
      %v1210 = vadd.f32 %v1161, %v1209
      %1211 = vmatmul.bf16.gmra.mxu0 %v764
      %v1212 = vpop.f32.mrf.mxu0
      %v1213 = vadd.f32 %v1164, %v1212
      %v1214 = vpop.f32.mrf.mxu0
      %v1215 = vadd.f32 %v1166, %v1214
      %1216 = vdwg.mxu0
      %1217 = vmatpush.bf16.msra.mxu0 %v1037
      %1218 = vmatpush.bf16.msra.mxu0 %v1035
      %1219 = vmatpush.bf16.msra.mxu0 %v1033
      %1220 = vmatpush.bf16.msra.mxu0 %v1031
      %1221 = vmatpush.bf16.msra.mxu0 %v1029
      %1222 = vmatpush.bf16.msra.mxu0 %v1027
      %1223 = vmatpush.bf16.msra.mxu0 %v1025
      %1224 = vmatpush.bf16.msra.mxu0 %v1023
      %1225 = vmatmul.bf16.gmra.mxu0 %v737
      %v1226 = vpop.f32.mrf.mxu0
      %v1227 = vadd.f32 %v1178, %v1226
      %v1228 = vpop.f32.mrf.mxu0
      %v1229 = vadd.f32 %v1180, %v1228
      %1230 = vmatmul.bf16.gmra.mxu0 %v741
      %v1231 = vpop.f32.mrf.mxu0
      %v1232 = vadd.f32 %v1183, %v1231
      %v1233 = vpop.f32.mrf.mxu0
      %v1234 = vadd.f32 %v1185, %v1233
      %1235 = vmatmul.bf16.gmra.mxu0 %v745
      %v1236 = vpop.f32.mrf.mxu0
      %v1237 = vadd.f32 %v1188, %v1236
      %v1238 = vpop.f32.mrf.mxu0
      %v1239 = vadd.f32 %v1190, %v1238
      %1240 = vmatmul.bf16.gmra.mxu0 %v749
      %v1241 = vpop.f32.mrf.mxu0
      %v1242 = vadd.f32 %v1193, %v1241
      %v1243 = vpop.f32.mrf.mxu0
      %v1244 = vadd.f32 %v1195, %v1243
      %1245 = vmatmul.bf16.gmra.mxu0 %v753
      %v1246 = vpop.f32.mrf.mxu0
      %v1247 = vadd.f32 %v1198, %v1246
      %v1248 = vpop.f32.mrf.mxu0
      %v1249 = vadd.f32 %v1200, %v1248
      %1250 = vmatmul.bf16.gmra.mxu0 %v757
      %v1251 = vpop.f32.mrf.mxu0
      %v1252 = vadd.f32 %v1203, %v1251
      %v1253 = vpop.f32.mrf.mxu0
      %v1254 = vadd.f32 %v1205, %v1253
      %1255 = vmatmul.bf16.gmra.mxu0 %v761
      %v1256 = vpop.f32.mrf.mxu0
      %v1257 = vadd.f32 %v1208, %v1256
      %v1258 = vpop.f32.mrf.mxu0
      %v1259 = vadd.f32 %v1210, %v1258
      %1260 = vmatmul.bf16.gmra.mxu0 %v765
      %v1261 = vpop.f32.mrf.mxu0
      %v1262 = vadd.f32 %v1213, %v1261
      %v1263 = vpop.f32.mrf.mxu0
      %v1264 = vadd.f32 %v1215, %v1263
      %1265 = vdwg.mxu0
      %1266 = vmatpush.bf16.msra.mxu0 %v1053
      %1267 = vmatpush.bf16.msra.mxu0 %v1051
      %1268 = vmatpush.bf16.msra.mxu0 %v1049
      %1269 = vmatpush.bf16.msra.mxu0 %v1047
      %1270 = vmatpush.bf16.msra.mxu0 %v1045
      %1271 = vmatpush.bf16.msra.mxu0 %v1043
      %1272 = vmatpush.bf16.msra.mxu0 %v1041
      %1273 = vmatpush.bf16.msra.mxu0 %v1039
      %1274 = vmatmul.bf16.gmra.mxu0 %v738
      %v1275 = vpop.f32.mrf.mxu0
      %v1276 = vadd.f32 %v1227, %v1275
      %v1277 = vpop.f32.mrf.mxu0
      %v1278 = vadd.f32 %v1229, %v1277
      %1279 = vmatmul.bf16.gmra.mxu0 %v742
      %v1280 = vpop.f32.mrf.mxu0
      %v1281 = vadd.f32 %v1232, %v1280
      %v1282 = vpop.f32.mrf.mxu0
      %v1283 = vadd.f32 %v1234, %v1282
      %1284 = vmatmul.bf16.gmra.mxu0 %v746
      %v1285 = vpop.f32.mrf.mxu0
      %v1286 = vadd.f32 %v1237, %v1285
      %v1287 = vpop.f32.mrf.mxu0
      %v1288 = vadd.f32 %v1239, %v1287
      %1289 = vmatmul.bf16.gmra.mxu0 %v750
      %v1290 = vpop.f32.mrf.mxu0
      %v1291 = vadd.f32 %v1242, %v1290
      %v1292 = vpop.f32.mrf.mxu0
      %v1293 = vadd.f32 %v1244, %v1292
      %1294 = vmatmul.bf16.gmra.mxu0 %v754
      %v1295 = vpop.f32.mrf.mxu0
      %v1296 = vadd.f32 %v1247, %v1295
      %v1297 = vpop.f32.mrf.mxu0
      %v1298 = vadd.f32 %v1249, %v1297
      %1299 = vmatmul.bf16.gmra.mxu0 %v758
      %v1300 = vpop.f32.mrf.mxu0
      %v1301 = vadd.f32 %v1252, %v1300
      %v1302 = vpop.f32.mrf.mxu0
      %v1303 = vadd.f32 %v1254, %v1302
      %1304 = vmatmul.bf16.gmra.mxu0 %v762
      %v1305 = vpop.f32.mrf.mxu0
      %v1306 = vadd.f32 %v1257, %v1305
      %v1307 = vpop.f32.mrf.mxu0
      %v1308 = vadd.f32 %v1259, %v1307
      %1309 = vmatmul.bf16.gmra.mxu0 %v766
      %v1310 = vpop.f32.mrf.mxu0
      %v1311 = vadd.f32 %v1262, %v1310
      %v1312 = vpop.f32.mrf.mxu0
      %v1313 = vadd.f32 %v1264, %v1312
      %1314 = vdwg.mxu0
      %1315 = vmatpush.bf16.msra.mxu0 %v1006
      %1316 = vmatpush.bf16.msra.mxu0 %v1004
      %1317 = vmatpush.bf16.msra.mxu0 %v1002
      %1318 = vmatpush.bf16.msra.mxu0 %v1000
      %1319 = vmatpush.bf16.msra.mxu0 %v998
      %1320 = vmatpush.bf16.msra.mxu0 %v996
      %1321 = vmatpush.bf16.msra.mxu0 %v994
      %1322 = vmatpush.bf16.msra.mxu0 %v992
      %1323 = vmatmul.bf16.gmra.mxu0 %v735
      %v1324 = vpop.f32.mrf.mxu0
      %v1325 = vadd.f32 0.0, %v1324
      %v1326 = vpop.f32.mrf.mxu0
      %v1327 = vadd.f32 0.0, %v1326
      %1328 = vmatmul.bf16.gmra.mxu0 %v739
      %v1329 = vpop.f32.mrf.mxu0
      %v1330 = vadd.f32 0.0, %v1329
      %v1331 = vpop.f32.mrf.mxu0
      %v1332 = vadd.f32 0.0, %v1331
      %1333 = vmatmul.bf16.gmra.mxu0 %v743
      %v1334 = vpop.f32.mrf.mxu0
      %v1335 = vadd.f32 0.0, %v1334
      %v1336 = vpop.f32.mrf.mxu0
      %v1337 = vadd.f32 0.0, %v1336
      %1338 = vmatmul.bf16.gmra.mxu0 %v747
      %v1339 = vpop.f32.mrf.mxu0
      %v1340 = vadd.f32 0.0, %v1339
      %v1341 = vpop.f32.mrf.mxu0
      %v1342 = vadd.f32 0.0, %v1341
      %1343 = vmatmul.bf16.gmra.mxu0 %v751
      %v1344 = vpop.f32.mrf.mxu0
      %v1345 = vadd.f32 0.0, %v1344
      %v1346 = vpop.f32.mrf.mxu0
      %v1347 = vadd.f32 0.0, %v1346
      %1348 = vmatmul.bf16.gmra.mxu0 %v755
      %v1349 = vpop.f32.mrf.mxu0
      %v1350 = vadd.f32 0.0, %v1349
      %v1351 = vpop.f32.mrf.mxu0
      %v1352 = vadd.f32 0.0, %v1351
      %1353 = vmatmul.bf16.gmra.mxu0 %v759
      %v1354 = vpop.f32.mrf.mxu0
      %v1355 = vadd.f32 0.0, %v1354
      %v1356 = vpop.f32.mrf.mxu0
      %v1357 = vadd.f32 0.0, %v1356
      %1358 = vmatmul.bf16.gmra.mxu0 %v763
      %v1359 = vpop.f32.mrf.mxu0
      %v1360 = vadd.f32 0.0, %v1359
      %v1361 = vpop.f32.mrf.mxu0
      %v1362 = vadd.f32 0.0, %v1361
      %1363 = vdwg.mxu0
      %1364 = vmatpush.bf16.msra.mxu0 %v1022
      %1365 = vmatpush.bf16.msra.mxu0 %v1020
      %1366 = vmatpush.bf16.msra.mxu0 %v1018
      %1367 = vmatpush.bf16.msra.mxu0 %v1016
      %1368 = vmatpush.bf16.msra.mxu0 %v1014
      %1369 = vmatpush.bf16.msra.mxu0 %v1012
      %1370 = vmatpush.bf16.msra.mxu0 %v1010
      %1371 = vmatpush.bf16.msra.mxu0 %v1008
      %1372 = vmatmul.bf16.gmra.mxu0 %v736
      %v1373 = vpop.f32.mrf.mxu0
      %v1374 = vadd.f32 %v1325, %v1373
      %v1375 = vpop.f32.mrf.mxu0
      %v1376 = vadd.f32 %v1327, %v1375
      %1377 = vmatmul.bf16.gmra.mxu0 %v740
      %v1378 = vpop.f32.mrf.mxu0
      %v1379 = vadd.f32 %v1330, %v1378
      %v1380 = vpop.f32.mrf.mxu0
      %v1381 = vadd.f32 %v1332, %v1380
      %1382 = vmatmul.bf16.gmra.mxu0 %v744
      %v1383 = vpop.f32.mrf.mxu0
      %v1384 = vadd.f32 %v1335, %v1383
      %v1385 = vpop.f32.mrf.mxu0
      %v1386 = vadd.f32 %v1337, %v1385
      %1387 = vmatmul.bf16.gmra.mxu0 %v748
      %v1388 = vpop.f32.mrf.mxu0
      %v1389 = vadd.f32 %v1340, %v1388
      %v1390 = vpop.f32.mrf.mxu0
      %v1391 = vadd.f32 %v1342, %v1390
      %1392 = vmatmul.bf16.gmra.mxu0 %v752
      %v1393 = vpop.f32.mrf.mxu0
      %v1394 = vadd.f32 %v1345, %v1393
      %v1395 = vpop.f32.mrf.mxu0
      %v1396 = vadd.f32 %v1347, %v1395
      %1397 = vmatmul.bf16.gmra.mxu0 %v756
      %v1398 = vpop.f32.mrf.mxu0
      %v1399 = vadd.f32 %v1350, %v1398
      %v1400 = vpop.f32.mrf.mxu0
      %v1401 = vadd.f32 %v1352, %v1400
      %1402 = vmatmul.bf16.gmra.mxu0 %v760
      %v1403 = vpop.f32.mrf.mxu0
      %v1404 = vadd.f32 %v1355, %v1403
      %v1405 = vpop.f32.mrf.mxu0
      %v1406 = vadd.f32 %v1357, %v1405
      %1407 = vmatmul.bf16.gmra.mxu0 %v764
      %v1408 = vpop.f32.mrf.mxu0
      %v1409 = vadd.f32 %v1360, %v1408
      %v1410 = vpop.f32.mrf.mxu0
      %v1411 = vadd.f32 %v1362, %v1410
      %1412 = vdwg.mxu0
      %1413 = vmatpush.bf16.msra.mxu0 %v1038
      %1414 = vmatpush.bf16.msra.mxu0 %v1036
      %1415 = vmatpush.bf16.msra.mxu0 %v1034
      %1416 = vmatpush.bf16.msra.mxu0 %v1032
      %1417 = vmatpush.bf16.msra.mxu0 %v1030
      %1418 = vmatpush.bf16.msra.mxu0 %v1028
      %1419 = vmatpush.bf16.msra.mxu0 %v1026
      %1420 = vmatpush.bf16.msra.mxu0 %v1024
      %1421 = vmatmul.bf16.gmra.mxu0 %v737
      %v1422 = vpop.f32.mrf.mxu0
      %v1423 = vadd.f32 %v1374, %v1422
      %v1424 = vpop.f32.mrf.mxu0
      %v1425 = vadd.f32 %v1376, %v1424
      %1426 = vmatmul.bf16.gmra.mxu0 %v741
      %v1427 = vpop.f32.mrf.mxu0
      %v1428 = vadd.f32 %v1379, %v1427
      %v1429 = vpop.f32.mrf.mxu0
      %v1430 = vadd.f32 %v1381, %v1429
      %1431 = vmatmul.bf16.gmra.mxu0 %v745
      %v1432 = vpop.f32.mrf.mxu0
      %v1433 = vadd.f32 %v1384, %v1432
      %v1434 = vpop.f32.mrf.mxu0
      %v1435 = vadd.f32 %v1386, %v1434
      %1436 = vmatmul.bf16.gmra.mxu0 %v749
      %v1437 = vpop.f32.mrf.mxu0
      %v1438 = vadd.f32 %v1389, %v1437
      %v1439 = vpop.f32.mrf.mxu0
      %v1440 = vadd.f32 %v1391, %v1439
      %1441 = vmatmul.bf16.gmra.mxu0 %v753
      %v1442 = vpop.f32.mrf.mxu0
      %v1443 = vadd.f32 %v1394, %v1442
      %v1444 = vpop.f32.mrf.mxu0
      %v1445 = vadd.f32 %v1396, %v1444
      %1446 = vmatmul.bf16.gmra.mxu0 %v757
      %v1447 = vpop.f32.mrf.mxu0
      %v1448 = vadd.f32 %v1399, %v1447
      %v1449 = vpop.f32.mrf.mxu0
      %v1450 = vadd.f32 %v1401, %v1449
      %1451 = vmatmul.bf16.gmra.mxu0 %v761
      %v1452 = vpop.f32.mrf.mxu0
      %v1453 = vadd.f32 %v1404, %v1452
      %v1454 = vpop.f32.mrf.mxu0
      %v1455 = vadd.f32 %v1406, %v1454
      %1456 = vmatmul.bf16.gmra.mxu0 %v765
      %v1457 = vpop.f32.mrf.mxu0
      %v1458 = vadd.f32 %v1409, %v1457
      %v1459 = vpop.f32.mrf.mxu0
      %v1460 = vadd.f32 %v1411, %v1459
      %1461 = vdwg.mxu0
      %1462 = vmatpush.bf16.msra.mxu0 %v1054
      %1463 = vmatpush.bf16.msra.mxu0 %v1052
      %1464 = vmatpush.bf16.msra.mxu0 %v1050
      %1465 = vmatpush.bf16.msra.mxu0 %v1048
      %1466 = vmatpush.bf16.msra.mxu0 %v1046
      %1467 = vmatpush.bf16.msra.mxu0 %v1044
      %1468 = vmatpush.bf16.msra.mxu0 %v1042
      %1469 = vmatpush.bf16.msra.mxu0 %v1040
      %1470 = vmatmul.bf16.gmra.mxu0 %v738
      %v1471 = vpop.f32.mrf.mxu0
      %v1472 = vadd.f32 %v1423, %v1471
      %v1473 = vpop.f32.mrf.mxu0
      %v1474 = vadd.f32 %v1425, %v1473
      %1475 = vmatmul.bf16.gmra.mxu0 %v742
      %v1476 = vpop.f32.mrf.mxu0
      %v1477 = vadd.f32 %v1428, %v1476
      %v1478 = vpop.f32.mrf.mxu0
      %v1479 = vadd.f32 %v1430, %v1478
      %1480 = vmatmul.bf16.gmra.mxu0 %v746
      %v1481 = vpop.f32.mrf.mxu0
      %v1482 = vadd.f32 %v1433, %v1481
      %v1483 = vpop.f32.mrf.mxu0
      %v1484 = vadd.f32 %v1435, %v1483
      %1485 = vmatmul.bf16.gmra.mxu0 %v750
      %v1486 = vpop.f32.mrf.mxu0
      %v1487 = vadd.f32 %v1438, %v1486
      %v1488 = vpop.f32.mrf.mxu0
      %v1489 = vadd.f32 %v1440, %v1488
      %1490 = vmatmul.bf16.gmra.mxu0 %v754
      %v1491 = vpop.f32.mrf.mxu0
      %v1492 = vadd.f32 %v1443, %v1491
      %v1493 = vpop.f32.mrf.mxu0
      %v1494 = vadd.f32 %v1445, %v1493
      %1495 = vmatmul.bf16.gmra.mxu0 %v758
      %v1496 = vpop.f32.mrf.mxu0
      %v1497 = vadd.f32 %v1448, %v1496
      %v1498 = vpop.f32.mrf.mxu0
      %v1499 = vadd.f32 %v1450, %v1498
      %1500 = vmatmul.bf16.gmra.mxu0 %v762
      %v1501 = vpop.f32.mrf.mxu0
      %v1502 = vadd.f32 %v1453, %v1501
      %v1503 = vpop.f32.mrf.mxu0
      %v1504 = vadd.f32 %v1455, %v1503
      %1505 = vmatmul.bf16.gmra.mxu0 %v766
      %v1506 = vpop.f32.mrf.mxu0
      %v1507 = vadd.f32 %v1458, %v1506
      %v1508 = vpop.f32.mrf.mxu0
      %v1509 = vadd.f32 %v1460, %v1508
      %1510 = vdwg.mxu0
      %s1511 = sshra.s32 %s535, 3
      %s1512 = sand.u32 %s535, 7
      %s1513 = smul.u32 %s1511, 2
      %s1514 = smul.addr %s1513, 4
      %s1515 = scalar_lea.vmem %s1, %s1514
      %v1516 = vld [vmem:[%s1515] sm:$0xff]
      %v1517 = vld [vmem:[%s1515 + $0x8] sm:$0xff]
      %v1518 = vld [vmem:[%s1515 + $0x10] sm:$0xff]
      %v1519 = vld [vmem:[%s1515 + $0x18] sm:$0xff]
      %v1520 = vld [vmem:[%s1515 + $0x20] sm:$0xff]
      %v1521 = vld [vmem:[%s1515 + $0x28] sm:$0xff]
      %v1522 = vld [vmem:[%s1515 + $0x30] sm:$0xff]
      %v1523 = vld [vmem:[%s1515 + $0x38] sm:$0xff]
      %v1524 = vld [vmem:[%s1515 + $0x40] sm:$0xff]
      %v1525 = vld [vmem:[%s1515 + $0x48] sm:$0xff]
      %v1526 = vld [vmem:[%s1515 + $0x50] sm:$0xff]
      %v1527 = vld [vmem:[%s1515 + $0x58] sm:$0xff]
      %v1528 = vld [vmem:[%s1515 + $0x60] sm:$0xff]
      %v1529 = vld [vmem:[%s1515 + $0x68] sm:$0xff]
      %v1530 = vld [vmem:[%s1515 + $0x70] sm:$0xff]
      %v1531 = vld [vmem:[%s1515 + $0x78] sm:$0xff]
      %v1532 = vunpack.c.l.bf16 %v1516
      %v1533 = vunpack.c.h.bf16 %v1516
      %v1534 = vunpack.c.l.bf16 %v1517
      %v1535 = vunpack.c.h.bf16 %v1517
      %v1536 = vunpack.c.l.bf16 %v1518
      %v1537 = vunpack.c.h.bf16 %v1518
      %v1538 = vunpack.c.l.bf16 %v1519
      %v1539 = vunpack.c.h.bf16 %v1519
      %v1540 = vunpack.c.l.bf16 %v1520
      %v1541 = vunpack.c.h.bf16 %v1520
      %v1542 = vunpack.c.l.bf16 %v1521
      %v1543 = vunpack.c.h.bf16 %v1521
      %v1544 = vunpack.c.l.bf16 %v1522
      %v1545 = vunpack.c.h.bf16 %v1522
      %v1546 = vunpack.c.l.bf16 %v1523
      %v1547 = vunpack.c.h.bf16 %v1523
      %v1548 = vunpack.c.l.bf16 %v1524
      %v1549 = vunpack.c.h.bf16 %v1524
      %v1550 = vunpack.c.l.bf16 %v1525
      %v1551 = vunpack.c.h.bf16 %v1525
      %v1552 = vunpack.c.l.bf16 %v1526
      %v1553 = vunpack.c.h.bf16 %v1526
      %v1554 = vunpack.c.l.bf16 %v1527
      %v1555 = vunpack.c.h.bf16 %v1527
      %v1556 = vunpack.c.l.bf16 %v1528
      %v1557 = vunpack.c.h.bf16 %v1528
      %v1558 = vunpack.c.l.bf16 %v1529
      %v1559 = vunpack.c.h.bf16 %v1529
      %v1560 = vunpack.c.l.bf16 %v1530
      %v1561 = vunpack.c.h.bf16 %v1530
      %v1562 = vunpack.c.l.bf16 %v1531
      %v1563 = vunpack.c.h.bf16 %v1531
      %v1564 = vld [vmem:[%s4] sm:$0xff]
      %v1565 = vld [vmem:[%s4 + $0x8] sm:$0xff]
      %v1566 = vld [vmem:[%s4 + $0x10] sm:$0xff]
      %v1567 = vld [vmem:[%s4 + $0x18] sm:$0xff]
      %v1568 = vld [vmem:[%s4 + $0x20] sm:$0xff]
      %v1569 = vld [vmem:[%s4 + $0x28] sm:$0xff]
      %v1570 = vld [vmem:[%s4 + $0x30] sm:$0xff]
      %v1571 = vld [vmem:[%s4 + $0x38] sm:$0xff]
      %v1572 = vld [vmem:[%s4 + $0x40] sm:$0xff]
      %v1573 = vld [vmem:[%s4 + $0x48] sm:$0xff]
      %v1574 = vld [vmem:[%s4 + $0x50] sm:$0xff]
      %v1575 = vld [vmem:[%s4 + $0x58] sm:$0xff]
      %v1576 = vld [vmem:[%s4 + $0x60] sm:$0xff]
      %v1577 = vld [vmem:[%s4 + $0x68] sm:$0xff]
      %v1578 = vld [vmem:[%s4 + $0x70] sm:$0xff]
      %v1579 = vld [vmem:[%s4 + $0x78] sm:$0xff]
      %v1580 = vld [vmem:[%s4 + $0x80] sm:$0xff]
      %v1581 = vld [vmem:[%s4 + $0x88] sm:$0xff]
      %v1582 = vld [vmem:[%s4 + $0x90] sm:$0xff]
      %v1583 = vld [vmem:[%s4 + $0x98] sm:$0xff]
      %v1584 = vld [vmem:[%s4 + $0xa0] sm:$0xff]
      %v1585 = vld [vmem:[%s4 + $0xa8] sm:$0xff]
      %v1586 = vld [vmem:[%s4 + $0xb0] sm:$0xff]
      %v1587 = vld [vmem:[%s4 + $0xb8] sm:$0xff]
      %v1588 = vld [vmem:[%s4 + $0xc0] sm:$0xff]
      %v1589 = vld [vmem:[%s4 + $0xc8] sm:$0xff]
      %v1590 = vld [vmem:[%s4 + $0xd0] sm:$0xff]
      %v1591 = vld [vmem:[%s4 + $0xd8] sm:$0xff]
      %v1592 = vld [vmem:[%s4 + $0xe0] sm:$0xff]
      %v1593 = vld [vmem:[%s4 + $0xe8] sm:$0xff]
      %v1594 = vld [vmem:[%s4 + $0xf0] sm:$0xff]
      %v1595 = vld [vmem:[%s4 + $0xf8] sm:$0xff]
      %v1596 = vld [vmem:[%s4 + $0x100] sm:$0xff]
      %v1597 = vld [vmem:[%s4 + $0x108] sm:$0xff]
      %v1598 = vld [vmem:[%s4 + $0x110] sm:$0xff]
      %v1599 = vld [vmem:[%s4 + $0x118] sm:$0xff]
      %v1600 = vld [vmem:[%s4 + $0x120] sm:$0xff]
      %v1601 = vld [vmem:[%s4 + $0x128] sm:$0xff]
      %v1602 = vld [vmem:[%s4 + $0x130] sm:$0xff]
      %v1603 = vld [vmem:[%s4 + $0x138] sm:$0xff]
      %v1604 = vld [vmem:[%s4 + $0x140] sm:$0xff]
      %v1605 = vld [vmem:[%s4 + $0x148] sm:$0xff]
      %v1606 = vld [vmem:[%s4 + $0x150] sm:$0xff]
      %v1607 = vld [vmem:[%s4 + $0x158] sm:$0xff]
      %v1608 = vld [vmem:[%s4 + $0x160] sm:$0xff]
      %v1609 = vld [vmem:[%s4 + $0x168] sm:$0xff]
      %v1610 = vld [vmem:[%s4 + $0x170] sm:$0xff]
      %v1611 = vld [vmem:[%s4 + $0x178] sm:$0xff]
      %v1612 = vld [vmem:[%s4 + $0x180] sm:$0xff]
      %v1613 = vld [vmem:[%s4 + $0x188] sm:$0xff]
      %v1614 = vld [vmem:[%s4 + $0x190] sm:$0xff]
      %v1615 = vld [vmem:[%s4 + $0x198] sm:$0xff]
      %v1616 = vld [vmem:[%s4 + $0x1a0] sm:$0xff]
      %v1617 = vld [vmem:[%s4 + $0x1a8] sm:$0xff]
      %v1618 = vld [vmem:[%s4 + $0x1b0] sm:$0xff]
      %v1619 = vld [vmem:[%s4 + $0x1b8] sm:$0xff]
      %v1620 = vld [vmem:[%s4 + $0x1c0] sm:$0xff]
      %v1621 = vld [vmem:[%s4 + $0x1c8] sm:$0xff]
      %v1622 = vld [vmem:[%s4 + $0x1d0] sm:$0xff]
      %v1623 = vld [vmem:[%s4 + $0x1d8] sm:$0xff]
      %v1624 = vld [vmem:[%s4 + $0x1e0] sm:$0xff]
      %v1625 = vld [vmem:[%s4 + $0x1e8] sm:$0xff]
      %v1626 = vld [vmem:[%s4 + $0x1f0] sm:$0xff]
      %v1627 = vld [vmem:[%s4 + $0x1f8] sm:$0xff]
      %v1628 = vld [vmem:[%s5] sm:$0xff]
      %v1629 = vld [vmem:[%s5 + $0x8] sm:$0xff]
      %v1630 = vld [vmem:[%s5 + $0x10] sm:$0xff]
      %v1631 = vld [vmem:[%s5 + $0x18] sm:$0xff]
      %v1632 = vld [vmem:[%s5 + $0x20] sm:$0xff]
      %v1633 = vld [vmem:[%s5 + $0x28] sm:$0xff]
      %v1634 = vld [vmem:[%s5 + $0x30] sm:$0xff]
      %v1635 = vld [vmem:[%s5 + $0x38] sm:$0xff]
      %v1636 = vld [vmem:[%s5 + $0x40] sm:$0xff]
      %v1637 = vld [vmem:[%s5 + $0x48] sm:$0xff]
      %v1638 = vld [vmem:[%s5 + $0x50] sm:$0xff]
      %v1639 = vld [vmem:[%s5 + $0x58] sm:$0xff]
      %v1640 = vld [vmem:[%s5 + $0x60] sm:$0xff]
      %v1641 = vld [vmem:[%s5 + $0x68] sm:$0xff]
      %v1642 = vld [vmem:[%s5 + $0x70] sm:$0xff]
      %v1643 = vld [vmem:[%s5 + $0x78] sm:$0xff]
      %v1644 = vld [vmem:[%s5 + $0x80] sm:$0xff]
      %v1645 = vld [vmem:[%s5 + $0x88] sm:$0xff]
      %v1646 = vld [vmem:[%s5 + $0x90] sm:$0xff]
      %v1647 = vld [vmem:[%s5 + $0x98] sm:$0xff]
      %v1648 = vld [vmem:[%s5 + $0xa0] sm:$0xff]
      %v1649 = vld [vmem:[%s5 + $0xa8] sm:$0xff]
      %v1650 = vld [vmem:[%s5 + $0xb0] sm:$0xff]
      %v1651 = vld [vmem:[%s5 + $0xb8] sm:$0xff]
      %v1652 = vld [vmem:[%s5 + $0xc0] sm:$0xff]
      %v1653 = vld [vmem:[%s5 + $0xc8] sm:$0xff]
      %v1654 = vld [vmem:[%s5 + $0xd0] sm:$0xff]
      %v1655 = vld [vmem:[%s5 + $0xd8] sm:$0xff]
      %v1656 = vld [vmem:[%s5 + $0xe0] sm:$0xff]
      %v1657 = vld [vmem:[%s5 + $0xe8] sm:$0xff]
      %v1658 = vld [vmem:[%s5 + $0xf0] sm:$0xff]
      %v1659 = vld [vmem:[%s5 + $0xf8] sm:$0xff]
      %v1660 = vld [vmem:[%s5 + $0x100] sm:$0xff]
      %v1661 = vld [vmem:[%s5 + $0x108] sm:$0xff]
      %v1662 = vld [vmem:[%s5 + $0x110] sm:$0xff]
      %v1663 = vld [vmem:[%s5 + $0x118] sm:$0xff]
      %v1664 = vld [vmem:[%s5 + $0x120] sm:$0xff]
      %v1665 = vld [vmem:[%s5 + $0x128] sm:$0xff]
      %v1666 = vld [vmem:[%s5 + $0x130] sm:$0xff]
      %v1667 = vld [vmem:[%s5 + $0x138] sm:$0xff]
      %v1668 = vld [vmem:[%s5 + $0x140] sm:$0xff]
      %v1669 = vld [vmem:[%s5 + $0x148] sm:$0xff]
      %v1670 = vld [vmem:[%s5 + $0x150] sm:$0xff]
      %v1671 = vld [vmem:[%s5 + $0x158] sm:$0xff]
      %v1672 = vld [vmem:[%s5 + $0x160] sm:$0xff]
      %v1673 = vld [vmem:[%s5 + $0x168] sm:$0xff]
      %v1674 = vld [vmem:[%s5 + $0x170] sm:$0xff]
      %v1675 = vld [vmem:[%s5 + $0x178] sm:$0xff]
      %v1676 = vld [vmem:[%s5 + $0x180] sm:$0xff]
      %v1677 = vld [vmem:[%s5 + $0x188] sm:$0xff]
      %v1678 = vld [vmem:[%s5 + $0x190] sm:$0xff]
      %v1679 = vld [vmem:[%s5 + $0x198] sm:$0xff]
      %v1680 = vld [vmem:[%s5 + $0x1a0] sm:$0xff]
      %v1681 = vld [vmem:[%s5 + $0x1a8] sm:$0xff]
      %v1682 = vld [vmem:[%s5 + $0x1b0] sm:$0xff]
      %v1683 = vld [vmem:[%s5 + $0x1b8] sm:$0xff]
      %v1684 = vld [vmem:[%s5 + $0x1c0] sm:$0xff]
      %v1685 = vld [vmem:[%s5 + $0x1c8] sm:$0xff]
      %v1686 = vld [vmem:[%s5 + $0x1d0] sm:$0xff]
      %v1687 = vld [vmem:[%s5 + $0x1d8] sm:$0xff]
      %v1688 = vld [vmem:[%s5 + $0x1e0] sm:$0xff]
      %v1689 = vld [vmem:[%s5 + $0x1e8] sm:$0xff]
      %v1690 = vld [vmem:[%s5 + $0x1f0] sm:$0xff]
      %v1691 = vld [vmem:[%s5 + $0x1f8] sm:$0xff]
      %1692 = vmatpush.msra.mxu0 %v1658
      %1693 = vmatpush.msra.mxu0 %v1656
      %1694 = vmatpush.msra.mxu0 %v1654
      %1695 = vmatpush.msra.mxu0 %v1652
      %1696 = vmatpush.msra.mxu0 %v1650
      %1697 = vmatpush.msra.mxu0 %v1648
      %1698 = vmatpush.msra.mxu0 %v1646
      %1699 = vmatpush.msra.mxu0 %v1644
      %1700 = vmatpush.msra.mxu0 %v1642
      %1701 = vmatpush.msra.mxu0 %v1640
      %1702 = vmatpush.msra.mxu0 %v1638
      %1703 = vmatpush.msra.mxu0 %v1636
      %1704 = vmatpush.msra.mxu0 %v1634
      %1705 = vmatpush.msra.mxu0 %v1632
      %1706 = vmatpush.msra.mxu0 %v1630
      %1707 = vmatpush.msra.mxu0 %v1628
      %1708 = vmatmul.f32.gmra.mxu0 %v1532
      %v1709 = vpop.f32.mrf.mxu0
      %v1710 = vadd.f32 0.0, %v1709
      %1711 = vmatmul.f32.gmra.mxu0 %v1534
      %v1712 = vpop.f32.mrf.mxu0
      %v1713 = vadd.f32 0.0, %v1712
      %1714 = vmatmul.f32.gmra.mxu0 %v1536
      %v1715 = vpop.f32.mrf.mxu0
      %v1716 = vadd.f32 0.0, %v1715
      %1717 = vmatmul.f32.gmra.mxu0 %v1538
      %v1718 = vpop.f32.mrf.mxu0
      %v1719 = vadd.f32 0.0, %v1718
      %1720 = vmatmul.f32.gmra.mxu0 %v1540
      %v1721 = vpop.f32.mrf.mxu0
      %v1722 = vadd.f32 0.0, %v1721
      %1723 = vmatmul.f32.gmra.mxu0 %v1542
      %v1724 = vpop.f32.mrf.mxu0
      %v1725 = vadd.f32 0.0, %v1724
      %1726 = vmatmul.f32.gmra.mxu0 %v1544
      %v1727 = vpop.f32.mrf.mxu0
      %v1728 = vadd.f32 0.0, %v1727
      %1729 = vmatmul.f32.gmra.mxu0 %v1546
      %v1730 = vpop.f32.mrf.mxu0
      %v1731 = vadd.f32 0.0, %v1730
      %1732 = vmatmul.f32.gmra.mxu0 %v1548
      %v1733 = vpop.f32.mrf.mxu0
      %v1734 = vadd.f32 0.0, %v1733
      %1735 = vmatmul.f32.gmra.mxu0 %v1550
      %v1736 = vpop.f32.mrf.mxu0
      %v1737 = vadd.f32 0.0, %v1736
      %1738 = vmatmul.f32.gmra.mxu0 %v1552
      %v1739 = vpop.f32.mrf.mxu0
      %v1740 = vadd.f32 0.0, %v1739
      %1741 = vmatmul.f32.gmra.mxu0 %v1554
      %v1742 = vpop.f32.mrf.mxu0
      %v1743 = vadd.f32 0.0, %v1742
      %1744 = vmatmul.f32.gmra.mxu0 %v1556
      %v1745 = vpop.f32.mrf.mxu0
      %v1746 = vadd.f32 0.0, %v1745
      %1747 = vmatmul.f32.gmra.mxu0 %v1558
      %v1748 = vpop.f32.mrf.mxu0
      %v1749 = vadd.f32 0.0, %v1748
      %1750 = vmatmul.f32.gmra.mxu0 %v1560
      %v1751 = vpop.f32.mrf.mxu0
      %v1752 = vadd.f32 0.0, %v1751
      %1753 = vmatmul.f32.gmra.mxu0 %v1562
      %v1754 = vpop.f32.mrf.mxu0
      %v1755 = vadd.f32 0.0, %v1754
      %1756 = vdwg.mxu0
      %1757 = vmatpush.msra.mxu0 %v1690
      %1758 = vmatpush.msra.mxu0 %v1688
      %1759 = vmatpush.msra.mxu0 %v1686
      %1760 = vmatpush.msra.mxu0 %v1684
      %1761 = vmatpush.msra.mxu0 %v1682
      %1762 = vmatpush.msra.mxu0 %v1680
      %1763 = vmatpush.msra.mxu0 %v1678
      %1764 = vmatpush.msra.mxu0 %v1676
      %1765 = vmatpush.msra.mxu0 %v1674
      %1766 = vmatpush.msra.mxu0 %v1672
      %1767 = vmatpush.msra.mxu0 %v1670
      %1768 = vmatpush.msra.mxu0 %v1668
      %1769 = vmatpush.msra.mxu0 %v1666
      %1770 = vmatpush.msra.mxu0 %v1664
      %1771 = vmatpush.msra.mxu0 %v1662
      %1772 = vmatpush.msra.mxu0 %v1660
      %1773 = vmatmul.f32.gmra.mxu0 %v1533
      %v1774 = vpop.f32.mrf.mxu0
      %v1775 = vadd.f32 %v1710, %v1774
      %1776 = vmatmul.f32.gmra.mxu0 %v1535
      %v1777 = vpop.f32.mrf.mxu0
      %v1778 = vadd.f32 %v1713, %v1777
      %1779 = vmatmul.f32.gmra.mxu0 %v1537
      %v1780 = vpop.f32.mrf.mxu0
      %v1781 = vadd.f32 %v1716, %v1780
      %1782 = vmatmul.f32.gmra.mxu0 %v1539
      %v1783 = vpop.f32.mrf.mxu0
      %v1784 = vadd.f32 %v1719, %v1783
      %1785 = vmatmul.f32.gmra.mxu0 %v1541
      %v1786 = vpop.f32.mrf.mxu0
      %v1787 = vadd.f32 %v1722, %v1786
      %1788 = vmatmul.f32.gmra.mxu0 %v1543
      %v1789 = vpop.f32.mrf.mxu0
      %v1790 = vadd.f32 %v1725, %v1789
      %1791 = vmatmul.f32.gmra.mxu0 %v1545
      %v1792 = vpop.f32.mrf.mxu0
      %v1793 = vadd.f32 %v1728, %v1792
      %1794 = vmatmul.f32.gmra.mxu0 %v1547
      %v1795 = vpop.f32.mrf.mxu0
      %v1796 = vadd.f32 %v1731, %v1795
      %1797 = vmatmul.f32.gmra.mxu0 %v1549
      %v1798 = vpop.f32.mrf.mxu0
      %v1799 = vadd.f32 %v1734, %v1798
      %1800 = vmatmul.f32.gmra.mxu0 %v1551
      %v1801 = vpop.f32.mrf.mxu0
      %v1802 = vadd.f32 %v1737, %v1801
      %1803 = vmatmul.f32.gmra.mxu0 %v1553
      %v1804 = vpop.f32.mrf.mxu0
      %v1805 = vadd.f32 %v1740, %v1804
      %1806 = vmatmul.f32.gmra.mxu0 %v1555
      %v1807 = vpop.f32.mrf.mxu0
      %v1808 = vadd.f32 %v1743, %v1807
      %1809 = vmatmul.f32.gmra.mxu0 %v1557
      %v1810 = vpop.f32.mrf.mxu0
      %v1811 = vadd.f32 %v1746, %v1810
      %1812 = vmatmul.f32.gmra.mxu0 %v1559
      %v1813 = vpop.f32.mrf.mxu0
      %v1814 = vadd.f32 %v1749, %v1813
      %1815 = vmatmul.f32.gmra.mxu0 %v1561
      %v1816 = vpop.f32.mrf.mxu0
      %v1817 = vadd.f32 %v1752, %v1816
      %1818 = vmatmul.f32.gmra.mxu0 %v1563
      %v1819 = vpop.f32.mrf.mxu0
      %v1820 = vadd.f32 %v1755, %v1819
      %1821 = vdwg.mxu0
      %1822 = vmatpush.msra.mxu0 %v1659
      %1823 = vmatpush.msra.mxu0 %v1657
      %1824 = vmatpush.msra.mxu0 %v1655
      %1825 = vmatpush.msra.mxu0 %v1653
      %1826 = vmatpush.msra.mxu0 %v1651
      %1827 = vmatpush.msra.mxu0 %v1649
      %1828 = vmatpush.msra.mxu0 %v1647
      %1829 = vmatpush.msra.mxu0 %v1645
      %1830 = vmatpush.msra.mxu0 %v1643
      %1831 = vmatpush.msra.mxu0 %v1641
      %1832 = vmatpush.msra.mxu0 %v1639
      %1833 = vmatpush.msra.mxu0 %v1637
      %1834 = vmatpush.msra.mxu0 %v1635
      %1835 = vmatpush.msra.mxu0 %v1633
      %1836 = vmatpush.msra.mxu0 %v1631
      %1837 = vmatpush.msra.mxu0 %v1629
      %1838 = vmatmul.f32.gmra.mxu0 %v1532
      %v1839 = vpop.f32.mrf.mxu0
      %v1840 = vadd.f32 0.0, %v1839
      %1841 = vmatmul.f32.gmra.mxu0 %v1534
      %v1842 = vpop.f32.mrf.mxu0
      %v1843 = vadd.f32 0.0, %v1842
      %1844 = vmatmul.f32.gmra.mxu0 %v1536
      %v1845 = vpop.f32.mrf.mxu0
      %v1846 = vadd.f32 0.0, %v1845
      %1847 = vmatmul.f32.gmra.mxu0 %v1538
      %v1848 = vpop.f32.mrf.mxu0
      %v1849 = vadd.f32 0.0, %v1848
      %1850 = vmatmul.f32.gmra.mxu0 %v1540
      %v1851 = vpop.f32.mrf.mxu0
      %v1852 = vadd.f32 0.0, %v1851
      %1853 = vmatmul.f32.gmra.mxu0 %v1542
      %v1854 = vpop.f32.mrf.mxu0
      %v1855 = vadd.f32 0.0, %v1854
      %1856 = vmatmul.f32.gmra.mxu0 %v1544
      %v1857 = vpop.f32.mrf.mxu0
      %v1858 = vadd.f32 0.0, %v1857
      %1859 = vmatmul.f32.gmra.mxu0 %v1546
      %v1860 = vpop.f32.mrf.mxu0
      %v1861 = vadd.f32 0.0, %v1860
      %1862 = vmatmul.f32.gmra.mxu0 %v1548
      %v1863 = vpop.f32.mrf.mxu0
      %v1864 = vadd.f32 0.0, %v1863
      %1865 = vmatmul.f32.gmra.mxu0 %v1550
      %v1866 = vpop.f32.mrf.mxu0
      %v1867 = vadd.f32 0.0, %v1866
      %1868 = vmatmul.f32.gmra.mxu0 %v1552
      %v1869 = vpop.f32.mrf.mxu0
      %v1870 = vadd.f32 0.0, %v1869
      %1871 = vmatmul.f32.gmra.mxu0 %v1554
      %v1872 = vpop.f32.mrf.mxu0
      %v1873 = vadd.f32 0.0, %v1872
      %1874 = vmatmul.f32.gmra.mxu0 %v1556
      %v1875 = vpop.f32.mrf.mxu0
      %v1876 = vadd.f32 0.0, %v1875
      %1877 = vmatmul.f32.gmra.mxu0 %v1558
      %v1878 = vpop.f32.mrf.mxu0
      %v1879 = vadd.f32 0.0, %v1878
      %1880 = vmatmul.f32.gmra.mxu0 %v1560
      %v1881 = vpop.f32.mrf.mxu0
      %v1882 = vadd.f32 0.0, %v1881
      %1883 = vmatmul.f32.gmra.mxu0 %v1562
      %v1884 = vpop.f32.mrf.mxu0
      %v1885 = vadd.f32 0.0, %v1884
      %1886 = vdwg.mxu0
      %1887 = vmatpush.msra.mxu0 %v1691
      %1888 = vmatpush.msra.mxu0 %v1689
      %1889 = vmatpush.msra.mxu0 %v1687
      %1890 = vmatpush.msra.mxu0 %v1685
      %1891 = vmatpush.msra.mxu0 %v1683
      %1892 = vmatpush.msra.mxu0 %v1681
      %1893 = vmatpush.msra.mxu0 %v1679
      %1894 = vmatpush.msra.mxu0 %v1677
      %1895 = vmatpush.msra.mxu0 %v1675
      %1896 = vmatpush.msra.mxu0 %v1673
      %1897 = vmatpush.msra.mxu0 %v1671
      %1898 = vmatpush.msra.mxu0 %v1669
      %1899 = vmatpush.msra.mxu0 %v1667
      %1900 = vmatpush.msra.mxu0 %v1665
      %1901 = vmatpush.msra.mxu0 %v1663
      %1902 = vmatpush.msra.mxu0 %v1661
      %1903 = vmatmul.f32.gmra.mxu0 %v1533
      %v1904 = vpop.f32.mrf.mxu0
      %v1905 = vadd.f32 %v1840, %v1904
      %1906 = vmatmul.f32.gmra.mxu0 %v1535
      %v1907 = vpop.f32.mrf.mxu0
      %v1908 = vadd.f32 %v1843, %v1907
      %1909 = vmatmul.f32.gmra.mxu0 %v1537
      %v1910 = vpop.f32.mrf.mxu0
      %v1911 = vadd.f32 %v1846, %v1910
      %1912 = vmatmul.f32.gmra.mxu0 %v1539
      %v1913 = vpop.f32.mrf.mxu0
      %v1914 = vadd.f32 %v1849, %v1913
      %1915 = vmatmul.f32.gmra.mxu0 %v1541
      %v1916 = vpop.f32.mrf.mxu0
      %v1917 = vadd.f32 %v1852, %v1916
      %1918 = vmatmul.f32.gmra.mxu0 %v1543
      %v1919 = vpop.f32.mrf.mxu0
      %v1920 = vadd.f32 %v1855, %v1919
      %1921 = vmatmul.f32.gmra.mxu0 %v1545
      %v1922 = vpop.f32.mrf.mxu0
      %v1923 = vadd.f32 %v1858, %v1922
      %1924 = vmatmul.f32.gmra.mxu0 %v1547
      %v1925 = vpop.f32.mrf.mxu0
      %v1926 = vadd.f32 %v1861, %v1925
      %1927 = vmatmul.f32.gmra.mxu0 %v1549
      %v1928 = vpop.f32.mrf.mxu0
      %v1929 = vadd.f32 %v1864, %v1928
      %1930 = vmatmul.f32.gmra.mxu0 %v1551
      %v1931 = vpop.f32.mrf.mxu0
      %v1932 = vadd.f32 %v1867, %v1931
      %1933 = vmatmul.f32.gmra.mxu0 %v1553
      %v1934 = vpop.f32.mrf.mxu0
      %v1935 = vadd.f32 %v1870, %v1934
      %1936 = vmatmul.f32.gmra.mxu0 %v1555
      %v1937 = vpop.f32.mrf.mxu0
      %v1938 = vadd.f32 %v1873, %v1937
      %1939 = vmatmul.f32.gmra.mxu0 %v1557
      %v1940 = vpop.f32.mrf.mxu0
      %v1941 = vadd.f32 %v1876, %v1940
      %1942 = vmatmul.f32.gmra.mxu0 %v1559
      %v1943 = vpop.f32.mrf.mxu0
      %v1944 = vadd.f32 %v1879, %v1943
      %1945 = vmatmul.f32.gmra.mxu0 %v1561
      %v1946 = vpop.f32.mrf.mxu0
      %v1947 = vadd.f32 %v1882, %v1946
      %1948 = vmatmul.f32.gmra.mxu0 %v1563
      %v1949 = vpop.f32.mrf.mxu0
      %v1950 = vadd.f32 %v1885, %v1949
      %1951 = vdwg.mxu0
      %1952 = vmatpush.msra.mxu0 %v1594
      %1953 = vmatpush.msra.mxu0 %v1592
      %1954 = vmatpush.msra.mxu0 %v1590
      %1955 = vmatpush.msra.mxu0 %v1588
      %1956 = vmatpush.msra.mxu0 %v1586
      %1957 = vmatpush.msra.mxu0 %v1584
      %1958 = vmatpush.msra.mxu0 %v1582
      %1959 = vmatpush.msra.mxu0 %v1580
      %1960 = vmatpush.msra.mxu0 %v1578
      %1961 = vmatpush.msra.mxu0 %v1576
      %1962 = vmatpush.msra.mxu0 %v1574
      %1963 = vmatpush.msra.mxu0 %v1572
      %1964 = vmatpush.msra.mxu0 %v1570
      %1965 = vmatpush.msra.mxu0 %v1568
      %1966 = vmatpush.msra.mxu0 %v1566
      %1967 = vmatpush.msra.mxu0 %v1564
      %1968 = vmatmul.f32.gmra.mxu0 %v1276
      %v1969 = vpop.f32.mrf.mxu0
      %v1970 = vadd.f32 %v1775, %v1969
      %1971 = vmatmul.f32.gmra.mxu0 %v1278
      %v1972 = vpop.f32.mrf.mxu0
      %v1973 = vadd.f32 %v1778, %v1972
      %1974 = vmatmul.f32.gmra.mxu0 %v1281
      %v1975 = vpop.f32.mrf.mxu0
      %v1976 = vadd.f32 %v1781, %v1975
      %1977 = vmatmul.f32.gmra.mxu0 %v1283
      %v1978 = vpop.f32.mrf.mxu0
      %v1979 = vadd.f32 %v1784, %v1978
      %1980 = vmatmul.f32.gmra.mxu0 %v1286
      %v1981 = vpop.f32.mrf.mxu0
      %v1982 = vadd.f32 %v1787, %v1981
      %1983 = vmatmul.f32.gmra.mxu0 %v1288
      %v1984 = vpop.f32.mrf.mxu0
      %v1985 = vadd.f32 %v1790, %v1984
      %1986 = vmatmul.f32.gmra.mxu0 %v1291
      %v1987 = vpop.f32.mrf.mxu0
      %v1988 = vadd.f32 %v1793, %v1987
      %1989 = vmatmul.f32.gmra.mxu0 %v1293
      %v1990 = vpop.f32.mrf.mxu0
      %v1991 = vadd.f32 %v1796, %v1990
      %1992 = vmatmul.f32.gmra.mxu0 %v1296
      %v1993 = vpop.f32.mrf.mxu0
      %v1994 = vadd.f32 %v1799, %v1993
      %1995 = vmatmul.f32.gmra.mxu0 %v1298
      %v1996 = vpop.f32.mrf.mxu0
      %v1997 = vadd.f32 %v1802, %v1996
      %1998 = vmatmul.f32.gmra.mxu0 %v1301
      %v1999 = vpop.f32.mrf.mxu0
      %v2000 = vadd.f32 %v1805, %v1999
      %2001 = vmatmul.f32.gmra.mxu0 %v1303
      %v2002 = vpop.f32.mrf.mxu0
      %v2003 = vadd.f32 %v1808, %v2002
      %2004 = vmatmul.f32.gmra.mxu0 %v1306
      %v2005 = vpop.f32.mrf.mxu0
      %v2006 = vadd.f32 %v1811, %v2005
      %2007 = vmatmul.f32.gmra.mxu0 %v1308
      %v2008 = vpop.f32.mrf.mxu0
      %v2009 = vadd.f32 %v1814, %v2008
      %2010 = vmatmul.f32.gmra.mxu0 %v1311
      %v2011 = vpop.f32.mrf.mxu0
      %v2012 = vadd.f32 %v1817, %v2011
      %2013 = vmatmul.f32.gmra.mxu0 %v1313
      %v2014 = vpop.f32.mrf.mxu0
      %v2015 = vadd.f32 %v1820, %v2014
      %2016 = vdwg.mxu0
      %2017 = vmatpush.msra.mxu0 %v1626
      %2018 = vmatpush.msra.mxu0 %v1624
      %2019 = vmatpush.msra.mxu0 %v1622
      %2020 = vmatpush.msra.mxu0 %v1620
      %2021 = vmatpush.msra.mxu0 %v1618
      %2022 = vmatpush.msra.mxu0 %v1616
      %2023 = vmatpush.msra.mxu0 %v1614
      %2024 = vmatpush.msra.mxu0 %v1612
      %2025 = vmatpush.msra.mxu0 %v1610
      %2026 = vmatpush.msra.mxu0 %v1608
      %2027 = vmatpush.msra.mxu0 %v1606
      %2028 = vmatpush.msra.mxu0 %v1604
      %2029 = vmatpush.msra.mxu0 %v1602
      %2030 = vmatpush.msra.mxu0 %v1600
      %2031 = vmatpush.msra.mxu0 %v1598
      %2032 = vmatpush.msra.mxu0 %v1596
      %2033 = vmatmul.f32.gmra.mxu0 %v1472
      %v2034 = vpop.f32.mrf.mxu0
      %v2035 = vadd.f32 %v1970, %v2034
      %2036 = vmatmul.f32.gmra.mxu0 %v1474
      %v2037 = vpop.f32.mrf.mxu0
      %v2038 = vadd.f32 %v1973, %v2037
      %2039 = vmatmul.f32.gmra.mxu0 %v1477
      %v2040 = vpop.f32.mrf.mxu0
      %v2041 = vadd.f32 %v1976, %v2040
      %2042 = vmatmul.f32.gmra.mxu0 %v1479
      %v2043 = vpop.f32.mrf.mxu0
      %v2044 = vadd.f32 %v1979, %v2043
      %2045 = vmatmul.f32.gmra.mxu0 %v1482
      %v2046 = vpop.f32.mrf.mxu0
      %v2047 = vadd.f32 %v1982, %v2046
      %2048 = vmatmul.f32.gmra.mxu0 %v1484
      %v2049 = vpop.f32.mrf.mxu0
      %v2050 = vadd.f32 %v1985, %v2049
      %2051 = vmatmul.f32.gmra.mxu0 %v1487
      %v2052 = vpop.f32.mrf.mxu0
      %v2053 = vadd.f32 %v1988, %v2052
      %2054 = vmatmul.f32.gmra.mxu0 %v1489
      %v2055 = vpop.f32.mrf.mxu0
      %v2056 = vadd.f32 %v1991, %v2055
      %2057 = vmatmul.f32.gmra.mxu0 %v1492
      %v2058 = vpop.f32.mrf.mxu0
      %v2059 = vadd.f32 %v1994, %v2058
      %2060 = vmatmul.f32.gmra.mxu0 %v1494
      %v2061 = vpop.f32.mrf.mxu0
      %v2062 = vadd.f32 %v1997, %v2061
      %2063 = vmatmul.f32.gmra.mxu0 %v1497
      %v2064 = vpop.f32.mrf.mxu0
      %v2065 = vadd.f32 %v2000, %v2064
      %2066 = vmatmul.f32.gmra.mxu0 %v1499
      %v2067 = vpop.f32.mrf.mxu0
      %v2068 = vadd.f32 %v2003, %v2067
      %2069 = vmatmul.f32.gmra.mxu0 %v1502
      %v2070 = vpop.f32.mrf.mxu0
      %v2071 = vadd.f32 %v2006, %v2070
      %2072 = vmatmul.f32.gmra.mxu0 %v1504
      %v2073 = vpop.f32.mrf.mxu0
      %v2074 = vadd.f32 %v2009, %v2073
      %2075 = vmatmul.f32.gmra.mxu0 %v1507
      %v2076 = vpop.f32.mrf.mxu0
      %v2077 = vadd.f32 %v2012, %v2076
      %2078 = vmatmul.f32.gmra.mxu0 %v1509
      %v2079 = vpop.f32.mrf.mxu0
      %v2080 = vadd.f32 %v2015, %v2079
      %2081 = vdwg.mxu0
      %2082 = vmatpush.msra.mxu0 %v1595
      %2083 = vmatpush.msra.mxu0 %v1593
      %2084 = vmatpush.msra.mxu0 %v1591
      %2085 = vmatpush.msra.mxu0 %v1589
      %2086 = vmatpush.msra.mxu0 %v1587
      %2087 = vmatpush.msra.mxu0 %v1585
      %2088 = vmatpush.msra.mxu0 %v1583
      %2089 = vmatpush.msra.mxu0 %v1581
      %2090 = vmatpush.msra.mxu0 %v1579
      %2091 = vmatpush.msra.mxu0 %v1577
      %2092 = vmatpush.msra.mxu0 %v1575
      %2093 = vmatpush.msra.mxu0 %v1573
      %2094 = vmatpush.msra.mxu0 %v1571
      %2095 = vmatpush.msra.mxu0 %v1569
      %2096 = vmatpush.msra.mxu0 %v1567
      %2097 = vmatpush.msra.mxu0 %v1565
      %2098 = vmatmul.f32.gmra.mxu0 %v1276
      %v2099 = vpop.f32.mrf.mxu0
      %v2100 = vadd.f32 %v1905, %v2099
      %2101 = vmatmul.f32.gmra.mxu0 %v1278
      %v2102 = vpop.f32.mrf.mxu0
      %v2103 = vadd.f32 %v1908, %v2102
      %2104 = vmatmul.f32.gmra.mxu0 %v1281
      %v2105 = vpop.f32.mrf.mxu0
      %v2106 = vadd.f32 %v1911, %v2105
      %2107 = vmatmul.f32.gmra.mxu0 %v1283
      %v2108 = vpop.f32.mrf.mxu0
      %v2109 = vadd.f32 %v1914, %v2108
      %2110 = vmatmul.f32.gmra.mxu0 %v1286
      %v2111 = vpop.f32.mrf.mxu0
      %v2112 = vadd.f32 %v1917, %v2111
      %2113 = vmatmul.f32.gmra.mxu0 %v1288
      %v2114 = vpop.f32.mrf.mxu0
      %v2115 = vadd.f32 %v1920, %v2114
      %2116 = vmatmul.f32.gmra.mxu0 %v1291
      %v2117 = vpop.f32.mrf.mxu0
      %v2118 = vadd.f32 %v1923, %v2117
      %2119 = vmatmul.f32.gmra.mxu0 %v1293
      %v2120 = vpop.f32.mrf.mxu0
      %v2121 = vadd.f32 %v1926, %v2120
      %2122 = vmatmul.f32.gmra.mxu0 %v1296
      %v2123 = vpop.f32.mrf.mxu0
      %v2124 = vadd.f32 %v1929, %v2123
      %2125 = vmatmul.f32.gmra.mxu0 %v1298
      %v2126 = vpop.f32.mrf.mxu0
      %v2127 = vadd.f32 %v1932, %v2126
      %2128 = vmatmul.f32.gmra.mxu0 %v1301
      %v2129 = vpop.f32.mrf.mxu0
      %v2130 = vadd.f32 %v1935, %v2129
      %2131 = vmatmul.f32.gmra.mxu0 %v1303
      %v2132 = vpop.f32.mrf.mxu0
      %v2133 = vadd.f32 %v1938, %v2132
      %2134 = vmatmul.f32.gmra.mxu0 %v1306
      %v2135 = vpop.f32.mrf.mxu0
      %v2136 = vadd.f32 %v1941, %v2135
      %2137 = vmatmul.f32.gmra.mxu0 %v1308
      %v2138 = vpop.f32.mrf.mxu0
      %v2139 = vadd.f32 %v1944, %v2138
      %2140 = vmatmul.f32.gmra.mxu0 %v1311
      %v2141 = vpop.f32.mrf.mxu0
      %v2142 = vadd.f32 %v1947, %v2141
      %2143 = vmatmul.f32.gmra.mxu0 %v1313
      %v2144 = vpop.f32.mrf.mxu0
      %v2145 = vadd.f32 %v1950, %v2144
      %2146 = vdwg.mxu0
      %2147 = vmatpush.msra.mxu0 %v1627
      %2148 = vmatpush.msra.mxu0 %v1625
      %2149 = vmatpush.msra.mxu0 %v1623
      %2150 = vmatpush.msra.mxu0 %v1621
      %2151 = vmatpush.msra.mxu0 %v1619
      %2152 = vmatpush.msra.mxu0 %v1617
      %2153 = vmatpush.msra.mxu0 %v1615
      %2154 = vmatpush.msra.mxu0 %v1613
      %2155 = vmatpush.msra.mxu0 %v1611
      %2156 = vmatpush.msra.mxu0 %v1609
      %2157 = vmatpush.msra.mxu0 %v1607
      %2158 = vmatpush.msra.mxu0 %v1605
      %2159 = vmatpush.msra.mxu0 %v1603
      %2160 = vmatpush.msra.mxu0 %v1601
      %2161 = vmatpush.msra.mxu0 %v1599
      %2162 = vmatpush.msra.mxu0 %v1597
      %2163 = vmatmul.f32.gmra.mxu0 %v1472
      %v2164 = vpop.f32.mrf.mxu0
      %v2165 = vadd.f32 %v2100, %v2164
      %2166 = vmatmul.f32.gmra.mxu0 %v1474
      %v2167 = vpop.f32.mrf.mxu0
      %v2168 = vadd.f32 %v2103, %v2167
      %2169 = vmatmul.f32.gmra.mxu0 %v1477
      %v2170 = vpop.f32.mrf.mxu0
      %v2171 = vadd.f32 %v2106, %v2170
      %2172 = vmatmul.f32.gmra.mxu0 %v1479
      %v2173 = vpop.f32.mrf.mxu0
      %v2174 = vadd.f32 %v2109, %v2173
      %2175 = vmatmul.f32.gmra.mxu0 %v1482
      %v2176 = vpop.f32.mrf.mxu0
      %v2177 = vadd.f32 %v2112, %v2176
      %2178 = vmatmul.f32.gmra.mxu0 %v1484
      %v2179 = vpop.f32.mrf.mxu0
      %v2180 = vadd.f32 %v2115, %v2179
      %2181 = vmatmul.f32.gmra.mxu0 %v1487
      %v2182 = vpop.f32.mrf.mxu0
      %v2183 = vadd.f32 %v2118, %v2182
      %2184 = vmatmul.f32.gmra.mxu0 %v1489
      %v2185 = vpop.f32.mrf.mxu0
      %v2186 = vadd.f32 %v2121, %v2185
      %2187 = vmatmul.f32.gmra.mxu0 %v1492
      %v2188 = vpop.f32.mrf.mxu0
      %v2189 = vadd.f32 %v2124, %v2188
      %2190 = vmatmul.f32.gmra.mxu0 %v1494
      %v2191 = vpop.f32.mrf.mxu0
      %v2192 = vadd.f32 %v2127, %v2191
      %2193 = vmatmul.f32.gmra.mxu0 %v1497
      %v2194 = vpop.f32.mrf.mxu0
      %v2195 = vadd.f32 %v2130, %v2194
      %2196 = vmatmul.f32.gmra.mxu0 %v1499
      %v2197 = vpop.f32.mrf.mxu0
      %v2198 = vadd.f32 %v2133, %v2197
      %2199 = vmatmul.f32.gmra.mxu0 %v1502
      %v2200 = vpop.f32.mrf.mxu0
      %v2201 = vadd.f32 %v2136, %v2200
      %2202 = vmatmul.f32.gmra.mxu0 %v1504
      %v2203 = vpop.f32.mrf.mxu0
      %v2204 = vadd.f32 %v2139, %v2203
      %2205 = vmatmul.f32.gmra.mxu0 %v1507
      %v2206 = vpop.f32.mrf.mxu0
      %v2207 = vadd.f32 %v2142, %v2206
      %2208 = vmatmul.f32.gmra.mxu0 %v1509
      %v2209 = vpop.f32.mrf.mxu0
      %v2210 = vadd.f32 %v2145, %v2209
      %2211 = vdwg.mxu0
      %v2212 = vld [vmem:[%s6] sm:$0x3]
      %v2214 = vperm.slane %v2212, 0
      %v2215 = vperm.slane %v2212, 1
      %v2218 = vadd.f32 %v2035, %v2214
      %v2219 = vadd.f32 %v2165, %v2215
      %v2220 = vadd.f32 %v2038, %v2214
      %v2221 = vadd.f32 %v2168, %v2215
      %v2222 = vadd.f32 %v2041, %v2214
      %v2223 = vadd.f32 %v2171, %v2215
      %v2224 = vadd.f32 %v2044, %v2214
      %v2225 = vadd.f32 %v2174, %v2215
      %v2226 = vadd.f32 %v2047, %v2214
      %v2227 = vadd.f32 %v2177, %v2215
      %v2228 = vadd.f32 %v2050, %v2214
      %v2229 = vadd.f32 %v2180, %v2215
      %v2230 = vadd.f32 %v2053, %v2214
      %v2231 = vadd.f32 %v2183, %v2215
      %v2232 = vadd.f32 %v2056, %v2214
      %v2233 = vadd.f32 %v2186, %v2215
      %v2234 = vadd.f32 %v2059, %v2214
      %v2235 = vadd.f32 %v2189, %v2215
      %v2236 = vadd.f32 %v2062, %v2214
      %v2237 = vadd.f32 %v2192, %v2215
      %v2238 = vadd.f32 %v2065, %v2214
      %v2239 = vadd.f32 %v2195, %v2215
      %v2240 = vadd.f32 %v2068, %v2214
      %v2241 = vadd.f32 %v2198, %v2215
      %v2242 = vadd.f32 %v2071, %v2214
      %v2243 = vadd.f32 %v2201, %v2215
      %v2244 = vadd.f32 %v2074, %v2214
      %v2245 = vadd.f32 %v2204, %v2215
      %v2246 = vadd.f32 %v2077, %v2214
      %v2247 = vadd.f32 %v2207, %v2215
      %v2248 = vadd.f32 %v2080, %v2214
      %v2249 = vadd.f32 %v2210, %v2215
      %v2250 = vld [vmem:[%s7] sm:$0x3]
      %v2251 = vld [vmem:[%s8] sm:$0x3]
      %v2252 = vadd.f32 %v2218, %v2219
      %2253 = vadd.xlane.f32.xlu0 %v2252
      %v2254 = vpop.xlane.xlu0 %2253
      %v2255 = vadd.f32 %v2220, %v2221
      %2256 = vadd.xlane.f32.xlu0 %v2255
      %v2257 = vpop.xlane.xlu0 %2256
      %v2258 = vadd.f32 %v2222, %v2223
      %2259 = vadd.xlane.f32.xlu0 %v2258
      %v2260 = vpop.xlane.xlu0 %2259
      %v2261 = vadd.f32 %v2224, %v2225
      %2262 = vadd.xlane.f32.xlu0 %v2261
      %v2263 = vpop.xlane.xlu0 %2262
      %v2264 = vadd.f32 %v2226, %v2227
      %2265 = vadd.xlane.f32.xlu0 %v2264
      %v2266 = vpop.xlane.xlu0 %2265
      %v2267 = vadd.f32 %v2228, %v2229
      %2268 = vadd.xlane.f32.xlu0 %v2267
      %v2269 = vpop.xlane.xlu0 %2268
      %v2270 = vadd.f32 %v2230, %v2231
      %2271 = vadd.xlane.f32.xlu0 %v2270
      %v2272 = vpop.xlane.xlu0 %2271
      %v2273 = vadd.f32 %v2232, %v2233
      %2274 = vadd.xlane.f32.xlu0 %v2273
      %v2275 = vpop.xlane.xlu0 %2274
      %v2276 = vadd.f32 %v2234, %v2235
      %2277 = vadd.xlane.f32.xlu0 %v2276
      %v2278 = vpop.xlane.xlu0 %2277
      %v2279 = vadd.f32 %v2236, %v2237
      %2280 = vadd.xlane.f32.xlu0 %v2279
      %v2281 = vpop.xlane.xlu0 %2280
      %v2282 = vadd.f32 %v2238, %v2239
      %2283 = vadd.xlane.f32.xlu0 %v2282
      %v2284 = vpop.xlane.xlu0 %2283
      %v2285 = vadd.f32 %v2240, %v2241
      %2286 = vadd.xlane.f32.xlu0 %v2285
      %v2287 = vpop.xlane.xlu0 %2286
      %v2288 = vadd.f32 %v2242, %v2243
      %2289 = vadd.xlane.f32.xlu0 %v2288
      %v2290 = vpop.xlane.xlu0 %2289
      %v2291 = vadd.f32 %v2244, %v2245
      %2292 = vadd.xlane.f32.xlu0 %v2291
      %v2293 = vpop.xlane.xlu0 %2292
      %v2294 = vadd.f32 %v2246, %v2247
      %2295 = vadd.xlane.f32.xlu0 %v2294
      %v2296 = vpop.xlane.xlu0 %2295
      %v2297 = vadd.f32 %v2248, %v2249
      %2298 = vadd.xlane.f32.xlu0 %v2297
      %v2299 = vpop.xlane.xlu0 %2298
      %v2300 = vrcp.pop 256.0
      %v2301 = vmul.f32 256.0, %v2300
      %v2302 = vsub.f32 1.0, %v2301
      %v2303 = vmul.f32 %v2300, %v2302
      %v2304 = vadd.f32 %v2300, %v2303
      %vm2305 = vweird.f32 %v2300
      %v2306 = vsel %vm2305, %v2300, %v2304
      %v2307 = vmul.f32 %v2254, %v2306
      %v2308 = vmul.f32 %v2257, %v2306
      %v2309 = vmul.f32 %v2260, %v2306
      %v2310 = vmul.f32 %v2263, %v2306
      %v2311 = vmul.f32 %v2266, %v2306
      %v2312 = vmul.f32 %v2269, %v2306
      %v2313 = vmul.f32 %v2272, %v2306
      %v2314 = vmul.f32 %v2275, %v2306
      %v2315 = vmul.f32 %v2278, %v2306
      %v2316 = vmul.f32 %v2281, %v2306
      %v2317 = vmul.f32 %v2284, %v2306
      %v2318 = vmul.f32 %v2287, %v2306
      %v2319 = vmul.f32 %v2290, %v2306
      %v2320 = vmul.f32 %v2293, %v2306
      %v2321 = vmul.f32 %v2296, %v2306
      %v2322 = vmul.f32 %v2299, %v2306
      %v2323 = vmul.f32 %v2218, %v2218
      %v2324 = vmul.f32 %v2219, %v2219
      %v2325 = vmul.f32 %v2220, %v2220
      %v2326 = vmul.f32 %v2221, %v2221
      %v2327 = vmul.f32 %v2222, %v2222
      %v2328 = vmul.f32 %v2223, %v2223
      %v2329 = vmul.f32 %v2224, %v2224
      %v2330 = vmul.f32 %v2225, %v2225
      %v2331 = vmul.f32 %v2226, %v2226
      %v2332 = vmul.f32 %v2227, %v2227
      %v2333 = vmul.f32 %v2228, %v2228
      %v2334 = vmul.f32 %v2229, %v2229
      %v2335 = vmul.f32 %v2230, %v2230
      %v2336 = vmul.f32 %v2231, %v2231
      %v2337 = vmul.f32 %v2232, %v2232
      %v2338 = vmul.f32 %v2233, %v2233
      %v2339 = vmul.f32 %v2234, %v2234
      %v2340 = vmul.f32 %v2235, %v2235
      %v2341 = vmul.f32 %v2236, %v2236
      %v2342 = vmul.f32 %v2237, %v2237
      %v2343 = vmul.f32 %v2238, %v2238
      %v2344 = vmul.f32 %v2239, %v2239
      %v2345 = vmul.f32 %v2240, %v2240
      %v2346 = vmul.f32 %v2241, %v2241
      %v2347 = vmul.f32 %v2242, %v2242
      %v2348 = vmul.f32 %v2243, %v2243
      %v2349 = vmul.f32 %v2244, %v2244
      %v2350 = vmul.f32 %v2245, %v2245
      %v2351 = vmul.f32 %v2246, %v2246
      %v2352 = vmul.f32 %v2247, %v2247
      %v2353 = vmul.f32 %v2248, %v2248
      %v2354 = vmul.f32 %v2249, %v2249
      %v2355 = vadd.f32 %v2323, %v2324
      %2356 = vadd.xlane.f32.xlu0 %v2355
      %v2357 = vpop.xlane.xlu0 %2356
      %v2358 = vadd.f32 %v2325, %v2326
      %2359 = vadd.xlane.f32.xlu0 %v2358
      %v2360 = vpop.xlane.xlu0 %2359
      %v2361 = vadd.f32 %v2327, %v2328
      %2362 = vadd.xlane.f32.xlu0 %v2361
      %v2363 = vpop.xlane.xlu0 %2362
      %v2364 = vadd.f32 %v2329, %v2330
      %2365 = vadd.xlane.f32.xlu0 %v2364
      %v2366 = vpop.xlane.xlu0 %2365
      %v2367 = vadd.f32 %v2331, %v2332
      %2368 = vadd.xlane.f32.xlu0 %v2367
      %v2369 = vpop.xlane.xlu0 %2368
      %v2370 = vadd.f32 %v2333, %v2334
      %2371 = vadd.xlane.f32.xlu0 %v2370
      %v2372 = vpop.xlane.xlu0 %2371
      %v2373 = vadd.f32 %v2335, %v2336
      %2374 = vadd.xlane.f32.xlu0 %v2373
      %v2375 = vpop.xlane.xlu0 %2374
      %v2376 = vadd.f32 %v2337, %v2338
      %2377 = vadd.xlane.f32.xlu0 %v2376
      %v2378 = vpop.xlane.xlu0 %2377
      %v2379 = vadd.f32 %v2339, %v2340
      %2380 = vadd.xlane.f32.xlu0 %v2379
      %v2381 = vpop.xlane.xlu0 %2380
      %v2382 = vadd.f32 %v2341, %v2342
      %2383 = vadd.xlane.f32.xlu0 %v2382
      %v2384 = vpop.xlane.xlu0 %2383
      %v2385 = vadd.f32 %v2343, %v2344
      %2386 = vadd.xlane.f32.xlu0 %v2385
      %v2387 = vpop.xlane.xlu0 %2386
      %v2388 = vadd.f32 %v2345, %v2346
      %2389 = vadd.xlane.f32.xlu0 %v2388
      %v2390 = vpop.xlane.xlu0 %2389
      %v2391 = vadd.f32 %v2347, %v2348
      %2392 = vadd.xlane.f32.xlu0 %v2391
      %v2393 = vpop.xlane.xlu0 %2392
      %v2394 = vadd.f32 %v2349, %v2350
      %2395 = vadd.xlane.f32.xlu0 %v2394
      %v2396 = vpop.xlane.xlu0 %2395
      %v2397 = vadd.f32 %v2351, %v2352
      %2398 = vadd.xlane.f32.xlu0 %v2397
      %v2399 = vpop.xlane.xlu0 %2398
      %v2400 = vadd.f32 %v2353, %v2354
      %2401 = vadd.xlane.f32.xlu0 %v2400
      %v2402 = vpop.xlane.xlu0 %2401
      %v2403 = vmul.f32 %v2357, %v2306
      %v2404 = vmul.f32 %v2360, %v2306
      %v2405 = vmul.f32 %v2363, %v2306
      %v2406 = vmul.f32 %v2366, %v2306
      %v2407 = vmul.f32 %v2369, %v2306
      %v2408 = vmul.f32 %v2372, %v2306
      %v2409 = vmul.f32 %v2375, %v2306
      %v2410 = vmul.f32 %v2378, %v2306
      %v2411 = vmul.f32 %v2381, %v2306
      %v2412 = vmul.f32 %v2384, %v2306
      %v2413 = vmul.f32 %v2387, %v2306
      %v2414 = vmul.f32 %v2390, %v2306
      %v2415 = vmul.f32 %v2393, %v2306
      %v2416 = vmul.f32 %v2396, %v2306
      %v2417 = vmul.f32 %v2399, %v2306
      %v2418 = vmul.f32 %v2402, %v2306
      %v2419 = vmul.f32 %v2307, %v2307
      %v2420 = vmul.f32 %v2308, %v2308
      %v2421 = vmul.f32 %v2309, %v2309
      %v2422 = vmul.f32 %v2310, %v2310
      %v2423 = vmul.f32 %v2311, %v2311
      %v2424 = vmul.f32 %v2312, %v2312
      %v2425 = vmul.f32 %v2313, %v2313
      %v2426 = vmul.f32 %v2314, %v2314
      %v2427 = vmul.f32 %v2315, %v2315
      %v2428 = vmul.f32 %v2316, %v2316
      %v2429 = vmul.f32 %v2317, %v2317
      %v2430 = vmul.f32 %v2318, %v2318
      %v2431 = vmul.f32 %v2319, %v2319
      %v2432 = vmul.f32 %v2320, %v2320
      %v2433 = vmul.f32 %v2321, %v2321
      %v2434 = vmul.f32 %v2322, %v2322
      %v2435 = vsub.f32 %v2403, %v2419
      %v2436 = vsub.f32 %v2404, %v2420
      %v2437 = vsub.f32 %v2405, %v2421
      %v2438 = vsub.f32 %v2406, %v2422
      %v2439 = vsub.f32 %v2407, %v2423
      %v2440 = vsub.f32 %v2408, %v2424
      %v2441 = vsub.f32 %v2409, %v2425
      %v2442 = vsub.f32 %v2410, %v2426
      %v2443 = vsub.f32 %v2411, %v2427
      %v2444 = vsub.f32 %v2412, %v2428
      %v2445 = vsub.f32 %v2413, %v2429
      %v2446 = vsub.f32 %v2414, %v2430
      %v2447 = vsub.f32 %v2415, %v2431
      %v2448 = vsub.f32 %v2416, %v2432
      %v2449 = vsub.f32 %v2417, %v2433
      %v2450 = vsub.f32 %v2418, %v2434
      %v2451 = vmax.f32 %v2435, 0.0
      %v2452 = vmax.f32 %v2436, 0.0
      %v2453 = vmax.f32 %v2437, 0.0
      %v2454 = vmax.f32 %v2438, 0.0
      %v2455 = vmax.f32 %v2439, 0.0
      %v2456 = vmax.f32 %v2440, 0.0
      %v2457 = vmax.f32 %v2441, 0.0
      %v2458 = vmax.f32 %v2442, 0.0
      %v2459 = vmax.f32 %v2443, 0.0
      %v2460 = vmax.f32 %v2444, 0.0
      %v2461 = vmax.f32 %v2445, 0.0
      %v2462 = vmax.f32 %v2446, 0.0
      %v2463 = vmax.f32 %v2447, 0.0
      %v2464 = vmax.f32 %v2448, 0.0
      %v2465 = vmax.f32 %v2449, 0.0
      %v2466 = vmax.f32 %v2450, 0.0
      %v2467 = vsub.f32 %v2218, %v2307
      %v2468 = vsub.f32 %v2219, %v2307
      %v2469 = vsub.f32 %v2220, %v2308
      %v2470 = vsub.f32 %v2221, %v2308
      %v2471 = vsub.f32 %v2222, %v2309
      %v2472 = vsub.f32 %v2223, %v2309
      %v2473 = vsub.f32 %v2224, %v2310
      %v2474 = vsub.f32 %v2225, %v2310
      %v2475 = vsub.f32 %v2226, %v2311
      %v2476 = vsub.f32 %v2227, %v2311
      %v2477 = vsub.f32 %v2228, %v2312
      %v2478 = vsub.f32 %v2229, %v2312
      %v2479 = vsub.f32 %v2230, %v2313
      %v2480 = vsub.f32 %v2231, %v2313
      %v2481 = vsub.f32 %v2232, %v2314
      %v2482 = vsub.f32 %v2233, %v2314
      %v2483 = vsub.f32 %v2234, %v2315
      %v2484 = vsub.f32 %v2235, %v2315
      %v2485 = vsub.f32 %v2236, %v2316
      %v2486 = vsub.f32 %v2237, %v2316
      %v2487 = vsub.f32 %v2238, %v2317
      %v2488 = vsub.f32 %v2239, %v2317
      %v2489 = vsub.f32 %v2240, %v2318
      %v2490 = vsub.f32 %v2241, %v2318
      %v2491 = vsub.f32 %v2242, %v2319
      %v2492 = vsub.f32 %v2243, %v2319
      %v2493 = vsub.f32 %v2244, %v2320
      %v2494 = vsub.f32 %v2245, %v2320
      %v2495 = vsub.f32 %v2246, %v2321
      %v2496 = vsub.f32 %v2247, %v2321
      %v2497 = vsub.f32 %v2248, %v2322
      %v2498 = vsub.f32 %v2249, %v2322
      %v2499 = vadd.f32 %v2451, 1e-05
      %v2500 = vadd.f32 %v2452, 1e-05
      %v2501 = vadd.f32 %v2453, 1e-05
      %v2502 = vadd.f32 %v2454, 1e-05
      %v2503 = vadd.f32 %v2455, 1e-05
      %v2504 = vadd.f32 %v2456, 1e-05
      %v2505 = vadd.f32 %v2457, 1e-05
      %v2506 = vadd.f32 %v2458, 1e-05
      %v2507 = vadd.f32 %v2459, 1e-05
      %v2508 = vadd.f32 %v2460, 1e-05
      %v2509 = vadd.f32 %v2461, 1e-05
      %v2510 = vadd.f32 %v2462, 1e-05
      %v2511 = vadd.f32 %v2463, 1e-05
      %v2512 = vadd.f32 %v2464, 1e-05
      %v2513 = vadd.f32 %v2465, 1e-05
      %v2514 = vadd.f32 %v2466, 1e-05
      %v2515 = vrsqrt.pop %v2499
      %v2516 = vmul.f32 %v2515, %v2499
      %v2517 = vmul.f32 %v2516, %v2515
      %v2518 = vmul.f32 0.5, %v2517
      %v2519 = vsub.f32 1.5, %v2518
      %v2520 = vmul.f32 %v2515, %v2519
      %vm2521 = vweird.f32 %v2499
      %vm2522 = vweird.f32 %v2515
      %vm2523 = vmor %vm2521, %vm2522
      %v2524 = vsel %vm2523, %v2515, %v2520
      %v2525 = vrsqrt.pop %v2500
      %v2526 = vmul.f32 %v2525, %v2500
      %v2527 = vmul.f32 %v2526, %v2525
      %v2528 = vmul.f32 0.5, %v2527
      %v2529 = vsub.f32 1.5, %v2528
      %v2530 = vmul.f32 %v2525, %v2529
      %vm2531 = vweird.f32 %v2500
      %vm2532 = vweird.f32 %v2525
      %vm2533 = vmor %vm2531, %vm2532
      %v2534 = vsel %vm2533, %v2525, %v2530
      %v2535 = vrsqrt.pop %v2501
      %v2536 = vmul.f32 %v2535, %v2501
      %v2537 = vmul.f32 %v2536, %v2535
      %v2538 = vmul.f32 0.5, %v2537
      %v2539 = vsub.f32 1.5, %v2538
      %v2540 = vmul.f32 %v2535, %v2539
      %vm2541 = vweird.f32 %v2501
      %vm2542 = vweird.f32 %v2535
      %vm2543 = vmor %vm2541, %vm2542
      %v2544 = vsel %vm2543, %v2535, %v2540
      %v2545 = vrsqrt.pop %v2502
      %v2546 = vmul.f32 %v2545, %v2502
      %v2547 = vmul.f32 %v2546, %v2545
      %v2548 = vmul.f32 0.5, %v2547
      %v2549 = vsub.f32 1.5, %v2548
      %v2550 = vmul.f32 %v2545, %v2549
      %vm2551 = vweird.f32 %v2502
      %vm2552 = vweird.f32 %v2545
      %vm2553 = vmor %vm2551, %vm2552
      %v2554 = vsel %vm2553, %v2545, %v2550
      %v2555 = vrsqrt.pop %v2503
      %v2556 = vmul.f32 %v2555, %v2503
      %v2557 = vmul.f32 %v2556, %v2555
      %v2558 = vmul.f32 0.5, %v2557
      %v2559 = vsub.f32 1.5, %v2558
      %v2560 = vmul.f32 %v2555, %v2559
      %vm2561 = vweird.f32 %v2503
      %vm2562 = vweird.f32 %v2555
      %vm2563 = vmor %vm2561, %vm2562
      %v2564 = vsel %vm2563, %v2555, %v2560
      %v2565 = vrsqrt.pop %v2504
      %v2566 = vmul.f32 %v2565, %v2504
      %v2567 = vmul.f32 %v2566, %v2565
      %v2568 = vmul.f32 0.5, %v2567
      %v2569 = vsub.f32 1.5, %v2568
      %v2570 = vmul.f32 %v2565, %v2569
      %vm2571 = vweird.f32 %v2504
      %vm2572 = vweird.f32 %v2565
      %vm2573 = vmor %vm2571, %vm2572
      %v2574 = vsel %vm2573, %v2565, %v2570
      %v2575 = vrsqrt.pop %v2505
      %v2576 = vmul.f32 %v2575, %v2505
      %v2577 = vmul.f32 %v2576, %v2575
      %v2578 = vmul.f32 0.5, %v2577
      %v2579 = vsub.f32 1.5, %v2578
      %v2580 = vmul.f32 %v2575, %v2579
      %vm2581 = vweird.f32 %v2505
      %vm2582 = vweird.f32 %v2575
      %vm2583 = vmor %vm2581, %vm2582
      %v2584 = vsel %vm2583, %v2575, %v2580
      %v2585 = vrsqrt.pop %v2506
      %v2586 = vmul.f32 %v2585, %v2506
      %v2587 = vmul.f32 %v2586, %v2585
      %v2588 = vmul.f32 0.5, %v2587
      %v2589 = vsub.f32 1.5, %v2588
      %v2590 = vmul.f32 %v2585, %v2589
      %vm2591 = vweird.f32 %v2506
      %vm2592 = vweird.f32 %v2585
      %vm2593 = vmor %vm2591, %vm2592
      %v2594 = vsel %vm2593, %v2585, %v2590
      %v2595 = vrsqrt.pop %v2507
      %v2596 = vmul.f32 %v2595, %v2507
      %v2597 = vmul.f32 %v2596, %v2595
      %v2598 = vmul.f32 0.5, %v2597
      %v2599 = vsub.f32 1.5, %v2598
      %v2600 = vmul.f32 %v2595, %v2599
      %vm2601 = vweird.f32 %v2507
      %vm2602 = vweird.f32 %v2595
      %vm2603 = vmor %vm2601, %vm2602
      %v2604 = vsel %vm2603, %v2595, %v2600
      %v2605 = vrsqrt.pop %v2508
      %v2606 = vmul.f32 %v2605, %v2508
      %v2607 = vmul.f32 %v2606, %v2605
      %v2608 = vmul.f32 0.5, %v2607
      %v2609 = vsub.f32 1.5, %v2608
      %v2610 = vmul.f32 %v2605, %v2609
      %vm2611 = vweird.f32 %v2508
      %vm2612 = vweird.f32 %v2605
      %vm2613 = vmor %vm2611, %vm2612
      %v2614 = vsel %vm2613, %v2605, %v2610
      %v2615 = vrsqrt.pop %v2509
      %v2616 = vmul.f32 %v2615, %v2509
      %v2617 = vmul.f32 %v2616, %v2615
      %v2618 = vmul.f32 0.5, %v2617
      %v2619 = vsub.f32 1.5, %v2618
      %v2620 = vmul.f32 %v2615, %v2619
      %vm2621 = vweird.f32 %v2509
      %vm2622 = vweird.f32 %v2615
      %vm2623 = vmor %vm2621, %vm2622
      %v2624 = vsel %vm2623, %v2615, %v2620
      %v2625 = vrsqrt.pop %v2510
      %v2626 = vmul.f32 %v2625, %v2510
      %v2627 = vmul.f32 %v2626, %v2625
      %v2628 = vmul.f32 0.5, %v2627
      %v2629 = vsub.f32 1.5, %v2628
      %v2630 = vmul.f32 %v2625, %v2629
      %vm2631 = vweird.f32 %v2510
      %vm2632 = vweird.f32 %v2625
      %vm2633 = vmor %vm2631, %vm2632
      %v2634 = vsel %vm2633, %v2625, %v2630
      %v2635 = vrsqrt.pop %v2511
      %v2636 = vmul.f32 %v2635, %v2511
      %v2637 = vmul.f32 %v2636, %v2635
      %v2638 = vmul.f32 0.5, %v2637
      %v2639 = vsub.f32 1.5, %v2638
      %v2640 = vmul.f32 %v2635, %v2639
      %vm2641 = vweird.f32 %v2511
      %vm2642 = vweird.f32 %v2635
      %vm2643 = vmor %vm2641, %vm2642
      %v2644 = vsel %vm2643, %v2635, %v2640
      %v2645 = vrsqrt.pop %v2512
      %v2646 = vmul.f32 %v2645, %v2512
      %v2647 = vmul.f32 %v2646, %v2645
      %v2648 = vmul.f32 0.5, %v2647
      %v2649 = vsub.f32 1.5, %v2648
      %v2650 = vmul.f32 %v2645, %v2649
      %vm2651 = vweird.f32 %v2512
      %vm2652 = vweird.f32 %v2645
      %vm2653 = vmor %vm2651, %vm2652
      %v2654 = vsel %vm2653, %v2645, %v2650
      %v2655 = vrsqrt.pop %v2513
      %v2656 = vmul.f32 %v2655, %v2513
      %v2657 = vmul.f32 %v2656, %v2655
      %v2658 = vmul.f32 0.5, %v2657
      %v2659 = vsub.f32 1.5, %v2658
      %v2660 = vmul.f32 %v2655, %v2659
      %vm2661 = vweird.f32 %v2513
      %vm2662 = vweird.f32 %v2655
      %vm2663 = vmor %vm2661, %vm2662
      %v2664 = vsel %vm2663, %v2655, %v2660
      %v2665 = vrsqrt.pop %v2514
      %v2666 = vmul.f32 %v2665, %v2514
      %v2667 = vmul.f32 %v2666, %v2665
      %v2668 = vmul.f32 0.5, %v2667
      %v2669 = vsub.f32 1.5, %v2668
      %v2670 = vmul.f32 %v2665, %v2669
      %vm2671 = vweird.f32 %v2514
      %vm2672 = vweird.f32 %v2665
      %vm2673 = vmor %vm2671, %vm2672
      %v2674 = vsel %vm2673, %v2665, %v2670
      %v2675 = vmul.f32 %v2467, %v2524
      %v2676 = vmul.f32 %v2468, %v2524
      %v2677 = vmul.f32 %v2469, %v2534
      %v2678 = vmul.f32 %v2470, %v2534
      %v2679 = vmul.f32 %v2471, %v2544
      %v2680 = vmul.f32 %v2472, %v2544
      %v2681 = vmul.f32 %v2473, %v2554
      %v2682 = vmul.f32 %v2474, %v2554
      %v2683 = vmul.f32 %v2475, %v2564
      %v2684 = vmul.f32 %v2476, %v2564
      %v2685 = vmul.f32 %v2477, %v2574
      %v2686 = vmul.f32 %v2478, %v2574
      %v2687 = vmul.f32 %v2479, %v2584
      %v2688 = vmul.f32 %v2480, %v2584
      %v2689 = vmul.f32 %v2481, %v2594
      %v2690 = vmul.f32 %v2482, %v2594
      %v2691 = vmul.f32 %v2483, %v2604
      %v2692 = vmul.f32 %v2484, %v2604
      %v2693 = vmul.f32 %v2485, %v2614
      %v2694 = vmul.f32 %v2486, %v2614
      %v2695 = vmul.f32 %v2487, %v2624
      %v2696 = vmul.f32 %v2488, %v2624
      %v2697 = vmul.f32 %v2489, %v2634
      %v2698 = vmul.f32 %v2490, %v2634
      %v2699 = vmul.f32 %v2491, %v2644
      %v2700 = vmul.f32 %v2492, %v2644
      %v2701 = vmul.f32 %v2493, %v2654
      %v2702 = vmul.f32 %v2494, %v2654
      %v2703 = vmul.f32 %v2495, %v2664
      %v2704 = vmul.f32 %v2496, %v2664
      %v2705 = vmul.f32 %v2497, %v2674
      %v2706 = vmul.f32 %v2498, %v2674
      %v2708 = vperm.slane %v2250, 0
      %v2709 = vperm.slane %v2250, 1
      %v2712 = vmul.f32 %v2675, %v2708
      %v2713 = vmul.f32 %v2676, %v2709
      %v2714 = vmul.f32 %v2677, %v2708
      %v2715 = vmul.f32 %v2678, %v2709
      %v2716 = vmul.f32 %v2679, %v2708
      %v2717 = vmul.f32 %v2680, %v2709
      %v2718 = vmul.f32 %v2681, %v2708
      %v2719 = vmul.f32 %v2682, %v2709
      %v2720 = vmul.f32 %v2683, %v2708
      %v2721 = vmul.f32 %v2684, %v2709
      %v2722 = vmul.f32 %v2685, %v2708
      %v2723 = vmul.f32 %v2686, %v2709
      %v2724 = vmul.f32 %v2687, %v2708
      %v2725 = vmul.f32 %v2688, %v2709
      %v2726 = vmul.f32 %v2689, %v2708
      %v2727 = vmul.f32 %v2690, %v2709
      %v2728 = vmul.f32 %v2691, %v2708
      %v2729 = vmul.f32 %v2692, %v2709
      %v2730 = vmul.f32 %v2693, %v2708
      %v2731 = vmul.f32 %v2694, %v2709
      %v2732 = vmul.f32 %v2695, %v2708
      %v2733 = vmul.f32 %v2696, %v2709
      %v2734 = vmul.f32 %v2697, %v2708
      %v2735 = vmul.f32 %v2698, %v2709
      %v2736 = vmul.f32 %v2699, %v2708
      %v2737 = vmul.f32 %v2700, %v2709
      %v2738 = vmul.f32 %v2701, %v2708
      %v2739 = vmul.f32 %v2702, %v2709
      %v2740 = vmul.f32 %v2703, %v2708
      %v2741 = vmul.f32 %v2704, %v2709
      %v2742 = vmul.f32 %v2705, %v2708
      %v2743 = vmul.f32 %v2706, %v2709
      %v2745 = vperm.slane %v2251, 0
      %v2746 = vperm.slane %v2251, 1
      %v2749 = vadd.f32 %v2712, %v2745
      %v2750 = vadd.f32 %v2713, %v2746
      %v2751 = vadd.f32 %v2714, %v2745
      %v2752 = vadd.f32 %v2715, %v2746
      %v2753 = vadd.f32 %v2716, %v2745
      %v2754 = vadd.f32 %v2717, %v2746
      %v2755 = vadd.f32 %v2718, %v2745
      %v2756 = vadd.f32 %v2719, %v2746
      %v2757 = vadd.f32 %v2720, %v2745
      %v2758 = vadd.f32 %v2721, %v2746
      %v2759 = vadd.f32 %v2722, %v2745
      %v2760 = vadd.f32 %v2723, %v2746
      %v2761 = vadd.f32 %v2724, %v2745
      %v2762 = vadd.f32 %v2725, %v2746
      %v2763 = vadd.f32 %v2726, %v2745
      %v2764 = vadd.f32 %v2727, %v2746
      %v2765 = vadd.f32 %v2728, %v2745
      %v2766 = vadd.f32 %v2729, %v2746
      %v2767 = vadd.f32 %v2730, %v2745
      %v2768 = vadd.f32 %v2731, %v2746
      %v2769 = vadd.f32 %v2732, %v2745
      %v2770 = vadd.f32 %v2733, %v2746
      %v2771 = vadd.f32 %v2734, %v2745
      %v2772 = vadd.f32 %v2735, %v2746
      %v2773 = vadd.f32 %v2736, %v2745
      %v2774 = vadd.f32 %v2737, %v2746
      %v2775 = vadd.f32 %v2738, %v2745
      %v2776 = vadd.f32 %v2739, %v2746
      %v2777 = vadd.f32 %v2740, %v2745
      %v2778 = vadd.f32 %v2741, %v2746
      %v2779 = vadd.f32 %v2742, %v2745
      %v2780 = vadd.f32 %v2743, %v2746
      %v2781 = vmax.f32 %v2749, 0.0
      %v2782 = vmax.f32 %v2750, 0.0
      %v2783 = vmax.f32 %v2751, 0.0
      %v2784 = vmax.f32 %v2752, 0.0
      %v2785 = vmax.f32 %v2753, 0.0
      %v2786 = vmax.f32 %v2754, 0.0
      %v2787 = vmax.f32 %v2755, 0.0
      %v2788 = vmax.f32 %v2756, 0.0
      %v2789 = vmax.f32 %v2757, 0.0
      %v2790 = vmax.f32 %v2758, 0.0
      %v2791 = vmax.f32 %v2759, 0.0
      %v2792 = vmax.f32 %v2760, 0.0
      %v2793 = vmax.f32 %v2761, 0.0
      %v2794 = vmax.f32 %v2762, 0.0
      %v2795 = vmax.f32 %v2763, 0.0
      %v2796 = vmax.f32 %v2764, 0.0
      %v2797 = vmax.f32 %v2765, 0.0
      %v2798 = vmax.f32 %v2766, 0.0
      %v2799 = vmax.f32 %v2767, 0.0
      %v2800 = vmax.f32 %v2768, 0.0
      %v2801 = vmax.f32 %v2769, 0.0
      %v2802 = vmax.f32 %v2770, 0.0
      %v2803 = vmax.f32 %v2771, 0.0
      %v2804 = vmax.f32 %v2772, 0.0
      %v2805 = vmax.f32 %v2773, 0.0
      %v2806 = vmax.f32 %v2774, 0.0
      %v2807 = vmax.f32 %v2775, 0.0
      %v2808 = vmax.f32 %v2776, 0.0
      %v2809 = vmax.f32 %v2777, 0.0
      %v2810 = vmax.f32 %v2778, 0.0
      %v2811 = vmax.f32 %v2779, 0.0
      %v2812 = vmax.f32 %v2780, 0.0
      %v2813 = vld [vmem:[%s508] sm:$0xff]
      %v2814 = vld [vmem:[%s508 + $0x8] sm:$0xff]
      %v2815 = vld [vmem:[%s508 + $0x10] sm:$0xff]
      %v2816 = vld [vmem:[%s508 + $0x18] sm:$0xff]
      %v2817 = vld [vmem:[%s508 + $0x20] sm:$0xff]
      %v2818 = vld [vmem:[%s508 + $0x28] sm:$0xff]
      %v2819 = vld [vmem:[%s508 + $0x30] sm:$0xff]
      %v2820 = vld [vmem:[%s508 + $0x38] sm:$0xff]
      %v2821 = vld [vmem:[%s508 + $0x40] sm:$0xff]
      %v2822 = vld [vmem:[%s508 + $0x48] sm:$0xff]
      %v2823 = vld [vmem:[%s508 + $0x50] sm:$0xff]
      %v2824 = vld [vmem:[%s508 + $0x58] sm:$0xff]
      %v2825 = vld [vmem:[%s508 + $0x60] sm:$0xff]
      %v2826 = vld [vmem:[%s508 + $0x68] sm:$0xff]
      %v2827 = vld [vmem:[%s508 + $0x70] sm:$0xff]
      %v2828 = vld [vmem:[%s508 + $0x78] sm:$0xff]
      %v2829 = vld [vmem:[%s9] sm:$0x7]
      %vm2830 = vcmask 23552
      %v2832 = vsel %vm2830, %v2813, 0
      %v2835 = vsel %vm2830, %v2814, 0
      %v2838 = vsel %vm2830, %v2815, 0
      %v2841 = vsel %vm2830, %v2816, 0
      %v2844 = vsel %vm2830, %v2817, 0
      %v2847 = vsel %vm2830, %v2818, 0
      %v2850 = vsel %vm2830, %v2819, 0
      %v2853 = vsel %vm2830, %v2820, 0
      %v2856 = vsel %vm2830, %v2821, 0
      %v2859 = vsel %vm2830, %v2822, 0
      %v2862 = vsel %vm2830, %v2823, 0
      %v2865 = vsel %vm2830, %v2824, 0
      %v2868 = vsel %vm2830, %v2825, 0
      %v2871 = vsel %vm2830, %v2826, 0
      %v2874 = vsel %vm2830, %v2827, 0
      %v2877 = vsel %vm2830, %v2828, 0
      %vm2879 = vcmask 1042432
      %v2881 = vsel %vm2879, %v2829, 0
      %2883 = vmatpush.msra.mxu0 0.0
      %2884 = vmatpush.msra.mxu0 0.0
      %2885 = vmatpush.msra.mxu0 0.0
      %2886 = vmatpush.msra.mxu0 0.0
      %2887 = vmatpush.msra.mxu0 0.0
      %2888 = vmatpush.msra.mxu0 0.0
      %2889 = vmatpush.msra.mxu0 0.0
      %2890 = vmatpush.msra.mxu0 0.0
      %2891 = vmatpush.msra.mxu0 0.0
      %2892 = vmatpush.msra.mxu0 0.0
      %2893 = vmatpush.msra.mxu0 0.0
      %2894 = vmatpush.msra.mxu0 0.0
      %2895 = vmatpush.msra.mxu0 0.0
      %2896 = vmatpush.msra.mxu0 0.0
      %2897 = vmatpush.msra.mxu0 0.0
      %2898 = vmatpush.msra.mxu0 %v2881
      %2899 = vmatmul.f32.gmra.mxu0 %v2832
      %v2900 = vpop.f32.mrf.mxu0
      %v2901 = vadd.f32 0.0, %v2900
      %2902 = vmatmul.f32.gmra.mxu0 %v2835
      %v2903 = vpop.f32.mrf.mxu0
      %v2904 = vadd.f32 0.0, %v2903
      %2905 = vmatmul.f32.gmra.mxu0 %v2838
      %v2906 = vpop.f32.mrf.mxu0
      %v2907 = vadd.f32 0.0, %v2906
      %2908 = vmatmul.f32.gmra.mxu0 %v2841
      %v2909 = vpop.f32.mrf.mxu0
      %v2910 = vadd.f32 0.0, %v2909
      %2911 = vmatmul.f32.gmra.mxu0 %v2844
      %v2912 = vpop.f32.mrf.mxu0
      %v2913 = vadd.f32 0.0, %v2912
      %2914 = vmatmul.f32.gmra.mxu0 %v2847
      %v2915 = vpop.f32.mrf.mxu0
      %v2916 = vadd.f32 0.0, %v2915
      %2917 = vmatmul.f32.gmra.mxu0 %v2850
      %v2918 = vpop.f32.mrf.mxu0
      %v2919 = vadd.f32 0.0, %v2918
      %2920 = vmatmul.f32.gmra.mxu0 %v2853
      %v2921 = vpop.f32.mrf.mxu0
      %v2922 = vadd.f32 0.0, %v2921
      %2923 = vmatmul.f32.gmra.mxu0 %v2856
      %v2924 = vpop.f32.mrf.mxu0
      %v2925 = vadd.f32 0.0, %v2924
      %2926 = vmatmul.f32.gmra.mxu0 %v2859
      %v2927 = vpop.f32.mrf.mxu0
      %v2928 = vadd.f32 0.0, %v2927
      %2929 = vmatmul.f32.gmra.mxu0 %v2862
      %v2930 = vpop.f32.mrf.mxu0
      %v2931 = vadd.f32 0.0, %v2930
      %2932 = vmatmul.f32.gmra.mxu0 %v2865
      %v2933 = vpop.f32.mrf.mxu0
      %v2934 = vadd.f32 0.0, %v2933
      %2935 = vmatmul.f32.gmra.mxu0 %v2868
      %v2936 = vpop.f32.mrf.mxu0
      %v2937 = vadd.f32 0.0, %v2936
      %2938 = vmatmul.f32.gmra.mxu0 %v2871
      %v2939 = vpop.f32.mrf.mxu0
      %v2940 = vadd.f32 0.0, %v2939
      %2941 = vmatmul.f32.gmra.mxu0 %v2874
      %v2942 = vpop.f32.mrf.mxu0
      %v2943 = vadd.f32 0.0, %v2942
      %2944 = vmatmul.f32.gmra.mxu0 %v2877
      %v2945 = vpop.f32.mrf.mxu0
      %v2946 = vadd.f32 0.0, %v2945
      %2947 = vdwg.mxu0
      %v2948 = vld [vmem:[%s517] sm:$0x7]
      %v2949 = vld [vmem:[%s524] sm:$0x77]
      %2950 = vmatpush.msra.mxu0 %v2811
      %2951 = vmatpush.msra.mxu0 %v2809
      %2952 = vmatpush.msra.mxu0 %v2807
      %2953 = vmatpush.msra.mxu0 %v2805
      %2954 = vmatpush.msra.mxu0 %v2803
      %2955 = vmatpush.msra.mxu0 %v2801
      %2956 = vmatpush.msra.mxu0 %v2799
      %2957 = vmatpush.msra.mxu0 %v2797
      %2958 = vmatpush.msra.mxu0 %v2795
      %2959 = vmatpush.msra.mxu0 %v2793
      %2960 = vmatpush.msra.mxu0 %v2791
      %2961 = vmatpush.msra.mxu0 %v2789
      %2962 = vmatpush.msra.mxu0 %v2787
      %2963 = vmatpush.msra.mxu0 %v2785
      %2964 = vmatpush.msra.mxu0 %v2783
      %2965 = vmatpush.msra.mxu0 %v2781
      %2966 = vmatmul.f32.gmra.mxu0 %v2948
      %v2967 = vpop.f32.mrf.mxu0
      %v2968 = vadd.f32 0.0, %v2967
      %2969 = vdwg.mxu0
      %2970 = vmatpush.msra.mxu0 %v2812
      %2971 = vmatpush.msra.mxu0 %v2810
      %2972 = vmatpush.msra.mxu0 %v2808
      %2973 = vmatpush.msra.mxu0 %v2806
      %2974 = vmatpush.msra.mxu0 %v2804
      %2975 = vmatpush.msra.mxu0 %v2802
      %2976 = vmatpush.msra.mxu0 %v2800
      %2977 = vmatpush.msra.mxu0 %v2798
      %2978 = vmatpush.msra.mxu0 %v2796
      %2979 = vmatpush.msra.mxu0 %v2794
      %2980 = vmatpush.msra.mxu0 %v2792
      %2981 = vmatpush.msra.mxu0 %v2790
      %2982 = vmatpush.msra.mxu0 %v2788
      %2983 = vmatpush.msra.mxu0 %v2786
      %2984 = vmatpush.msra.mxu0 %v2784
      %2985 = vmatpush.msra.mxu0 %v2782
      %2986 = vmatmul.f32.gmra.mxu0 %v2948
      %v2987 = vpop.f32.mrf.mxu0
      %v2988 = vadd.f32 0.0, %v2987
      %2989 = vdwg.mxu0
      %v2992 = vrot.slane %v2988, 4
      %vm2993 = vcmask 1043456
      %v2994 = vsel %vm2993, %v2968, %v2992
      %v2996 = vadd.f32 %v2949, %v2994
      %2997 = vst [vmem:[%s524] sm:$0x77] %v2996
      %v2998 = vld [vmem:[%s528] sm:$0x7]
      %v2999 = vand.u32 2147483647, %v2901
      %vm3000 = vcmp.le.f32.partialorder %v2999, 0.7853982
      %vm3001 = vcmp.lt.s32.totalorder %v2901, 0
      %v3002 = vand.u32 %v2901, 2139095040
      %v3003 = vshrl.u32 %v3002, 23
      %v3004 = vsub.s32 %v3003, 127
      %v3005 = vand.u32 2147483647, %v2901
      %v3006 = vand.u32 %v3005, 8388607
      %v3007 = vor.u32 %v3006, 8388608
      %v3008 = vsub.s32 0, %v3007
      %v3009 = vadd.s32 %v3004, 1
      %vm3010 = vcmp.gt.s32.totalorder %v3009, 0
      %v3011 = vsel %vm3010, %v3009, 0
      %v3012 = vshrl.u32 %v3011, 5
      %v3013 = vand.u32 %v3011, 31
      %v3014 = vsub.s32 32, %v3013
      %v3015 = vshrl.u32 683565275, %v3014
      %v3016 = vshll.u32 683565275, %v3013
      %v3017 = vshrl.u32 2475754826, %v3014
      %v3018 = vor.u32 %v3016, %v3017
      %v3019 = vshll.u32 2475754826, %v3013
      %v3020 = vshrl.u32 2131351028, %v3014
      %v3021 = vor.u32 %v3019, %v3020
      %v3022 = vshll.u32 2131351028, %v3013
      %v3023 = vshrl.u32 2102212464, %v3014
      %v3024 = vor.u32 %v3022, %v3023
      %v3025 = vshll.u32 2102212464, %v3013
      %v3026 = vshrl.u32 920167782, %v3014
      %v3027 = vor.u32 %v3025, %v3026
      %v3028 = vshll.u32 920167782, %v3013
      %v3029 = vshrl.u32 1326507024, %v3014
      %v3030 = vor.u32 %v3028, %v3029
      %vm3031 = vcmp.lt.s32.totalorder %v3012, 1
      %vm3032 = vcmp.lt.s32.totalorder %v3012, 2
      %vm3033 = vcmp.lt.s32.totalorder %v3012, 3
      %vm3034 = vcmp.lt.s32.totalorder %v3012, 4
      %v3035 = vsel %vm3031, %v3015, %v3018
      %v3036 = vsel %vm3034, %v3024, 2102212464
      %v3037 = vsel %vm3033, %v3021, %v3036
      %v3038 = vsel %vm3032, %v3035, %v3037
      %v3039 = vsel %vm3031, %v3018, %v3021
      %v3040 = vsel %vm3034, %v3027, 920167782
      %v3041 = vsel %vm3033, %v3024, %v3040
      %v3042 = vsel %vm3032, %v3039, %v3041
      %v3043 = vsel %vm3031, %v3021, %v3024
      %v3044 = vsel %vm3034, %v3030, 1326507024
      %v3045 = vsel %vm3033, %v3027, %v3044
      %v3046 = vsel %vm3032, %v3043, %v3045
      %v3047 = vshll.u32 %v3007, 8
      %v3048 = vand.u32 %v3047, 65535
      %v3049 = vshrl.u32 %v3047, 16
      %v3050 = vand.u32 %v3046, 65535
      %v3051 = vshrl.u32 %v3046, 16
      %v3052 = vmul.u32 %v3048, %v3050
      %v3053 = vmul.u32 %v3048, %v3051
      %v3054 = vmul.u32 %v3049, %v3050
      %v3055 = vmul.u32 %v3049, %v3051
      %v3056 = vshll.u32 %v3053, 16
      %v3057 = vshrl.u32 %v3053, 16
      %v3058 = vshll.u32 %v3054, 16
      %v3059 = vshrl.u32 %v3054, 16
      %vm3060 = vc.u32 %v3052, %v3056
      %v3061 = vsel %vm3060, 1, 0
      %v3062 = vadd.s32 %v3052, %v3056
      %v3063 = vadd.s32 %v3055, %v3061
      %vm3064 = vc.u32 %v3062, %v3058
      %v3065 = vsel %vm3064, 1, 0
      %v3066 = vadd.s32 %v3062, %v3058
      %v3067 = vadd.s32 %v3063, %v3065
      %v3068 = vadd.s32 %v3067, %v3057
      %v3069 = vadd.s32 %v3068, %v3059
      %v3070 = vand.u32 %v3047, 65535
      %v3071 = vshrl.u32 %v3047, 16
      %v3072 = vand.u32 %v3042, 65535
      %v3073 = vshrl.u32 %v3042, 16
      %v3074 = vmul.u32 %v3070, %v3072
      %v3075 = vmul.u32 %v3070, %v3073
      %v3076 = vmul.u32 %v3071, %v3072
      %v3077 = vmul.u32 %v3071, %v3073
      %v3078 = vshll.u32 %v3075, 16
      %v3079 = vshrl.u32 %v3075, 16
      %v3080 = vshll.u32 %v3076, 16
      %v3081 = vshrl.u32 %v3076, 16
      %vm3082 = vc.u32 %v3074, %v3078
      %v3083 = vsel %vm3082, 1, 0
      %v3084 = vadd.s32 %v3074, %v3078
      %v3085 = vadd.s32 %v3077, %v3083
      %vm3086 = vc.u32 %v3084, %v3080
      %v3087 = vsel %vm3086, 1, 0
      %v3088 = vadd.s32 %v3084, %v3080
      %v3089 = vadd.s32 %v3085, %v3087
      %v3090 = vadd.s32 %v3089, %v3079
      %v3091 = vadd.s32 %v3090, %v3081
      %v3092 = vmul.u32 %v3047, %v3038
      %v3093 = vadd.s32 %v3069, %v3088
      %vm3094 = vc.u32 %v3069, %v3088
      %v3095 = vadd.s32 %v3091, 1
      %v3096 = vsel %vm3094, %v3095, %v3091
      %v3097 = vadd.s32 %v3092, %v3096
      %v3098 = vadd.s32 %v3097, 536870912
      %v3099 = vshrl.u32 %v3098, 30
      %v3100 = vshll.u32 %v3099, 30
      %v3101 = vsub.s32 %v3097, %v3100
      %vm3102 = vcmp.lt.s32.totalorder %v3101, 0
      %v3103 = vsub.s32 0, %v3101
      %v3104 = vsel %vm3102, %v3103, %v3101
      %v3105 = vclz %v3104
      %v3106 = vsub.s32 %v3105, 2
      %vm3107 = vcmp.gt.s32.totalorder 0, %v3106
      %v3108 = vsel %vm3107, 0, %v3106
      %v3109 = vsub.s32 32, %v3108
      %v3110 = vshll.u32 %v3101, %v3108
      %v3111 = vshrl.u32 %v3093, %v3109
      %v3112 = vor.u32 %v3110, %v3111
      %v3113 = vsub.s32 4294967266, %v3108
      %v3114 = vadd.s32 %v3113, 127
      %v3115 = vshll.u32 %v3114, 23
      %v3116 = vor.u32 4788187, %v3115
      %v3117 = vand.u32 2147483647, %v3116
      %v3119 = vcvt.s32.f32 %v3112
      %v3120 = vmul.f32 %v3119, %v3117
      %v3121 = vxor.u32 %v3120, 2147483648
      %v3122 = vsel %vm3001, %v3121, %v3120
      %v3123 = vsub.s32 4, %v3099
      %v3124 = vsel %vm3001, %v3123, %v3099
      %v3125 = vsel %vm3000, %v2901, %v3122
      %v3126 = vsel %vm3000, 0, %v3124
      %v3127 = vmul.f32 %v3125, %v3125
      %v3128 = vmul.f32 %v3127, -0.001358992
      %v3129 = vadd.f32 %v3128, 0.041655596
      %v3130 = vmul.f32 %v3127, %v3129
      %v3131 = vadd.f32 %v3130, -0.4999988
      %v3132 = vmul.f32 %v3127, %v3131
      %v3133 = vadd.f32 1.0, %v3132
      %v3134 = vmul.f32 %v3125, %v3125
      %v3135 = vmul.f32 %v3134, -0.00019511016
      %v3136 = vadd.f32 %v3135, 0.008332121
      %v3137 = vmul.f32 %v3134, %v3136
      %v3138 = vadd.f32 %v3137, -0.16666654
      %v3139 = vmul.f32 %v3134, %v3138
      %v3140 = vadd.f32 %v3139, 1.0
      %v3141 = vmul.f32 %v3140, %v3125
      %vm3142 = vweird.f32 %v2901
      %v3143 = vadd.s32 %v3126, 3
      %v3144 = vand.u32 %v3143, 3
      %vm3145 = vcmp.lt.s32.totalorder %v3144, 2
      %vm3146 = vcmp.eq.s32.totalorder %v3144, 0
      %v3147 = vxor.u32 %v3141, 2147483648
      %v3148 = vsel %vm3146, %v3133, %v3147
      %vm3149 = vcmp.eq.s32.totalorder %v3144, 2
      %v3150 = vxor.u32 %v3133, 2147483648
      %v3151 = vsel %vm3149, %v3150, %v3141
      %v3152 = vsel %vm3145, %v3148, %v3151
      %v3153 = vsel %vm3142, nan, %v3152
      %v3154 = vand.u32 2147483647, %v2904
      %vm3155 = vcmp.le.f32.partialorder %v3154, 0.7853982
      %vm3156 = vcmp.lt.s32.totalorder %v2904, 0
      %v3157 = vand.u32 %v2904, 2139095040
      %v3158 = vshrl.u32 %v3157, 23
      %v3159 = vsub.s32 %v3158, 127
      %v3160 = vand.u32 2147483647, %v2904
      %v3161 = vand.u32 %v3160, 8388607
      %v3162 = vor.u32 %v3161, 8388608
      %v3163 = vsub.s32 0, %v3162
      %v3164 = vadd.s32 %v3159, 1
      %vm3165 = vcmp.gt.s32.totalorder %v3164, 0
      %v3166 = vsel %vm3165, %v3164, 0
      %v3167 = vshrl.u32 %v3166, 5
      %v3168 = vand.u32 %v3166, 31
      %v3169 = vsub.s32 32, %v3168
      %v3170 = vshrl.u32 683565275, %v3169
      %v3171 = vshll.u32 683565275, %v3168
      %v3172 = vshrl.u32 2475754826, %v3169
      %v3173 = vor.u32 %v3171, %v3172
      %v3174 = vshll.u32 2475754826, %v3168
      %v3175 = vshrl.u32 2131351028, %v3169
      %v3176 = vor.u32 %v3174, %v3175
      %v3177 = vshll.u32 2131351028, %v3168
      %v3178 = vshrl.u32 2102212464, %v3169
      %v3179 = vor.u32 %v3177, %v3178
      %v3180 = vshll.u32 2102212464, %v3168
      %v3181 = vshrl.u32 920167782, %v3169
      %v3182 = vor.u32 %v3180, %v3181
      %v3183 = vshll.u32 920167782, %v3168
      %v3184 = vshrl.u32 1326507024, %v3169
      %v3185 = vor.u32 %v3183, %v3184
      %vm3186 = vcmp.lt.s32.totalorder %v3167, 1
      %vm3187 = vcmp.lt.s32.totalorder %v3167, 2
      %vm3188 = vcmp.lt.s32.totalorder %v3167, 3
      %vm3189 = vcmp.lt.s32.totalorder %v3167, 4
      %v3190 = vsel %vm3186, %v3170, %v3173
      %v3191 = vsel %vm3189, %v3179, 2102212464
      %v3192 = vsel %vm3188, %v3176, %v3191
      %v3193 = vsel %vm3187, %v3190, %v3192
      %v3194 = vsel %vm3186, %v3173, %v3176
      %v3195 = vsel %vm3189, %v3182, 920167782
      %v3196 = vsel %vm3188, %v3179, %v3195
      %v3197 = vsel %vm3187, %v3194, %v3196
      %v3198 = vsel %vm3186, %v3176, %v3179
      %v3199 = vsel %vm3189, %v3185, 1326507024
      %v3200 = vsel %vm3188, %v3182, %v3199
      %v3201 = vsel %vm3187, %v3198, %v3200
      %v3202 = vshll.u32 %v3162, 8
      %v3203 = vand.u32 %v3202, 65535
      %v3204 = vshrl.u32 %v3202, 16
      %v3205 = vand.u32 %v3201, 65535
      %v3206 = vshrl.u32 %v3201, 16
      %v3207 = vmul.u32 %v3203, %v3205
      %v3208 = vmul.u32 %v3203, %v3206
      %v3209 = vmul.u32 %v3204, %v3205
      %v3210 = vmul.u32 %v3204, %v3206
      %v3211 = vshll.u32 %v3208, 16
      %v3212 = vshrl.u32 %v3208, 16
      %v3213 = vshll.u32 %v3209, 16
      %v3214 = vshrl.u32 %v3209, 16
      %vm3215 = vc.u32 %v3207, %v3211
      %v3216 = vsel %vm3215, 1, 0
      %v3217 = vadd.s32 %v3207, %v3211
      %v3218 = vadd.s32 %v3210, %v3216
      %vm3219 = vc.u32 %v3217, %v3213
      %v3220 = vsel %vm3219, 1, 0
      %v3221 = vadd.s32 %v3217, %v3213
      %v3222 = vadd.s32 %v3218, %v3220
      %v3223 = vadd.s32 %v3222, %v3212
      %v3224 = vadd.s32 %v3223, %v3214
      %v3225 = vand.u32 %v3202, 65535
      %v3226 = vshrl.u32 %v3202, 16
      %v3227 = vand.u32 %v3197, 65535
      %v3228 = vshrl.u32 %v3197, 16
      %v3229 = vmul.u32 %v3225, %v3227
      %v3230 = vmul.u32 %v3225, %v3228
      %v3231 = vmul.u32 %v3226, %v3227
      %v3232 = vmul.u32 %v3226, %v3228
      %v3233 = vshll.u32 %v3230, 16
      %v3234 = vshrl.u32 %v3230, 16
      %v3235 = vshll.u32 %v3231, 16
      %v3236 = vshrl.u32 %v3231, 16
      %vm3237 = vc.u32 %v3229, %v3233
      %v3238 = vsel %vm3237, 1, 0
      %v3239 = vadd.s32 %v3229, %v3233
      %v3240 = vadd.s32 %v3232, %v3238
      %vm3241 = vc.u32 %v3239, %v3235
      %v3242 = vsel %vm3241, 1, 0
      %v3243 = vadd.s32 %v3239, %v3235
      %v3244 = vadd.s32 %v3240, %v3242
      %v3245 = vadd.s32 %v3244, %v3234
      %v3246 = vadd.s32 %v3245, %v3236
      %v3247 = vmul.u32 %v3202, %v3193
      %v3248 = vadd.s32 %v3224, %v3243
      %vm3249 = vc.u32 %v3224, %v3243
      %v3250 = vadd.s32 %v3246, 1
      %v3251 = vsel %vm3249, %v3250, %v3246
      %v3252 = vadd.s32 %v3247, %v3251
      %v3253 = vadd.s32 %v3252, 536870912
      %v3254 = vshrl.u32 %v3253, 30
      %v3255 = vshll.u32 %v3254, 30
      %v3256 = vsub.s32 %v3252, %v3255
      %vm3257 = vcmp.lt.s32.totalorder %v3256, 0
      %v3258 = vsub.s32 0, %v3256
      %v3259 = vsel %vm3257, %v3258, %v3256
      %v3260 = vclz %v3259
      %v3261 = vsub.s32 %v3260, 2
      %vm3262 = vcmp.gt.s32.totalorder 0, %v3261
      %v3263 = vsel %vm3262, 0, %v3261
      %v3264 = vsub.s32 32, %v3263
      %v3265 = vshll.u32 %v3256, %v3263
      %v3266 = vshrl.u32 %v3248, %v3264
      %v3267 = vor.u32 %v3265, %v3266
      %v3268 = vsub.s32 4294967266, %v3263
      %v3269 = vadd.s32 %v3268, 127
      %v3270 = vshll.u32 %v3269, 23
      %v3271 = vor.u32 4788187, %v3270
      %v3272 = vand.u32 2147483647, %v3271
      %v3274 = vcvt.s32.f32 %v3267
      %v3275 = vmul.f32 %v3274, %v3272
      %v3276 = vxor.u32 %v3275, 2147483648
      %v3277 = vsel %vm3156, %v3276, %v3275
      %v3278 = vsub.s32 4, %v3254
      %v3279 = vsel %vm3156, %v3278, %v3254
      %v3280 = vsel %vm3155, %v2904, %v3277
      %v3281 = vsel %vm3155, 0, %v3279
      %v3282 = vmul.f32 %v3280, %v3280
      %v3283 = vmul.f32 %v3282, -0.001358992
      %v3284 = vadd.f32 %v3283, 0.041655596
      %v3285 = vmul.f32 %v3282, %v3284
      %v3286 = vadd.f32 %v3285, -0.4999988
      %v3287 = vmul.f32 %v3282, %v3286
      %v3288 = vadd.f32 1.0, %v3287
      %v3289 = vmul.f32 %v3280, %v3280
      %v3290 = vmul.f32 %v3289, -0.00019511016
      %v3291 = vadd.f32 %v3290, 0.008332121
      %v3292 = vmul.f32 %v3289, %v3291
      %v3293 = vadd.f32 %v3292, -0.16666654
      %v3294 = vmul.f32 %v3289, %v3293
      %v3295 = vadd.f32 %v3294, 1.0
      %v3296 = vmul.f32 %v3295, %v3280
      %vm3297 = vweird.f32 %v2904
      %v3298 = vadd.s32 %v3281, 3
      %v3299 = vand.u32 %v3298, 3
      %vm3300 = vcmp.lt.s32.totalorder %v3299, 2
      %vm3301 = vcmp.eq.s32.totalorder %v3299, 0
      %v3302 = vxor.u32 %v3296, 2147483648
      %v3303 = vsel %vm3301, %v3288, %v3302
      %vm3304 = vcmp.eq.s32.totalorder %v3299, 2
      %v3305 = vxor.u32 %v3288, 2147483648
      %v3306 = vsel %vm3304, %v3305, %v3296
      %v3307 = vsel %vm3300, %v3303, %v3306
      %v3308 = vsel %vm3297, nan, %v3307
      %v3309 = vand.u32 2147483647, %v2907
      %vm3310 = vcmp.le.f32.partialorder %v3309, 0.7853982
      %vm3311 = vcmp.lt.s32.totalorder %v2907, 0
      %v3312 = vand.u32 %v2907, 2139095040
      %v3313 = vshrl.u32 %v3312, 23
      %v3314 = vsub.s32 %v3313, 127
      %v3315 = vand.u32 2147483647, %v2907
      %v3316 = vand.u32 %v3315, 8388607
      %v3317 = vor.u32 %v3316, 8388608
      %v3318 = vsub.s32 0, %v3317
      %v3319 = vadd.s32 %v3314, 1
      %vm3320 = vcmp.gt.s32.totalorder %v3319, 0
      %v3321 = vsel %vm3320, %v3319, 0
      %v3322 = vshrl.u32 %v3321, 5
      %v3323 = vand.u32 %v3321, 31
      %v3324 = vsub.s32 32, %v3323
      %v3325 = vshrl.u32 683565275, %v3324
      %v3326 = vshll.u32 683565275, %v3323
      %v3327 = vshrl.u32 2475754826, %v3324
      %v3328 = vor.u32 %v3326, %v3327
      %v3329 = vshll.u32 2475754826, %v3323
      %v3330 = vshrl.u32 2131351028, %v3324
      %v3331 = vor.u32 %v3329, %v3330
      %v3332 = vshll.u32 2131351028, %v3323
      %v3333 = vshrl.u32 2102212464, %v3324
      %v3334 = vor.u32 %v3332, %v3333
      %v3335 = vshll.u32 2102212464, %v3323
      %v3336 = vshrl.u32 920167782, %v3324
      %v3337 = vor.u32 %v3335, %v3336
      %v3338 = vshll.u32 920167782, %v3323
      %v3339 = vshrl.u32 1326507024, %v3324
      %v3340 = vor.u32 %v3338, %v3339
      %vm3341 = vcmp.lt.s32.totalorder %v3322, 1
      %vm3342 = vcmp.lt.s32.totalorder %v3322, 2
      %vm3343 = vcmp.lt.s32.totalorder %v3322, 3
      %vm3344 = vcmp.lt.s32.totalorder %v3322, 4
      %v3345 = vsel %vm3341, %v3325, %v3328
      %v3346 = vsel %vm3344, %v3334, 2102212464
      %v3347 = vsel %vm3343, %v3331, %v3346
      %v3348 = vsel %vm3342, %v3345, %v3347
      %v3349 = vsel %vm3341, %v3328, %v3331
      %v3350 = vsel %vm3344, %v3337, 920167782
      %v3351 = vsel %vm3343, %v3334, %v3350
      %v3352 = vsel %vm3342, %v3349, %v3351
      %v3353 = vsel %vm3341, %v3331, %v3334
      %v3354 = vsel %vm3344, %v3340, 1326507024
      %v3355 = vsel %vm3343, %v3337, %v3354
      %v3356 = vsel %vm3342, %v3353, %v3355
      %v3357 = vshll.u32 %v3317, 8
      %v3358 = vand.u32 %v3357, 65535
      %v3359 = vshrl.u32 %v3357, 16
      %v3360 = vand.u32 %v3356, 65535
      %v3361 = vshrl.u32 %v3356, 16
      %v3362 = vmul.u32 %v3358, %v3360
      %v3363 = vmul.u32 %v3358, %v3361
      %v3364 = vmul.u32 %v3359, %v3360
      %v3365 = vmul.u32 %v3359, %v3361
      %v3366 = vshll.u32 %v3363, 16
      %v3367 = vshrl.u32 %v3363, 16
      %v3368 = vshll.u32 %v3364, 16
      %v3369 = vshrl.u32 %v3364, 16
      %vm3370 = vc.u32 %v3362, %v3366
      %v3371 = vsel %vm3370, 1, 0
      %v3372 = vadd.s32 %v3362, %v3366
      %v3373 = vadd.s32 %v3365, %v3371
      %vm3374 = vc.u32 %v3372, %v3368
      %v3375 = vsel %vm3374, 1, 0
      %v3376 = vadd.s32 %v3372, %v3368
      %v3377 = vadd.s32 %v3373, %v3375
      %v3378 = vadd.s32 %v3377, %v3367
      %v3379 = vadd.s32 %v3378, %v3369
      %v3380 = vand.u32 %v3357, 65535
      %v3381 = vshrl.u32 %v3357, 16
      %v3382 = vand.u32 %v3352, 65535
      %v3383 = vshrl.u32 %v3352, 16
      %v3384 = vmul.u32 %v3380, %v3382
      %v3385 = vmul.u32 %v3380, %v3383
      %v3386 = vmul.u32 %v3381, %v3382
      %v3387 = vmul.u32 %v3381, %v3383
      %v3388 = vshll.u32 %v3385, 16
      %v3389 = vshrl.u32 %v3385, 16
      %v3390 = vshll.u32 %v3386, 16
      %v3391 = vshrl.u32 %v3386, 16
      %vm3392 = vc.u32 %v3384, %v3388
      %v3393 = vsel %vm3392, 1, 0
      %v3394 = vadd.s32 %v3384, %v3388
      %v3395 = vadd.s32 %v3387, %v3393
      %vm3396 = vc.u32 %v3394, %v3390
      %v3397 = vsel %vm3396, 1, 0
      %v3398 = vadd.s32 %v3394, %v3390
      %v3399 = vadd.s32 %v3395, %v3397
      %v3400 = vadd.s32 %v3399, %v3389
      %v3401 = vadd.s32 %v3400, %v3391
      %v3402 = vmul.u32 %v3357, %v3348
      %v3403 = vadd.s32 %v3379, %v3398
      %vm3404 = vc.u32 %v3379, %v3398
      %v3405 = vadd.s32 %v3401, 1
      %v3406 = vsel %vm3404, %v3405, %v3401
      %v3407 = vadd.s32 %v3402, %v3406
      %v3408 = vadd.s32 %v3407, 536870912
      %v3409 = vshrl.u32 %v3408, 30
      %v3410 = vshll.u32 %v3409, 30
      %v3411 = vsub.s32 %v3407, %v3410
      %vm3412 = vcmp.lt.s32.totalorder %v3411, 0
      %v3413 = vsub.s32 0, %v3411
      %v3414 = vsel %vm3412, %v3413, %v3411
      %v3415 = vclz %v3414
      %v3416 = vsub.s32 %v3415, 2
      %vm3417 = vcmp.gt.s32.totalorder 0, %v3416
      %v3418 = vsel %vm3417, 0, %v3416
      %v3419 = vsub.s32 32, %v3418
      %v3420 = vshll.u32 %v3411, %v3418
      %v3421 = vshrl.u32 %v3403, %v3419
      %v3422 = vor.u32 %v3420, %v3421
      %v3423 = vsub.s32 4294967266, %v3418
      %v3424 = vadd.s32 %v3423, 127
      %v3425 = vshll.u32 %v3424, 23
      %v3426 = vor.u32 4788187, %v3425
      %v3427 = vand.u32 2147483647, %v3426
      %v3429 = vcvt.s32.f32 %v3422
      %v3430 = vmul.f32 %v3429, %v3427
      %v3431 = vxor.u32 %v3430, 2147483648
      %v3432 = vsel %vm3311, %v3431, %v3430
      %v3433 = vsub.s32 4, %v3409
      %v3434 = vsel %vm3311, %v3433, %v3409
      %v3435 = vsel %vm3310, %v2907, %v3432
      %v3436 = vsel %vm3310, 0, %v3434
      %v3437 = vmul.f32 %v3435, %v3435
      %v3438 = vmul.f32 %v3437, -0.001358992
      %v3439 = vadd.f32 %v3438, 0.041655596
      %v3440 = vmul.f32 %v3437, %v3439
      %v3441 = vadd.f32 %v3440, -0.4999988
      %v3442 = vmul.f32 %v3437, %v3441
      %v3443 = vadd.f32 1.0, %v3442
      %v3444 = vmul.f32 %v3435, %v3435
      %v3445 = vmul.f32 %v3444, -0.00019511016
      %v3446 = vadd.f32 %v3445, 0.008332121
      %v3447 = vmul.f32 %v3444, %v3446
      %v3448 = vadd.f32 %v3447, -0.16666654
      %v3449 = vmul.f32 %v3444, %v3448
      %v3450 = vadd.f32 %v3449, 1.0
      %v3451 = vmul.f32 %v3450, %v3435
      %vm3452 = vweird.f32 %v2907
      %v3453 = vadd.s32 %v3436, 3
      %v3454 = vand.u32 %v3453, 3
      %vm3455 = vcmp.lt.s32.totalorder %v3454, 2
      %vm3456 = vcmp.eq.s32.totalorder %v3454, 0
      %v3457 = vxor.u32 %v3451, 2147483648
      %v3458 = vsel %vm3456, %v3443, %v3457
      %vm3459 = vcmp.eq.s32.totalorder %v3454, 2
      %v3460 = vxor.u32 %v3443, 2147483648
      %v3461 = vsel %vm3459, %v3460, %v3451
      %v3462 = vsel %vm3455, %v3458, %v3461
      %v3463 = vsel %vm3452, nan, %v3462
      %v3464 = vand.u32 2147483647, %v2910
      %vm3465 = vcmp.le.f32.partialorder %v3464, 0.7853982
      %vm3466 = vcmp.lt.s32.totalorder %v2910, 0
      %v3467 = vand.u32 %v2910, 2139095040
      %v3468 = vshrl.u32 %v3467, 23
      %v3469 = vsub.s32 %v3468, 127
      %v3470 = vand.u32 2147483647, %v2910
      %v3471 = vand.u32 %v3470, 8388607
      %v3472 = vor.u32 %v3471, 8388608
      %v3473 = vsub.s32 0, %v3472
      %v3474 = vadd.s32 %v3469, 1
      %vm3475 = vcmp.gt.s32.totalorder %v3474, 0
      %v3476 = vsel %vm3475, %v3474, 0
      %v3477 = vshrl.u32 %v3476, 5
      %v3478 = vand.u32 %v3476, 31
      %v3479 = vsub.s32 32, %v3478
      %v3480 = vshrl.u32 683565275, %v3479
      %v3481 = vshll.u32 683565275, %v3478
      %v3482 = vshrl.u32 2475754826, %v3479
      %v3483 = vor.u32 %v3481, %v3482
      %v3484 = vshll.u32 2475754826, %v3478
      %v3485 = vshrl.u32 2131351028, %v3479
      %v3486 = vor.u32 %v3484, %v3485
      %v3487 = vshll.u32 2131351028, %v3478
      %v3488 = vshrl.u32 2102212464, %v3479
      %v3489 = vor.u32 %v3487, %v3488
      %v3490 = vshll.u32 2102212464, %v3478
      %v3491 = vshrl.u32 920167782, %v3479
      %v3492 = vor.u32 %v3490, %v3491
      %v3493 = vshll.u32 920167782, %v3478
      %v3494 = vshrl.u32 1326507024, %v3479
      %v3495 = vor.u32 %v3493, %v3494
      %vm3496 = vcmp.lt.s32.totalorder %v3477, 1
      %vm3497 = vcmp.lt.s32.totalorder %v3477, 2
      %vm3498 = vcmp.lt.s32.totalorder %v3477, 3
      %vm3499 = vcmp.lt.s32.totalorder %v3477, 4
      %v3500 = vsel %vm3496, %v3480, %v3483
      %v3501 = vsel %vm3499, %v3489, 2102212464
      %v3502 = vsel %vm3498, %v3486, %v3501
      %v3503 = vsel %vm3497, %v3500, %v3502
      %v3504 = vsel %vm3496, %v3483, %v3486
      %v3505 = vsel %vm3499, %v3492, 920167782
      %v3506 = vsel %vm3498, %v3489, %v3505
      %v3507 = vsel %vm3497, %v3504, %v3506
      %v3508 = vsel %vm3496, %v3486, %v3489
      %v3509 = vsel %vm3499, %v3495, 1326507024
      %v3510 = vsel %vm3498, %v3492, %v3509
      %v3511 = vsel %vm3497, %v3508, %v3510
      %v3512 = vshll.u32 %v3472, 8
      %v3513 = vand.u32 %v3512, 65535
      %v3514 = vshrl.u32 %v3512, 16
      %v3515 = vand.u32 %v3511, 65535
      %v3516 = vshrl.u32 %v3511, 16
      %v3517 = vmul.u32 %v3513, %v3515
      %v3518 = vmul.u32 %v3513, %v3516
      %v3519 = vmul.u32 %v3514, %v3515
      %v3520 = vmul.u32 %v3514, %v3516
      %v3521 = vshll.u32 %v3518, 16
      %v3522 = vshrl.u32 %v3518, 16
      %v3523 = vshll.u32 %v3519, 16
      %v3524 = vshrl.u32 %v3519, 16
      %vm3525 = vc.u32 %v3517, %v3521
      %v3526 = vsel %vm3525, 1, 0
      %v3527 = vadd.s32 %v3517, %v3521
      %v3528 = vadd.s32 %v3520, %v3526
      %vm3529 = vc.u32 %v3527, %v3523
      %v3530 = vsel %vm3529, 1, 0
      %v3531 = vadd.s32 %v3527, %v3523
      %v3532 = vadd.s32 %v3528, %v3530
      %v3533 = vadd.s32 %v3532, %v3522
      %v3534 = vadd.s32 %v3533, %v3524
      %v3535 = vand.u32 %v3512, 65535
      %v3536 = vshrl.u32 %v3512, 16
      %v3537 = vand.u32 %v3507, 65535
      %v3538 = vshrl.u32 %v3507, 16
      %v3539 = vmul.u32 %v3535, %v3537
      %v3540 = vmul.u32 %v3535, %v3538
      %v3541 = vmul.u32 %v3536, %v3537
      %v3542 = vmul.u32 %v3536, %v3538
      %v3543 = vshll.u32 %v3540, 16
      %v3544 = vshrl.u32 %v3540, 16
      %v3545 = vshll.u32 %v3541, 16
      %v3546 = vshrl.u32 %v3541, 16
      %vm3547 = vc.u32 %v3539, %v3543
      %v3548 = vsel %vm3547, 1, 0
      %v3549 = vadd.s32 %v3539, %v3543
      %v3550 = vadd.s32 %v3542, %v3548
      %vm3551 = vc.u32 %v3549, %v3545
      %v3552 = vsel %vm3551, 1, 0
      %v3553 = vadd.s32 %v3549, %v3545
      %v3554 = vadd.s32 %v3550, %v3552
      %v3555 = vadd.s32 %v3554, %v3544
      %v3556 = vadd.s32 %v3555, %v3546
      %v3557 = vmul.u32 %v3512, %v3503
      %v3558 = vadd.s32 %v3534, %v3553
      %vm3559 = vc.u32 %v3534, %v3553
      %v3560 = vadd.s32 %v3556, 1
      %v3561 = vsel %vm3559, %v3560, %v3556
      %v3562 = vadd.s32 %v3557, %v3561
      %v3563 = vadd.s32 %v3562, 536870912
      %v3564 = vshrl.u32 %v3563, 30
      %v3565 = vshll.u32 %v3564, 30
      %v3566 = vsub.s32 %v3562, %v3565
      %vm3567 = vcmp.lt.s32.totalorder %v3566, 0
      %v3568 = vsub.s32 0, %v3566
      %v3569 = vsel %vm3567, %v3568, %v3566
      %v3570 = vclz %v3569
      %v3571 = vsub.s32 %v3570, 2
      %vm3572 = vcmp.gt.s32.totalorder 0, %v3571
      %v3573 = vsel %vm3572, 0, %v3571
      %v3574 = vsub.s32 32, %v3573
      %v3575 = vshll.u32 %v3566, %v3573
      %v3576 = vshrl.u32 %v3558, %v3574
      %v3577 = vor.u32 %v3575, %v3576
      %v3578 = vsub.s32 4294967266, %v3573
      %v3579 = vadd.s32 %v3578, 127
      %v3580 = vshll.u32 %v3579, 23
      %v3581 = vor.u32 4788187, %v3580
      %v3582 = vand.u32 2147483647, %v3581
      %v3584 = vcvt.s32.f32 %v3577
      %v3585 = vmul.f32 %v3584, %v3582
      %v3586 = vxor.u32 %v3585, 2147483648
      %v3587 = vsel %vm3466, %v3586, %v3585
      %v3588 = vsub.s32 4, %v3564
      %v3589 = vsel %vm3466, %v3588, %v3564
      %v3590 = vsel %vm3465, %v2910, %v3587
      %v3591 = vsel %vm3465, 0, %v3589
      %v3592 = vmul.f32 %v3590, %v3590
      %v3593 = vmul.f32 %v3592, -0.001358992
      %v3594 = vadd.f32 %v3593, 0.041655596
      %v3595 = vmul.f32 %v3592, %v3594
      %v3596 = vadd.f32 %v3595, -0.4999988
      %v3597 = vmul.f32 %v3592, %v3596
      %v3598 = vadd.f32 1.0, %v3597
      %v3599 = vmul.f32 %v3590, %v3590
      %v3600 = vmul.f32 %v3599, -0.00019511016
      %v3601 = vadd.f32 %v3600, 0.008332121
      %v3602 = vmul.f32 %v3599, %v3601
      %v3603 = vadd.f32 %v3602, -0.16666654
      %v3604 = vmul.f32 %v3599, %v3603
      %v3605 = vadd.f32 %v3604, 1.0
      %v3606 = vmul.f32 %v3605, %v3590
      %vm3607 = vweird.f32 %v2910
      %v3608 = vadd.s32 %v3591, 3
      %v3609 = vand.u32 %v3608, 3
      %vm3610 = vcmp.lt.s32.totalorder %v3609, 2
      %vm3611 = vcmp.eq.s32.totalorder %v3609, 0
      %v3612 = vxor.u32 %v3606, 2147483648
      %v3613 = vsel %vm3611, %v3598, %v3612
      %vm3614 = vcmp.eq.s32.totalorder %v3609, 2
      %v3615 = vxor.u32 %v3598, 2147483648
      %v3616 = vsel %vm3614, %v3615, %v3606
      %v3617 = vsel %vm3610, %v3613, %v3616
      %v3618 = vsel %vm3607, nan, %v3617
      %v3619 = vand.u32 2147483647, %v2913
      %vm3620 = vcmp.le.f32.partialorder %v3619, 0.7853982
      %vm3621 = vcmp.lt.s32.totalorder %v2913, 0
      %v3622 = vand.u32 %v2913, 2139095040
      %v3623 = vshrl.u32 %v3622, 23
      %v3624 = vsub.s32 %v3623, 127
      %v3625 = vand.u32 2147483647, %v2913
      %v3626 = vand.u32 %v3625, 8388607
      %v3627 = vor.u32 %v3626, 8388608
      %v3628 = vsub.s32 0, %v3627
      %v3629 = vadd.s32 %v3624, 1
      %vm3630 = vcmp.gt.s32.totalorder %v3629, 0
      %v3631 = vsel %vm3630, %v3629, 0
      %v3632 = vshrl.u32 %v3631, 5
      %v3633 = vand.u32 %v3631, 31
      %v3634 = vsub.s32 32, %v3633
      %v3635 = vshrl.u32 683565275, %v3634
      %v3636 = vshll.u32 683565275, %v3633
      %v3637 = vshrl.u32 2475754826, %v3634
      %v3638 = vor.u32 %v3636, %v3637
      %v3639 = vshll.u32 2475754826, %v3633
      %v3640 = vshrl.u32 2131351028, %v3634
      %v3641 = vor.u32 %v3639, %v3640
      %v3642 = vshll.u32 2131351028, %v3633
      %v3643 = vshrl.u32 2102212464, %v3634
      %v3644 = vor.u32 %v3642, %v3643
      %v3645 = vshll.u32 2102212464, %v3633
      %v3646 = vshrl.u32 920167782, %v3634
      %v3647 = vor.u32 %v3645, %v3646
      %v3648 = vshll.u32 920167782, %v3633
      %v3649 = vshrl.u32 1326507024, %v3634
      %v3650 = vor.u32 %v3648, %v3649
      %vm3651 = vcmp.lt.s32.totalorder %v3632, 1
      %vm3652 = vcmp.lt.s32.totalorder %v3632, 2
      %vm3653 = vcmp.lt.s32.totalorder %v3632, 3
      %vm3654 = vcmp.lt.s32.totalorder %v3632, 4
      %v3655 = vsel %vm3651, %v3635, %v3638
      %v3656 = vsel %vm3654, %v3644, 2102212464
      %v3657 = vsel %vm3653, %v3641, %v3656
      %v3658 = vsel %vm3652, %v3655, %v3657
      %v3659 = vsel %vm3651, %v3638, %v3641
      %v3660 = vsel %vm3654, %v3647, 920167782
      %v3661 = vsel %vm3653, %v3644, %v3660
      %v3662 = vsel %vm3652, %v3659, %v3661
      %v3663 = vsel %vm3651, %v3641, %v3644
      %v3664 = vsel %vm3654, %v3650, 1326507024
      %v3665 = vsel %vm3653, %v3647, %v3664
      %v3666 = vsel %vm3652, %v3663, %v3665
      %v3667 = vshll.u32 %v3627, 8
      %v3668 = vand.u32 %v3667, 65535
      %v3669 = vshrl.u32 %v3667, 16
      %v3670 = vand.u32 %v3666, 65535
      %v3671 = vshrl.u32 %v3666, 16
      %v3672 = vmul.u32 %v3668, %v3670
      %v3673 = vmul.u32 %v3668, %v3671
      %v3674 = vmul.u32 %v3669, %v3670
      %v3675 = vmul.u32 %v3669, %v3671
      %v3676 = vshll.u32 %v3673, 16
      %v3677 = vshrl.u32 %v3673, 16
      %v3678 = vshll.u32 %v3674, 16
      %v3679 = vshrl.u32 %v3674, 16
      %vm3680 = vc.u32 %v3672, %v3676
      %v3681 = vsel %vm3680, 1, 0
      %v3682 = vadd.s32 %v3672, %v3676
      %v3683 = vadd.s32 %v3675, %v3681
      %vm3684 = vc.u32 %v3682, %v3678
      %v3685 = vsel %vm3684, 1, 0
      %v3686 = vadd.s32 %v3682, %v3678
      %v3687 = vadd.s32 %v3683, %v3685
      %v3688 = vadd.s32 %v3687, %v3677
      %v3689 = vadd.s32 %v3688, %v3679
      %v3690 = vand.u32 %v3667, 65535
      %v3691 = vshrl.u32 %v3667, 16
      %v3692 = vand.u32 %v3662, 65535
      %v3693 = vshrl.u32 %v3662, 16
      %v3694 = vmul.u32 %v3690, %v3692
      %v3695 = vmul.u32 %v3690, %v3693
      %v3696 = vmul.u32 %v3691, %v3692
      %v3697 = vmul.u32 %v3691, %v3693
      %v3698 = vshll.u32 %v3695, 16
      %v3699 = vshrl.u32 %v3695, 16
      %v3700 = vshll.u32 %v3696, 16
      %v3701 = vshrl.u32 %v3696, 16
      %vm3702 = vc.u32 %v3694, %v3698
      %v3703 = vsel %vm3702, 1, 0
      %v3704 = vadd.s32 %v3694, %v3698
      %v3705 = vadd.s32 %v3697, %v3703
      %vm3706 = vc.u32 %v3704, %v3700
      %v3707 = vsel %vm3706, 1, 0
      %v3708 = vadd.s32 %v3704, %v3700
      %v3709 = vadd.s32 %v3705, %v3707
      %v3710 = vadd.s32 %v3709, %v3699
      %v3711 = vadd.s32 %v3710, %v3701
      %v3712 = vmul.u32 %v3667, %v3658
      %v3713 = vadd.s32 %v3689, %v3708
      %vm3714 = vc.u32 %v3689, %v3708
      %v3715 = vadd.s32 %v3711, 1
      %v3716 = vsel %vm3714, %v3715, %v3711
      %v3717 = vadd.s32 %v3712, %v3716
      %v3718 = vadd.s32 %v3717, 536870912
      %v3719 = vshrl.u32 %v3718, 30
      %v3720 = vshll.u32 %v3719, 30
      %v3721 = vsub.s32 %v3717, %v3720
      %vm3722 = vcmp.lt.s32.totalorder %v3721, 0
      %v3723 = vsub.s32 0, %v3721
      %v3724 = vsel %vm3722, %v3723, %v3721
      %v3725 = vclz %v3724
      %v3726 = vsub.s32 %v3725, 2
      %vm3727 = vcmp.gt.s32.totalorder 0, %v3726
      %v3728 = vsel %vm3727, 0, %v3726
      %v3729 = vsub.s32 32, %v3728
      %v3730 = vshll.u32 %v3721, %v3728
      %v3731 = vshrl.u32 %v3713, %v3729
      %v3732 = vor.u32 %v3730, %v3731
      %v3733 = vsub.s32 4294967266, %v3728
      %v3734 = vadd.s32 %v3733, 127
      %v3735 = vshll.u32 %v3734, 23
      %v3736 = vor.u32 4788187, %v3735
      %v3737 = vand.u32 2147483647, %v3736
      %v3739 = vcvt.s32.f32 %v3732
      %v3740 = vmul.f32 %v3739, %v3737
      %v3741 = vxor.u32 %v3740, 2147483648
      %v3742 = vsel %vm3621, %v3741, %v3740
      %v3743 = vsub.s32 4, %v3719
      %v3744 = vsel %vm3621, %v3743, %v3719
      %v3745 = vsel %vm3620, %v2913, %v3742
      %v3746 = vsel %vm3620, 0, %v3744
      %v3747 = vmul.f32 %v3745, %v3745
      %v3748 = vmul.f32 %v3747, -0.001358992
      %v3749 = vadd.f32 %v3748, 0.041655596
      %v3750 = vmul.f32 %v3747, %v3749
      %v3751 = vadd.f32 %v3750, -0.4999988
      %v3752 = vmul.f32 %v3747, %v3751
      %v3753 = vadd.f32 1.0, %v3752
      %v3754 = vmul.f32 %v3745, %v3745
      %v3755 = vmul.f32 %v3754, -0.00019511016
      %v3756 = vadd.f32 %v3755, 0.008332121
      %v3757 = vmul.f32 %v3754, %v3756
      %v3758 = vadd.f32 %v3757, -0.16666654
      %v3759 = vmul.f32 %v3754, %v3758
      %v3760 = vadd.f32 %v3759, 1.0
      %v3761 = vmul.f32 %v3760, %v3745
      %vm3762 = vweird.f32 %v2913
      %v3763 = vadd.s32 %v3746, 3
      %v3764 = vand.u32 %v3763, 3
      %vm3765 = vcmp.lt.s32.totalorder %v3764, 2
      %vm3766 = vcmp.eq.s32.totalorder %v3764, 0
      %v3767 = vxor.u32 %v3761, 2147483648
      %v3768 = vsel %vm3766, %v3753, %v3767
      %vm3769 = vcmp.eq.s32.totalorder %v3764, 2
      %v3770 = vxor.u32 %v3753, 2147483648
      %v3771 = vsel %vm3769, %v3770, %v3761
      %v3772 = vsel %vm3765, %v3768, %v3771
      %v3773 = vsel %vm3762, nan, %v3772
      %v3774 = vand.u32 2147483647, %v2916
      %vm3775 = vcmp.le.f32.partialorder %v3774, 0.7853982
      %vm3776 = vcmp.lt.s32.totalorder %v2916, 0
      %v3777 = vand.u32 %v2916, 2139095040
      %v3778 = vshrl.u32 %v3777, 23
      %v3779 = vsub.s32 %v3778, 127
      %v3780 = vand.u32 2147483647, %v2916
      %v3781 = vand.u32 %v3780, 8388607
      %v3782 = vor.u32 %v3781, 8388608
      %v3783 = vsub.s32 0, %v3782
      %v3784 = vadd.s32 %v3779, 1
      %vm3785 = vcmp.gt.s32.totalorder %v3784, 0
      %v3786 = vsel %vm3785, %v3784, 0
      %v3787 = vshrl.u32 %v3786, 5
      %v3788 = vand.u32 %v3786, 31
      %v3789 = vsub.s32 32, %v3788
      %v3790 = vshrl.u32 683565275, %v3789
      %v3791 = vshll.u32 683565275, %v3788
      %v3792 = vshrl.u32 2475754826, %v3789
      %v3793 = vor.u32 %v3791, %v3792
      %v3794 = vshll.u32 2475754826, %v3788
      %v3795 = vshrl.u32 2131351028, %v3789
      %v3796 = vor.u32 %v3794, %v3795
      %v3797 = vshll.u32 2131351028, %v3788
      %v3798 = vshrl.u32 2102212464, %v3789
      %v3799 = vor.u32 %v3797, %v3798
      %v3800 = vshll.u32 2102212464, %v3788
      %v3801 = vshrl.u32 920167782, %v3789
      %v3802 = vor.u32 %v3800, %v3801
      %v3803 = vshll.u32 920167782, %v3788
      %v3804 = vshrl.u32 1326507024, %v3789
      %v3805 = vor.u32 %v3803, %v3804
      %vm3806 = vcmp.lt.s32.totalorder %v3787, 1
      %vm3807 = vcmp.lt.s32.totalorder %v3787, 2
      %vm3808 = vcmp.lt.s32.totalorder %v3787, 3
      %vm3809 = vcmp.lt.s32.totalorder %v3787, 4
      %v3810 = vsel %vm3806, %v3790, %v3793
      %v3811 = vsel %vm3809, %v3799, 2102212464
      %v3812 = vsel %vm3808, %v3796, %v3811
      %v3813 = vsel %vm3807, %v3810, %v3812
      %v3814 = vsel %vm3806, %v3793, %v3796
      %v3815 = vsel %vm3809, %v3802, 920167782
      %v3816 = vsel %vm3808, %v3799, %v3815
      %v3817 = vsel %vm3807, %v3814, %v3816
      %v3818 = vsel %vm3806, %v3796, %v3799
      %v3819 = vsel %vm3809, %v3805, 1326507024
      %v3820 = vsel %vm3808, %v3802, %v3819
      %v3821 = vsel %vm3807, %v3818, %v3820
      %v3822 = vshll.u32 %v3782, 8
      %v3823 = vand.u32 %v3822, 65535
      %v3824 = vshrl.u32 %v3822, 16
      %v3825 = vand.u32 %v3821, 65535
      %v3826 = vshrl.u32 %v3821, 16
      %v3827 = vmul.u32 %v3823, %v3825
      %v3828 = vmul.u32 %v3823, %v3826
      %v3829 = vmul.u32 %v3824, %v3825
      %v3830 = vmul.u32 %v3824, %v3826
      %v3831 = vshll.u32 %v3828, 16
      %v3832 = vshrl.u32 %v3828, 16
      %v3833 = vshll.u32 %v3829, 16
      %v3834 = vshrl.u32 %v3829, 16
      %vm3835 = vc.u32 %v3827, %v3831
      %v3836 = vsel %vm3835, 1, 0
      %v3837 = vadd.s32 %v3827, %v3831
      %v3838 = vadd.s32 %v3830, %v3836
      %vm3839 = vc.u32 %v3837, %v3833
      %v3840 = vsel %vm3839, 1, 0
      %v3841 = vadd.s32 %v3837, %v3833
      %v3842 = vadd.s32 %v3838, %v3840
      %v3843 = vadd.s32 %v3842, %v3832
      %v3844 = vadd.s32 %v3843, %v3834
      %v3845 = vand.u32 %v3822, 65535
      %v3846 = vshrl.u32 %v3822, 16
      %v3847 = vand.u32 %v3817, 65535
      %v3848 = vshrl.u32 %v3817, 16
      %v3849 = vmul.u32 %v3845, %v3847
      %v3850 = vmul.u32 %v3845, %v3848
      %v3851 = vmul.u32 %v3846, %v3847
      %v3852 = vmul.u32 %v3846, %v3848
      %v3853 = vshll.u32 %v3850, 16
      %v3854 = vshrl.u32 %v3850, 16
      %v3855 = vshll.u32 %v3851, 16
      %v3856 = vshrl.u32 %v3851, 16
      %vm3857 = vc.u32 %v3849, %v3853
      %v3858 = vsel %vm3857, 1, 0
      %v3859 = vadd.s32 %v3849, %v3853
      %v3860 = vadd.s32 %v3852, %v3858
      %vm3861 = vc.u32 %v3859, %v3855
      %v3862 = vsel %vm3861, 1, 0
      %v3863 = vadd.s32 %v3859, %v3855
      %v3864 = vadd.s32 %v3860, %v3862
      %v3865 = vadd.s32 %v3864, %v3854
      %v3866 = vadd.s32 %v3865, %v3856
      %v3867 = vmul.u32 %v3822, %v3813
      %v3868 = vadd.s32 %v3844, %v3863
      %vm3869 = vc.u32 %v3844, %v3863
      %v3870 = vadd.s32 %v3866, 1
      %v3871 = vsel %vm3869, %v3870, %v3866
      %v3872 = vadd.s32 %v3867, %v3871
      %v3873 = vadd.s32 %v3872, 536870912
      %v3874 = vshrl.u32 %v3873, 30
      %v3875 = vshll.u32 %v3874, 30
      %v3876 = vsub.s32 %v3872, %v3875
      %vm3877 = vcmp.lt.s32.totalorder %v3876, 0
      %v3878 = vsub.s32 0, %v3876
      %v3879 = vsel %vm3877, %v3878, %v3876
      %v3880 = vclz %v3879
      %v3881 = vsub.s32 %v3880, 2
      %vm3882 = vcmp.gt.s32.totalorder 0, %v3881
      %v3883 = vsel %vm3882, 0, %v3881
      %v3884 = vsub.s32 32, %v3883
      %v3885 = vshll.u32 %v3876, %v3883
      %v3886 = vshrl.u32 %v3868, %v3884
      %v3887 = vor.u32 %v3885, %v3886
      %v3888 = vsub.s32 4294967266, %v3883
      %v3889 = vadd.s32 %v3888, 127
      %v3890 = vshll.u32 %v3889, 23
      %v3891 = vor.u32 4788187, %v3890
      %v3892 = vand.u32 2147483647, %v3891
      %v3894 = vcvt.s32.f32 %v3887
      %v3895 = vmul.f32 %v3894, %v3892
      %v3896 = vxor.u32 %v3895, 2147483648
      %v3897 = vsel %vm3776, %v3896, %v3895
      %v3898 = vsub.s32 4, %v3874
      %v3899 = vsel %vm3776, %v3898, %v3874
      %v3900 = vsel %vm3775, %v2916, %v3897
      %v3901 = vsel %vm3775, 0, %v3899
      %v3902 = vmul.f32 %v3900, %v3900
      %v3903 = vmul.f32 %v3902, -0.001358992
      %v3904 = vadd.f32 %v3903, 0.041655596
      %v3905 = vmul.f32 %v3902, %v3904
      %v3906 = vadd.f32 %v3905, -0.4999988
      %v3907 = vmul.f32 %v3902, %v3906
      %v3908 = vadd.f32 1.0, %v3907
      %v3909 = vmul.f32 %v3900, %v3900
      %v3910 = vmul.f32 %v3909, -0.00019511016
      %v3911 = vadd.f32 %v3910, 0.008332121
      %v3912 = vmul.f32 %v3909, %v3911
      %v3913 = vadd.f32 %v3912, -0.16666654
      %v3914 = vmul.f32 %v3909, %v3913
      %v3915 = vadd.f32 %v3914, 1.0
      %v3916 = vmul.f32 %v3915, %v3900
      %vm3917 = vweird.f32 %v2916
      %v3918 = vadd.s32 %v3901, 3
      %v3919 = vand.u32 %v3918, 3
      %vm3920 = vcmp.lt.s32.totalorder %v3919, 2
      %vm3921 = vcmp.eq.s32.totalorder %v3919, 0
      %v3922 = vxor.u32 %v3916, 2147483648
      %v3923 = vsel %vm3921, %v3908, %v3922
      %vm3924 = vcmp.eq.s32.totalorder %v3919, 2
      %v3925 = vxor.u32 %v3908, 2147483648
      %v3926 = vsel %vm3924, %v3925, %v3916
      %v3927 = vsel %vm3920, %v3923, %v3926
      %v3928 = vsel %vm3917, nan, %v3927
      %v3929 = vand.u32 2147483647, %v2919
      %vm3930 = vcmp.le.f32.partialorder %v3929, 0.7853982
      %vm3931 = vcmp.lt.s32.totalorder %v2919, 0
      %v3932 = vand.u32 %v2919, 2139095040
      %v3933 = vshrl.u32 %v3932, 23
      %v3934 = vsub.s32 %v3933, 127
      %v3935 = vand.u32 2147483647, %v2919
      %v3936 = vand.u32 %v3935, 8388607
      %v3937 = vor.u32 %v3936, 8388608
      %v3938 = vsub.s32 0, %v3937
      %v3939 = vadd.s32 %v3934, 1
      %vm3940 = vcmp.gt.s32.totalorder %v3939, 0
      %v3941 = vsel %vm3940, %v3939, 0
      %v3942 = vshrl.u32 %v3941, 5
      %v3943 = vand.u32 %v3941, 31
      %v3944 = vsub.s32 32, %v3943
      %v3945 = vshrl.u32 683565275, %v3944
      %v3946 = vshll.u32 683565275, %v3943
      %v3947 = vshrl.u32 2475754826, %v3944
      %v3948 = vor.u32 %v3946, %v3947
      %v3949 = vshll.u32 2475754826, %v3943
      %v3950 = vshrl.u32 2131351028, %v3944
      %v3951 = vor.u32 %v3949, %v3950
      %v3952 = vshll.u32 2131351028, %v3943
      %v3953 = vshrl.u32 2102212464, %v3944
      %v3954 = vor.u32 %v3952, %v3953
      %v3955 = vshll.u32 2102212464, %v3943
      %v3956 = vshrl.u32 920167782, %v3944
      %v3957 = vor.u32 %v3955, %v3956
      %v3958 = vshll.u32 920167782, %v3943
      %v3959 = vshrl.u32 1326507024, %v3944
      %v3960 = vor.u32 %v3958, %v3959
      %vm3961 = vcmp.lt.s32.totalorder %v3942, 1
      %vm3962 = vcmp.lt.s32.totalorder %v3942, 2
      %vm3963 = vcmp.lt.s32.totalorder %v3942, 3
      %vm3964 = vcmp.lt.s32.totalorder %v3942, 4
      %v3965 = vsel %vm3961, %v3945, %v3948
      %v3966 = vsel %vm3964, %v3954, 2102212464
      %v3967 = vsel %vm3963, %v3951, %v3966
      %v3968 = vsel %vm3962, %v3965, %v3967
      %v3969 = vsel %vm3961, %v3948, %v3951
      %v3970 = vsel %vm3964, %v3957, 920167782
      %v3971 = vsel %vm3963, %v3954, %v3970
      %v3972 = vsel %vm3962, %v3969, %v3971
      %v3973 = vsel %vm3961, %v3951, %v3954
      %v3974 = vsel %vm3964, %v3960, 1326507024
      %v3975 = vsel %vm3963, %v3957, %v3974
      %v3976 = vsel %vm3962, %v3973, %v3975
      %v3977 = vshll.u32 %v3937, 8
      %v3978 = vand.u32 %v3977, 65535
      %v3979 = vshrl.u32 %v3977, 16
      %v3980 = vand.u32 %v3976, 65535
      %v3981 = vshrl.u32 %v3976, 16
      %v3982 = vmul.u32 %v3978, %v3980
      %v3983 = vmul.u32 %v3978, %v3981
      %v3984 = vmul.u32 %v3979, %v3980
      %v3985 = vmul.u32 %v3979, %v3981
      %v3986 = vshll.u32 %v3983, 16
      %v3987 = vshrl.u32 %v3983, 16
      %v3988 = vshll.u32 %v3984, 16
      %v3989 = vshrl.u32 %v3984, 16
      %vm3990 = vc.u32 %v3982, %v3986
      %v3991 = vsel %vm3990, 1, 0
      %v3992 = vadd.s32 %v3982, %v3986
      %v3993 = vadd.s32 %v3985, %v3991
      %vm3994 = vc.u32 %v3992, %v3988
      %v3995 = vsel %vm3994, 1, 0
      %v3996 = vadd.s32 %v3992, %v3988
      %v3997 = vadd.s32 %v3993, %v3995
      %v3998 = vadd.s32 %v3997, %v3987
      %v3999 = vadd.s32 %v3998, %v3989
      %v4000 = vand.u32 %v3977, 65535
      %v4001 = vshrl.u32 %v3977, 16
      %v4002 = vand.u32 %v3972, 65535
      %v4003 = vshrl.u32 %v3972, 16
      %v4004 = vmul.u32 %v4000, %v4002
      %v4005 = vmul.u32 %v4000, %v4003
      %v4006 = vmul.u32 %v4001, %v4002
      %v4007 = vmul.u32 %v4001, %v4003
      %v4008 = vshll.u32 %v4005, 16
      %v4009 = vshrl.u32 %v4005, 16
      %v4010 = vshll.u32 %v4006, 16
      %v4011 = vshrl.u32 %v4006, 16
      %vm4012 = vc.u32 %v4004, %v4008
      %v4013 = vsel %vm4012, 1, 0
      %v4014 = vadd.s32 %v4004, %v4008
      %v4015 = vadd.s32 %v4007, %v4013
      %vm4016 = vc.u32 %v4014, %v4010
      %v4017 = vsel %vm4016, 1, 0
      %v4018 = vadd.s32 %v4014, %v4010
      %v4019 = vadd.s32 %v4015, %v4017
      %v4020 = vadd.s32 %v4019, %v4009
      %v4021 = vadd.s32 %v4020, %v4011
      %v4022 = vmul.u32 %v3977, %v3968
      %v4023 = vadd.s32 %v3999, %v4018
      %vm4024 = vc.u32 %v3999, %v4018
      %v4025 = vadd.s32 %v4021, 1
      %v4026 = vsel %vm4024, %v4025, %v4021
      %v4027 = vadd.s32 %v4022, %v4026
      %v4028 = vadd.s32 %v4027, 536870912
      %v4029 = vshrl.u32 %v4028, 30
      %v4030 = vshll.u32 %v4029, 30
      %v4031 = vsub.s32 %v4027, %v4030
      %vm4032 = vcmp.lt.s32.totalorder %v4031, 0
      %v4033 = vsub.s32 0, %v4031
      %v4034 = vsel %vm4032, %v4033, %v4031
      %v4035 = vclz %v4034
      %v4036 = vsub.s32 %v4035, 2
      %vm4037 = vcmp.gt.s32.totalorder 0, %v4036
      %v4038 = vsel %vm4037, 0, %v4036
      %v4039 = vsub.s32 32, %v4038
      %v4040 = vshll.u32 %v4031, %v4038
      %v4041 = vshrl.u32 %v4023, %v4039
      %v4042 = vor.u32 %v4040, %v4041
      %v4043 = vsub.s32 4294967266, %v4038
      %v4044 = vadd.s32 %v4043, 127
      %v4045 = vshll.u32 %v4044, 23
      %v4046 = vor.u32 4788187, %v4045
      %v4047 = vand.u32 2147483647, %v4046
      %v4049 = vcvt.s32.f32 %v4042
      %v4050 = vmul.f32 %v4049, %v4047
      %v4051 = vxor.u32 %v4050, 2147483648
      %v4052 = vsel %vm3931, %v4051, %v4050
      %v4053 = vsub.s32 4, %v4029
      %v4054 = vsel %vm3931, %v4053, %v4029
      %v4055 = vsel %vm3930, %v2919, %v4052
      %v4056 = vsel %vm3930, 0, %v4054
      %v4057 = vmul.f32 %v4055, %v4055
      %v4058 = vmul.f32 %v4057, -0.001358992
      %v4059 = vadd.f32 %v4058, 0.041655596
      %v4060 = vmul.f32 %v4057, %v4059
      %v4061 = vadd.f32 %v4060, -0.4999988
      %v4062 = vmul.f32 %v4057, %v4061
      %v4063 = vadd.f32 1.0, %v4062
      %v4064 = vmul.f32 %v4055, %v4055
      %v4065 = vmul.f32 %v4064, -0.00019511016
      %v4066 = vadd.f32 %v4065, 0.008332121
      %v4067 = vmul.f32 %v4064, %v4066
      %v4068 = vadd.f32 %v4067, -0.16666654
      %v4069 = vmul.f32 %v4064, %v4068
      %v4070 = vadd.f32 %v4069, 1.0
      %v4071 = vmul.f32 %v4070, %v4055
      %vm4072 = vweird.f32 %v2919
      %v4073 = vadd.s32 %v4056, 3
      %v4074 = vand.u32 %v4073, 3
      %vm4075 = vcmp.lt.s32.totalorder %v4074, 2
      %vm4076 = vcmp.eq.s32.totalorder %v4074, 0
      %v4077 = vxor.u32 %v4071, 2147483648
      %v4078 = vsel %vm4076, %v4063, %v4077
      %vm4079 = vcmp.eq.s32.totalorder %v4074, 2
      %v4080 = vxor.u32 %v4063, 2147483648
      %v4081 = vsel %vm4079, %v4080, %v4071
      %v4082 = vsel %vm4075, %v4078, %v4081
      %v4083 = vsel %vm4072, nan, %v4082
      %v4084 = vand.u32 2147483647, %v2922
      %vm4085 = vcmp.le.f32.partialorder %v4084, 0.7853982
      %vm4086 = vcmp.lt.s32.totalorder %v2922, 0
      %v4087 = vand.u32 %v2922, 2139095040
      %v4088 = vshrl.u32 %v4087, 23
      %v4089 = vsub.s32 %v4088, 127
      %v4090 = vand.u32 2147483647, %v2922
      %v4091 = vand.u32 %v4090, 8388607
      %v4092 = vor.u32 %v4091, 8388608
      %v4093 = vsub.s32 0, %v4092
      %v4094 = vadd.s32 %v4089, 1
      %vm4095 = vcmp.gt.s32.totalorder %v4094, 0
      %v4096 = vsel %vm4095, %v4094, 0
      %v4097 = vshrl.u32 %v4096, 5
      %v4098 = vand.u32 %v4096, 31
      %v4099 = vsub.s32 32, %v4098
      %v4100 = vshrl.u32 683565275, %v4099
      %v4101 = vshll.u32 683565275, %v4098
      %v4102 = vshrl.u32 2475754826, %v4099
      %v4103 = vor.u32 %v4101, %v4102
      %v4104 = vshll.u32 2475754826, %v4098
      %v4105 = vshrl.u32 2131351028, %v4099
      %v4106 = vor.u32 %v4104, %v4105
      %v4107 = vshll.u32 2131351028, %v4098
      %v4108 = vshrl.u32 2102212464, %v4099
      %v4109 = vor.u32 %v4107, %v4108
      %v4110 = vshll.u32 2102212464, %v4098
      %v4111 = vshrl.u32 920167782, %v4099
      %v4112 = vor.u32 %v4110, %v4111
      %v4113 = vshll.u32 920167782, %v4098
      %v4114 = vshrl.u32 1326507024, %v4099
      %v4115 = vor.u32 %v4113, %v4114
      %vm4116 = vcmp.lt.s32.totalorder %v4097, 1
      %vm4117 = vcmp.lt.s32.totalorder %v4097, 2
      %vm4118 = vcmp.lt.s32.totalorder %v4097, 3
      %vm4119 = vcmp.lt.s32.totalorder %v4097, 4
      %v4120 = vsel %vm4116, %v4100, %v4103
      %v4121 = vsel %vm4119, %v4109, 2102212464
      %v4122 = vsel %vm4118, %v4106, %v4121
      %v4123 = vsel %vm4117, %v4120, %v4122
      %v4124 = vsel %vm4116, %v4103, %v4106
      %v4125 = vsel %vm4119, %v4112, 920167782
      %v4126 = vsel %vm4118, %v4109, %v4125
      %v4127 = vsel %vm4117, %v4124, %v4126
      %v4128 = vsel %vm4116, %v4106, %v4109
      %v4129 = vsel %vm4119, %v4115, 1326507024
      %v4130 = vsel %vm4118, %v4112, %v4129
      %v4131 = vsel %vm4117, %v4128, %v4130
      %v4132 = vshll.u32 %v4092, 8
      %v4133 = vand.u32 %v4132, 65535
      %v4134 = vshrl.u32 %v4132, 16
      %v4135 = vand.u32 %v4131, 65535
      %v4136 = vshrl.u32 %v4131, 16
      %v4137 = vmul.u32 %v4133, %v4135
      %v4138 = vmul.u32 %v4133, %v4136
      %v4139 = vmul.u32 %v4134, %v4135
      %v4140 = vmul.u32 %v4134, %v4136
      %v4141 = vshll.u32 %v4138, 16
      %v4142 = vshrl.u32 %v4138, 16
      %v4143 = vshll.u32 %v4139, 16
      %v4144 = vshrl.u32 %v4139, 16
      %vm4145 = vc.u32 %v4137, %v4141
      %v4146 = vsel %vm4145, 1, 0
      %v4147 = vadd.s32 %v4137, %v4141
      %v4148 = vadd.s32 %v4140, %v4146
      %vm4149 = vc.u32 %v4147, %v4143
      %v4150 = vsel %vm4149, 1, 0
      %v4151 = vadd.s32 %v4147, %v4143
      %v4152 = vadd.s32 %v4148, %v4150
      %v4153 = vadd.s32 %v4152, %v4142
      %v4154 = vadd.s32 %v4153, %v4144
      %v4155 = vand.u32 %v4132, 65535
      %v4156 = vshrl.u32 %v4132, 16
      %v4157 = vand.u32 %v4127, 65535
      %v4158 = vshrl.u32 %v4127, 16
      %v4159 = vmul.u32 %v4155, %v4157
      %v4160 = vmul.u32 %v4155, %v4158
      %v4161 = vmul.u32 %v4156, %v4157
      %v4162 = vmul.u32 %v4156, %v4158
      %v4163 = vshll.u32 %v4160, 16
      %v4164 = vshrl.u32 %v4160, 16
      %v4165 = vshll.u32 %v4161, 16
      %v4166 = vshrl.u32 %v4161, 16
      %vm4167 = vc.u32 %v4159, %v4163
      %v4168 = vsel %vm4167, 1, 0
      %v4169 = vadd.s32 %v4159, %v4163
      %v4170 = vadd.s32 %v4162, %v4168
      %vm4171 = vc.u32 %v4169, %v4165
      %v4172 = vsel %vm4171, 1, 0
      %v4173 = vadd.s32 %v4169, %v4165
      %v4174 = vadd.s32 %v4170, %v4172
      %v4175 = vadd.s32 %v4174, %v4164
      %v4176 = vadd.s32 %v4175, %v4166
      %v4177 = vmul.u32 %v4132, %v4123
      %v4178 = vadd.s32 %v4154, %v4173
      %vm4179 = vc.u32 %v4154, %v4173
      %v4180 = vadd.s32 %v4176, 1
      %v4181 = vsel %vm4179, %v4180, %v4176
      %v4182 = vadd.s32 %v4177, %v4181
      %v4183 = vadd.s32 %v4182, 536870912
      %v4184 = vshrl.u32 %v4183, 30
      %v4185 = vshll.u32 %v4184, 30
      %v4186 = vsub.s32 %v4182, %v4185
      %vm4187 = vcmp.lt.s32.totalorder %v4186, 0
      %v4188 = vsub.s32 0, %v4186
      %v4189 = vsel %vm4187, %v4188, %v4186
      %v4190 = vclz %v4189
      %v4191 = vsub.s32 %v4190, 2
      %vm4192 = vcmp.gt.s32.totalorder 0, %v4191
      %v4193 = vsel %vm4192, 0, %v4191
      %v4194 = vsub.s32 32, %v4193
      %v4195 = vshll.u32 %v4186, %v4193
      %v4196 = vshrl.u32 %v4178, %v4194
      %v4197 = vor.u32 %v4195, %v4196
      %v4198 = vsub.s32 4294967266, %v4193
      %v4199 = vadd.s32 %v4198, 127
      %v4200 = vshll.u32 %v4199, 23
      %v4201 = vor.u32 4788187, %v4200
      %v4202 = vand.u32 2147483647, %v4201
      %v4204 = vcvt.s32.f32 %v4197
      %v4205 = vmul.f32 %v4204, %v4202
      %v4206 = vxor.u32 %v4205, 2147483648
      %v4207 = vsel %vm4086, %v4206, %v4205
      %v4208 = vsub.s32 4, %v4184
      %v4209 = vsel %vm4086, %v4208, %v4184
      %v4210 = vsel %vm4085, %v2922, %v4207
      %v4211 = vsel %vm4085, 0, %v4209
      %v4212 = vmul.f32 %v4210, %v4210
      %v4213 = vmul.f32 %v4212, -0.001358992
      %v4214 = vadd.f32 %v4213, 0.041655596
      %v4215 = vmul.f32 %v4212, %v4214
      %v4216 = vadd.f32 %v4215, -0.4999988
      %v4217 = vmul.f32 %v4212, %v4216
      %v4218 = vadd.f32 1.0, %v4217
      %v4219 = vmul.f32 %v4210, %v4210
      %v4220 = vmul.f32 %v4219, -0.00019511016
      %v4221 = vadd.f32 %v4220, 0.008332121
      %v4222 = vmul.f32 %v4219, %v4221
      %v4223 = vadd.f32 %v4222, -0.16666654
      %v4224 = vmul.f32 %v4219, %v4223
      %v4225 = vadd.f32 %v4224, 1.0
      %v4226 = vmul.f32 %v4225, %v4210
      %vm4227 = vweird.f32 %v2922
      %v4228 = vadd.s32 %v4211, 3
      %v4229 = vand.u32 %v4228, 3
      %vm4230 = vcmp.lt.s32.totalorder %v4229, 2
      %vm4231 = vcmp.eq.s32.totalorder %v4229, 0
      %v4232 = vxor.u32 %v4226, 2147483648
      %v4233 = vsel %vm4231, %v4218, %v4232
      %vm4234 = vcmp.eq.s32.totalorder %v4229, 2
      %v4235 = vxor.u32 %v4218, 2147483648
      %v4236 = vsel %vm4234, %v4235, %v4226
      %v4237 = vsel %vm4230, %v4233, %v4236
      %v4238 = vsel %vm4227, nan, %v4237
      %v4239 = vand.u32 2147483647, %v2925
      %vm4240 = vcmp.le.f32.partialorder %v4239, 0.7853982
      %vm4241 = vcmp.lt.s32.totalorder %v2925, 0
      %v4242 = vand.u32 %v2925, 2139095040
      %v4243 = vshrl.u32 %v4242, 23
      %v4244 = vsub.s32 %v4243, 127
      %v4245 = vand.u32 2147483647, %v2925
      %v4246 = vand.u32 %v4245, 8388607
      %v4247 = vor.u32 %v4246, 8388608
      %v4248 = vsub.s32 0, %v4247
      %v4249 = vadd.s32 %v4244, 1
      %vm4250 = vcmp.gt.s32.totalorder %v4249, 0
      %v4251 = vsel %vm4250, %v4249, 0
      %v4252 = vshrl.u32 %v4251, 5
      %v4253 = vand.u32 %v4251, 31
      %v4254 = vsub.s32 32, %v4253
      %v4255 = vshrl.u32 683565275, %v4254
      %v4256 = vshll.u32 683565275, %v4253
      %v4257 = vshrl.u32 2475754826, %v4254
      %v4258 = vor.u32 %v4256, %v4257
      %v4259 = vshll.u32 2475754826, %v4253
      %v4260 = vshrl.u32 2131351028, %v4254
      %v4261 = vor.u32 %v4259, %v4260
      %v4262 = vshll.u32 2131351028, %v4253
      %v4263 = vshrl.u32 2102212464, %v4254
      %v4264 = vor.u32 %v4262, %v4263
      %v4265 = vshll.u32 2102212464, %v4253
      %v4266 = vshrl.u32 920167782, %v4254
      %v4267 = vor.u32 %v4265, %v4266
      %v4268 = vshll.u32 920167782, %v4253
      %v4269 = vshrl.u32 1326507024, %v4254
      %v4270 = vor.u32 %v4268, %v4269
      %vm4271 = vcmp.lt.s32.totalorder %v4252, 1
      %vm4272 = vcmp.lt.s32.totalorder %v4252, 2
      %vm4273 = vcmp.lt.s32.totalorder %v4252, 3
      %vm4274 = vcmp.lt.s32.totalorder %v4252, 4
      %v4275 = vsel %vm4271, %v4255, %v4258
      %v4276 = vsel %vm4274, %v4264, 2102212464
      %v4277 = vsel %vm4273, %v4261, %v4276
      %v4278 = vsel %vm4272, %v4275, %v4277
      %v4279 = vsel %vm4271, %v4258, %v4261
      %v4280 = vsel %vm4274, %v4267, 920167782
      %v4281 = vsel %vm4273, %v4264, %v4280
      %v4282 = vsel %vm4272, %v4279, %v4281
      %v4283 = vsel %vm4271, %v4261, %v4264
      %v4284 = vsel %vm4274, %v4270, 1326507024
      %v4285 = vsel %vm4273, %v4267, %v4284
      %v4286 = vsel %vm4272, %v4283, %v4285
      %v4287 = vshll.u32 %v4247, 8
      %v4288 = vand.u32 %v4287, 65535
      %v4289 = vshrl.u32 %v4287, 16
      %v4290 = vand.u32 %v4286, 65535
      %v4291 = vshrl.u32 %v4286, 16
      %v4292 = vmul.u32 %v4288, %v4290
      %v4293 = vmul.u32 %v4288, %v4291
      %v4294 = vmul.u32 %v4289, %v4290
      %v4295 = vmul.u32 %v4289, %v4291
      %v4296 = vshll.u32 %v4293, 16
      %v4297 = vshrl.u32 %v4293, 16
      %v4298 = vshll.u32 %v4294, 16
      %v4299 = vshrl.u32 %v4294, 16
      %vm4300 = vc.u32 %v4292, %v4296
      %v4301 = vsel %vm4300, 1, 0
      %v4302 = vadd.s32 %v4292, %v4296
      %v4303 = vadd.s32 %v4295, %v4301
      %vm4304 = vc.u32 %v4302, %v4298
      %v4305 = vsel %vm4304, 1, 0
      %v4306 = vadd.s32 %v4302, %v4298
      %v4307 = vadd.s32 %v4303, %v4305
      %v4308 = vadd.s32 %v4307, %v4297
      %v4309 = vadd.s32 %v4308, %v4299
      %v4310 = vand.u32 %v4287, 65535
      %v4311 = vshrl.u32 %v4287, 16
      %v4312 = vand.u32 %v4282, 65535
      %v4313 = vshrl.u32 %v4282, 16
      %v4314 = vmul.u32 %v4310, %v4312
      %v4315 = vmul.u32 %v4310, %v4313
      %v4316 = vmul.u32 %v4311, %v4312
      %v4317 = vmul.u32 %v4311, %v4313
      %v4318 = vshll.u32 %v4315, 16
      %v4319 = vshrl.u32 %v4315, 16
      %v4320 = vshll.u32 %v4316, 16
      %v4321 = vshrl.u32 %v4316, 16
      %vm4322 = vc.u32 %v4314, %v4318
      %v4323 = vsel %vm4322, 1, 0
      %v4324 = vadd.s32 %v4314, %v4318
      %v4325 = vadd.s32 %v4317, %v4323
      %vm4326 = vc.u32 %v4324, %v4320
      %v4327 = vsel %vm4326, 1, 0
      %v4328 = vadd.s32 %v4324, %v4320
      %v4329 = vadd.s32 %v4325, %v4327
      %v4330 = vadd.s32 %v4329, %v4319
      %v4331 = vadd.s32 %v4330, %v4321
      %v4332 = vmul.u32 %v4287, %v4278
      %v4333 = vadd.s32 %v4309, %v4328
      %vm4334 = vc.u32 %v4309, %v4328
      %v4335 = vadd.s32 %v4331, 1
      %v4336 = vsel %vm4334, %v4335, %v4331
      %v4337 = vadd.s32 %v4332, %v4336
      %v4338 = vadd.s32 %v4337, 536870912
      %v4339 = vshrl.u32 %v4338, 30
      %v4340 = vshll.u32 %v4339, 30
      %v4341 = vsub.s32 %v4337, %v4340
      %vm4342 = vcmp.lt.s32.totalorder %v4341, 0
      %v4343 = vsub.s32 0, %v4341
      %v4344 = vsel %vm4342, %v4343, %v4341
      %v4345 = vclz %v4344
      %v4346 = vsub.s32 %v4345, 2
      %vm4347 = vcmp.gt.s32.totalorder 0, %v4346
      %v4348 = vsel %vm4347, 0, %v4346
      %v4349 = vsub.s32 32, %v4348
      %v4350 = vshll.u32 %v4341, %v4348
      %v4351 = vshrl.u32 %v4333, %v4349
      %v4352 = vor.u32 %v4350, %v4351
      %v4353 = vsub.s32 4294967266, %v4348
      %v4354 = vadd.s32 %v4353, 127
      %v4355 = vshll.u32 %v4354, 23
      %v4356 = vor.u32 4788187, %v4355
      %v4357 = vand.u32 2147483647, %v4356
      %v4359 = vcvt.s32.f32 %v4352
      %v4360 = vmul.f32 %v4359, %v4357
      %v4361 = vxor.u32 %v4360, 2147483648
      %v4362 = vsel %vm4241, %v4361, %v4360
      %v4363 = vsub.s32 4, %v4339
      %v4364 = vsel %vm4241, %v4363, %v4339
      %v4365 = vsel %vm4240, %v2925, %v4362
      %v4366 = vsel %vm4240, 0, %v4364
      %v4367 = vmul.f32 %v4365, %v4365
      %v4368 = vmul.f32 %v4367, -0.001358992
      %v4369 = vadd.f32 %v4368, 0.041655596
      %v4370 = vmul.f32 %v4367, %v4369
      %v4371 = vadd.f32 %v4370, -0.4999988
      %v4372 = vmul.f32 %v4367, %v4371
      %v4373 = vadd.f32 1.0, %v4372
      %v4374 = vmul.f32 %v4365, %v4365
      %v4375 = vmul.f32 %v4374, -0.00019511016
      %v4376 = vadd.f32 %v4375, 0.008332121
      %v4377 = vmul.f32 %v4374, %v4376
      %v4378 = vadd.f32 %v4377, -0.16666654
      %v4379 = vmul.f32 %v4374, %v4378
      %v4380 = vadd.f32 %v4379, 1.0
      %v4381 = vmul.f32 %v4380, %v4365
      %vm4382 = vweird.f32 %v2925
      %v4383 = vadd.s32 %v4366, 3
      %v4384 = vand.u32 %v4383, 3
      %vm4385 = vcmp.lt.s32.totalorder %v4384, 2
      %vm4386 = vcmp.eq.s32.totalorder %v4384, 0
      %v4387 = vxor.u32 %v4381, 2147483648
      %v4388 = vsel %vm4386, %v4373, %v4387
      %vm4389 = vcmp.eq.s32.totalorder %v4384, 2
      %v4390 = vxor.u32 %v4373, 2147483648
      %v4391 = vsel %vm4389, %v4390, %v4381
      %v4392 = vsel %vm4385, %v4388, %v4391
      %v4393 = vsel %vm4382, nan, %v4392
      %v4394 = vand.u32 2147483647, %v2928
      %vm4395 = vcmp.le.f32.partialorder %v4394, 0.7853982
      %vm4396 = vcmp.lt.s32.totalorder %v2928, 0
      %v4397 = vand.u32 %v2928, 2139095040
      %v4398 = vshrl.u32 %v4397, 23
      %v4399 = vsub.s32 %v4398, 127
      %v4400 = vand.u32 2147483647, %v2928
      %v4401 = vand.u32 %v4400, 8388607
      %v4402 = vor.u32 %v4401, 8388608
      %v4403 = vsub.s32 0, %v4402
      %v4404 = vadd.s32 %v4399, 1
      %vm4405 = vcmp.gt.s32.totalorder %v4404, 0
      %v4406 = vsel %vm4405, %v4404, 0
      %v4407 = vshrl.u32 %v4406, 5
      %v4408 = vand.u32 %v4406, 31
      %v4409 = vsub.s32 32, %v4408
      %v4410 = vshrl.u32 683565275, %v4409
      %v4411 = vshll.u32 683565275, %v4408
      %v4412 = vshrl.u32 2475754826, %v4409
      %v4413 = vor.u32 %v4411, %v4412
      %v4414 = vshll.u32 2475754826, %v4408
      %v4415 = vshrl.u32 2131351028, %v4409
      %v4416 = vor.u32 %v4414, %v4415
      %v4417 = vshll.u32 2131351028, %v4408
      %v4418 = vshrl.u32 2102212464, %v4409
      %v4419 = vor.u32 %v4417, %v4418
      %v4420 = vshll.u32 2102212464, %v4408
      %v4421 = vshrl.u32 920167782, %v4409
      %v4422 = vor.u32 %v4420, %v4421
      %v4423 = vshll.u32 920167782, %v4408
      %v4424 = vshrl.u32 1326507024, %v4409
      %v4425 = vor.u32 %v4423, %v4424
      %vm4426 = vcmp.lt.s32.totalorder %v4407, 1
      %vm4427 = vcmp.lt.s32.totalorder %v4407, 2
      %vm4428 = vcmp.lt.s32.totalorder %v4407, 3
      %vm4429 = vcmp.lt.s32.totalorder %v4407, 4
      %v4430 = vsel %vm4426, %v4410, %v4413
      %v4431 = vsel %vm4429, %v4419, 2102212464
      %v4432 = vsel %vm4428, %v4416, %v4431
      %v4433 = vsel %vm4427, %v4430, %v4432
      %v4434 = vsel %vm4426, %v4413, %v4416
      %v4435 = vsel %vm4429, %v4422, 920167782
      %v4436 = vsel %vm4428, %v4419, %v4435
      %v4437 = vsel %vm4427, %v4434, %v4436
      %v4438 = vsel %vm4426, %v4416, %v4419
      %v4439 = vsel %vm4429, %v4425, 1326507024
      %v4440 = vsel %vm4428, %v4422, %v4439
      %v4441 = vsel %vm4427, %v4438, %v4440
      %v4442 = vshll.u32 %v4402, 8
      %v4443 = vand.u32 %v4442, 65535
      %v4444 = vshrl.u32 %v4442, 16
      %v4445 = vand.u32 %v4441, 65535
      %v4446 = vshrl.u32 %v4441, 16
      %v4447 = vmul.u32 %v4443, %v4445
      %v4448 = vmul.u32 %v4443, %v4446
      %v4449 = vmul.u32 %v4444, %v4445
      %v4450 = vmul.u32 %v4444, %v4446
      %v4451 = vshll.u32 %v4448, 16
      %v4452 = vshrl.u32 %v4448, 16
      %v4453 = vshll.u32 %v4449, 16
      %v4454 = vshrl.u32 %v4449, 16
      %vm4455 = vc.u32 %v4447, %v4451
      %v4456 = vsel %vm4455, 1, 0
      %v4457 = vadd.s32 %v4447, %v4451
      %v4458 = vadd.s32 %v4450, %v4456
      %vm4459 = vc.u32 %v4457, %v4453
      %v4460 = vsel %vm4459, 1, 0
      %v4461 = vadd.s32 %v4457, %v4453
      %v4462 = vadd.s32 %v4458, %v4460
      %v4463 = vadd.s32 %v4462, %v4452
      %v4464 = vadd.s32 %v4463, %v4454
      %v4465 = vand.u32 %v4442, 65535
      %v4466 = vshrl.u32 %v4442, 16
      %v4467 = vand.u32 %v4437, 65535
      %v4468 = vshrl.u32 %v4437, 16
      %v4469 = vmul.u32 %v4465, %v4467
      %v4470 = vmul.u32 %v4465, %v4468
      %v4471 = vmul.u32 %v4466, %v4467
      %v4472 = vmul.u32 %v4466, %v4468
      %v4473 = vshll.u32 %v4470, 16
      %v4474 = vshrl.u32 %v4470, 16
      %v4475 = vshll.u32 %v4471, 16
      %v4476 = vshrl.u32 %v4471, 16
      %vm4477 = vc.u32 %v4469, %v4473
      %v4478 = vsel %vm4477, 1, 0
      %v4479 = vadd.s32 %v4469, %v4473
      %v4480 = vadd.s32 %v4472, %v4478
      %vm4481 = vc.u32 %v4479, %v4475
      %v4482 = vsel %vm4481, 1, 0
      %v4483 = vadd.s32 %v4479, %v4475
      %v4484 = vadd.s32 %v4480, %v4482
      %v4485 = vadd.s32 %v4484, %v4474
      %v4486 = vadd.s32 %v4485, %v4476
      %v4487 = vmul.u32 %v4442, %v4433
      %v4488 = vadd.s32 %v4464, %v4483
      %vm4489 = vc.u32 %v4464, %v4483
      %v4490 = vadd.s32 %v4486, 1
      %v4491 = vsel %vm4489, %v4490, %v4486
      %v4492 = vadd.s32 %v4487, %v4491
      %v4493 = vadd.s32 %v4492, 536870912
      %v4494 = vshrl.u32 %v4493, 30
      %v4495 = vshll.u32 %v4494, 30
      %v4496 = vsub.s32 %v4492, %v4495
      %vm4497 = vcmp.lt.s32.totalorder %v4496, 0
      %v4498 = vsub.s32 0, %v4496
      %v4499 = vsel %vm4497, %v4498, %v4496
      %v4500 = vclz %v4499
      %v4501 = vsub.s32 %v4500, 2
      %vm4502 = vcmp.gt.s32.totalorder 0, %v4501
      %v4503 = vsel %vm4502, 0, %v4501
      %v4504 = vsub.s32 32, %v4503
      %v4505 = vshll.u32 %v4496, %v4503
      %v4506 = vshrl.u32 %v4488, %v4504
      %v4507 = vor.u32 %v4505, %v4506
      %v4508 = vsub.s32 4294967266, %v4503
      %v4509 = vadd.s32 %v4508, 127
      %v4510 = vshll.u32 %v4509, 23
      %v4511 = vor.u32 4788187, %v4510
      %v4512 = vand.u32 2147483647, %v4511
      %v4514 = vcvt.s32.f32 %v4507
      %v4515 = vmul.f32 %v4514, %v4512
      %v4516 = vxor.u32 %v4515, 2147483648
      %v4517 = vsel %vm4396, %v4516, %v4515
      %v4518 = vsub.s32 4, %v4494
      %v4519 = vsel %vm4396, %v4518, %v4494
      %v4520 = vsel %vm4395, %v2928, %v4517
      %v4521 = vsel %vm4395, 0, %v4519
      %v4522 = vmul.f32 %v4520, %v4520
      %v4523 = vmul.f32 %v4522, -0.001358992
      %v4524 = vadd.f32 %v4523, 0.041655596
      %v4525 = vmul.f32 %v4522, %v4524
      %v4526 = vadd.f32 %v4525, -0.4999988
      %v4527 = vmul.f32 %v4522, %v4526
      %v4528 = vadd.f32 1.0, %v4527
      %v4529 = vmul.f32 %v4520, %v4520
      %v4530 = vmul.f32 %v4529, -0.00019511016
      %v4531 = vadd.f32 %v4530, 0.008332121
      %v4532 = vmul.f32 %v4529, %v4531
      %v4533 = vadd.f32 %v4532, -0.16666654
      %v4534 = vmul.f32 %v4529, %v4533
      %v4535 = vadd.f32 %v4534, 1.0
      %v4536 = vmul.f32 %v4535, %v4520
      %vm4537 = vweird.f32 %v2928
      %v4538 = vadd.s32 %v4521, 3
      %v4539 = vand.u32 %v4538, 3
      %vm4540 = vcmp.lt.s32.totalorder %v4539, 2
      %vm4541 = vcmp.eq.s32.totalorder %v4539, 0
      %v4542 = vxor.u32 %v4536, 2147483648
      %v4543 = vsel %vm4541, %v4528, %v4542
      %vm4544 = vcmp.eq.s32.totalorder %v4539, 2
      %v4545 = vxor.u32 %v4528, 2147483648
      %v4546 = vsel %vm4544, %v4545, %v4536
      %v4547 = vsel %vm4540, %v4543, %v4546
      %v4548 = vsel %vm4537, nan, %v4547
      %v4549 = vand.u32 2147483647, %v2931
      %vm4550 = vcmp.le.f32.partialorder %v4549, 0.7853982
      %vm4551 = vcmp.lt.s32.totalorder %v2931, 0
      %v4552 = vand.u32 %v2931, 2139095040
      %v4553 = vshrl.u32 %v4552, 23
      %v4554 = vsub.s32 %v4553, 127
      %v4555 = vand.u32 2147483647, %v2931
      %v4556 = vand.u32 %v4555, 8388607
      %v4557 = vor.u32 %v4556, 8388608
      %v4558 = vsub.s32 0, %v4557
      %v4559 = vadd.s32 %v4554, 1
      %vm4560 = vcmp.gt.s32.totalorder %v4559, 0
      %v4561 = vsel %vm4560, %v4559, 0
      %v4562 = vshrl.u32 %v4561, 5
      %v4563 = vand.u32 %v4561, 31
      %v4564 = vsub.s32 32, %v4563
      %v4565 = vshrl.u32 683565275, %v4564
      %v4566 = vshll.u32 683565275, %v4563
      %v4567 = vshrl.u32 2475754826, %v4564
      %v4568 = vor.u32 %v4566, %v4567
      %v4569 = vshll.u32 2475754826, %v4563
      %v4570 = vshrl.u32 2131351028, %v4564
      %v4571 = vor.u32 %v4569, %v4570
      %v4572 = vshll.u32 2131351028, %v4563
      %v4573 = vshrl.u32 2102212464, %v4564
      %v4574 = vor.u32 %v4572, %v4573
      %v4575 = vshll.u32 2102212464, %v4563
      %v4576 = vshrl.u32 920167782, %v4564
      %v4577 = vor.u32 %v4575, %v4576
      %v4578 = vshll.u32 920167782, %v4563
      %v4579 = vshrl.u32 1326507024, %v4564
      %v4580 = vor.u32 %v4578, %v4579
      %vm4581 = vcmp.lt.s32.totalorder %v4562, 1
      %vm4582 = vcmp.lt.s32.totalorder %v4562, 2
      %vm4583 = vcmp.lt.s32.totalorder %v4562, 3
      %vm4584 = vcmp.lt.s32.totalorder %v4562, 4
      %v4585 = vsel %vm4581, %v4565, %v4568
      %v4586 = vsel %vm4584, %v4574, 2102212464
      %v4587 = vsel %vm4583, %v4571, %v4586
      %v4588 = vsel %vm4582, %v4585, %v4587
      %v4589 = vsel %vm4581, %v4568, %v4571
      %v4590 = vsel %vm4584, %v4577, 920167782
      %v4591 = vsel %vm4583, %v4574, %v4590
      %v4592 = vsel %vm4582, %v4589, %v4591
      %v4593 = vsel %vm4581, %v4571, %v4574
      %v4594 = vsel %vm4584, %v4580, 1326507024
      %v4595 = vsel %vm4583, %v4577, %v4594
      %v4596 = vsel %vm4582, %v4593, %v4595
      %v4597 = vshll.u32 %v4557, 8
      %v4598 = vand.u32 %v4597, 65535
      %v4599 = vshrl.u32 %v4597, 16
      %v4600 = vand.u32 %v4596, 65535
      %v4601 = vshrl.u32 %v4596, 16
      %v4602 = vmul.u32 %v4598, %v4600
      %v4603 = vmul.u32 %v4598, %v4601
      %v4604 = vmul.u32 %v4599, %v4600
      %v4605 = vmul.u32 %v4599, %v4601
      %v4606 = vshll.u32 %v4603, 16
      %v4607 = vshrl.u32 %v4603, 16
      %v4608 = vshll.u32 %v4604, 16
      %v4609 = vshrl.u32 %v4604, 16
      %vm4610 = vc.u32 %v4602, %v4606
      %v4611 = vsel %vm4610, 1, 0
      %v4612 = vadd.s32 %v4602, %v4606
      %v4613 = vadd.s32 %v4605, %v4611
      %vm4614 = vc.u32 %v4612, %v4608
      %v4615 = vsel %vm4614, 1, 0
      %v4616 = vadd.s32 %v4612, %v4608
      %v4617 = vadd.s32 %v4613, %v4615
      %v4618 = vadd.s32 %v4617, %v4607
      %v4619 = vadd.s32 %v4618, %v4609
      %v4620 = vand.u32 %v4597, 65535
      %v4621 = vshrl.u32 %v4597, 16
      %v4622 = vand.u32 %v4592, 65535
      %v4623 = vshrl.u32 %v4592, 16
      %v4624 = vmul.u32 %v4620, %v4622
      %v4625 = vmul.u32 %v4620, %v4623
      %v4626 = vmul.u32 %v4621, %v4622
      %v4627 = vmul.u32 %v4621, %v4623
      %v4628 = vshll.u32 %v4625, 16
      %v4629 = vshrl.u32 %v4625, 16
      %v4630 = vshll.u32 %v4626, 16
      %v4631 = vshrl.u32 %v4626, 16
      %vm4632 = vc.u32 %v4624, %v4628
      %v4633 = vsel %vm4632, 1, 0
      %v4634 = vadd.s32 %v4624, %v4628
      %v4635 = vadd.s32 %v4627, %v4633
      %vm4636 = vc.u32 %v4634, %v4630
      %v4637 = vsel %vm4636, 1, 0
      %v4638 = vadd.s32 %v4634, %v4630
      %v4639 = vadd.s32 %v4635, %v4637
      %v4640 = vadd.s32 %v4639, %v4629
      %v4641 = vadd.s32 %v4640, %v4631
      %v4642 = vmul.u32 %v4597, %v4588
      %v4643 = vadd.s32 %v4619, %v4638
      %vm4644 = vc.u32 %v4619, %v4638
      %v4645 = vadd.s32 %v4641, 1
      %v4646 = vsel %vm4644, %v4645, %v4641
      %v4647 = vadd.s32 %v4642, %v4646
      %v4648 = vadd.s32 %v4647, 536870912
      %v4649 = vshrl.u32 %v4648, 30
      %v4650 = vshll.u32 %v4649, 30
      %v4651 = vsub.s32 %v4647, %v4650
      %vm4652 = vcmp.lt.s32.totalorder %v4651, 0
      %v4653 = vsub.s32 0, %v4651
      %v4654 = vsel %vm4652, %v4653, %v4651
      %v4655 = vclz %v4654
      %v4656 = vsub.s32 %v4655, 2
      %vm4657 = vcmp.gt.s32.totalorder 0, %v4656
      %v4658 = vsel %vm4657, 0, %v4656
      %v4659 = vsub.s32 32, %v4658
      %v4660 = vshll.u32 %v4651, %v4658
      %v4661 = vshrl.u32 %v4643, %v4659
      %v4662 = vor.u32 %v4660, %v4661
      %v4663 = vsub.s32 4294967266, %v4658
      %v4664 = vadd.s32 %v4663, 127
      %v4665 = vshll.u32 %v4664, 23
      %v4666 = vor.u32 4788187, %v4665
      %v4667 = vand.u32 2147483647, %v4666
      %v4669 = vcvt.s32.f32 %v4662
      %v4670 = vmul.f32 %v4669, %v4667
      %v4671 = vxor.u32 %v4670, 2147483648
      %v4672 = vsel %vm4551, %v4671, %v4670
      %v4673 = vsub.s32 4, %v4649
      %v4674 = vsel %vm4551, %v4673, %v4649
      %v4675 = vsel %vm4550, %v2931, %v4672
      %v4676 = vsel %vm4550, 0, %v4674
      %v4677 = vmul.f32 %v4675, %v4675
      %v4678 = vmul.f32 %v4677, -0.001358992
      %v4679 = vadd.f32 %v4678, 0.041655596
      %v4680 = vmul.f32 %v4677, %v4679
      %v4681 = vadd.f32 %v4680, -0.4999988
      %v4682 = vmul.f32 %v4677, %v4681
      %v4683 = vadd.f32 1.0, %v4682
      %v4684 = vmul.f32 %v4675, %v4675
      %v4685 = vmul.f32 %v4684, -0.00019511016
      %v4686 = vadd.f32 %v4685, 0.008332121
      %v4687 = vmul.f32 %v4684, %v4686
      %v4688 = vadd.f32 %v4687, -0.16666654
      %v4689 = vmul.f32 %v4684, %v4688
      %v4690 = vadd.f32 %v4689, 1.0
      %v4691 = vmul.f32 %v4690, %v4675
      %vm4692 = vweird.f32 %v2931
      %v4693 = vadd.s32 %v4676, 3
      %v4694 = vand.u32 %v4693, 3
      %vm4695 = vcmp.lt.s32.totalorder %v4694, 2
      %vm4696 = vcmp.eq.s32.totalorder %v4694, 0
      %v4697 = vxor.u32 %v4691, 2147483648
      %v4698 = vsel %vm4696, %v4683, %v4697
      %vm4699 = vcmp.eq.s32.totalorder %v4694, 2
      %v4700 = vxor.u32 %v4683, 2147483648
      %v4701 = vsel %vm4699, %v4700, %v4691
      %v4702 = vsel %vm4695, %v4698, %v4701
      %v4703 = vsel %vm4692, nan, %v4702
      %v4704 = vand.u32 2147483647, %v2934
      %vm4705 = vcmp.le.f32.partialorder %v4704, 0.7853982
      %vm4706 = vcmp.lt.s32.totalorder %v2934, 0
      %v4707 = vand.u32 %v2934, 2139095040
      %v4708 = vshrl.u32 %v4707, 23
      %v4709 = vsub.s32 %v4708, 127
      %v4710 = vand.u32 2147483647, %v2934
      %v4711 = vand.u32 %v4710, 8388607
      %v4712 = vor.u32 %v4711, 8388608
      %v4713 = vsub.s32 0, %v4712
      %v4714 = vadd.s32 %v4709, 1
      %vm4715 = vcmp.gt.s32.totalorder %v4714, 0
      %v4716 = vsel %vm4715, %v4714, 0
      %v4717 = vshrl.u32 %v4716, 5
      %v4718 = vand.u32 %v4716, 31
      %v4719 = vsub.s32 32, %v4718
      %v4720 = vshrl.u32 683565275, %v4719
      %v4721 = vshll.u32 683565275, %v4718
      %v4722 = vshrl.u32 2475754826, %v4719
      %v4723 = vor.u32 %v4721, %v4722
      %v4724 = vshll.u32 2475754826, %v4718
      %v4725 = vshrl.u32 2131351028, %v4719
      %v4726 = vor.u32 %v4724, %v4725
      %v4727 = vshll.u32 2131351028, %v4718
      %v4728 = vshrl.u32 2102212464, %v4719
      %v4729 = vor.u32 %v4727, %v4728
      %v4730 = vshll.u32 2102212464, %v4718
      %v4731 = vshrl.u32 920167782, %v4719
      %v4732 = vor.u32 %v4730, %v4731
      %v4733 = vshll.u32 920167782, %v4718
      %v4734 = vshrl.u32 1326507024, %v4719
      %v4735 = vor.u32 %v4733, %v4734
      %vm4736 = vcmp.lt.s32.totalorder %v4717, 1
      %vm4737 = vcmp.lt.s32.totalorder %v4717, 2
      %vm4738 = vcmp.lt.s32.totalorder %v4717, 3
      %vm4739 = vcmp.lt.s32.totalorder %v4717, 4
      %v4740 = vsel %vm4736, %v4720, %v4723
      %v4741 = vsel %vm4739, %v4729, 2102212464
      %v4742 = vsel %vm4738, %v4726, %v4741
      %v4743 = vsel %vm4737, %v4740, %v4742
      %v4744 = vsel %vm4736, %v4723, %v4726
      %v4745 = vsel %vm4739, %v4732, 920167782
      %v4746 = vsel %vm4738, %v4729, %v4745
      %v4747 = vsel %vm4737, %v4744, %v4746
      %v4748 = vsel %vm4736, %v4726, %v4729
      %v4749 = vsel %vm4739, %v4735, 1326507024
      %v4750 = vsel %vm4738, %v4732, %v4749
      %v4751 = vsel %vm4737, %v4748, %v4750
      %v4752 = vshll.u32 %v4712, 8
      %v4753 = vand.u32 %v4752, 65535
      %v4754 = vshrl.u32 %v4752, 16
      %v4755 = vand.u32 %v4751, 65535
      %v4756 = vshrl.u32 %v4751, 16
      %v4757 = vmul.u32 %v4753, %v4755
      %v4758 = vmul.u32 %v4753, %v4756
      %v4759 = vmul.u32 %v4754, %v4755
      %v4760 = vmul.u32 %v4754, %v4756
      %v4761 = vshll.u32 %v4758, 16
      %v4762 = vshrl.u32 %v4758, 16
      %v4763 = vshll.u32 %v4759, 16
      %v4764 = vshrl.u32 %v4759, 16
      %vm4765 = vc.u32 %v4757, %v4761
      %v4766 = vsel %vm4765, 1, 0
      %v4767 = vadd.s32 %v4757, %v4761
      %v4768 = vadd.s32 %v4760, %v4766
      %vm4769 = vc.u32 %v4767, %v4763
      %v4770 = vsel %vm4769, 1, 0
      %v4771 = vadd.s32 %v4767, %v4763
      %v4772 = vadd.s32 %v4768, %v4770
      %v4773 = vadd.s32 %v4772, %v4762
      %v4774 = vadd.s32 %v4773, %v4764
      %v4775 = vand.u32 %v4752, 65535
      %v4776 = vshrl.u32 %v4752, 16
      %v4777 = vand.u32 %v4747, 65535
      %v4778 = vshrl.u32 %v4747, 16
      %v4779 = vmul.u32 %v4775, %v4777
      %v4780 = vmul.u32 %v4775, %v4778
      %v4781 = vmul.u32 %v4776, %v4777
      %v4782 = vmul.u32 %v4776, %v4778
      %v4783 = vshll.u32 %v4780, 16
      %v4784 = vshrl.u32 %v4780, 16
      %v4785 = vshll.u32 %v4781, 16
      %v4786 = vshrl.u32 %v4781, 16
      %vm4787 = vc.u32 %v4779, %v4783
      %v4788 = vsel %vm4787, 1, 0
      %v4789 = vadd.s32 %v4779, %v4783
      %v4790 = vadd.s32 %v4782, %v4788
      %vm4791 = vc.u32 %v4789, %v4785
      %v4792 = vsel %vm4791, 1, 0
      %v4793 = vadd.s32 %v4789, %v4785
      %v4794 = vadd.s32 %v4790, %v4792
      %v4795 = vadd.s32 %v4794, %v4784
      %v4796 = vadd.s32 %v4795, %v4786
      %v4797 = vmul.u32 %v4752, %v4743
      %v4798 = vadd.s32 %v4774, %v4793
      %vm4799 = vc.u32 %v4774, %v4793
      %v4800 = vadd.s32 %v4796, 1
      %v4801 = vsel %vm4799, %v4800, %v4796
      %v4802 = vadd.s32 %v4797, %v4801
      %v4803 = vadd.s32 %v4802, 536870912
      %v4804 = vshrl.u32 %v4803, 30
      %v4805 = vshll.u32 %v4804, 30
      %v4806 = vsub.s32 %v4802, %v4805
      %vm4807 = vcmp.lt.s32.totalorder %v4806, 0
      %v4808 = vsub.s32 0, %v4806
      %v4809 = vsel %vm4807, %v4808, %v4806
      %v4810 = vclz %v4809
      %v4811 = vsub.s32 %v4810, 2
      %vm4812 = vcmp.gt.s32.totalorder 0, %v4811
      %v4813 = vsel %vm4812, 0, %v4811
      %v4814 = vsub.s32 32, %v4813
      %v4815 = vshll.u32 %v4806, %v4813
      %v4816 = vshrl.u32 %v4798, %v4814
      %v4817 = vor.u32 %v4815, %v4816
      %v4818 = vsub.s32 4294967266, %v4813
      %v4819 = vadd.s32 %v4818, 127
      %v4820 = vshll.u32 %v4819, 23
      %v4821 = vor.u32 4788187, %v4820
      %v4822 = vand.u32 2147483647, %v4821
      %v4824 = vcvt.s32.f32 %v4817
      %v4825 = vmul.f32 %v4824, %v4822
      %v4826 = vxor.u32 %v4825, 2147483648
      %v4827 = vsel %vm4706, %v4826, %v4825
      %v4828 = vsub.s32 4, %v4804
      %v4829 = vsel %vm4706, %v4828, %v4804
      %v4830 = vsel %vm4705, %v2934, %v4827
      %v4831 = vsel %vm4705, 0, %v4829
      %v4832 = vmul.f32 %v4830, %v4830
      %v4833 = vmul.f32 %v4832, -0.001358992
      %v4834 = vadd.f32 %v4833, 0.041655596
      %v4835 = vmul.f32 %v4832, %v4834
      %v4836 = vadd.f32 %v4835, -0.4999988
      %v4837 = vmul.f32 %v4832, %v4836
      %v4838 = vadd.f32 1.0, %v4837
      %v4839 = vmul.f32 %v4830, %v4830
      %v4840 = vmul.f32 %v4839, -0.00019511016
      %v4841 = vadd.f32 %v4840, 0.008332121
      %v4842 = vmul.f32 %v4839, %v4841
      %v4843 = vadd.f32 %v4842, -0.16666654
      %v4844 = vmul.f32 %v4839, %v4843
      %v4845 = vadd.f32 %v4844, 1.0
      %v4846 = vmul.f32 %v4845, %v4830
      %vm4847 = vweird.f32 %v2934
      %v4848 = vadd.s32 %v4831, 3
      %v4849 = vand.u32 %v4848, 3
      %vm4850 = vcmp.lt.s32.totalorder %v4849, 2
      %vm4851 = vcmp.eq.s32.totalorder %v4849, 0
      %v4852 = vxor.u32 %v4846, 2147483648
      %v4853 = vsel %vm4851, %v4838, %v4852
      %vm4854 = vcmp.eq.s32.totalorder %v4849, 2
      %v4855 = vxor.u32 %v4838, 2147483648
      %v4856 = vsel %vm4854, %v4855, %v4846
      %v4857 = vsel %vm4850, %v4853, %v4856
      %v4858 = vsel %vm4847, nan, %v4857
      %v4859 = vand.u32 2147483647, %v2937
      %vm4860 = vcmp.le.f32.partialorder %v4859, 0.7853982
      %vm4861 = vcmp.lt.s32.totalorder %v2937, 0
      %v4862 = vand.u32 %v2937, 2139095040
      %v4863 = vshrl.u32 %v4862, 23
      %v4864 = vsub.s32 %v4863, 127
      %v4865 = vand.u32 2147483647, %v2937
      %v4866 = vand.u32 %v4865, 8388607
      %v4867 = vor.u32 %v4866, 8388608
      %v4868 = vsub.s32 0, %v4867
      %v4869 = vadd.s32 %v4864, 1
      %vm4870 = vcmp.gt.s32.totalorder %v4869, 0
      %v4871 = vsel %vm4870, %v4869, 0
      %v4872 = vshrl.u32 %v4871, 5
      %v4873 = vand.u32 %v4871, 31
      %v4874 = vsub.s32 32, %v4873
      %v4875 = vshrl.u32 683565275, %v4874
      %v4876 = vshll.u32 683565275, %v4873
      %v4877 = vshrl.u32 2475754826, %v4874
      %v4878 = vor.u32 %v4876, %v4877
      %v4879 = vshll.u32 2475754826, %v4873
      %v4880 = vshrl.u32 2131351028, %v4874
      %v4881 = vor.u32 %v4879, %v4880
      %v4882 = vshll.u32 2131351028, %v4873
      %v4883 = vshrl.u32 2102212464, %v4874
      %v4884 = vor.u32 %v4882, %v4883
      %v4885 = vshll.u32 2102212464, %v4873
      %v4886 = vshrl.u32 920167782, %v4874
      %v4887 = vor.u32 %v4885, %v4886
      %v4888 = vshll.u32 920167782, %v4873
      %v4889 = vshrl.u32 1326507024, %v4874
      %v4890 = vor.u32 %v4888, %v4889
      %vm4891 = vcmp.lt.s32.totalorder %v4872, 1
      %vm4892 = vcmp.lt.s32.totalorder %v4872, 2
      %vm4893 = vcmp.lt.s32.totalorder %v4872, 3
      %vm4894 = vcmp.lt.s32.totalorder %v4872, 4
      %v4895 = vsel %vm4891, %v4875, %v4878
      %v4896 = vsel %vm4894, %v4884, 2102212464
      %v4897 = vsel %vm4893, %v4881, %v4896
      %v4898 = vsel %vm4892, %v4895, %v4897
      %v4899 = vsel %vm4891, %v4878, %v4881
      %v4900 = vsel %vm4894, %v4887, 920167782
      %v4901 = vsel %vm4893, %v4884, %v4900
      %v4902 = vsel %vm4892, %v4899, %v4901
      %v4903 = vsel %vm4891, %v4881, %v4884
      %v4904 = vsel %vm4894, %v4890, 1326507024
      %v4905 = vsel %vm4893, %v4887, %v4904
      %v4906 = vsel %vm4892, %v4903, %v4905
      %v4907 = vshll.u32 %v4867, 8
      %v4908 = vand.u32 %v4907, 65535
      %v4909 = vshrl.u32 %v4907, 16
      %v4910 = vand.u32 %v4906, 65535
      %v4911 = vshrl.u32 %v4906, 16
      %v4912 = vmul.u32 %v4908, %v4910
      %v4913 = vmul.u32 %v4908, %v4911
      %v4914 = vmul.u32 %v4909, %v4910
      %v4915 = vmul.u32 %v4909, %v4911
      %v4916 = vshll.u32 %v4913, 16
      %v4917 = vshrl.u32 %v4913, 16
      %v4918 = vshll.u32 %v4914, 16
      %v4919 = vshrl.u32 %v4914, 16
      %vm4920 = vc.u32 %v4912, %v4916
      %v4921 = vsel %vm4920, 1, 0
      %v4922 = vadd.s32 %v4912, %v4916
      %v4923 = vadd.s32 %v4915, %v4921
      %vm4924 = vc.u32 %v4922, %v4918
      %v4925 = vsel %vm4924, 1, 0
      %v4926 = vadd.s32 %v4922, %v4918
      %v4927 = vadd.s32 %v4923, %v4925
      %v4928 = vadd.s32 %v4927, %v4917
      %v4929 = vadd.s32 %v4928, %v4919
      %v4930 = vand.u32 %v4907, 65535
      %v4931 = vshrl.u32 %v4907, 16
      %v4932 = vand.u32 %v4902, 65535
      %v4933 = vshrl.u32 %v4902, 16
      %v4934 = vmul.u32 %v4930, %v4932
      %v4935 = vmul.u32 %v4930, %v4933
      %v4936 = vmul.u32 %v4931, %v4932
      %v4937 = vmul.u32 %v4931, %v4933
      %v4938 = vshll.u32 %v4935, 16
      %v4939 = vshrl.u32 %v4935, 16
      %v4940 = vshll.u32 %v4936, 16
      %v4941 = vshrl.u32 %v4936, 16
      %vm4942 = vc.u32 %v4934, %v4938
      %v4943 = vsel %vm4942, 1, 0
      %v4944 = vadd.s32 %v4934, %v4938
      %v4945 = vadd.s32 %v4937, %v4943
      %vm4946 = vc.u32 %v4944, %v4940
      %v4947 = vsel %vm4946, 1, 0
      %v4948 = vadd.s32 %v4944, %v4940
      %v4949 = vadd.s32 %v4945, %v4947
      %v4950 = vadd.s32 %v4949, %v4939
      %v4951 = vadd.s32 %v4950, %v4941
      %v4952 = vmul.u32 %v4907, %v4898
      %v4953 = vadd.s32 %v4929, %v4948
      %vm4954 = vc.u32 %v4929, %v4948
      %v4955 = vadd.s32 %v4951, 1
      %v4956 = vsel %vm4954, %v4955, %v4951
      %v4957 = vadd.s32 %v4952, %v4956
      %v4958 = vadd.s32 %v4957, 536870912
      %v4959 = vshrl.u32 %v4958, 30
      %v4960 = vshll.u32 %v4959, 30
      %v4961 = vsub.s32 %v4957, %v4960
      %vm4962 = vcmp.lt.s32.totalorder %v4961, 0
      %v4963 = vsub.s32 0, %v4961
      %v4964 = vsel %vm4962, %v4963, %v4961
      %v4965 = vclz %v4964
      %v4966 = vsub.s32 %v4965, 2
      %vm4967 = vcmp.gt.s32.totalorder 0, %v4966
      %v4968 = vsel %vm4967, 0, %v4966
      %v4969 = vsub.s32 32, %v4968
      %v4970 = vshll.u32 %v4961, %v4968
      %v4971 = vshrl.u32 %v4953, %v4969
      %v4972 = vor.u32 %v4970, %v4971
      %v4973 = vsub.s32 4294967266, %v4968
      %v4974 = vadd.s32 %v4973, 127
      %v4975 = vshll.u32 %v4974, 23
      %v4976 = vor.u32 4788187, %v4975
      %v4977 = vand.u32 2147483647, %v4976
      %v4979 = vcvt.s32.f32 %v4972
      %v4980 = vmul.f32 %v4979, %v4977
      %v4981 = vxor.u32 %v4980, 2147483648
      %v4982 = vsel %vm4861, %v4981, %v4980
      %v4983 = vsub.s32 4, %v4959
      %v4984 = vsel %vm4861, %v4983, %v4959
      %v4985 = vsel %vm4860, %v2937, %v4982
      %v4986 = vsel %vm4860, 0, %v4984
      %v4987 = vmul.f32 %v4985, %v4985
      %v4988 = vmul.f32 %v4987, -0.001358992
      %v4989 = vadd.f32 %v4988, 0.041655596
      %v4990 = vmul.f32 %v4987, %v4989
      %v4991 = vadd.f32 %v4990, -0.4999988
      %v4992 = vmul.f32 %v4987, %v4991
      %v4993 = vadd.f32 1.0, %v4992
      %v4994 = vmul.f32 %v4985, %v4985
      %v4995 = vmul.f32 %v4994, -0.00019511016
      %v4996 = vadd.f32 %v4995, 0.008332121
      %v4997 = vmul.f32 %v4994, %v4996
      %v4998 = vadd.f32 %v4997, -0.16666654
      %v4999 = vmul.f32 %v4994, %v4998
      %v5000 = vadd.f32 %v4999, 1.0
      %v5001 = vmul.f32 %v5000, %v4985
      %vm5002 = vweird.f32 %v2937
      %v5003 = vadd.s32 %v4986, 3
      %v5004 = vand.u32 %v5003, 3
      %vm5005 = vcmp.lt.s32.totalorder %v5004, 2
      %vm5006 = vcmp.eq.s32.totalorder %v5004, 0
      %v5007 = vxor.u32 %v5001, 2147483648
      %v5008 = vsel %vm5006, %v4993, %v5007
      %vm5009 = vcmp.eq.s32.totalorder %v5004, 2
      %v5010 = vxor.u32 %v4993, 2147483648
      %v5011 = vsel %vm5009, %v5010, %v5001
      %v5012 = vsel %vm5005, %v5008, %v5011
      %v5013 = vsel %vm5002, nan, %v5012
      %v5014 = vand.u32 2147483647, %v2940
      %vm5015 = vcmp.le.f32.partialorder %v5014, 0.7853982
      %vm5016 = vcmp.lt.s32.totalorder %v2940, 0
      %v5017 = vand.u32 %v2940, 2139095040
      %v5018 = vshrl.u32 %v5017, 23
      %v5019 = vsub.s32 %v5018, 127
      %v5020 = vand.u32 2147483647, %v2940
      %v5021 = vand.u32 %v5020, 8388607
      %v5022 = vor.u32 %v5021, 8388608
      %v5023 = vsub.s32 0, %v5022
      %v5024 = vadd.s32 %v5019, 1
      %vm5025 = vcmp.gt.s32.totalorder %v5024, 0
      %v5026 = vsel %vm5025, %v5024, 0
      %v5027 = vshrl.u32 %v5026, 5
      %v5028 = vand.u32 %v5026, 31
      %v5029 = vsub.s32 32, %v5028
      %v5030 = vshrl.u32 683565275, %v5029
      %v5031 = vshll.u32 683565275, %v5028
      %v5032 = vshrl.u32 2475754826, %v5029
      %v5033 = vor.u32 %v5031, %v5032
      %v5034 = vshll.u32 2475754826, %v5028
      %v5035 = vshrl.u32 2131351028, %v5029
      %v5036 = vor.u32 %v5034, %v5035
      %v5037 = vshll.u32 2131351028, %v5028
      %v5038 = vshrl.u32 2102212464, %v5029
      %v5039 = vor.u32 %v5037, %v5038
      %v5040 = vshll.u32 2102212464, %v5028
      %v5041 = vshrl.u32 920167782, %v5029
      %v5042 = vor.u32 %v5040, %v5041
      %v5043 = vshll.u32 920167782, %v5028
      %v5044 = vshrl.u32 1326507024, %v5029
      %v5045 = vor.u32 %v5043, %v5044
      %vm5046 = vcmp.lt.s32.totalorder %v5027, 1
      %vm5047 = vcmp.lt.s32.totalorder %v5027, 2
      %vm5048 = vcmp.lt.s32.totalorder %v5027, 3
      %vm5049 = vcmp.lt.s32.totalorder %v5027, 4
      %v5050 = vsel %vm5046, %v5030, %v5033
      %v5051 = vsel %vm5049, %v5039, 2102212464
      %v5052 = vsel %vm5048, %v5036, %v5051
      %v5053 = vsel %vm5047, %v5050, %v5052
      %v5054 = vsel %vm5046, %v5033, %v5036
      %v5055 = vsel %vm5049, %v5042, 920167782
      %v5056 = vsel %vm5048, %v5039, %v5055
      %v5057 = vsel %vm5047, %v5054, %v5056
      %v5058 = vsel %vm5046, %v5036, %v5039
      %v5059 = vsel %vm5049, %v5045, 1326507024
      %v5060 = vsel %vm5048, %v5042, %v5059
      %v5061 = vsel %vm5047, %v5058, %v5060
      %v5062 = vshll.u32 %v5022, 8
      %v5063 = vand.u32 %v5062, 65535
      %v5064 = vshrl.u32 %v5062, 16
      %v5065 = vand.u32 %v5061, 65535
      %v5066 = vshrl.u32 %v5061, 16
      %v5067 = vmul.u32 %v5063, %v5065
      %v5068 = vmul.u32 %v5063, %v5066
      %v5069 = vmul.u32 %v5064, %v5065
      %v5070 = vmul.u32 %v5064, %v5066
      %v5071 = vshll.u32 %v5068, 16
      %v5072 = vshrl.u32 %v5068, 16
      %v5073 = vshll.u32 %v5069, 16
      %v5074 = vshrl.u32 %v5069, 16
      %vm5075 = vc.u32 %v5067, %v5071
      %v5076 = vsel %vm5075, 1, 0
      %v5077 = vadd.s32 %v5067, %v5071
      %v5078 = vadd.s32 %v5070, %v5076
      %vm5079 = vc.u32 %v5077, %v5073
      %v5080 = vsel %vm5079, 1, 0
      %v5081 = vadd.s32 %v5077, %v5073
      %v5082 = vadd.s32 %v5078, %v5080
      %v5083 = vadd.s32 %v5082, %v5072
      %v5084 = vadd.s32 %v5083, %v5074
      %v5085 = vand.u32 %v5062, 65535
      %v5086 = vshrl.u32 %v5062, 16
      %v5087 = vand.u32 %v5057, 65535
      %v5088 = vshrl.u32 %v5057, 16
      %v5089 = vmul.u32 %v5085, %v5087
      %v5090 = vmul.u32 %v5085, %v5088
      %v5091 = vmul.u32 %v5086, %v5087
      %v5092 = vmul.u32 %v5086, %v5088
      %v5093 = vshll.u32 %v5090, 16
      %v5094 = vshrl.u32 %v5090, 16
      %v5095 = vshll.u32 %v5091, 16
      %v5096 = vshrl.u32 %v5091, 16
      %vm5097 = vc.u32 %v5089, %v5093
      %v5098 = vsel %vm5097, 1, 0
      %v5099 = vadd.s32 %v5089, %v5093
      %v5100 = vadd.s32 %v5092, %v5098
      %vm5101 = vc.u32 %v5099, %v5095
      %v5102 = vsel %vm5101, 1, 0
      %v5103 = vadd.s32 %v5099, %v5095
      %v5104 = vadd.s32 %v5100, %v5102
      %v5105 = vadd.s32 %v5104, %v5094
      %v5106 = vadd.s32 %v5105, %v5096
      %v5107 = vmul.u32 %v5062, %v5053
      %v5108 = vadd.s32 %v5084, %v5103
      %vm5109 = vc.u32 %v5084, %v5103
      %v5110 = vadd.s32 %v5106, 1
      %v5111 = vsel %vm5109, %v5110, %v5106
      %v5112 = vadd.s32 %v5107, %v5111
      %v5113 = vadd.s32 %v5112, 536870912
      %v5114 = vshrl.u32 %v5113, 30
      %v5115 = vshll.u32 %v5114, 30
      %v5116 = vsub.s32 %v5112, %v5115
      %vm5117 = vcmp.lt.s32.totalorder %v5116, 0
      %v5118 = vsub.s32 0, %v5116
      %v5119 = vsel %vm5117, %v5118, %v5116
      %v5120 = vclz %v5119
      %v5121 = vsub.s32 %v5120, 2
      %vm5122 = vcmp.gt.s32.totalorder 0, %v5121
      %v5123 = vsel %vm5122, 0, %v5121
      %v5124 = vsub.s32 32, %v5123
      %v5125 = vshll.u32 %v5116, %v5123
      %v5126 = vshrl.u32 %v5108, %v5124
      %v5127 = vor.u32 %v5125, %v5126
      %v5128 = vsub.s32 4294967266, %v5123
      %v5129 = vadd.s32 %v5128, 127
      %v5130 = vshll.u32 %v5129, 23
      %v5131 = vor.u32 4788187, %v5130
      %v5132 = vand.u32 2147483647, %v5131
      %v5134 = vcvt.s32.f32 %v5127
      %v5135 = vmul.f32 %v5134, %v5132
      %v5136 = vxor.u32 %v5135, 2147483648
      %v5137 = vsel %vm5016, %v5136, %v5135
      %v5138 = vsub.s32 4, %v5114
      %v5139 = vsel %vm5016, %v5138, %v5114
      %v5140 = vsel %vm5015, %v2940, %v5137
      %v5141 = vsel %vm5015, 0, %v5139
      %v5142 = vmul.f32 %v5140, %v5140
      %v5143 = vmul.f32 %v5142, -0.001358992
      %v5144 = vadd.f32 %v5143, 0.041655596
      %v5145 = vmul.f32 %v5142, %v5144
      %v5146 = vadd.f32 %v5145, -0.4999988
      %v5147 = vmul.f32 %v5142, %v5146
      %v5148 = vadd.f32 1.0, %v5147
      %v5149 = vmul.f32 %v5140, %v5140
      %v5150 = vmul.f32 %v5149, -0.00019511016
      %v5151 = vadd.f32 %v5150, 0.008332121
      %v5152 = vmul.f32 %v5149, %v5151
      %v5153 = vadd.f32 %v5152, -0.16666654
      %v5154 = vmul.f32 %v5149, %v5153
      %v5155 = vadd.f32 %v5154, 1.0
      %v5156 = vmul.f32 %v5155, %v5140
      %vm5157 = vweird.f32 %v2940
      %v5158 = vadd.s32 %v5141, 3
      %v5159 = vand.u32 %v5158, 3
      %vm5160 = vcmp.lt.s32.totalorder %v5159, 2
      %vm5161 = vcmp.eq.s32.totalorder %v5159, 0
      %v5162 = vxor.u32 %v5156, 2147483648
      %v5163 = vsel %vm5161, %v5148, %v5162
      %vm5164 = vcmp.eq.s32.totalorder %v5159, 2
      %v5165 = vxor.u32 %v5148, 2147483648
      %v5166 = vsel %vm5164, %v5165, %v5156
      %v5167 = vsel %vm5160, %v5163, %v5166
      %v5168 = vsel %vm5157, nan, %v5167
      %v5169 = vand.u32 2147483647, %v2943
      %vm5170 = vcmp.le.f32.partialorder %v5169, 0.7853982
      %vm5171 = vcmp.lt.s32.totalorder %v2943, 0
      %v5172 = vand.u32 %v2943, 2139095040
      %v5173 = vshrl.u32 %v5172, 23
      %v5174 = vsub.s32 %v5173, 127
      %v5175 = vand.u32 2147483647, %v2943
      %v5176 = vand.u32 %v5175, 8388607
      %v5177 = vor.u32 %v5176, 8388608
      %v5178 = vsub.s32 0, %v5177
      %v5179 = vadd.s32 %v5174, 1
      %vm5180 = vcmp.gt.s32.totalorder %v5179, 0
      %v5181 = vsel %vm5180, %v5179, 0
      %v5182 = vshrl.u32 %v5181, 5
      %v5183 = vand.u32 %v5181, 31
      %v5184 = vsub.s32 32, %v5183
      %v5185 = vshrl.u32 683565275, %v5184
      %v5186 = vshll.u32 683565275, %v5183
      %v5187 = vshrl.u32 2475754826, %v5184
      %v5188 = vor.u32 %v5186, %v5187
      %v5189 = vshll.u32 2475754826, %v5183
      %v5190 = vshrl.u32 2131351028, %v5184
      %v5191 = vor.u32 %v5189, %v5190
      %v5192 = vshll.u32 2131351028, %v5183
      %v5193 = vshrl.u32 2102212464, %v5184
      %v5194 = vor.u32 %v5192, %v5193
      %v5195 = vshll.u32 2102212464, %v5183
      %v5196 = vshrl.u32 920167782, %v5184
      %v5197 = vor.u32 %v5195, %v5196
      %v5198 = vshll.u32 920167782, %v5183
      %v5199 = vshrl.u32 1326507024, %v5184
      %v5200 = vor.u32 %v5198, %v5199
      %vm5201 = vcmp.lt.s32.totalorder %v5182, 1
      %vm5202 = vcmp.lt.s32.totalorder %v5182, 2
      %vm5203 = vcmp.lt.s32.totalorder %v5182, 3
      %vm5204 = vcmp.lt.s32.totalorder %v5182, 4
      %v5205 = vsel %vm5201, %v5185, %v5188
      %v5206 = vsel %vm5204, %v5194, 2102212464
      %v5207 = vsel %vm5203, %v5191, %v5206
      %v5208 = vsel %vm5202, %v5205, %v5207
      %v5209 = vsel %vm5201, %v5188, %v5191
      %v5210 = vsel %vm5204, %v5197, 920167782
      %v5211 = vsel %vm5203, %v5194, %v5210
      %v5212 = vsel %vm5202, %v5209, %v5211
      %v5213 = vsel %vm5201, %v5191, %v5194
      %v5214 = vsel %vm5204, %v5200, 1326507024
      %v5215 = vsel %vm5203, %v5197, %v5214
      %v5216 = vsel %vm5202, %v5213, %v5215
      %v5217 = vshll.u32 %v5177, 8
      %v5218 = vand.u32 %v5217, 65535
      %v5219 = vshrl.u32 %v5217, 16
      %v5220 = vand.u32 %v5216, 65535
      %v5221 = vshrl.u32 %v5216, 16
      %v5222 = vmul.u32 %v5218, %v5220
      %v5223 = vmul.u32 %v5218, %v5221
      %v5224 = vmul.u32 %v5219, %v5220
      %v5225 = vmul.u32 %v5219, %v5221
      %v5226 = vshll.u32 %v5223, 16
      %v5227 = vshrl.u32 %v5223, 16
      %v5228 = vshll.u32 %v5224, 16
      %v5229 = vshrl.u32 %v5224, 16
      %vm5230 = vc.u32 %v5222, %v5226
      %v5231 = vsel %vm5230, 1, 0
      %v5232 = vadd.s32 %v5222, %v5226
      %v5233 = vadd.s32 %v5225, %v5231
      %vm5234 = vc.u32 %v5232, %v5228
      %v5235 = vsel %vm5234, 1, 0
      %v5236 = vadd.s32 %v5232, %v5228
      %v5237 = vadd.s32 %v5233, %v5235
      %v5238 = vadd.s32 %v5237, %v5227
      %v5239 = vadd.s32 %v5238, %v5229
      %v5240 = vand.u32 %v5217, 65535
      %v5241 = vshrl.u32 %v5217, 16
      %v5242 = vand.u32 %v5212, 65535
      %v5243 = vshrl.u32 %v5212, 16
      %v5244 = vmul.u32 %v5240, %v5242
      %v5245 = vmul.u32 %v5240, %v5243
      %v5246 = vmul.u32 %v5241, %v5242
      %v5247 = vmul.u32 %v5241, %v5243
      %v5248 = vshll.u32 %v5245, 16
      %v5249 = vshrl.u32 %v5245, 16
      %v5250 = vshll.u32 %v5246, 16
      %v5251 = vshrl.u32 %v5246, 16
      %vm5252 = vc.u32 %v5244, %v5248
      %v5253 = vsel %vm5252, 1, 0
      %v5254 = vadd.s32 %v5244, %v5248
      %v5255 = vadd.s32 %v5247, %v5253
      %vm5256 = vc.u32 %v5254, %v5250
      %v5257 = vsel %vm5256, 1, 0
      %v5258 = vadd.s32 %v5254, %v5250
      %v5259 = vadd.s32 %v5255, %v5257
      %v5260 = vadd.s32 %v5259, %v5249
      %v5261 = vadd.s32 %v5260, %v5251
      %v5262 = vmul.u32 %v5217, %v5208
      %v5263 = vadd.s32 %v5239, %v5258
      %vm5264 = vc.u32 %v5239, %v5258
      %v5265 = vadd.s32 %v5261, 1
      %v5266 = vsel %vm5264, %v5265, %v5261
      %v5267 = vadd.s32 %v5262, %v5266
      %v5268 = vadd.s32 %v5267, 536870912
      %v5269 = vshrl.u32 %v5268, 30
      %v5270 = vshll.u32 %v5269, 30
      %v5271 = vsub.s32 %v5267, %v5270
      %vm5272 = vcmp.lt.s32.totalorder %v5271, 0
      %v5273 = vsub.s32 0, %v5271
      %v5274 = vsel %vm5272, %v5273, %v5271
      %v5275 = vclz %v5274
      %v5276 = vsub.s32 %v5275, 2
      %vm5277 = vcmp.gt.s32.totalorder 0, %v5276
      %v5278 = vsel %vm5277, 0, %v5276
      %v5279 = vsub.s32 32, %v5278
      %v5280 = vshll.u32 %v5271, %v5278
      %v5281 = vshrl.u32 %v5263, %v5279
      %v5282 = vor.u32 %v5280, %v5281
      %v5283 = vsub.s32 4294967266, %v5278
      %v5284 = vadd.s32 %v5283, 127
      %v5285 = vshll.u32 %v5284, 23
      %v5286 = vor.u32 4788187, %v5285
      %v5287 = vand.u32 2147483647, %v5286
      %v5289 = vcvt.s32.f32 %v5282
      %v5290 = vmul.f32 %v5289, %v5287
      %v5291 = vxor.u32 %v5290, 2147483648
      %v5292 = vsel %vm5171, %v5291, %v5290
      %v5293 = vsub.s32 4, %v5269
      %v5294 = vsel %vm5171, %v5293, %v5269
      %v5295 = vsel %vm5170, %v2943, %v5292
      %v5296 = vsel %vm5170, 0, %v5294
      %v5297 = vmul.f32 %v5295, %v5295
      %v5298 = vmul.f32 %v5297, -0.001358992
      %v5299 = vadd.f32 %v5298, 0.041655596
      %v5300 = vmul.f32 %v5297, %v5299
      %v5301 = vadd.f32 %v5300, -0.4999988
      %v5302 = vmul.f32 %v5297, %v5301
      %v5303 = vadd.f32 1.0, %v5302
      %v5304 = vmul.f32 %v5295, %v5295
      %v5305 = vmul.f32 %v5304, -0.00019511016
      %v5306 = vadd.f32 %v5305, 0.008332121
      %v5307 = vmul.f32 %v5304, %v5306
      %v5308 = vadd.f32 %v5307, -0.16666654
      %v5309 = vmul.f32 %v5304, %v5308
      %v5310 = vadd.f32 %v5309, 1.0
      %v5311 = vmul.f32 %v5310, %v5295
      %vm5312 = vweird.f32 %v2943
      %v5313 = vadd.s32 %v5296, 3
      %v5314 = vand.u32 %v5313, 3
      %vm5315 = vcmp.lt.s32.totalorder %v5314, 2
      %vm5316 = vcmp.eq.s32.totalorder %v5314, 0
      %v5317 = vxor.u32 %v5311, 2147483648
      %v5318 = vsel %vm5316, %v5303, %v5317
      %vm5319 = vcmp.eq.s32.totalorder %v5314, 2
      %v5320 = vxor.u32 %v5303, 2147483648
      %v5321 = vsel %vm5319, %v5320, %v5311
      %v5322 = vsel %vm5315, %v5318, %v5321
      %v5323 = vsel %vm5312, nan, %v5322
      %v5324 = vand.u32 2147483647, %v2946
      %vm5325 = vcmp.le.f32.partialorder %v5324, 0.7853982
      %vm5326 = vcmp.lt.s32.totalorder %v2946, 0
      %v5327 = vand.u32 %v2946, 2139095040
      %v5328 = vshrl.u32 %v5327, 23
      %v5329 = vsub.s32 %v5328, 127
      %v5330 = vand.u32 2147483647, %v2946
      %v5331 = vand.u32 %v5330, 8388607
      %v5332 = vor.u32 %v5331, 8388608
      %v5333 = vsub.s32 0, %v5332
      %v5334 = vadd.s32 %v5329, 1
      %vm5335 = vcmp.gt.s32.totalorder %v5334, 0
      %v5336 = vsel %vm5335, %v5334, 0
      %v5337 = vshrl.u32 %v5336, 5
      %v5338 = vand.u32 %v5336, 31
      %v5339 = vsub.s32 32, %v5338
      %v5340 = vshrl.u32 683565275, %v5339
      %v5341 = vshll.u32 683565275, %v5338
      %v5342 = vshrl.u32 2475754826, %v5339
      %v5343 = vor.u32 %v5341, %v5342
      %v5344 = vshll.u32 2475754826, %v5338
      %v5345 = vshrl.u32 2131351028, %v5339
      %v5346 = vor.u32 %v5344, %v5345
      %v5347 = vshll.u32 2131351028, %v5338
      %v5348 = vshrl.u32 2102212464, %v5339
      %v5349 = vor.u32 %v5347, %v5348
      %v5350 = vshll.u32 2102212464, %v5338
      %v5351 = vshrl.u32 920167782, %v5339
      %v5352 = vor.u32 %v5350, %v5351
      %v5353 = vshll.u32 920167782, %v5338
      %v5354 = vshrl.u32 1326507024, %v5339
      %v5355 = vor.u32 %v5353, %v5354
      %vm5356 = vcmp.lt.s32.totalorder %v5337, 1
      %vm5357 = vcmp.lt.s32.totalorder %v5337, 2
      %vm5358 = vcmp.lt.s32.totalorder %v5337, 3
      %vm5359 = vcmp.lt.s32.totalorder %v5337, 4
      %v5360 = vsel %vm5356, %v5340, %v5343
      %v5361 = vsel %vm5359, %v5349, 2102212464
      %v5362 = vsel %vm5358, %v5346, %v5361
      %v5363 = vsel %vm5357, %v5360, %v5362
      %v5364 = vsel %vm5356, %v5343, %v5346
      %v5365 = vsel %vm5359, %v5352, 920167782
      %v5366 = vsel %vm5358, %v5349, %v5365
      %v5367 = vsel %vm5357, %v5364, %v5366
      %v5368 = vsel %vm5356, %v5346, %v5349
      %v5369 = vsel %vm5359, %v5355, 1326507024
      %v5370 = vsel %vm5358, %v5352, %v5369
      %v5371 = vsel %vm5357, %v5368, %v5370
      %v5372 = vshll.u32 %v5332, 8
      %v5373 = vand.u32 %v5372, 65535
      %v5374 = vshrl.u32 %v5372, 16
      %v5375 = vand.u32 %v5371, 65535
      %v5376 = vshrl.u32 %v5371, 16
      %v5377 = vmul.u32 %v5373, %v5375
      %v5378 = vmul.u32 %v5373, %v5376
      %v5379 = vmul.u32 %v5374, %v5375
      %v5380 = vmul.u32 %v5374, %v5376
      %v5381 = vshll.u32 %v5378, 16
      %v5382 = vshrl.u32 %v5378, 16
      %v5383 = vshll.u32 %v5379, 16
      %v5384 = vshrl.u32 %v5379, 16
      %vm5385 = vc.u32 %v5377, %v5381
      %v5386 = vsel %vm5385, 1, 0
      %v5387 = vadd.s32 %v5377, %v5381
      %v5388 = vadd.s32 %v5380, %v5386
      %vm5389 = vc.u32 %v5387, %v5383
      %v5390 = vsel %vm5389, 1, 0
      %v5391 = vadd.s32 %v5387, %v5383
      %v5392 = vadd.s32 %v5388, %v5390
      %v5393 = vadd.s32 %v5392, %v5382
      %v5394 = vadd.s32 %v5393, %v5384
      %v5395 = vand.u32 %v5372, 65535
      %v5396 = vshrl.u32 %v5372, 16
      %v5397 = vand.u32 %v5367, 65535
      %v5398 = vshrl.u32 %v5367, 16
      %v5399 = vmul.u32 %v5395, %v5397
      %v5400 = vmul.u32 %v5395, %v5398
      %v5401 = vmul.u32 %v5396, %v5397
      %v5402 = vmul.u32 %v5396, %v5398
      %v5403 = vshll.u32 %v5400, 16
      %v5404 = vshrl.u32 %v5400, 16
      %v5405 = vshll.u32 %v5401, 16
      %v5406 = vshrl.u32 %v5401, 16
      %vm5407 = vc.u32 %v5399, %v5403
      %v5408 = vsel %vm5407, 1, 0
      %v5409 = vadd.s32 %v5399, %v5403
      %v5410 = vadd.s32 %v5402, %v5408
      %vm5411 = vc.u32 %v5409, %v5405
      %v5412 = vsel %vm5411, 1, 0
      %v5413 = vadd.s32 %v5409, %v5405
      %v5414 = vadd.s32 %v5410, %v5412
      %v5415 = vadd.s32 %v5414, %v5404
      %v5416 = vadd.s32 %v5415, %v5406
      %v5417 = vmul.u32 %v5372, %v5363
      %v5418 = vadd.s32 %v5394, %v5413
      %vm5419 = vc.u32 %v5394, %v5413
      %v5420 = vadd.s32 %v5416, 1
      %v5421 = vsel %vm5419, %v5420, %v5416
      %v5422 = vadd.s32 %v5417, %v5421
      %v5423 = vadd.s32 %v5422, 536870912
      %v5424 = vshrl.u32 %v5423, 30
      %v5425 = vshll.u32 %v5424, 30
      %v5426 = vsub.s32 %v5422, %v5425
      %vm5427 = vcmp.lt.s32.totalorder %v5426, 0
      %v5428 = vsub.s32 0, %v5426
      %v5429 = vsel %vm5427, %v5428, %v5426
      %v5430 = vclz %v5429
      %v5431 = vsub.s32 %v5430, 2
      %vm5432 = vcmp.gt.s32.totalorder 0, %v5431
      %v5433 = vsel %vm5432, 0, %v5431
      %v5434 = vsub.s32 32, %v5433
      %v5435 = vshll.u32 %v5426, %v5433
      %v5436 = vshrl.u32 %v5418, %v5434
      %v5437 = vor.u32 %v5435, %v5436
      %v5438 = vsub.s32 4294967266, %v5433
      %v5439 = vadd.s32 %v5438, 127
      %v5440 = vshll.u32 %v5439, 23
      %v5441 = vor.u32 4788187, %v5440
      %v5442 = vand.u32 2147483647, %v5441
      %v5444 = vcvt.s32.f32 %v5437
      %v5445 = vmul.f32 %v5444, %v5442
      %v5446 = vxor.u32 %v5445, 2147483648
      %v5447 = vsel %vm5326, %v5446, %v5445
      %v5448 = vsub.s32 4, %v5424
      %v5449 = vsel %vm5326, %v5448, %v5424
      %v5450 = vsel %vm5325, %v2946, %v5447
      %v5451 = vsel %vm5325, 0, %v5449
      %v5452 = vmul.f32 %v5450, %v5450
      %v5453 = vmul.f32 %v5452, -0.001358992
      %v5454 = vadd.f32 %v5453, 0.041655596
      %v5455 = vmul.f32 %v5452, %v5454
      %v5456 = vadd.f32 %v5455, -0.4999988
      %v5457 = vmul.f32 %v5452, %v5456
      %v5458 = vadd.f32 1.0, %v5457
      %v5459 = vmul.f32 %v5450, %v5450
      %v5460 = vmul.f32 %v5459, -0.00019511016
      %v5461 = vadd.f32 %v5460, 0.008332121
      %v5462 = vmul.f32 %v5459, %v5461
      %v5463 = vadd.f32 %v5462, -0.16666654
      %v5464 = vmul.f32 %v5459, %v5463
      %v5465 = vadd.f32 %v5464, 1.0
      %v5466 = vmul.f32 %v5465, %v5450
      %vm5467 = vweird.f32 %v2946
      %v5468 = vadd.s32 %v5451, 3
      %v5469 = vand.u32 %v5468, 3
      %vm5470 = vcmp.lt.s32.totalorder %v5469, 2
      %vm5471 = vcmp.eq.s32.totalorder %v5469, 0
      %v5472 = vxor.u32 %v5466, 2147483648
      %v5473 = vsel %vm5471, %v5458, %v5472
      %vm5474 = vcmp.eq.s32.totalorder %v5469, 2
      %v5475 = vxor.u32 %v5458, 2147483648
      %v5476 = vsel %vm5474, %v5475, %v5466
      %v5477 = vsel %vm5470, %v5473, %v5476
      %v5478 = vsel %vm5467, nan, %v5477
      %5479 = vmatpush.msra.mxu0 %v5478
      %5480 = vmatpush.msra.mxu0 %v5323
      %5481 = vmatpush.msra.mxu0 %v5168
      %5482 = vmatpush.msra.mxu0 %v5013
      %5483 = vmatpush.msra.mxu0 %v4858
      %5484 = vmatpush.msra.mxu0 %v4703
      %5485 = vmatpush.msra.mxu0 %v4548
      %5486 = vmatpush.msra.mxu0 %v4393
      %5487 = vmatpush.msra.mxu0 %v4238
      %5488 = vmatpush.msra.mxu0 %v4083
      %5489 = vmatpush.msra.mxu0 %v3928
      %5490 = vmatpush.msra.mxu0 %v3773
      %5491 = vmatpush.msra.mxu0 %v3618
      %5492 = vmatpush.msra.mxu0 %v3463
      %5493 = vmatpush.msra.mxu0 %v3308
      %5494 = vmatpush.msra.mxu0 %v3153
      %5495 = vmatmul.f32.gmra.mxu0 %v2948
      %v5496 = vpop.f32.mrf.mxu0
      %v5497 = vadd.f32 0.0, %v5496
      %5498 = vdwg.mxu0
      %v5499 = vadd.f32 %v2998, %v5497
      %5500 = vst [vmem:[%s528] sm:$0x7] %v5499
      %v5501 = vld [vmem:[%s532] sm:$0x7]
      %v5502 = vand.u32 2147483647, %v2901
      %vm5503 = vcmp.le.f32.partialorder %v5502, 0.7853982
      %vm5504 = vcmp.lt.s32.totalorder %v2901, 0
      %v5505 = vand.u32 %v2901, 2139095040
      %v5506 = vshrl.u32 %v5505, 23
      %v5507 = vsub.s32 %v5506, 127
      %v5508 = vand.u32 2147483647, %v2901
      %v5509 = vand.u32 %v5508, 8388607
      %v5510 = vor.u32 %v5509, 8388608
      %v5511 = vsub.s32 0, %v5510
      %v5512 = vadd.s32 %v5507, 1
      %vm5513 = vcmp.gt.s32.totalorder %v5512, 0
      %v5514 = vsel %vm5513, %v5512, 0
      %v5515 = vshrl.u32 %v5514, 5
      %v5516 = vand.u32 %v5514, 31
      %v5517 = vsub.s32 32, %v5516
      %v5518 = vshrl.u32 683565275, %v5517
      %v5519 = vshll.u32 683565275, %v5516
      %v5520 = vshrl.u32 2475754826, %v5517
      %v5521 = vor.u32 %v5519, %v5520
      %v5522 = vshll.u32 2475754826, %v5516
      %v5523 = vshrl.u32 2131351028, %v5517
      %v5524 = vor.u32 %v5522, %v5523
      %v5525 = vshll.u32 2131351028, %v5516
      %v5526 = vshrl.u32 2102212464, %v5517
      %v5527 = vor.u32 %v5525, %v5526
      %v5528 = vshll.u32 2102212464, %v5516
      %v5529 = vshrl.u32 920167782, %v5517
      %v5530 = vor.u32 %v5528, %v5529
      %v5531 = vshll.u32 920167782, %v5516
      %v5532 = vshrl.u32 1326507024, %v5517
      %v5533 = vor.u32 %v5531, %v5532
      %vm5534 = vcmp.lt.s32.totalorder %v5515, 1
      %vm5535 = vcmp.lt.s32.totalorder %v5515, 2
      %vm5536 = vcmp.lt.s32.totalorder %v5515, 3
      %vm5537 = vcmp.lt.s32.totalorder %v5515, 4
      %v5538 = vsel %vm5534, %v5518, %v5521
      %v5539 = vsel %vm5537, %v5527, 2102212464
      %v5540 = vsel %vm5536, %v5524, %v5539
      %v5541 = vsel %vm5535, %v5538, %v5540
      %v5542 = vsel %vm5534, %v5521, %v5524
      %v5543 = vsel %vm5537, %v5530, 920167782
      %v5544 = vsel %vm5536, %v5527, %v5543
      %v5545 = vsel %vm5535, %v5542, %v5544
      %v5546 = vsel %vm5534, %v5524, %v5527
      %v5547 = vsel %vm5537, %v5533, 1326507024
      %v5548 = vsel %vm5536, %v5530, %v5547
      %v5549 = vsel %vm5535, %v5546, %v5548
      %v5550 = vshll.u32 %v5510, 8
      %v5551 = vand.u32 %v5550, 65535
      %v5552 = vshrl.u32 %v5550, 16
      %v5553 = vand.u32 %v5549, 65535
      %v5554 = vshrl.u32 %v5549, 16
      %v5555 = vmul.u32 %v5551, %v5553
      %v5556 = vmul.u32 %v5551, %v5554
      %v5557 = vmul.u32 %v5552, %v5553
      %v5558 = vmul.u32 %v5552, %v5554
      %v5559 = vshll.u32 %v5556, 16
      %v5560 = vshrl.u32 %v5556, 16
      %v5561 = vshll.u32 %v5557, 16
      %v5562 = vshrl.u32 %v5557, 16
      %vm5563 = vc.u32 %v5555, %v5559
      %v5564 = vsel %vm5563, 1, 0
      %v5565 = vadd.s32 %v5555, %v5559
      %v5566 = vadd.s32 %v5558, %v5564
      %vm5567 = vc.u32 %v5565, %v5561
      %v5568 = vsel %vm5567, 1, 0
      %v5569 = vadd.s32 %v5565, %v5561
      %v5570 = vadd.s32 %v5566, %v5568
      %v5571 = vadd.s32 %v5570, %v5560
      %v5572 = vadd.s32 %v5571, %v5562
      %v5573 = vand.u32 %v5550, 65535
      %v5574 = vshrl.u32 %v5550, 16
      %v5575 = vand.u32 %v5545, 65535
      %v5576 = vshrl.u32 %v5545, 16
      %v5577 = vmul.u32 %v5573, %v5575
      %v5578 = vmul.u32 %v5573, %v5576
      %v5579 = vmul.u32 %v5574, %v5575
      %v5580 = vmul.u32 %v5574, %v5576
      %v5581 = vshll.u32 %v5578, 16
      %v5582 = vshrl.u32 %v5578, 16
      %v5583 = vshll.u32 %v5579, 16
      %v5584 = vshrl.u32 %v5579, 16
      %vm5585 = vc.u32 %v5577, %v5581
      %v5586 = vsel %vm5585, 1, 0
      %v5587 = vadd.s32 %v5577, %v5581
      %v5588 = vadd.s32 %v5580, %v5586
      %vm5589 = vc.u32 %v5587, %v5583
      %v5590 = vsel %vm5589, 1, 0
      %v5591 = vadd.s32 %v5587, %v5583
      %v5592 = vadd.s32 %v5588, %v5590
      %v5593 = vadd.s32 %v5592, %v5582
      %v5594 = vadd.s32 %v5593, %v5584
      %v5595 = vmul.u32 %v5550, %v5541
      %v5596 = vadd.s32 %v5572, %v5591
      %vm5597 = vc.u32 %v5572, %v5591
      %v5598 = vadd.s32 %v5594, 1
      %v5599 = vsel %vm5597, %v5598, %v5594
      %v5600 = vadd.s32 %v5595, %v5599
      %v5601 = vadd.s32 %v5600, 536870912
      %v5602 = vshrl.u32 %v5601, 30
      %v5603 = vshll.u32 %v5602, 30
      %v5604 = vsub.s32 %v5600, %v5603
      %vm5605 = vcmp.lt.s32.totalorder %v5604, 0
      %v5606 = vsub.s32 0, %v5604
      %v5607 = vsel %vm5605, %v5606, %v5604
      %v5608 = vclz %v5607
      %v5609 = vsub.s32 %v5608, 2
      %vm5610 = vcmp.gt.s32.totalorder 0, %v5609
      %v5611 = vsel %vm5610, 0, %v5609
      %v5612 = vsub.s32 32, %v5611
      %v5613 = vshll.u32 %v5604, %v5611
      %v5614 = vshrl.u32 %v5596, %v5612
      %v5615 = vor.u32 %v5613, %v5614
      %v5616 = vsub.s32 4294967266, %v5611
      %v5617 = vadd.s32 %v5616, 127
      %v5618 = vshll.u32 %v5617, 23
      %v5619 = vor.u32 4788187, %v5618
      %v5620 = vand.u32 2147483647, %v5619
      %v5622 = vcvt.s32.f32 %v5615
      %v5623 = vmul.f32 %v5622, %v5620
      %v5624 = vxor.u32 %v5623, 2147483648
      %v5625 = vsel %vm5504, %v5624, %v5623
      %v5626 = vsub.s32 4, %v5602
      %v5627 = vsel %vm5504, %v5626, %v5602
      %v5628 = vsel %vm5503, %v2901, %v5625
      %v5629 = vsel %vm5503, 0, %v5627
      %v5630 = vmul.f32 %v5628, %v5628
      %v5631 = vmul.f32 %v5630, -0.001358992
      %v5632 = vadd.f32 %v5631, 0.041655596
      %v5633 = vmul.f32 %v5630, %v5632
      %v5634 = vadd.f32 %v5633, -0.4999988
      %v5635 = vmul.f32 %v5630, %v5634
      %v5636 = vadd.f32 1.0, %v5635
      %v5637 = vmul.f32 %v5628, %v5628
      %v5638 = vmul.f32 %v5637, -0.00019511016
      %v5639 = vadd.f32 %v5638, 0.008332121
      %v5640 = vmul.f32 %v5637, %v5639
      %v5641 = vadd.f32 %v5640, -0.16666654
      %v5642 = vmul.f32 %v5637, %v5641
      %v5643 = vadd.f32 %v5642, 1.0
      %v5644 = vmul.f32 %v5643, %v5628
      %vm5645 = vweird.f32 %v2901
      %v5646 = vand.u32 %v5629, 3
      %vm5647 = vcmp.lt.s32.totalorder %v5646, 2
      %vm5648 = vcmp.eq.s32.totalorder %v5646, 0
      %v5649 = vxor.u32 %v5644, 2147483648
      %v5650 = vsel %vm5648, %v5636, %v5649
      %vm5651 = vcmp.eq.s32.totalorder %v5646, 2
      %v5652 = vxor.u32 %v5636, 2147483648
      %v5653 = vsel %vm5651, %v5652, %v5644
      %v5654 = vsel %vm5647, %v5650, %v5653
      %v5655 = vsel %vm5645, nan, %v5654
      %v5656 = vand.u32 2147483647, %v2904
      %vm5657 = vcmp.le.f32.partialorder %v5656, 0.7853982
      %vm5658 = vcmp.lt.s32.totalorder %v2904, 0
      %v5659 = vand.u32 %v2904, 2139095040
      %v5660 = vshrl.u32 %v5659, 23
      %v5661 = vsub.s32 %v5660, 127
      %v5662 = vand.u32 2147483647, %v2904
      %v5663 = vand.u32 %v5662, 8388607
      %v5664 = vor.u32 %v5663, 8388608
      %v5665 = vsub.s32 0, %v5664
      %v5666 = vadd.s32 %v5661, 1
      %vm5667 = vcmp.gt.s32.totalorder %v5666, 0
      %v5668 = vsel %vm5667, %v5666, 0
      %v5669 = vshrl.u32 %v5668, 5
      %v5670 = vand.u32 %v5668, 31
      %v5671 = vsub.s32 32, %v5670
      %v5672 = vshrl.u32 683565275, %v5671
      %v5673 = vshll.u32 683565275, %v5670
      %v5674 = vshrl.u32 2475754826, %v5671
      %v5675 = vor.u32 %v5673, %v5674
      %v5676 = vshll.u32 2475754826, %v5670
      %v5677 = vshrl.u32 2131351028, %v5671
      %v5678 = vor.u32 %v5676, %v5677
      %v5679 = vshll.u32 2131351028, %v5670
      %v5680 = vshrl.u32 2102212464, %v5671
      %v5681 = vor.u32 %v5679, %v5680
      %v5682 = vshll.u32 2102212464, %v5670
      %v5683 = vshrl.u32 920167782, %v5671
      %v5684 = vor.u32 %v5682, %v5683
      %v5685 = vshll.u32 920167782, %v5670
      %v5686 = vshrl.u32 1326507024, %v5671
      %v5687 = vor.u32 %v5685, %v5686
      %vm5688 = vcmp.lt.s32.totalorder %v5669, 1
      %vm5689 = vcmp.lt.s32.totalorder %v5669, 2
      %vm5690 = vcmp.lt.s32.totalorder %v5669, 3
      %vm5691 = vcmp.lt.s32.totalorder %v5669, 4
      %v5692 = vsel %vm5688, %v5672, %v5675
      %v5693 = vsel %vm5691, %v5681, 2102212464
      %v5694 = vsel %vm5690, %v5678, %v5693
      %v5695 = vsel %vm5689, %v5692, %v5694
      %v5696 = vsel %vm5688, %v5675, %v5678
      %v5697 = vsel %vm5691, %v5684, 920167782
      %v5698 = vsel %vm5690, %v5681, %v5697
      %v5699 = vsel %vm5689, %v5696, %v5698
      %v5700 = vsel %vm5688, %v5678, %v5681
      %v5701 = vsel %vm5691, %v5687, 1326507024
      %v5702 = vsel %vm5690, %v5684, %v5701
      %v5703 = vsel %vm5689, %v5700, %v5702
      %v5704 = vshll.u32 %v5664, 8
      %v5705 = vand.u32 %v5704, 65535
      %v5706 = vshrl.u32 %v5704, 16
      %v5707 = vand.u32 %v5703, 65535
      %v5708 = vshrl.u32 %v5703, 16
      %v5709 = vmul.u32 %v5705, %v5707
      %v5710 = vmul.u32 %v5705, %v5708
      %v5711 = vmul.u32 %v5706, %v5707
      %v5712 = vmul.u32 %v5706, %v5708
      %v5713 = vshll.u32 %v5710, 16
      %v5714 = vshrl.u32 %v5710, 16
      %v5715 = vshll.u32 %v5711, 16
      %v5716 = vshrl.u32 %v5711, 16
      %vm5717 = vc.u32 %v5709, %v5713
      %v5718 = vsel %vm5717, 1, 0
      %v5719 = vadd.s32 %v5709, %v5713
      %v5720 = vadd.s32 %v5712, %v5718
      %vm5721 = vc.u32 %v5719, %v5715
      %v5722 = vsel %vm5721, 1, 0
      %v5723 = vadd.s32 %v5719, %v5715
      %v5724 = vadd.s32 %v5720, %v5722
      %v5725 = vadd.s32 %v5724, %v5714
      %v5726 = vadd.s32 %v5725, %v5716
      %v5727 = vand.u32 %v5704, 65535
      %v5728 = vshrl.u32 %v5704, 16
      %v5729 = vand.u32 %v5699, 65535
      %v5730 = vshrl.u32 %v5699, 16
      %v5731 = vmul.u32 %v5727, %v5729
      %v5732 = vmul.u32 %v5727, %v5730
      %v5733 = vmul.u32 %v5728, %v5729
      %v5734 = vmul.u32 %v5728, %v5730
      %v5735 = vshll.u32 %v5732, 16
      %v5736 = vshrl.u32 %v5732, 16
      %v5737 = vshll.u32 %v5733, 16
      %v5738 = vshrl.u32 %v5733, 16
      %vm5739 = vc.u32 %v5731, %v5735
      %v5740 = vsel %vm5739, 1, 0
      %v5741 = vadd.s32 %v5731, %v5735
      %v5742 = vadd.s32 %v5734, %v5740
      %vm5743 = vc.u32 %v5741, %v5737
      %v5744 = vsel %vm5743, 1, 0
      %v5745 = vadd.s32 %v5741, %v5737
      %v5746 = vadd.s32 %v5742, %v5744
      %v5747 = vadd.s32 %v5746, %v5736
      %v5748 = vadd.s32 %v5747, %v5738
      %v5749 = vmul.u32 %v5704, %v5695
      %v5750 = vadd.s32 %v5726, %v5745
      %vm5751 = vc.u32 %v5726, %v5745
      %v5752 = vadd.s32 %v5748, 1
      %v5753 = vsel %vm5751, %v5752, %v5748
      %v5754 = vadd.s32 %v5749, %v5753
      %v5755 = vadd.s32 %v5754, 536870912
      %v5756 = vshrl.u32 %v5755, 30
      %v5757 = vshll.u32 %v5756, 30
      %v5758 = vsub.s32 %v5754, %v5757
      %vm5759 = vcmp.lt.s32.totalorder %v5758, 0
      %v5760 = vsub.s32 0, %v5758
      %v5761 = vsel %vm5759, %v5760, %v5758
      %v5762 = vclz %v5761
      %v5763 = vsub.s32 %v5762, 2
      %vm5764 = vcmp.gt.s32.totalorder 0, %v5763
      %v5765 = vsel %vm5764, 0, %v5763
      %v5766 = vsub.s32 32, %v5765
      %v5767 = vshll.u32 %v5758, %v5765
      %v5768 = vshrl.u32 %v5750, %v5766
      %v5769 = vor.u32 %v5767, %v5768
      %v5770 = vsub.s32 4294967266, %v5765
      %v5771 = vadd.s32 %v5770, 127
      %v5772 = vshll.u32 %v5771, 23
      %v5773 = vor.u32 4788187, %v5772
      %v5774 = vand.u32 2147483647, %v5773
      %v5776 = vcvt.s32.f32 %v5769
      %v5777 = vmul.f32 %v5776, %v5774
      %v5778 = vxor.u32 %v5777, 2147483648
      %v5779 = vsel %vm5658, %v5778, %v5777
      %v5780 = vsub.s32 4, %v5756
      %v5781 = vsel %vm5658, %v5780, %v5756
      %v5782 = vsel %vm5657, %v2904, %v5779
      %v5783 = vsel %vm5657, 0, %v5781
      %v5784 = vmul.f32 %v5782, %v5782
      %v5785 = vmul.f32 %v5784, -0.001358992
      %v5786 = vadd.f32 %v5785, 0.041655596
      %v5787 = vmul.f32 %v5784, %v5786
      %v5788 = vadd.f32 %v5787, -0.4999988
      %v5789 = vmul.f32 %v5784, %v5788
      %v5790 = vadd.f32 1.0, %v5789
      %v5791 = vmul.f32 %v5782, %v5782
      %v5792 = vmul.f32 %v5791, -0.00019511016
      %v5793 = vadd.f32 %v5792, 0.008332121
      %v5794 = vmul.f32 %v5791, %v5793
      %v5795 = vadd.f32 %v5794, -0.16666654
      %v5796 = vmul.f32 %v5791, %v5795
      %v5797 = vadd.f32 %v5796, 1.0
      %v5798 = vmul.f32 %v5797, %v5782
      %vm5799 = vweird.f32 %v2904
      %v5800 = vand.u32 %v5783, 3
      %vm5801 = vcmp.lt.s32.totalorder %v5800, 2
      %vm5802 = vcmp.eq.s32.totalorder %v5800, 0
      %v5803 = vxor.u32 %v5798, 2147483648
      %v5804 = vsel %vm5802, %v5790, %v5803
      %vm5805 = vcmp.eq.s32.totalorder %v5800, 2
      %v5806 = vxor.u32 %v5790, 2147483648
      %v5807 = vsel %vm5805, %v5806, %v5798
      %v5808 = vsel %vm5801, %v5804, %v5807
      %v5809 = vsel %vm5799, nan, %v5808
      %v5810 = vand.u32 2147483647, %v2907
      %vm5811 = vcmp.le.f32.partialorder %v5810, 0.7853982
      %vm5812 = vcmp.lt.s32.totalorder %v2907, 0
      %v5813 = vand.u32 %v2907, 2139095040
      %v5814 = vshrl.u32 %v5813, 23
      %v5815 = vsub.s32 %v5814, 127
      %v5816 = vand.u32 2147483647, %v2907
      %v5817 = vand.u32 %v5816, 8388607
      %v5818 = vor.u32 %v5817, 8388608
      %v5819 = vsub.s32 0, %v5818
      %v5820 = vadd.s32 %v5815, 1
      %vm5821 = vcmp.gt.s32.totalorder %v5820, 0
      %v5822 = vsel %vm5821, %v5820, 0
      %v5823 = vshrl.u32 %v5822, 5
      %v5824 = vand.u32 %v5822, 31
      %v5825 = vsub.s32 32, %v5824
      %v5826 = vshrl.u32 683565275, %v5825
      %v5827 = vshll.u32 683565275, %v5824
      %v5828 = vshrl.u32 2475754826, %v5825
      %v5829 = vor.u32 %v5827, %v5828
      %v5830 = vshll.u32 2475754826, %v5824
      %v5831 = vshrl.u32 2131351028, %v5825
      %v5832 = vor.u32 %v5830, %v5831
      %v5833 = vshll.u32 2131351028, %v5824
      %v5834 = vshrl.u32 2102212464, %v5825
      %v5835 = vor.u32 %v5833, %v5834
      %v5836 = vshll.u32 2102212464, %v5824
      %v5837 = vshrl.u32 920167782, %v5825
      %v5838 = vor.u32 %v5836, %v5837
      %v5839 = vshll.u32 920167782, %v5824
      %v5840 = vshrl.u32 1326507024, %v5825
      %v5841 = vor.u32 %v5839, %v5840
      %vm5842 = vcmp.lt.s32.totalorder %v5823, 1
      %vm5843 = vcmp.lt.s32.totalorder %v5823, 2
      %vm5844 = vcmp.lt.s32.totalorder %v5823, 3
      %vm5845 = vcmp.lt.s32.totalorder %v5823, 4
      %v5846 = vsel %vm5842, %v5826, %v5829
      %v5847 = vsel %vm5845, %v5835, 2102212464
      %v5848 = vsel %vm5844, %v5832, %v5847
      %v5849 = vsel %vm5843, %v5846, %v5848
      %v5850 = vsel %vm5842, %v5829, %v5832
      %v5851 = vsel %vm5845, %v5838, 920167782
      %v5852 = vsel %vm5844, %v5835, %v5851
      %v5853 = vsel %vm5843, %v5850, %v5852
      %v5854 = vsel %vm5842, %v5832, %v5835
      %v5855 = vsel %vm5845, %v5841, 1326507024
      %v5856 = vsel %vm5844, %v5838, %v5855
      %v5857 = vsel %vm5843, %v5854, %v5856
      %v5858 = vshll.u32 %v5818, 8
      %v5859 = vand.u32 %v5858, 65535
      %v5860 = vshrl.u32 %v5858, 16
      %v5861 = vand.u32 %v5857, 65535
      %v5862 = vshrl.u32 %v5857, 16
      %v5863 = vmul.u32 %v5859, %v5861
      %v5864 = vmul.u32 %v5859, %v5862
      %v5865 = vmul.u32 %v5860, %v5861
      %v5866 = vmul.u32 %v5860, %v5862
      %v5867 = vshll.u32 %v5864, 16
      %v5868 = vshrl.u32 %v5864, 16
      %v5869 = vshll.u32 %v5865, 16
      %v5870 = vshrl.u32 %v5865, 16
      %vm5871 = vc.u32 %v5863, %v5867
      %v5872 = vsel %vm5871, 1, 0
      %v5873 = vadd.s32 %v5863, %v5867
      %v5874 = vadd.s32 %v5866, %v5872
      %vm5875 = vc.u32 %v5873, %v5869
      %v5876 = vsel %vm5875, 1, 0
      %v5877 = vadd.s32 %v5873, %v5869
      %v5878 = vadd.s32 %v5874, %v5876
      %v5879 = vadd.s32 %v5878, %v5868
      %v5880 = vadd.s32 %v5879, %v5870
      %v5881 = vand.u32 %v5858, 65535
      %v5882 = vshrl.u32 %v5858, 16
      %v5883 = vand.u32 %v5853, 65535
      %v5884 = vshrl.u32 %v5853, 16
      %v5885 = vmul.u32 %v5881, %v5883
      %v5886 = vmul.u32 %v5881, %v5884
      %v5887 = vmul.u32 %v5882, %v5883
      %v5888 = vmul.u32 %v5882, %v5884
      %v5889 = vshll.u32 %v5886, 16
      %v5890 = vshrl.u32 %v5886, 16
      %v5891 = vshll.u32 %v5887, 16
      %v5892 = vshrl.u32 %v5887, 16
      %vm5893 = vc.u32 %v5885, %v5889
      %v5894 = vsel %vm5893, 1, 0
      %v5895 = vadd.s32 %v5885, %v5889
      %v5896 = vadd.s32 %v5888, %v5894
      %vm5897 = vc.u32 %v5895, %v5891
      %v5898 = vsel %vm5897, 1, 0
      %v5899 = vadd.s32 %v5895, %v5891
      %v5900 = vadd.s32 %v5896, %v5898
      %v5901 = vadd.s32 %v5900, %v5890
      %v5902 = vadd.s32 %v5901, %v5892
      %v5903 = vmul.u32 %v5858, %v5849
      %v5904 = vadd.s32 %v5880, %v5899
      %vm5905 = vc.u32 %v5880, %v5899
      %v5906 = vadd.s32 %v5902, 1
      %v5907 = vsel %vm5905, %v5906, %v5902
      %v5908 = vadd.s32 %v5903, %v5907
      %v5909 = vadd.s32 %v5908, 536870912
      %v5910 = vshrl.u32 %v5909, 30
      %v5911 = vshll.u32 %v5910, 30
      %v5912 = vsub.s32 %v5908, %v5911
      %vm5913 = vcmp.lt.s32.totalorder %v5912, 0
      %v5914 = vsub.s32 0, %v5912
      %v5915 = vsel %vm5913, %v5914, %v5912
      %v5916 = vclz %v5915
      %v5917 = vsub.s32 %v5916, 2
      %vm5918 = vcmp.gt.s32.totalorder 0, %v5917
      %v5919 = vsel %vm5918, 0, %v5917
      %v5920 = vsub.s32 32, %v5919
      %v5921 = vshll.u32 %v5912, %v5919
      %v5922 = vshrl.u32 %v5904, %v5920
      %v5923 = vor.u32 %v5921, %v5922
      %v5924 = vsub.s32 4294967266, %v5919
      %v5925 = vadd.s32 %v5924, 127
      %v5926 = vshll.u32 %v5925, 23
      %v5927 = vor.u32 4788187, %v5926
      %v5928 = vand.u32 2147483647, %v5927
      %v5930 = vcvt.s32.f32 %v5923
      %v5931 = vmul.f32 %v5930, %v5928
      %v5932 = vxor.u32 %v5931, 2147483648
      %v5933 = vsel %vm5812, %v5932, %v5931
      %v5934 = vsub.s32 4, %v5910
      %v5935 = vsel %vm5812, %v5934, %v5910
      %v5936 = vsel %vm5811, %v2907, %v5933
      %v5937 = vsel %vm5811, 0, %v5935
      %v5938 = vmul.f32 %v5936, %v5936
      %v5939 = vmul.f32 %v5938, -0.001358992
      %v5940 = vadd.f32 %v5939, 0.041655596
      %v5941 = vmul.f32 %v5938, %v5940
      %v5942 = vadd.f32 %v5941, -0.4999988
      %v5943 = vmul.f32 %v5938, %v5942
      %v5944 = vadd.f32 1.0, %v5943
      %v5945 = vmul.f32 %v5936, %v5936
      %v5946 = vmul.f32 %v5945, -0.00019511016
      %v5947 = vadd.f32 %v5946, 0.008332121
      %v5948 = vmul.f32 %v5945, %v5947
      %v5949 = vadd.f32 %v5948, -0.16666654
      %v5950 = vmul.f32 %v5945, %v5949
      %v5951 = vadd.f32 %v5950, 1.0
      %v5952 = vmul.f32 %v5951, %v5936
      %vm5953 = vweird.f32 %v2907
      %v5954 = vand.u32 %v5937, 3
      %vm5955 = vcmp.lt.s32.totalorder %v5954, 2
      %vm5956 = vcmp.eq.s32.totalorder %v5954, 0
      %v5957 = vxor.u32 %v5952, 2147483648
      %v5958 = vsel %vm5956, %v5944, %v5957
      %vm5959 = vcmp.eq.s32.totalorder %v5954, 2
      %v5960 = vxor.u32 %v5944, 2147483648
      %v5961 = vsel %vm5959, %v5960, %v5952
      %v5962 = vsel %vm5955, %v5958, %v5961
      %v5963 = vsel %vm5953, nan, %v5962
      %v5964 = vand.u32 2147483647, %v2910
      %vm5965 = vcmp.le.f32.partialorder %v5964, 0.7853982
      %vm5966 = vcmp.lt.s32.totalorder %v2910, 0
      %v5967 = vand.u32 %v2910, 2139095040
      %v5968 = vshrl.u32 %v5967, 23
      %v5969 = vsub.s32 %v5968, 127
      %v5970 = vand.u32 2147483647, %v2910
      %v5971 = vand.u32 %v5970, 8388607
      %v5972 = vor.u32 %v5971, 8388608
      %v5973 = vsub.s32 0, %v5972
      %v5974 = vadd.s32 %v5969, 1
      %vm5975 = vcmp.gt.s32.totalorder %v5974, 0
      %v5976 = vsel %vm5975, %v5974, 0
      %v5977 = vshrl.u32 %v5976, 5
      %v5978 = vand.u32 %v5976, 31
      %v5979 = vsub.s32 32, %v5978
      %v5980 = vshrl.u32 683565275, %v5979
      %v5981 = vshll.u32 683565275, %v5978
      %v5982 = vshrl.u32 2475754826, %v5979
      %v5983 = vor.u32 %v5981, %v5982
      %v5984 = vshll.u32 2475754826, %v5978
      %v5985 = vshrl.u32 2131351028, %v5979
      %v5986 = vor.u32 %v5984, %v5985
      %v5987 = vshll.u32 2131351028, %v5978
      %v5988 = vshrl.u32 2102212464, %v5979
      %v5989 = vor.u32 %v5987, %v5988
      %v5990 = vshll.u32 2102212464, %v5978
      %v5991 = vshrl.u32 920167782, %v5979
      %v5992 = vor.u32 %v5990, %v5991
      %v5993 = vshll.u32 920167782, %v5978
      %v5994 = vshrl.u32 1326507024, %v5979
      %v5995 = vor.u32 %v5993, %v5994
      %vm5996 = vcmp.lt.s32.totalorder %v5977, 1
      %vm5997 = vcmp.lt.s32.totalorder %v5977, 2
      %vm5998 = vcmp.lt.s32.totalorder %v5977, 3
      %vm5999 = vcmp.lt.s32.totalorder %v5977, 4
      %v6000 = vsel %vm5996, %v5980, %v5983
      %v6001 = vsel %vm5999, %v5989, 2102212464
      %v6002 = vsel %vm5998, %v5986, %v6001
      %v6003 = vsel %vm5997, %v6000, %v6002
      %v6004 = vsel %vm5996, %v5983, %v5986
      %v6005 = vsel %vm5999, %v5992, 920167782
      %v6006 = vsel %vm5998, %v5989, %v6005
      %v6007 = vsel %vm5997, %v6004, %v6006
      %v6008 = vsel %vm5996, %v5986, %v5989
      %v6009 = vsel %vm5999, %v5995, 1326507024
      %v6010 = vsel %vm5998, %v5992, %v6009
      %v6011 = vsel %vm5997, %v6008, %v6010
      %v6012 = vshll.u32 %v5972, 8
      %v6013 = vand.u32 %v6012, 65535
      %v6014 = vshrl.u32 %v6012, 16
      %v6015 = vand.u32 %v6011, 65535
      %v6016 = vshrl.u32 %v6011, 16
      %v6017 = vmul.u32 %v6013, %v6015
      %v6018 = vmul.u32 %v6013, %v6016
      %v6019 = vmul.u32 %v6014, %v6015
      %v6020 = vmul.u32 %v6014, %v6016
      %v6021 = vshll.u32 %v6018, 16
      %v6022 = vshrl.u32 %v6018, 16
      %v6023 = vshll.u32 %v6019, 16
      %v6024 = vshrl.u32 %v6019, 16
      %vm6025 = vc.u32 %v6017, %v6021
      %v6026 = vsel %vm6025, 1, 0
      %v6027 = vadd.s32 %v6017, %v6021
      %v6028 = vadd.s32 %v6020, %v6026
      %vm6029 = vc.u32 %v6027, %v6023
      %v6030 = vsel %vm6029, 1, 0
      %v6031 = vadd.s32 %v6027, %v6023
      %v6032 = vadd.s32 %v6028, %v6030
      %v6033 = vadd.s32 %v6032, %v6022
      %v6034 = vadd.s32 %v6033, %v6024
      %v6035 = vand.u32 %v6012, 65535
      %v6036 = vshrl.u32 %v6012, 16
      %v6037 = vand.u32 %v6007, 65535
      %v6038 = vshrl.u32 %v6007, 16
      %v6039 = vmul.u32 %v6035, %v6037
      %v6040 = vmul.u32 %v6035, %v6038
      %v6041 = vmul.u32 %v6036, %v6037
      %v6042 = vmul.u32 %v6036, %v6038
      %v6043 = vshll.u32 %v6040, 16
      %v6044 = vshrl.u32 %v6040, 16
      %v6045 = vshll.u32 %v6041, 16
      %v6046 = vshrl.u32 %v6041, 16
      %vm6047 = vc.u32 %v6039, %v6043
      %v6048 = vsel %vm6047, 1, 0
      %v6049 = vadd.s32 %v6039, %v6043
      %v6050 = vadd.s32 %v6042, %v6048
      %vm6051 = vc.u32 %v6049, %v6045
      %v6052 = vsel %vm6051, 1, 0
      %v6053 = vadd.s32 %v6049, %v6045
      %v6054 = vadd.s32 %v6050, %v6052
      %v6055 = vadd.s32 %v6054, %v6044
      %v6056 = vadd.s32 %v6055, %v6046
      %v6057 = vmul.u32 %v6012, %v6003
      %v6058 = vadd.s32 %v6034, %v6053
      %vm6059 = vc.u32 %v6034, %v6053
      %v6060 = vadd.s32 %v6056, 1
      %v6061 = vsel %vm6059, %v6060, %v6056
      %v6062 = vadd.s32 %v6057, %v6061
      %v6063 = vadd.s32 %v6062, 536870912
      %v6064 = vshrl.u32 %v6063, 30
      %v6065 = vshll.u32 %v6064, 30
      %v6066 = vsub.s32 %v6062, %v6065
      %vm6067 = vcmp.lt.s32.totalorder %v6066, 0
      %v6068 = vsub.s32 0, %v6066
      %v6069 = vsel %vm6067, %v6068, %v6066
      %v6070 = vclz %v6069
      %v6071 = vsub.s32 %v6070, 2
      %vm6072 = vcmp.gt.s32.totalorder 0, %v6071
      %v6073 = vsel %vm6072, 0, %v6071
      %v6074 = vsub.s32 32, %v6073
      %v6075 = vshll.u32 %v6066, %v6073
      %v6076 = vshrl.u32 %v6058, %v6074
      %v6077 = vor.u32 %v6075, %v6076
      %v6078 = vsub.s32 4294967266, %v6073
      %v6079 = vadd.s32 %v6078, 127
      %v6080 = vshll.u32 %v6079, 23
      %v6081 = vor.u32 4788187, %v6080
      %v6082 = vand.u32 2147483647, %v6081
      %v6084 = vcvt.s32.f32 %v6077
      %v6085 = vmul.f32 %v6084, %v6082
      %v6086 = vxor.u32 %v6085, 2147483648
      %v6087 = vsel %vm5966, %v6086, %v6085
      %v6088 = vsub.s32 4, %v6064
      %v6089 = vsel %vm5966, %v6088, %v6064
      %v6090 = vsel %vm5965, %v2910, %v6087
      %v6091 = vsel %vm5965, 0, %v6089
      %v6092 = vmul.f32 %v6090, %v6090
      %v6093 = vmul.f32 %v6092, -0.001358992
      %v6094 = vadd.f32 %v6093, 0.041655596
      %v6095 = vmul.f32 %v6092, %v6094
      %v6096 = vadd.f32 %v6095, -0.4999988
      %v6097 = vmul.f32 %v6092, %v6096
      %v6098 = vadd.f32 1.0, %v6097
      %v6099 = vmul.f32 %v6090, %v6090
      %v6100 = vmul.f32 %v6099, -0.00019511016
      %v6101 = vadd.f32 %v6100, 0.008332121
      %v6102 = vmul.f32 %v6099, %v6101
      %v6103 = vadd.f32 %v6102, -0.16666654
      %v6104 = vmul.f32 %v6099, %v6103
      %v6105 = vadd.f32 %v6104, 1.0
      %v6106 = vmul.f32 %v6105, %v6090
      %vm6107 = vweird.f32 %v2910
      %v6108 = vand.u32 %v6091, 3
      %vm6109 = vcmp.lt.s32.totalorder %v6108, 2
      %vm6110 = vcmp.eq.s32.totalorder %v6108, 0
      %v6111 = vxor.u32 %v6106, 2147483648
      %v6112 = vsel %vm6110, %v6098, %v6111
      %vm6113 = vcmp.eq.s32.totalorder %v6108, 2
      %v6114 = vxor.u32 %v6098, 2147483648
      %v6115 = vsel %vm6113, %v6114, %v6106
      %v6116 = vsel %vm6109, %v6112, %v6115
      %v6117 = vsel %vm6107, nan, %v6116
      %v6118 = vand.u32 2147483647, %v2913
      %vm6119 = vcmp.le.f32.partialorder %v6118, 0.7853982
      %vm6120 = vcmp.lt.s32.totalorder %v2913, 0
      %v6121 = vand.u32 %v2913, 2139095040
      %v6122 = vshrl.u32 %v6121, 23
      %v6123 = vsub.s32 %v6122, 127
      %v6124 = vand.u32 2147483647, %v2913
      %v6125 = vand.u32 %v6124, 8388607
      %v6126 = vor.u32 %v6125, 8388608
      %v6127 = vsub.s32 0, %v6126
      %v6128 = vadd.s32 %v6123, 1
      %vm6129 = vcmp.gt.s32.totalorder %v6128, 0
      %v6130 = vsel %vm6129, %v6128, 0
      %v6131 = vshrl.u32 %v6130, 5
      %v6132 = vand.u32 %v6130, 31
      %v6133 = vsub.s32 32, %v6132
      %v6134 = vshrl.u32 683565275, %v6133
      %v6135 = vshll.u32 683565275, %v6132
      %v6136 = vshrl.u32 2475754826, %v6133
      %v6137 = vor.u32 %v6135, %v6136
      %v6138 = vshll.u32 2475754826, %v6132
      %v6139 = vshrl.u32 2131351028, %v6133
      %v6140 = vor.u32 %v6138, %v6139
      %v6141 = vshll.u32 2131351028, %v6132
      %v6142 = vshrl.u32 2102212464, %v6133
      %v6143 = vor.u32 %v6141, %v6142
      %v6144 = vshll.u32 2102212464, %v6132
      %v6145 = vshrl.u32 920167782, %v6133
      %v6146 = vor.u32 %v6144, %v6145
      %v6147 = vshll.u32 920167782, %v6132
      %v6148 = vshrl.u32 1326507024, %v6133
      %v6149 = vor.u32 %v6147, %v6148
      %vm6150 = vcmp.lt.s32.totalorder %v6131, 1
      %vm6151 = vcmp.lt.s32.totalorder %v6131, 2
      %vm6152 = vcmp.lt.s32.totalorder %v6131, 3
      %vm6153 = vcmp.lt.s32.totalorder %v6131, 4
      %v6154 = vsel %vm6150, %v6134, %v6137
      %v6155 = vsel %vm6153, %v6143, 2102212464
      %v6156 = vsel %vm6152, %v6140, %v6155
      %v6157 = vsel %vm6151, %v6154, %v6156
      %v6158 = vsel %vm6150, %v6137, %v6140
      %v6159 = vsel %vm6153, %v6146, 920167782
      %v6160 = vsel %vm6152, %v6143, %v6159
      %v6161 = vsel %vm6151, %v6158, %v6160
      %v6162 = vsel %vm6150, %v6140, %v6143
      %v6163 = vsel %vm6153, %v6149, 1326507024
      %v6164 = vsel %vm6152, %v6146, %v6163
      %v6165 = vsel %vm6151, %v6162, %v6164
      %v6166 = vshll.u32 %v6126, 8
      %v6167 = vand.u32 %v6166, 65535
      %v6168 = vshrl.u32 %v6166, 16
      %v6169 = vand.u32 %v6165, 65535
      %v6170 = vshrl.u32 %v6165, 16
      %v6171 = vmul.u32 %v6167, %v6169
      %v6172 = vmul.u32 %v6167, %v6170
      %v6173 = vmul.u32 %v6168, %v6169
      %v6174 = vmul.u32 %v6168, %v6170
      %v6175 = vshll.u32 %v6172, 16
      %v6176 = vshrl.u32 %v6172, 16
      %v6177 = vshll.u32 %v6173, 16
      %v6178 = vshrl.u32 %v6173, 16
      %vm6179 = vc.u32 %v6171, %v6175
      %v6180 = vsel %vm6179, 1, 0
      %v6181 = vadd.s32 %v6171, %v6175
      %v6182 = vadd.s32 %v6174, %v6180
      %vm6183 = vc.u32 %v6181, %v6177
      %v6184 = vsel %vm6183, 1, 0
      %v6185 = vadd.s32 %v6181, %v6177
      %v6186 = vadd.s32 %v6182, %v6184
      %v6187 = vadd.s32 %v6186, %v6176
      %v6188 = vadd.s32 %v6187, %v6178
      %v6189 = vand.u32 %v6166, 65535
      %v6190 = vshrl.u32 %v6166, 16
      %v6191 = vand.u32 %v6161, 65535
      %v6192 = vshrl.u32 %v6161, 16
      %v6193 = vmul.u32 %v6189, %v6191
      %v6194 = vmul.u32 %v6189, %v6192
      %v6195 = vmul.u32 %v6190, %v6191
      %v6196 = vmul.u32 %v6190, %v6192
      %v6197 = vshll.u32 %v6194, 16
      %v6198 = vshrl.u32 %v6194, 16
      %v6199 = vshll.u32 %v6195, 16
      %v6200 = vshrl.u32 %v6195, 16
      %vm6201 = vc.u32 %v6193, %v6197
      %v6202 = vsel %vm6201, 1, 0
      %v6203 = vadd.s32 %v6193, %v6197
      %v6204 = vadd.s32 %v6196, %v6202
      %vm6205 = vc.u32 %v6203, %v6199
      %v6206 = vsel %vm6205, 1, 0
      %v6207 = vadd.s32 %v6203, %v6199
      %v6208 = vadd.s32 %v6204, %v6206
      %v6209 = vadd.s32 %v6208, %v6198
      %v6210 = vadd.s32 %v6209, %v6200
      %v6211 = vmul.u32 %v6166, %v6157
      %v6212 = vadd.s32 %v6188, %v6207
      %vm6213 = vc.u32 %v6188, %v6207
      %v6214 = vadd.s32 %v6210, 1
      %v6215 = vsel %vm6213, %v6214, %v6210
      %v6216 = vadd.s32 %v6211, %v6215
      %v6217 = vadd.s32 %v6216, 536870912
      %v6218 = vshrl.u32 %v6217, 30
      %v6219 = vshll.u32 %v6218, 30
      %v6220 = vsub.s32 %v6216, %v6219
      %vm6221 = vcmp.lt.s32.totalorder %v6220, 0
      %v6222 = vsub.s32 0, %v6220
      %v6223 = vsel %vm6221, %v6222, %v6220
      %v6224 = vclz %v6223
      %v6225 = vsub.s32 %v6224, 2
      %vm6226 = vcmp.gt.s32.totalorder 0, %v6225
      %v6227 = vsel %vm6226, 0, %v6225
      %v6228 = vsub.s32 32, %v6227
      %v6229 = vshll.u32 %v6220, %v6227
      %v6230 = vshrl.u32 %v6212, %v6228
      %v6231 = vor.u32 %v6229, %v6230
      %v6232 = vsub.s32 4294967266, %v6227
      %v6233 = vadd.s32 %v6232, 127
      %v6234 = vshll.u32 %v6233, 23
      %v6235 = vor.u32 4788187, %v6234
      %v6236 = vand.u32 2147483647, %v6235
      %v6238 = vcvt.s32.f32 %v6231
      %v6239 = vmul.f32 %v6238, %v6236
      %v6240 = vxor.u32 %v6239, 2147483648
      %v6241 = vsel %vm6120, %v6240, %v6239
      %v6242 = vsub.s32 4, %v6218
      %v6243 = vsel %vm6120, %v6242, %v6218
      %v6244 = vsel %vm6119, %v2913, %v6241
      %v6245 = vsel %vm6119, 0, %v6243
      %v6246 = vmul.f32 %v6244, %v6244
      %v6247 = vmul.f32 %v6246, -0.001358992
      %v6248 = vadd.f32 %v6247, 0.041655596
      %v6249 = vmul.f32 %v6246, %v6248
      %v6250 = vadd.f32 %v6249, -0.4999988
      %v6251 = vmul.f32 %v6246, %v6250
      %v6252 = vadd.f32 1.0, %v6251
      %v6253 = vmul.f32 %v6244, %v6244
      %v6254 = vmul.f32 %v6253, -0.00019511016
      %v6255 = vadd.f32 %v6254, 0.008332121
      %v6256 = vmul.f32 %v6253, %v6255
      %v6257 = vadd.f32 %v6256, -0.16666654
      %v6258 = vmul.f32 %v6253, %v6257
      %v6259 = vadd.f32 %v6258, 1.0
      %v6260 = vmul.f32 %v6259, %v6244
      %vm6261 = vweird.f32 %v2913
      %v6262 = vand.u32 %v6245, 3
      %vm6263 = vcmp.lt.s32.totalorder %v6262, 2
      %vm6264 = vcmp.eq.s32.totalorder %v6262, 0
      %v6265 = vxor.u32 %v6260, 2147483648
      %v6266 = vsel %vm6264, %v6252, %v6265
      %vm6267 = vcmp.eq.s32.totalorder %v6262, 2
      %v6268 = vxor.u32 %v6252, 2147483648
      %v6269 = vsel %vm6267, %v6268, %v6260
      %v6270 = vsel %vm6263, %v6266, %v6269
      %v6271 = vsel %vm6261, nan, %v6270
      %v6272 = vand.u32 2147483647, %v2916
      %vm6273 = vcmp.le.f32.partialorder %v6272, 0.7853982
      %vm6274 = vcmp.lt.s32.totalorder %v2916, 0
      %v6275 = vand.u32 %v2916, 2139095040
      %v6276 = vshrl.u32 %v6275, 23
      %v6277 = vsub.s32 %v6276, 127
      %v6278 = vand.u32 2147483647, %v2916
      %v6279 = vand.u32 %v6278, 8388607
      %v6280 = vor.u32 %v6279, 8388608
      %v6281 = vsub.s32 0, %v6280
      %v6282 = vadd.s32 %v6277, 1
      %vm6283 = vcmp.gt.s32.totalorder %v6282, 0
      %v6284 = vsel %vm6283, %v6282, 0
      %v6285 = vshrl.u32 %v6284, 5
      %v6286 = vand.u32 %v6284, 31
      %v6287 = vsub.s32 32, %v6286
      %v6288 = vshrl.u32 683565275, %v6287
      %v6289 = vshll.u32 683565275, %v6286
      %v6290 = vshrl.u32 2475754826, %v6287
      %v6291 = vor.u32 %v6289, %v6290
      %v6292 = vshll.u32 2475754826, %v6286
      %v6293 = vshrl.u32 2131351028, %v6287
      %v6294 = vor.u32 %v6292, %v6293
      %v6295 = vshll.u32 2131351028, %v6286
      %v6296 = vshrl.u32 2102212464, %v6287
      %v6297 = vor.u32 %v6295, %v6296
      %v6298 = vshll.u32 2102212464, %v6286
      %v6299 = vshrl.u32 920167782, %v6287
      %v6300 = vor.u32 %v6298, %v6299
      %v6301 = vshll.u32 920167782, %v6286
      %v6302 = vshrl.u32 1326507024, %v6287
      %v6303 = vor.u32 %v6301, %v6302
      %vm6304 = vcmp.lt.s32.totalorder %v6285, 1
      %vm6305 = vcmp.lt.s32.totalorder %v6285, 2
      %vm6306 = vcmp.lt.s32.totalorder %v6285, 3
      %vm6307 = vcmp.lt.s32.totalorder %v6285, 4
      %v6308 = vsel %vm6304, %v6288, %v6291
      %v6309 = vsel %vm6307, %v6297, 2102212464
      %v6310 = vsel %vm6306, %v6294, %v6309
      %v6311 = vsel %vm6305, %v6308, %v6310
      %v6312 = vsel %vm6304, %v6291, %v6294
      %v6313 = vsel %vm6307, %v6300, 920167782
      %v6314 = vsel %vm6306, %v6297, %v6313
      %v6315 = vsel %vm6305, %v6312, %v6314
      %v6316 = vsel %vm6304, %v6294, %v6297
      %v6317 = vsel %vm6307, %v6303, 1326507024
      %v6318 = vsel %vm6306, %v6300, %v6317
      %v6319 = vsel %vm6305, %v6316, %v6318
      %v6320 = vshll.u32 %v6280, 8
      %v6321 = vand.u32 %v6320, 65535
      %v6322 = vshrl.u32 %v6320, 16
      %v6323 = vand.u32 %v6319, 65535
      %v6324 = vshrl.u32 %v6319, 16
      %v6325 = vmul.u32 %v6321, %v6323
      %v6326 = vmul.u32 %v6321, %v6324
      %v6327 = vmul.u32 %v6322, %v6323
      %v6328 = vmul.u32 %v6322, %v6324
      %v6329 = vshll.u32 %v6326, 16
      %v6330 = vshrl.u32 %v6326, 16
      %v6331 = vshll.u32 %v6327, 16
      %v6332 = vshrl.u32 %v6327, 16
      %vm6333 = vc.u32 %v6325, %v6329
      %v6334 = vsel %vm6333, 1, 0
      %v6335 = vadd.s32 %v6325, %v6329
      %v6336 = vadd.s32 %v6328, %v6334
      %vm6337 = vc.u32 %v6335, %v6331
      %v6338 = vsel %vm6337, 1, 0
      %v6339 = vadd.s32 %v6335, %v6331
      %v6340 = vadd.s32 %v6336, %v6338
      %v6341 = vadd.s32 %v6340, %v6330
      %v6342 = vadd.s32 %v6341, %v6332
      %v6343 = vand.u32 %v6320, 65535
      %v6344 = vshrl.u32 %v6320, 16
      %v6345 = vand.u32 %v6315, 65535
      %v6346 = vshrl.u32 %v6315, 16
      %v6347 = vmul.u32 %v6343, %v6345
      %v6348 = vmul.u32 %v6343, %v6346
      %v6349 = vmul.u32 %v6344, %v6345
      %v6350 = vmul.u32 %v6344, %v6346
      %v6351 = vshll.u32 %v6348, 16
      %v6352 = vshrl.u32 %v6348, 16
      %v6353 = vshll.u32 %v6349, 16
      %v6354 = vshrl.u32 %v6349, 16
      %vm6355 = vc.u32 %v6347, %v6351
      %v6356 = vsel %vm6355, 1, 0
      %v6357 = vadd.s32 %v6347, %v6351
      %v6358 = vadd.s32 %v6350, %v6356
      %vm6359 = vc.u32 %v6357, %v6353
      %v6360 = vsel %vm6359, 1, 0
      %v6361 = vadd.s32 %v6357, %v6353
      %v6362 = vadd.s32 %v6358, %v6360
      %v6363 = vadd.s32 %v6362, %v6352
      %v6364 = vadd.s32 %v6363, %v6354
      %v6365 = vmul.u32 %v6320, %v6311
      %v6366 = vadd.s32 %v6342, %v6361
      %vm6367 = vc.u32 %v6342, %v6361
      %v6368 = vadd.s32 %v6364, 1
      %v6369 = vsel %vm6367, %v6368, %v6364
      %v6370 = vadd.s32 %v6365, %v6369
      %v6371 = vadd.s32 %v6370, 536870912
      %v6372 = vshrl.u32 %v6371, 30
      %v6373 = vshll.u32 %v6372, 30
      %v6374 = vsub.s32 %v6370, %v6373
      %vm6375 = vcmp.lt.s32.totalorder %v6374, 0
      %v6376 = vsub.s32 0, %v6374
      %v6377 = vsel %vm6375, %v6376, %v6374
      %v6378 = vclz %v6377
      %v6379 = vsub.s32 %v6378, 2
      %vm6380 = vcmp.gt.s32.totalorder 0, %v6379
      %v6381 = vsel %vm6380, 0, %v6379
      %v6382 = vsub.s32 32, %v6381
      %v6383 = vshll.u32 %v6374, %v6381
      %v6384 = vshrl.u32 %v6366, %v6382
      %v6385 = vor.u32 %v6383, %v6384
      %v6386 = vsub.s32 4294967266, %v6381
      %v6387 = vadd.s32 %v6386, 127
      %v6388 = vshll.u32 %v6387, 23
      %v6389 = vor.u32 4788187, %v6388
      %v6390 = vand.u32 2147483647, %v6389
      %v6392 = vcvt.s32.f32 %v6385
      %v6393 = vmul.f32 %v6392, %v6390
      %v6394 = vxor.u32 %v6393, 2147483648
      %v6395 = vsel %vm6274, %v6394, %v6393
      %v6396 = vsub.s32 4, %v6372
      %v6397 = vsel %vm6274, %v6396, %v6372
      %v6398 = vsel %vm6273, %v2916, %v6395
      %v6399 = vsel %vm6273, 0, %v6397
      %v6400 = vmul.f32 %v6398, %v6398
      %v6401 = vmul.f32 %v6400, -0.001358992
      %v6402 = vadd.f32 %v6401, 0.041655596
      %v6403 = vmul.f32 %v6400, %v6402
      %v6404 = vadd.f32 %v6403, -0.4999988
      %v6405 = vmul.f32 %v6400, %v6404
      %v6406 = vadd.f32 1.0, %v6405
      %v6407 = vmul.f32 %v6398, %v6398
      %v6408 = vmul.f32 %v6407, -0.00019511016
      %v6409 = vadd.f32 %v6408, 0.008332121
      %v6410 = vmul.f32 %v6407, %v6409
      %v6411 = vadd.f32 %v6410, -0.16666654
      %v6412 = vmul.f32 %v6407, %v6411
      %v6413 = vadd.f32 %v6412, 1.0
      %v6414 = vmul.f32 %v6413, %v6398
      %vm6415 = vweird.f32 %v2916
      %v6416 = vand.u32 %v6399, 3
      %vm6417 = vcmp.lt.s32.totalorder %v6416, 2
      %vm6418 = vcmp.eq.s32.totalorder %v6416, 0
      %v6419 = vxor.u32 %v6414, 2147483648
      %v6420 = vsel %vm6418, %v6406, %v6419
      %vm6421 = vcmp.eq.s32.totalorder %v6416, 2
      %v6422 = vxor.u32 %v6406, 2147483648
      %v6423 = vsel %vm6421, %v6422, %v6414
      %v6424 = vsel %vm6417, %v6420, %v6423
      %v6425 = vsel %vm6415, nan, %v6424
      %v6426 = vand.u32 2147483647, %v2919
      %vm6427 = vcmp.le.f32.partialorder %v6426, 0.7853982
      %vm6428 = vcmp.lt.s32.totalorder %v2919, 0
      %v6429 = vand.u32 %v2919, 2139095040
      %v6430 = vshrl.u32 %v6429, 23
      %v6431 = vsub.s32 %v6430, 127
      %v6432 = vand.u32 2147483647, %v2919
      %v6433 = vand.u32 %v6432, 8388607
      %v6434 = vor.u32 %v6433, 8388608
      %v6435 = vsub.s32 0, %v6434
      %v6436 = vadd.s32 %v6431, 1
      %vm6437 = vcmp.gt.s32.totalorder %v6436, 0
      %v6438 = vsel %vm6437, %v6436, 0
      %v6439 = vshrl.u32 %v6438, 5
      %v6440 = vand.u32 %v6438, 31
      %v6441 = vsub.s32 32, %v6440
      %v6442 = vshrl.u32 683565275, %v6441
      %v6443 = vshll.u32 683565275, %v6440
      %v6444 = vshrl.u32 2475754826, %v6441
      %v6445 = vor.u32 %v6443, %v6444
      %v6446 = vshll.u32 2475754826, %v6440
      %v6447 = vshrl.u32 2131351028, %v6441
      %v6448 = vor.u32 %v6446, %v6447
      %v6449 = vshll.u32 2131351028, %v6440
      %v6450 = vshrl.u32 2102212464, %v6441
      %v6451 = vor.u32 %v6449, %v6450
      %v6452 = vshll.u32 2102212464, %v6440
      %v6453 = vshrl.u32 920167782, %v6441
      %v6454 = vor.u32 %v6452, %v6453
      %v6455 = vshll.u32 920167782, %v6440
      %v6456 = vshrl.u32 1326507024, %v6441
      %v6457 = vor.u32 %v6455, %v6456
      %vm6458 = vcmp.lt.s32.totalorder %v6439, 1
      %vm6459 = vcmp.lt.s32.totalorder %v6439, 2
      %vm6460 = vcmp.lt.s32.totalorder %v6439, 3
      %vm6461 = vcmp.lt.s32.totalorder %v6439, 4
      %v6462 = vsel %vm6458, %v6442, %v6445
      %v6463 = vsel %vm6461, %v6451, 2102212464
      %v6464 = vsel %vm6460, %v6448, %v6463
      %v6465 = vsel %vm6459, %v6462, %v6464
      %v6466 = vsel %vm6458, %v6445, %v6448
      %v6467 = vsel %vm6461, %v6454, 920167782
      %v6468 = vsel %vm6460, %v6451, %v6467
      %v6469 = vsel %vm6459, %v6466, %v6468
      %v6470 = vsel %vm6458, %v6448, %v6451
      %v6471 = vsel %vm6461, %v6457, 1326507024
      %v6472 = vsel %vm6460, %v6454, %v6471
      %v6473 = vsel %vm6459, %v6470, %v6472
      %v6474 = vshll.u32 %v6434, 8
      %v6475 = vand.u32 %v6474, 65535
      %v6476 = vshrl.u32 %v6474, 16
      %v6477 = vand.u32 %v6473, 65535
      %v6478 = vshrl.u32 %v6473, 16
      %v6479 = vmul.u32 %v6475, %v6477
      %v6480 = vmul.u32 %v6475, %v6478
      %v6481 = vmul.u32 %v6476, %v6477
      %v6482 = vmul.u32 %v6476, %v6478
      %v6483 = vshll.u32 %v6480, 16
      %v6484 = vshrl.u32 %v6480, 16
      %v6485 = vshll.u32 %v6481, 16
      %v6486 = vshrl.u32 %v6481, 16
      %vm6487 = vc.u32 %v6479, %v6483
      %v6488 = vsel %vm6487, 1, 0
      %v6489 = vadd.s32 %v6479, %v6483
      %v6490 = vadd.s32 %v6482, %v6488
      %vm6491 = vc.u32 %v6489, %v6485
      %v6492 = vsel %vm6491, 1, 0
      %v6493 = vadd.s32 %v6489, %v6485
      %v6494 = vadd.s32 %v6490, %v6492
      %v6495 = vadd.s32 %v6494, %v6484
      %v6496 = vadd.s32 %v6495, %v6486
      %v6497 = vand.u32 %v6474, 65535
      %v6498 = vshrl.u32 %v6474, 16
      %v6499 = vand.u32 %v6469, 65535
      %v6500 = vshrl.u32 %v6469, 16
      %v6501 = vmul.u32 %v6497, %v6499
      %v6502 = vmul.u32 %v6497, %v6500
      %v6503 = vmul.u32 %v6498, %v6499
      %v6504 = vmul.u32 %v6498, %v6500
      %v6505 = vshll.u32 %v6502, 16
      %v6506 = vshrl.u32 %v6502, 16
      %v6507 = vshll.u32 %v6503, 16
      %v6508 = vshrl.u32 %v6503, 16
      %vm6509 = vc.u32 %v6501, %v6505
      %v6510 = vsel %vm6509, 1, 0
      %v6511 = vadd.s32 %v6501, %v6505
      %v6512 = vadd.s32 %v6504, %v6510
      %vm6513 = vc.u32 %v6511, %v6507
      %v6514 = vsel %vm6513, 1, 0
      %v6515 = vadd.s32 %v6511, %v6507
      %v6516 = vadd.s32 %v6512, %v6514
      %v6517 = vadd.s32 %v6516, %v6506
      %v6518 = vadd.s32 %v6517, %v6508
      %v6519 = vmul.u32 %v6474, %v6465
      %v6520 = vadd.s32 %v6496, %v6515
      %vm6521 = vc.u32 %v6496, %v6515
      %v6522 = vadd.s32 %v6518, 1
      %v6523 = vsel %vm6521, %v6522, %v6518
      %v6524 = vadd.s32 %v6519, %v6523
      %v6525 = vadd.s32 %v6524, 536870912
      %v6526 = vshrl.u32 %v6525, 30
      %v6527 = vshll.u32 %v6526, 30
      %v6528 = vsub.s32 %v6524, %v6527
      %vm6529 = vcmp.lt.s32.totalorder %v6528, 0
      %v6530 = vsub.s32 0, %v6528
      %v6531 = vsel %vm6529, %v6530, %v6528
      %v6532 = vclz %v6531
      %v6533 = vsub.s32 %v6532, 2
      %vm6534 = vcmp.gt.s32.totalorder 0, %v6533
      %v6535 = vsel %vm6534, 0, %v6533
      %v6536 = vsub.s32 32, %v6535
      %v6537 = vshll.u32 %v6528, %v6535
      %v6538 = vshrl.u32 %v6520, %v6536
      %v6539 = vor.u32 %v6537, %v6538
      %v6540 = vsub.s32 4294967266, %v6535
      %v6541 = vadd.s32 %v6540, 127
      %v6542 = vshll.u32 %v6541, 23
      %v6543 = vor.u32 4788187, %v6542
      %v6544 = vand.u32 2147483647, %v6543
      %v6546 = vcvt.s32.f32 %v6539
      %v6547 = vmul.f32 %v6546, %v6544
      %v6548 = vxor.u32 %v6547, 2147483648
      %v6549 = vsel %vm6428, %v6548, %v6547
      %v6550 = vsub.s32 4, %v6526
      %v6551 = vsel %vm6428, %v6550, %v6526
      %v6552 = vsel %vm6427, %v2919, %v6549
      %v6553 = vsel %vm6427, 0, %v6551
      %v6554 = vmul.f32 %v6552, %v6552
      %v6555 = vmul.f32 %v6554, -0.001358992
      %v6556 = vadd.f32 %v6555, 0.041655596
      %v6557 = vmul.f32 %v6554, %v6556
      %v6558 = vadd.f32 %v6557, -0.4999988
      %v6559 = vmul.f32 %v6554, %v6558
      %v6560 = vadd.f32 1.0, %v6559
      %v6561 = vmul.f32 %v6552, %v6552
      %v6562 = vmul.f32 %v6561, -0.00019511016
      %v6563 = vadd.f32 %v6562, 0.008332121
      %v6564 = vmul.f32 %v6561, %v6563
      %v6565 = vadd.f32 %v6564, -0.16666654
      %v6566 = vmul.f32 %v6561, %v6565
      %v6567 = vadd.f32 %v6566, 1.0
      %v6568 = vmul.f32 %v6567, %v6552
      %vm6569 = vweird.f32 %v2919
      %v6570 = vand.u32 %v6553, 3
      %vm6571 = vcmp.lt.s32.totalorder %v6570, 2
      %vm6572 = vcmp.eq.s32.totalorder %v6570, 0
      %v6573 = vxor.u32 %v6568, 2147483648
      %v6574 = vsel %vm6572, %v6560, %v6573
      %vm6575 = vcmp.eq.s32.totalorder %v6570, 2
      %v6576 = vxor.u32 %v6560, 2147483648
      %v6577 = vsel %vm6575, %v6576, %v6568
      %v6578 = vsel %vm6571, %v6574, %v6577
      %v6579 = vsel %vm6569, nan, %v6578
      %v6580 = vand.u32 2147483647, %v2922
      %vm6581 = vcmp.le.f32.partialorder %v6580, 0.7853982
      %vm6582 = vcmp.lt.s32.totalorder %v2922, 0
      %v6583 = vand.u32 %v2922, 2139095040
      %v6584 = vshrl.u32 %v6583, 23
      %v6585 = vsub.s32 %v6584, 127
      %v6586 = vand.u32 2147483647, %v2922
      %v6587 = vand.u32 %v6586, 8388607
      %v6588 = vor.u32 %v6587, 8388608
      %v6589 = vsub.s32 0, %v6588
      %v6590 = vadd.s32 %v6585, 1
      %vm6591 = vcmp.gt.s32.totalorder %v6590, 0
      %v6592 = vsel %vm6591, %v6590, 0
      %v6593 = vshrl.u32 %v6592, 5
      %v6594 = vand.u32 %v6592, 31
      %v6595 = vsub.s32 32, %v6594
      %v6596 = vshrl.u32 683565275, %v6595
      %v6597 = vshll.u32 683565275, %v6594
      %v6598 = vshrl.u32 2475754826, %v6595
      %v6599 = vor.u32 %v6597, %v6598
      %v6600 = vshll.u32 2475754826, %v6594
      %v6601 = vshrl.u32 2131351028, %v6595
      %v6602 = vor.u32 %v6600, %v6601
      %v6603 = vshll.u32 2131351028, %v6594
      %v6604 = vshrl.u32 2102212464, %v6595
      %v6605 = vor.u32 %v6603, %v6604
      %v6606 = vshll.u32 2102212464, %v6594
      %v6607 = vshrl.u32 920167782, %v6595
      %v6608 = vor.u32 %v6606, %v6607
      %v6609 = vshll.u32 920167782, %v6594
      %v6610 = vshrl.u32 1326507024, %v6595
      %v6611 = vor.u32 %v6609, %v6610
      %vm6612 = vcmp.lt.s32.totalorder %v6593, 1
      %vm6613 = vcmp.lt.s32.totalorder %v6593, 2
      %vm6614 = vcmp.lt.s32.totalorder %v6593, 3
      %vm6615 = vcmp.lt.s32.totalorder %v6593, 4
      %v6616 = vsel %vm6612, %v6596, %v6599
      %v6617 = vsel %vm6615, %v6605, 2102212464
      %v6618 = vsel %vm6614, %v6602, %v6617
      %v6619 = vsel %vm6613, %v6616, %v6618
      %v6620 = vsel %vm6612, %v6599, %v6602
      %v6621 = vsel %vm6615, %v6608, 920167782
      %v6622 = vsel %vm6614, %v6605, %v6621
      %v6623 = vsel %vm6613, %v6620, %v6622
      %v6624 = vsel %vm6612, %v6602, %v6605
      %v6625 = vsel %vm6615, %v6611, 1326507024
      %v6626 = vsel %vm6614, %v6608, %v6625
      %v6627 = vsel %vm6613, %v6624, %v6626
      %v6628 = vshll.u32 %v6588, 8
      %v6629 = vand.u32 %v6628, 65535
      %v6630 = vshrl.u32 %v6628, 16
      %v6631 = vand.u32 %v6627, 65535
      %v6632 = vshrl.u32 %v6627, 16
      %v6633 = vmul.u32 %v6629, %v6631
      %v6634 = vmul.u32 %v6629, %v6632
      %v6635 = vmul.u32 %v6630, %v6631
      %v6636 = vmul.u32 %v6630, %v6632
      %v6637 = vshll.u32 %v6634, 16
      %v6638 = vshrl.u32 %v6634, 16
      %v6639 = vshll.u32 %v6635, 16
      %v6640 = vshrl.u32 %v6635, 16
      %vm6641 = vc.u32 %v6633, %v6637
      %v6642 = vsel %vm6641, 1, 0
      %v6643 = vadd.s32 %v6633, %v6637
      %v6644 = vadd.s32 %v6636, %v6642
      %vm6645 = vc.u32 %v6643, %v6639
      %v6646 = vsel %vm6645, 1, 0
      %v6647 = vadd.s32 %v6643, %v6639
      %v6648 = vadd.s32 %v6644, %v6646
      %v6649 = vadd.s32 %v6648, %v6638
      %v6650 = vadd.s32 %v6649, %v6640
      %v6651 = vand.u32 %v6628, 65535
      %v6652 = vshrl.u32 %v6628, 16
      %v6653 = vand.u32 %v6623, 65535
      %v6654 = vshrl.u32 %v6623, 16
      %v6655 = vmul.u32 %v6651, %v6653
      %v6656 = vmul.u32 %v6651, %v6654
      %v6657 = vmul.u32 %v6652, %v6653
      %v6658 = vmul.u32 %v6652, %v6654
      %v6659 = vshll.u32 %v6656, 16
      %v6660 = vshrl.u32 %v6656, 16
      %v6661 = vshll.u32 %v6657, 16
      %v6662 = vshrl.u32 %v6657, 16
      %vm6663 = vc.u32 %v6655, %v6659
      %v6664 = vsel %vm6663, 1, 0
      %v6665 = vadd.s32 %v6655, %v6659
      %v6666 = vadd.s32 %v6658, %v6664
      %vm6667 = vc.u32 %v6665, %v6661
      %v6668 = vsel %vm6667, 1, 0
      %v6669 = vadd.s32 %v6665, %v6661
      %v6670 = vadd.s32 %v6666, %v6668
      %v6671 = vadd.s32 %v6670, %v6660
      %v6672 = vadd.s32 %v6671, %v6662
      %v6673 = vmul.u32 %v6628, %v6619
      %v6674 = vadd.s32 %v6650, %v6669
      %vm6675 = vc.u32 %v6650, %v6669
      %v6676 = vadd.s32 %v6672, 1
      %v6677 = vsel %vm6675, %v6676, %v6672
      %v6678 = vadd.s32 %v6673, %v6677
      %v6679 = vadd.s32 %v6678, 536870912
      %v6680 = vshrl.u32 %v6679, 30
      %v6681 = vshll.u32 %v6680, 30
      %v6682 = vsub.s32 %v6678, %v6681
      %vm6683 = vcmp.lt.s32.totalorder %v6682, 0
      %v6684 = vsub.s32 0, %v6682
      %v6685 = vsel %vm6683, %v6684, %v6682
      %v6686 = vclz %v6685
      %v6687 = vsub.s32 %v6686, 2
      %vm6688 = vcmp.gt.s32.totalorder 0, %v6687
      %v6689 = vsel %vm6688, 0, %v6687
      %v6690 = vsub.s32 32, %v6689
      %v6691 = vshll.u32 %v6682, %v6689
      %v6692 = vshrl.u32 %v6674, %v6690
      %v6693 = vor.u32 %v6691, %v6692
      %v6694 = vsub.s32 4294967266, %v6689
      %v6695 = vadd.s32 %v6694, 127
      %v6696 = vshll.u32 %v6695, 23
      %v6697 = vor.u32 4788187, %v6696
      %v6698 = vand.u32 2147483647, %v6697
      %v6700 = vcvt.s32.f32 %v6693
      %v6701 = vmul.f32 %v6700, %v6698
      %v6702 = vxor.u32 %v6701, 2147483648
      %v6703 = vsel %vm6582, %v6702, %v6701
      %v6704 = vsub.s32 4, %v6680
      %v6705 = vsel %vm6582, %v6704, %v6680
      %v6706 = vsel %vm6581, %v2922, %v6703
      %v6707 = vsel %vm6581, 0, %v6705
      %v6708 = vmul.f32 %v6706, %v6706
      %v6709 = vmul.f32 %v6708, -0.001358992
      %v6710 = vadd.f32 %v6709, 0.041655596
      %v6711 = vmul.f32 %v6708, %v6710
      %v6712 = vadd.f32 %v6711, -0.4999988
      %v6713 = vmul.f32 %v6708, %v6712
      %v6714 = vadd.f32 1.0, %v6713
      %v6715 = vmul.f32 %v6706, %v6706
      %v6716 = vmul.f32 %v6715, -0.00019511016
      %v6717 = vadd.f32 %v6716, 0.008332121
      %v6718 = vmul.f32 %v6715, %v6717
      %v6719 = vadd.f32 %v6718, -0.16666654
      %v6720 = vmul.f32 %v6715, %v6719
      %v6721 = vadd.f32 %v6720, 1.0
      %v6722 = vmul.f32 %v6721, %v6706
      %vm6723 = vweird.f32 %v2922
      %v6724 = vand.u32 %v6707, 3
      %vm6725 = vcmp.lt.s32.totalorder %v6724, 2
      %vm6726 = vcmp.eq.s32.totalorder %v6724, 0
      %v6727 = vxor.u32 %v6722, 2147483648
      %v6728 = vsel %vm6726, %v6714, %v6727
      %vm6729 = vcmp.eq.s32.totalorder %v6724, 2
      %v6730 = vxor.u32 %v6714, 2147483648
      %v6731 = vsel %vm6729, %v6730, %v6722
      %v6732 = vsel %vm6725, %v6728, %v6731
      %v6733 = vsel %vm6723, nan, %v6732
      %v6734 = vand.u32 2147483647, %v2925
      %vm6735 = vcmp.le.f32.partialorder %v6734, 0.7853982
      %vm6736 = vcmp.lt.s32.totalorder %v2925, 0
      %v6737 = vand.u32 %v2925, 2139095040
      %v6738 = vshrl.u32 %v6737, 23
      %v6739 = vsub.s32 %v6738, 127
      %v6740 = vand.u32 2147483647, %v2925
      %v6741 = vand.u32 %v6740, 8388607
      %v6742 = vor.u32 %v6741, 8388608
      %v6743 = vsub.s32 0, %v6742
      %v6744 = vadd.s32 %v6739, 1
      %vm6745 = vcmp.gt.s32.totalorder %v6744, 0
      %v6746 = vsel %vm6745, %v6744, 0
      %v6747 = vshrl.u32 %v6746, 5
      %v6748 = vand.u32 %v6746, 31
      %v6749 = vsub.s32 32, %v6748
      %v6750 = vshrl.u32 683565275, %v6749
      %v6751 = vshll.u32 683565275, %v6748
      %v6752 = vshrl.u32 2475754826, %v6749
      %v6753 = vor.u32 %v6751, %v6752
      %v6754 = vshll.u32 2475754826, %v6748
      %v6755 = vshrl.u32 2131351028, %v6749
      %v6756 = vor.u32 %v6754, %v6755
      %v6757 = vshll.u32 2131351028, %v6748
      %v6758 = vshrl.u32 2102212464, %v6749
      %v6759 = vor.u32 %v6757, %v6758
      %v6760 = vshll.u32 2102212464, %v6748
      %v6761 = vshrl.u32 920167782, %v6749
      %v6762 = vor.u32 %v6760, %v6761
      %v6763 = vshll.u32 920167782, %v6748
      %v6764 = vshrl.u32 1326507024, %v6749
      %v6765 = vor.u32 %v6763, %v6764
      %vm6766 = vcmp.lt.s32.totalorder %v6747, 1
      %vm6767 = vcmp.lt.s32.totalorder %v6747, 2
      %vm6768 = vcmp.lt.s32.totalorder %v6747, 3
      %vm6769 = vcmp.lt.s32.totalorder %v6747, 4
      %v6770 = vsel %vm6766, %v6750, %v6753
      %v6771 = vsel %vm6769, %v6759, 2102212464
      %v6772 = vsel %vm6768, %v6756, %v6771
      %v6773 = vsel %vm6767, %v6770, %v6772
      %v6774 = vsel %vm6766, %v6753, %v6756
      %v6775 = vsel %vm6769, %v6762, 920167782
      %v6776 = vsel %vm6768, %v6759, %v6775
      %v6777 = vsel %vm6767, %v6774, %v6776
      %v6778 = vsel %vm6766, %v6756, %v6759
      %v6779 = vsel %vm6769, %v6765, 1326507024
      %v6780 = vsel %vm6768, %v6762, %v6779
      %v6781 = vsel %vm6767, %v6778, %v6780
      %v6782 = vshll.u32 %v6742, 8
      %v6783 = vand.u32 %v6782, 65535
      %v6784 = vshrl.u32 %v6782, 16
      %v6785 = vand.u32 %v6781, 65535
      %v6786 = vshrl.u32 %v6781, 16
      %v6787 = vmul.u32 %v6783, %v6785
      %v6788 = vmul.u32 %v6783, %v6786
      %v6789 = vmul.u32 %v6784, %v6785
      %v6790 = vmul.u32 %v6784, %v6786
      %v6791 = vshll.u32 %v6788, 16
      %v6792 = vshrl.u32 %v6788, 16
      %v6793 = vshll.u32 %v6789, 16
      %v6794 = vshrl.u32 %v6789, 16
      %vm6795 = vc.u32 %v6787, %v6791
      %v6796 = vsel %vm6795, 1, 0
      %v6797 = vadd.s32 %v6787, %v6791
      %v6798 = vadd.s32 %v6790, %v6796
      %vm6799 = vc.u32 %v6797, %v6793
      %v6800 = vsel %vm6799, 1, 0
      %v6801 = vadd.s32 %v6797, %v6793
      %v6802 = vadd.s32 %v6798, %v6800
      %v6803 = vadd.s32 %v6802, %v6792
      %v6804 = vadd.s32 %v6803, %v6794
      %v6805 = vand.u32 %v6782, 65535
      %v6806 = vshrl.u32 %v6782, 16
      %v6807 = vand.u32 %v6777, 65535
      %v6808 = vshrl.u32 %v6777, 16
      %v6809 = vmul.u32 %v6805, %v6807
      %v6810 = vmul.u32 %v6805, %v6808
      %v6811 = vmul.u32 %v6806, %v6807
      %v6812 = vmul.u32 %v6806, %v6808
      %v6813 = vshll.u32 %v6810, 16
      %v6814 = vshrl.u32 %v6810, 16
      %v6815 = vshll.u32 %v6811, 16
      %v6816 = vshrl.u32 %v6811, 16
      %vm6817 = vc.u32 %v6809, %v6813
      %v6818 = vsel %vm6817, 1, 0
      %v6819 = vadd.s32 %v6809, %v6813
      %v6820 = vadd.s32 %v6812, %v6818
      %vm6821 = vc.u32 %v6819, %v6815
      %v6822 = vsel %vm6821, 1, 0
      %v6823 = vadd.s32 %v6819, %v6815
      %v6824 = vadd.s32 %v6820, %v6822
      %v6825 = vadd.s32 %v6824, %v6814
      %v6826 = vadd.s32 %v6825, %v6816
      %v6827 = vmul.u32 %v6782, %v6773
      %v6828 = vadd.s32 %v6804, %v6823
      %vm6829 = vc.u32 %v6804, %v6823
      %v6830 = vadd.s32 %v6826, 1
      %v6831 = vsel %vm6829, %v6830, %v6826
      %v6832 = vadd.s32 %v6827, %v6831
      %v6833 = vadd.s32 %v6832, 536870912
      %v6834 = vshrl.u32 %v6833, 30
      %v6835 = vshll.u32 %v6834, 30
      %v6836 = vsub.s32 %v6832, %v6835
      %vm6837 = vcmp.lt.s32.totalorder %v6836, 0
      %v6838 = vsub.s32 0, %v6836
      %v6839 = vsel %vm6837, %v6838, %v6836
      %v6840 = vclz %v6839
      %v6841 = vsub.s32 %v6840, 2
      %vm6842 = vcmp.gt.s32.totalorder 0, %v6841
      %v6843 = vsel %vm6842, 0, %v6841
      %v6844 = vsub.s32 32, %v6843
      %v6845 = vshll.u32 %v6836, %v6843
      %v6846 = vshrl.u32 %v6828, %v6844
      %v6847 = vor.u32 %v6845, %v6846
      %v6848 = vsub.s32 4294967266, %v6843
      %v6849 = vadd.s32 %v6848, 127
      %v6850 = vshll.u32 %v6849, 23
      %v6851 = vor.u32 4788187, %v6850
      %v6852 = vand.u32 2147483647, %v6851
      %v6854 = vcvt.s32.f32 %v6847
      %v6855 = vmul.f32 %v6854, %v6852
      %v6856 = vxor.u32 %v6855, 2147483648
      %v6857 = vsel %vm6736, %v6856, %v6855
      %v6858 = vsub.s32 4, %v6834
      %v6859 = vsel %vm6736, %v6858, %v6834
      %v6860 = vsel %vm6735, %v2925, %v6857
      %v6861 = vsel %vm6735, 0, %v6859
      %v6862 = vmul.f32 %v6860, %v6860
      %v6863 = vmul.f32 %v6862, -0.001358992
      %v6864 = vadd.f32 %v6863, 0.041655596
      %v6865 = vmul.f32 %v6862, %v6864
      %v6866 = vadd.f32 %v6865, -0.4999988
      %v6867 = vmul.f32 %v6862, %v6866
      %v6868 = vadd.f32 1.0, %v6867
      %v6869 = vmul.f32 %v6860, %v6860
      %v6870 = vmul.f32 %v6869, -0.00019511016
      %v6871 = vadd.f32 %v6870, 0.008332121
      %v6872 = vmul.f32 %v6869, %v6871
      %v6873 = vadd.f32 %v6872, -0.16666654
      %v6874 = vmul.f32 %v6869, %v6873
      %v6875 = vadd.f32 %v6874, 1.0
      %v6876 = vmul.f32 %v6875, %v6860
      %vm6877 = vweird.f32 %v2925
      %v6878 = vand.u32 %v6861, 3
      %vm6879 = vcmp.lt.s32.totalorder %v6878, 2
      %vm6880 = vcmp.eq.s32.totalorder %v6878, 0
      %v6881 = vxor.u32 %v6876, 2147483648
      %v6882 = vsel %vm6880, %v6868, %v6881
      %vm6883 = vcmp.eq.s32.totalorder %v6878, 2
      %v6884 = vxor.u32 %v6868, 2147483648
      %v6885 = vsel %vm6883, %v6884, %v6876
      %v6886 = vsel %vm6879, %v6882, %v6885
      %v6887 = vsel %vm6877, nan, %v6886
      %v6888 = vand.u32 2147483647, %v2928
      %vm6889 = vcmp.le.f32.partialorder %v6888, 0.7853982
      %vm6890 = vcmp.lt.s32.totalorder %v2928, 0
      %v6891 = vand.u32 %v2928, 2139095040
      %v6892 = vshrl.u32 %v6891, 23
      %v6893 = vsub.s32 %v6892, 127
      %v6894 = vand.u32 2147483647, %v2928
      %v6895 = vand.u32 %v6894, 8388607
      %v6896 = vor.u32 %v6895, 8388608
      %v6897 = vsub.s32 0, %v6896
      %v6898 = vadd.s32 %v6893, 1
      %vm6899 = vcmp.gt.s32.totalorder %v6898, 0
      %v6900 = vsel %vm6899, %v6898, 0
      %v6901 = vshrl.u32 %v6900, 5
      %v6902 = vand.u32 %v6900, 31
      %v6903 = vsub.s32 32, %v6902
      %v6904 = vshrl.u32 683565275, %v6903
      %v6905 = vshll.u32 683565275, %v6902
      %v6906 = vshrl.u32 2475754826, %v6903
      %v6907 = vor.u32 %v6905, %v6906
      %v6908 = vshll.u32 2475754826, %v6902
      %v6909 = vshrl.u32 2131351028, %v6903
      %v6910 = vor.u32 %v6908, %v6909
      %v6911 = vshll.u32 2131351028, %v6902
      %v6912 = vshrl.u32 2102212464, %v6903
      %v6913 = vor.u32 %v6911, %v6912
      %v6914 = vshll.u32 2102212464, %v6902
      %v6915 = vshrl.u32 920167782, %v6903
      %v6916 = vor.u32 %v6914, %v6915
      %v6917 = vshll.u32 920167782, %v6902
      %v6918 = vshrl.u32 1326507024, %v6903
      %v6919 = vor.u32 %v6917, %v6918
      %vm6920 = vcmp.lt.s32.totalorder %v6901, 1
      %vm6921 = vcmp.lt.s32.totalorder %v6901, 2
      %vm6922 = vcmp.lt.s32.totalorder %v6901, 3
      %vm6923 = vcmp.lt.s32.totalorder %v6901, 4
      %v6924 = vsel %vm6920, %v6904, %v6907
      %v6925 = vsel %vm6923, %v6913, 2102212464
      %v6926 = vsel %vm6922, %v6910, %v6925
      %v6927 = vsel %vm6921, %v6924, %v6926
      %v6928 = vsel %vm6920, %v6907, %v6910
      %v6929 = vsel %vm6923, %v6916, 920167782
      %v6930 = vsel %vm6922, %v6913, %v6929
      %v6931 = vsel %vm6921, %v6928, %v6930
      %v6932 = vsel %vm6920, %v6910, %v6913
      %v6933 = vsel %vm6923, %v6919, 1326507024
      %v6934 = vsel %vm6922, %v6916, %v6933
      %v6935 = vsel %vm6921, %v6932, %v6934
      %v6936 = vshll.u32 %v6896, 8
      %v6937 = vand.u32 %v6936, 65535
      %v6938 = vshrl.u32 %v6936, 16
      %v6939 = vand.u32 %v6935, 65535
      %v6940 = vshrl.u32 %v6935, 16
      %v6941 = vmul.u32 %v6937, %v6939
      %v6942 = vmul.u32 %v6937, %v6940
      %v6943 = vmul.u32 %v6938, %v6939
      %v6944 = vmul.u32 %v6938, %v6940
      %v6945 = vshll.u32 %v6942, 16
      %v6946 = vshrl.u32 %v6942, 16
      %v6947 = vshll.u32 %v6943, 16
      %v6948 = vshrl.u32 %v6943, 16
      %vm6949 = vc.u32 %v6941, %v6945
      %v6950 = vsel %vm6949, 1, 0
      %v6951 = vadd.s32 %v6941, %v6945
      %v6952 = vadd.s32 %v6944, %v6950
      %vm6953 = vc.u32 %v6951, %v6947
      %v6954 = vsel %vm6953, 1, 0
      %v6955 = vadd.s32 %v6951, %v6947
      %v6956 = vadd.s32 %v6952, %v6954
      %v6957 = vadd.s32 %v6956, %v6946
      %v6958 = vadd.s32 %v6957, %v6948
      %v6959 = vand.u32 %v6936, 65535
      %v6960 = vshrl.u32 %v6936, 16
      %v6961 = vand.u32 %v6931, 65535
      %v6962 = vshrl.u32 %v6931, 16
      %v6963 = vmul.u32 %v6959, %v6961
      %v6964 = vmul.u32 %v6959, %v6962
      %v6965 = vmul.u32 %v6960, %v6961
      %v6966 = vmul.u32 %v6960, %v6962
      %v6967 = vshll.u32 %v6964, 16
      %v6968 = vshrl.u32 %v6964, 16
      %v6969 = vshll.u32 %v6965, 16
      %v6970 = vshrl.u32 %v6965, 16
      %vm6971 = vc.u32 %v6963, %v6967
      %v6972 = vsel %vm6971, 1, 0
      %v6973 = vadd.s32 %v6963, %v6967
      %v6974 = vadd.s32 %v6966, %v6972
      %vm6975 = vc.u32 %v6973, %v6969
      %v6976 = vsel %vm6975, 1, 0
      %v6977 = vadd.s32 %v6973, %v6969
      %v6978 = vadd.s32 %v6974, %v6976
      %v6979 = vadd.s32 %v6978, %v6968
      %v6980 = vadd.s32 %v6979, %v6970
      %v6981 = vmul.u32 %v6936, %v6927
      %v6982 = vadd.s32 %v6958, %v6977
      %vm6983 = vc.u32 %v6958, %v6977
      %v6984 = vadd.s32 %v6980, 1
      %v6985 = vsel %vm6983, %v6984, %v6980
      %v6986 = vadd.s32 %v6981, %v6985
      %v6987 = vadd.s32 %v6986, 536870912
      %v6988 = vshrl.u32 %v6987, 30
      %v6989 = vshll.u32 %v6988, 30
      %v6990 = vsub.s32 %v6986, %v6989
      %vm6991 = vcmp.lt.s32.totalorder %v6990, 0
      %v6992 = vsub.s32 0, %v6990
      %v6993 = vsel %vm6991, %v6992, %v6990
      %v6994 = vclz %v6993
      %v6995 = vsub.s32 %v6994, 2
      %vm6996 = vcmp.gt.s32.totalorder 0, %v6995
      %v6997 = vsel %vm6996, 0, %v6995
      %v6998 = vsub.s32 32, %v6997
      %v6999 = vshll.u32 %v6990, %v6997
      %v7000 = vshrl.u32 %v6982, %v6998
      %v7001 = vor.u32 %v6999, %v7000
      %v7002 = vsub.s32 4294967266, %v6997
      %v7003 = vadd.s32 %v7002, 127
      %v7004 = vshll.u32 %v7003, 23
      %v7005 = vor.u32 4788187, %v7004
      %v7006 = vand.u32 2147483647, %v7005
      %v7008 = vcvt.s32.f32 %v7001
      %v7009 = vmul.f32 %v7008, %v7006
      %v7010 = vxor.u32 %v7009, 2147483648
      %v7011 = vsel %vm6890, %v7010, %v7009
      %v7012 = vsub.s32 4, %v6988
      %v7013 = vsel %vm6890, %v7012, %v6988
      %v7014 = vsel %vm6889, %v2928, %v7011
      %v7015 = vsel %vm6889, 0, %v7013
      %v7016 = vmul.f32 %v7014, %v7014
      %v7017 = vmul.f32 %v7016, -0.001358992
      %v7018 = vadd.f32 %v7017, 0.041655596
      %v7019 = vmul.f32 %v7016, %v7018
      %v7020 = vadd.f32 %v7019, -0.4999988
      %v7021 = vmul.f32 %v7016, %v7020
      %v7022 = vadd.f32 1.0, %v7021
      %v7023 = vmul.f32 %v7014, %v7014
      %v7024 = vmul.f32 %v7023, -0.00019511016
      %v7025 = vadd.f32 %v7024, 0.008332121
      %v7026 = vmul.f32 %v7023, %v7025
      %v7027 = vadd.f32 %v7026, -0.16666654
      %v7028 = vmul.f32 %v7023, %v7027
      %v7029 = vadd.f32 %v7028, 1.0
      %v7030 = vmul.f32 %v7029, %v7014
      %vm7031 = vweird.f32 %v2928
      %v7032 = vand.u32 %v7015, 3
      %vm7033 = vcmp.lt.s32.totalorder %v7032, 2
      %vm7034 = vcmp.eq.s32.totalorder %v7032, 0
      %v7035 = vxor.u32 %v7030, 2147483648
      %v7036 = vsel %vm7034, %v7022, %v7035
      %vm7037 = vcmp.eq.s32.totalorder %v7032, 2
      %v7038 = vxor.u32 %v7022, 2147483648
      %v7039 = vsel %vm7037, %v7038, %v7030
      %v7040 = vsel %vm7033, %v7036, %v7039
      %v7041 = vsel %vm7031, nan, %v7040
      %v7042 = vand.u32 2147483647, %v2931
      %vm7043 = vcmp.le.f32.partialorder %v7042, 0.7853982
      %vm7044 = vcmp.lt.s32.totalorder %v2931, 0
      %v7045 = vand.u32 %v2931, 2139095040
      %v7046 = vshrl.u32 %v7045, 23
      %v7047 = vsub.s32 %v7046, 127
      %v7048 = vand.u32 2147483647, %v2931
      %v7049 = vand.u32 %v7048, 8388607
      %v7050 = vor.u32 %v7049, 8388608
      %v7051 = vsub.s32 0, %v7050
      %v7052 = vadd.s32 %v7047, 1
      %vm7053 = vcmp.gt.s32.totalorder %v7052, 0
      %v7054 = vsel %vm7053, %v7052, 0
      %v7055 = vshrl.u32 %v7054, 5
      %v7056 = vand.u32 %v7054, 31
      %v7057 = vsub.s32 32, %v7056
      %v7058 = vshrl.u32 683565275, %v7057
      %v7059 = vshll.u32 683565275, %v7056
      %v7060 = vshrl.u32 2475754826, %v7057
      %v7061 = vor.u32 %v7059, %v7060
      %v7062 = vshll.u32 2475754826, %v7056
      %v7063 = vshrl.u32 2131351028, %v7057
      %v7064 = vor.u32 %v7062, %v7063
      %v7065 = vshll.u32 2131351028, %v7056
      %v7066 = vshrl.u32 2102212464, %v7057
      %v7067 = vor.u32 %v7065, %v7066
      %v7068 = vshll.u32 2102212464, %v7056
      %v7069 = vshrl.u32 920167782, %v7057
      %v7070 = vor.u32 %v7068, %v7069
      %v7071 = vshll.u32 920167782, %v7056
      %v7072 = vshrl.u32 1326507024, %v7057
      %v7073 = vor.u32 %v7071, %v7072
      %vm7074 = vcmp.lt.s32.totalorder %v7055, 1
      %vm7075 = vcmp.lt.s32.totalorder %v7055, 2
      %vm7076 = vcmp.lt.s32.totalorder %v7055, 3
      %vm7077 = vcmp.lt.s32.totalorder %v7055, 4
      %v7078 = vsel %vm7074, %v7058, %v7061
      %v7079 = vsel %vm7077, %v7067, 2102212464
      %v7080 = vsel %vm7076, %v7064, %v7079
      %v7081 = vsel %vm7075, %v7078, %v7080
      %v7082 = vsel %vm7074, %v7061, %v7064
      %v7083 = vsel %vm7077, %v7070, 920167782
      %v7084 = vsel %vm7076, %v7067, %v7083
      %v7085 = vsel %vm7075, %v7082, %v7084
      %v7086 = vsel %vm7074, %v7064, %v7067
      %v7087 = vsel %vm7077, %v7073, 1326507024
      %v7088 = vsel %vm7076, %v7070, %v7087
      %v7089 = vsel %vm7075, %v7086, %v7088
      %v7090 = vshll.u32 %v7050, 8
      %v7091 = vand.u32 %v7090, 65535
      %v7092 = vshrl.u32 %v7090, 16
      %v7093 = vand.u32 %v7089, 65535
      %v7094 = vshrl.u32 %v7089, 16
      %v7095 = vmul.u32 %v7091, %v7093
      %v7096 = vmul.u32 %v7091, %v7094
      %v7097 = vmul.u32 %v7092, %v7093
      %v7098 = vmul.u32 %v7092, %v7094
      %v7099 = vshll.u32 %v7096, 16
      %v7100 = vshrl.u32 %v7096, 16
      %v7101 = vshll.u32 %v7097, 16
      %v7102 = vshrl.u32 %v7097, 16
      %vm7103 = vc.u32 %v7095, %v7099
      %v7104 = vsel %vm7103, 1, 0
      %v7105 = vadd.s32 %v7095, %v7099
      %v7106 = vadd.s32 %v7098, %v7104
      %vm7107 = vc.u32 %v7105, %v7101
      %v7108 = vsel %vm7107, 1, 0
      %v7109 = vadd.s32 %v7105, %v7101
      %v7110 = vadd.s32 %v7106, %v7108
      %v7111 = vadd.s32 %v7110, %v7100
      %v7112 = vadd.s32 %v7111, %v7102
      %v7113 = vand.u32 %v7090, 65535
      %v7114 = vshrl.u32 %v7090, 16
      %v7115 = vand.u32 %v7085, 65535
      %v7116 = vshrl.u32 %v7085, 16
      %v7117 = vmul.u32 %v7113, %v7115
      %v7118 = vmul.u32 %v7113, %v7116
      %v7119 = vmul.u32 %v7114, %v7115
      %v7120 = vmul.u32 %v7114, %v7116
      %v7121 = vshll.u32 %v7118, 16
      %v7122 = vshrl.u32 %v7118, 16
      %v7123 = vshll.u32 %v7119, 16
      %v7124 = vshrl.u32 %v7119, 16
      %vm7125 = vc.u32 %v7117, %v7121
      %v7126 = vsel %vm7125, 1, 0
      %v7127 = vadd.s32 %v7117, %v7121
      %v7128 = vadd.s32 %v7120, %v7126
      %vm7129 = vc.u32 %v7127, %v7123
      %v7130 = vsel %vm7129, 1, 0
      %v7131 = vadd.s32 %v7127, %v7123
      %v7132 = vadd.s32 %v7128, %v7130
      %v7133 = vadd.s32 %v7132, %v7122
      %v7134 = vadd.s32 %v7133, %v7124
      %v7135 = vmul.u32 %v7090, %v7081
      %v7136 = vadd.s32 %v7112, %v7131
      %vm7137 = vc.u32 %v7112, %v7131
      %v7138 = vadd.s32 %v7134, 1
      %v7139 = vsel %vm7137, %v7138, %v7134
      %v7140 = vadd.s32 %v7135, %v7139
      %v7141 = vadd.s32 %v7140, 536870912
      %v7142 = vshrl.u32 %v7141, 30
      %v7143 = vshll.u32 %v7142, 30
      %v7144 = vsub.s32 %v7140, %v7143
      %vm7145 = vcmp.lt.s32.totalorder %v7144, 0
      %v7146 = vsub.s32 0, %v7144
      %v7147 = vsel %vm7145, %v7146, %v7144
      %v7148 = vclz %v7147
      %v7149 = vsub.s32 %v7148, 2
      %vm7150 = vcmp.gt.s32.totalorder 0, %v7149
      %v7151 = vsel %vm7150, 0, %v7149
      %v7152 = vsub.s32 32, %v7151
      %v7153 = vshll.u32 %v7144, %v7151
      %v7154 = vshrl.u32 %v7136, %v7152
      %v7155 = vor.u32 %v7153, %v7154
      %v7156 = vsub.s32 4294967266, %v7151
      %v7157 = vadd.s32 %v7156, 127
      %v7158 = vshll.u32 %v7157, 23
      %v7159 = vor.u32 4788187, %v7158
      %v7160 = vand.u32 2147483647, %v7159
      %v7162 = vcvt.s32.f32 %v7155
      %v7163 = vmul.f32 %v7162, %v7160
      %v7164 = vxor.u32 %v7163, 2147483648
      %v7165 = vsel %vm7044, %v7164, %v7163
      %v7166 = vsub.s32 4, %v7142
      %v7167 = vsel %vm7044, %v7166, %v7142
      %v7168 = vsel %vm7043, %v2931, %v7165
      %v7169 = vsel %vm7043, 0, %v7167
      %v7170 = vmul.f32 %v7168, %v7168
      %v7171 = vmul.f32 %v7170, -0.001358992
      %v7172 = vadd.f32 %v7171, 0.041655596
      %v7173 = vmul.f32 %v7170, %v7172
      %v7174 = vadd.f32 %v7173, -0.4999988
      %v7175 = vmul.f32 %v7170, %v7174
      %v7176 = vadd.f32 1.0, %v7175
      %v7177 = vmul.f32 %v7168, %v7168
      %v7178 = vmul.f32 %v7177, -0.00019511016
      %v7179 = vadd.f32 %v7178, 0.008332121
      %v7180 = vmul.f32 %v7177, %v7179
      %v7181 = vadd.f32 %v7180, -0.16666654
      %v7182 = vmul.f32 %v7177, %v7181
      %v7183 = vadd.f32 %v7182, 1.0
      %v7184 = vmul.f32 %v7183, %v7168
      %vm7185 = vweird.f32 %v2931
      %v7186 = vand.u32 %v7169, 3
      %vm7187 = vcmp.lt.s32.totalorder %v7186, 2
      %vm7188 = vcmp.eq.s32.totalorder %v7186, 0
      %v7189 = vxor.u32 %v7184, 2147483648
      %v7190 = vsel %vm7188, %v7176, %v7189
      %vm7191 = vcmp.eq.s32.totalorder %v7186, 2
      %v7192 = vxor.u32 %v7176, 2147483648
      %v7193 = vsel %vm7191, %v7192, %v7184
      %v7194 = vsel %vm7187, %v7190, %v7193
      %v7195 = vsel %vm7185, nan, %v7194
      %v7196 = vand.u32 2147483647, %v2934
      %vm7197 = vcmp.le.f32.partialorder %v7196, 0.7853982
      %vm7198 = vcmp.lt.s32.totalorder %v2934, 0
      %v7199 = vand.u32 %v2934, 2139095040
      %v7200 = vshrl.u32 %v7199, 23
      %v7201 = vsub.s32 %v7200, 127
      %v7202 = vand.u32 2147483647, %v2934
      %v7203 = vand.u32 %v7202, 8388607
      %v7204 = vor.u32 %v7203, 8388608
      %v7205 = vsub.s32 0, %v7204
      %v7206 = vadd.s32 %v7201, 1
      %vm7207 = vcmp.gt.s32.totalorder %v7206, 0
      %v7208 = vsel %vm7207, %v7206, 0
      %v7209 = vshrl.u32 %v7208, 5
      %v7210 = vand.u32 %v7208, 31
      %v7211 = vsub.s32 32, %v7210
      %v7212 = vshrl.u32 683565275, %v7211
      %v7213 = vshll.u32 683565275, %v7210
      %v7214 = vshrl.u32 2475754826, %v7211
      %v7215 = vor.u32 %v7213, %v7214
      %v7216 = vshll.u32 2475754826, %v7210
      %v7217 = vshrl.u32 2131351028, %v7211
      %v7218 = vor.u32 %v7216, %v7217
      %v7219 = vshll.u32 2131351028, %v7210
      %v7220 = vshrl.u32 2102212464, %v7211
      %v7221 = vor.u32 %v7219, %v7220
      %v7222 = vshll.u32 2102212464, %v7210
      %v7223 = vshrl.u32 920167782, %v7211
      %v7224 = vor.u32 %v7222, %v7223
      %v7225 = vshll.u32 920167782, %v7210
      %v7226 = vshrl.u32 1326507024, %v7211
      %v7227 = vor.u32 %v7225, %v7226
      %vm7228 = vcmp.lt.s32.totalorder %v7209, 1
      %vm7229 = vcmp.lt.s32.totalorder %v7209, 2
      %vm7230 = vcmp.lt.s32.totalorder %v7209, 3
      %vm7231 = vcmp.lt.s32.totalorder %v7209, 4
      %v7232 = vsel %vm7228, %v7212, %v7215
      %v7233 = vsel %vm7231, %v7221, 2102212464
      %v7234 = vsel %vm7230, %v7218, %v7233
      %v7235 = vsel %vm7229, %v7232, %v7234
      %v7236 = vsel %vm7228, %v7215, %v7218
      %v7237 = vsel %vm7231, %v7224, 920167782
      %v7238 = vsel %vm7230, %v7221, %v7237
      %v7239 = vsel %vm7229, %v7236, %v7238
      %v7240 = vsel %vm7228, %v7218, %v7221
      %v7241 = vsel %vm7231, %v7227, 1326507024
      %v7242 = vsel %vm7230, %v7224, %v7241
      %v7243 = vsel %vm7229, %v7240, %v7242
      %v7244 = vshll.u32 %v7204, 8
      %v7245 = vand.u32 %v7244, 65535
      %v7246 = vshrl.u32 %v7244, 16
      %v7247 = vand.u32 %v7243, 65535
      %v7248 = vshrl.u32 %v7243, 16
      %v7249 = vmul.u32 %v7245, %v7247
      %v7250 = vmul.u32 %v7245, %v7248
      %v7251 = vmul.u32 %v7246, %v7247
      %v7252 = vmul.u32 %v7246, %v7248
      %v7253 = vshll.u32 %v7250, 16
      %v7254 = vshrl.u32 %v7250, 16
      %v7255 = vshll.u32 %v7251, 16
      %v7256 = vshrl.u32 %v7251, 16
      %vm7257 = vc.u32 %v7249, %v7253
      %v7258 = vsel %vm7257, 1, 0
      %v7259 = vadd.s32 %v7249, %v7253
      %v7260 = vadd.s32 %v7252, %v7258
      %vm7261 = vc.u32 %v7259, %v7255
      %v7262 = vsel %vm7261, 1, 0
      %v7263 = vadd.s32 %v7259, %v7255
      %v7264 = vadd.s32 %v7260, %v7262
      %v7265 = vadd.s32 %v7264, %v7254
      %v7266 = vadd.s32 %v7265, %v7256
      %v7267 = vand.u32 %v7244, 65535
      %v7268 = vshrl.u32 %v7244, 16
      %v7269 = vand.u32 %v7239, 65535
      %v7270 = vshrl.u32 %v7239, 16
      %v7271 = vmul.u32 %v7267, %v7269
      %v7272 = vmul.u32 %v7267, %v7270
      %v7273 = vmul.u32 %v7268, %v7269
      %v7274 = vmul.u32 %v7268, %v7270
      %v7275 = vshll.u32 %v7272, 16
      %v7276 = vshrl.u32 %v7272, 16
      %v7277 = vshll.u32 %v7273, 16
      %v7278 = vshrl.u32 %v7273, 16
      %vm7279 = vc.u32 %v7271, %v7275
      %v7280 = vsel %vm7279, 1, 0
      %v7281 = vadd.s32 %v7271, %v7275
      %v7282 = vadd.s32 %v7274, %v7280
      %vm7283 = vc.u32 %v7281, %v7277
      %v7284 = vsel %vm7283, 1, 0
      %v7285 = vadd.s32 %v7281, %v7277
      %v7286 = vadd.s32 %v7282, %v7284
      %v7287 = vadd.s32 %v7286, %v7276
      %v7288 = vadd.s32 %v7287, %v7278
      %v7289 = vmul.u32 %v7244, %v7235
      %v7290 = vadd.s32 %v7266, %v7285
      %vm7291 = vc.u32 %v7266, %v7285
      %v7292 = vadd.s32 %v7288, 1
      %v7293 = vsel %vm7291, %v7292, %v7288
      %v7294 = vadd.s32 %v7289, %v7293
      %v7295 = vadd.s32 %v7294, 536870912
      %v7296 = vshrl.u32 %v7295, 30
      %v7297 = vshll.u32 %v7296, 30
      %v7298 = vsub.s32 %v7294, %v7297
      %vm7299 = vcmp.lt.s32.totalorder %v7298, 0
      %v7300 = vsub.s32 0, %v7298
      %v7301 = vsel %vm7299, %v7300, %v7298
      %v7302 = vclz %v7301
      %v7303 = vsub.s32 %v7302, 2
      %vm7304 = vcmp.gt.s32.totalorder 0, %v7303
      %v7305 = vsel %vm7304, 0, %v7303
      %v7306 = vsub.s32 32, %v7305
      %v7307 = vshll.u32 %v7298, %v7305
      %v7308 = vshrl.u32 %v7290, %v7306
      %v7309 = vor.u32 %v7307, %v7308
      %v7310 = vsub.s32 4294967266, %v7305
      %v7311 = vadd.s32 %v7310, 127
      %v7312 = vshll.u32 %v7311, 23
      %v7313 = vor.u32 4788187, %v7312
      %v7314 = vand.u32 2147483647, %v7313
      %v7316 = vcvt.s32.f32 %v7309
      %v7317 = vmul.f32 %v7316, %v7314
      %v7318 = vxor.u32 %v7317, 2147483648
      %v7319 = vsel %vm7198, %v7318, %v7317
      %v7320 = vsub.s32 4, %v7296
      %v7321 = vsel %vm7198, %v7320, %v7296
      %v7322 = vsel %vm7197, %v2934, %v7319
      %v7323 = vsel %vm7197, 0, %v7321
      %v7324 = vmul.f32 %v7322, %v7322
      %v7325 = vmul.f32 %v7324, -0.001358992
      %v7326 = vadd.f32 %v7325, 0.041655596
      %v7327 = vmul.f32 %v7324, %v7326
      %v7328 = vadd.f32 %v7327, -0.4999988
      %v7329 = vmul.f32 %v7324, %v7328
      %v7330 = vadd.f32 1.0, %v7329
      %v7331 = vmul.f32 %v7322, %v7322
      %v7332 = vmul.f32 %v7331, -0.00019511016
      %v7333 = vadd.f32 %v7332, 0.008332121
      %v7334 = vmul.f32 %v7331, %v7333
      %v7335 = vadd.f32 %v7334, -0.16666654
      %v7336 = vmul.f32 %v7331, %v7335
      %v7337 = vadd.f32 %v7336, 1.0
      %v7338 = vmul.f32 %v7337, %v7322
      %vm7339 = vweird.f32 %v2934
      %v7340 = vand.u32 %v7323, 3
      %vm7341 = vcmp.lt.s32.totalorder %v7340, 2
      %vm7342 = vcmp.eq.s32.totalorder %v7340, 0
      %v7343 = vxor.u32 %v7338, 2147483648
      %v7344 = vsel %vm7342, %v7330, %v7343
      %vm7345 = vcmp.eq.s32.totalorder %v7340, 2
      %v7346 = vxor.u32 %v7330, 2147483648
      %v7347 = vsel %vm7345, %v7346, %v7338
      %v7348 = vsel %vm7341, %v7344, %v7347
      %v7349 = vsel %vm7339, nan, %v7348
      %v7350 = vand.u32 2147483647, %v2937
      %vm7351 = vcmp.le.f32.partialorder %v7350, 0.7853982
      %vm7352 = vcmp.lt.s32.totalorder %v2937, 0
      %v7353 = vand.u32 %v2937, 2139095040
      %v7354 = vshrl.u32 %v7353, 23
      %v7355 = vsub.s32 %v7354, 127
      %v7356 = vand.u32 2147483647, %v2937
      %v7357 = vand.u32 %v7356, 8388607
      %v7358 = vor.u32 %v7357, 8388608
      %v7359 = vsub.s32 0, %v7358
      %v7360 = vadd.s32 %v7355, 1
      %vm7361 = vcmp.gt.s32.totalorder %v7360, 0
      %v7362 = vsel %vm7361, %v7360, 0
      %v7363 = vshrl.u32 %v7362, 5
      %v7364 = vand.u32 %v7362, 31
      %v7365 = vsub.s32 32, %v7364
      %v7366 = vshrl.u32 683565275, %v7365
      %v7367 = vshll.u32 683565275, %v7364
      %v7368 = vshrl.u32 2475754826, %v7365
      %v7369 = vor.u32 %v7367, %v7368
      %v7370 = vshll.u32 2475754826, %v7364
      %v7371 = vshrl.u32 2131351028, %v7365
      %v7372 = vor.u32 %v7370, %v7371
      %v7373 = vshll.u32 2131351028, %v7364
      %v7374 = vshrl.u32 2102212464, %v7365
      %v7375 = vor.u32 %v7373, %v7374
      %v7376 = vshll.u32 2102212464, %v7364
      %v7377 = vshrl.u32 920167782, %v7365
      %v7378 = vor.u32 %v7376, %v7377
      %v7379 = vshll.u32 920167782, %v7364
      %v7380 = vshrl.u32 1326507024, %v7365
      %v7381 = vor.u32 %v7379, %v7380
      %vm7382 = vcmp.lt.s32.totalorder %v7363, 1
      %vm7383 = vcmp.lt.s32.totalorder %v7363, 2
      %vm7384 = vcmp.lt.s32.totalorder %v7363, 3
      %vm7385 = vcmp.lt.s32.totalorder %v7363, 4
      %v7386 = vsel %vm7382, %v7366, %v7369
      %v7387 = vsel %vm7385, %v7375, 2102212464
      %v7388 = vsel %vm7384, %v7372, %v7387
      %v7389 = vsel %vm7383, %v7386, %v7388
      %v7390 = vsel %vm7382, %v7369, %v7372
      %v7391 = vsel %vm7385, %v7378, 920167782
      %v7392 = vsel %vm7384, %v7375, %v7391
      %v7393 = vsel %vm7383, %v7390, %v7392
      %v7394 = vsel %vm7382, %v7372, %v7375
      %v7395 = vsel %vm7385, %v7381, 1326507024
      %v7396 = vsel %vm7384, %v7378, %v7395
      %v7397 = vsel %vm7383, %v7394, %v7396
      %v7398 = vshll.u32 %v7358, 8
      %v7399 = vand.u32 %v7398, 65535
      %v7400 = vshrl.u32 %v7398, 16
      %v7401 = vand.u32 %v7397, 65535
      %v7402 = vshrl.u32 %v7397, 16
      %v7403 = vmul.u32 %v7399, %v7401
      %v7404 = vmul.u32 %v7399, %v7402
      %v7405 = vmul.u32 %v7400, %v7401
      %v7406 = vmul.u32 %v7400, %v7402
      %v7407 = vshll.u32 %v7404, 16
      %v7408 = vshrl.u32 %v7404, 16
      %v7409 = vshll.u32 %v7405, 16
      %v7410 = vshrl.u32 %v7405, 16
      %vm7411 = vc.u32 %v7403, %v7407
      %v7412 = vsel %vm7411, 1, 0
      %v7413 = vadd.s32 %v7403, %v7407
      %v7414 = vadd.s32 %v7406, %v7412
      %vm7415 = vc.u32 %v7413, %v7409
      %v7416 = vsel %vm7415, 1, 0
      %v7417 = vadd.s32 %v7413, %v7409
      %v7418 = vadd.s32 %v7414, %v7416
      %v7419 = vadd.s32 %v7418, %v7408
      %v7420 = vadd.s32 %v7419, %v7410
      %v7421 = vand.u32 %v7398, 65535
      %v7422 = vshrl.u32 %v7398, 16
      %v7423 = vand.u32 %v7393, 65535
      %v7424 = vshrl.u32 %v7393, 16
      %v7425 = vmul.u32 %v7421, %v7423
      %v7426 = vmul.u32 %v7421, %v7424
      %v7427 = vmul.u32 %v7422, %v7423
      %v7428 = vmul.u32 %v7422, %v7424
      %v7429 = vshll.u32 %v7426, 16
      %v7430 = vshrl.u32 %v7426, 16
      %v7431 = vshll.u32 %v7427, 16
      %v7432 = vshrl.u32 %v7427, 16
      %vm7433 = vc.u32 %v7425, %v7429
      %v7434 = vsel %vm7433, 1, 0
      %v7435 = vadd.s32 %v7425, %v7429
      %v7436 = vadd.s32 %v7428, %v7434
      %vm7437 = vc.u32 %v7435, %v7431
      %v7438 = vsel %vm7437, 1, 0
      %v7439 = vadd.s32 %v7435, %v7431
      %v7440 = vadd.s32 %v7436, %v7438
      %v7441 = vadd.s32 %v7440, %v7430
      %v7442 = vadd.s32 %v7441, %v7432
      %v7443 = vmul.u32 %v7398, %v7389
      %v7444 = vadd.s32 %v7420, %v7439
      %vm7445 = vc.u32 %v7420, %v7439
      %v7446 = vadd.s32 %v7442, 1
      %v7447 = vsel %vm7445, %v7446, %v7442
      %v7448 = vadd.s32 %v7443, %v7447
      %v7449 = vadd.s32 %v7448, 536870912
      %v7450 = vshrl.u32 %v7449, 30
      %v7451 = vshll.u32 %v7450, 30
      %v7452 = vsub.s32 %v7448, %v7451
      %vm7453 = vcmp.lt.s32.totalorder %v7452, 0
      %v7454 = vsub.s32 0, %v7452
      %v7455 = vsel %vm7453, %v7454, %v7452
      %v7456 = vclz %v7455
      %v7457 = vsub.s32 %v7456, 2
      %vm7458 = vcmp.gt.s32.totalorder 0, %v7457
      %v7459 = vsel %vm7458, 0, %v7457
      %v7460 = vsub.s32 32, %v7459
      %v7461 = vshll.u32 %v7452, %v7459
      %v7462 = vshrl.u32 %v7444, %v7460
      %v7463 = vor.u32 %v7461, %v7462
      %v7464 = vsub.s32 4294967266, %v7459
      %v7465 = vadd.s32 %v7464, 127
      %v7466 = vshll.u32 %v7465, 23
      %v7467 = vor.u32 4788187, %v7466
      %v7468 = vand.u32 2147483647, %v7467
      %v7470 = vcvt.s32.f32 %v7463
      %v7471 = vmul.f32 %v7470, %v7468
      %v7472 = vxor.u32 %v7471, 2147483648
      %v7473 = vsel %vm7352, %v7472, %v7471
      %v7474 = vsub.s32 4, %v7450
      %v7475 = vsel %vm7352, %v7474, %v7450
      %v7476 = vsel %vm7351, %v2937, %v7473
      %v7477 = vsel %vm7351, 0, %v7475
      %v7478 = vmul.f32 %v7476, %v7476
      %v7479 = vmul.f32 %v7478, -0.001358992
      %v7480 = vadd.f32 %v7479, 0.041655596
      %v7481 = vmul.f32 %v7478, %v7480
      %v7482 = vadd.f32 %v7481, -0.4999988
      %v7483 = vmul.f32 %v7478, %v7482
      %v7484 = vadd.f32 1.0, %v7483
      %v7485 = vmul.f32 %v7476, %v7476
      %v7486 = vmul.f32 %v7485, -0.00019511016
      %v7487 = vadd.f32 %v7486, 0.008332121
      %v7488 = vmul.f32 %v7485, %v7487
      %v7489 = vadd.f32 %v7488, -0.16666654
      %v7490 = vmul.f32 %v7485, %v7489
      %v7491 = vadd.f32 %v7490, 1.0
      %v7492 = vmul.f32 %v7491, %v7476
      %vm7493 = vweird.f32 %v2937
      %v7494 = vand.u32 %v7477, 3
      %vm7495 = vcmp.lt.s32.totalorder %v7494, 2
      %vm7496 = vcmp.eq.s32.totalorder %v7494, 0
      %v7497 = vxor.u32 %v7492, 2147483648
      %v7498 = vsel %vm7496, %v7484, %v7497
      %vm7499 = vcmp.eq.s32.totalorder %v7494, 2
      %v7500 = vxor.u32 %v7484, 2147483648
      %v7501 = vsel %vm7499, %v7500, %v7492
      %v7502 = vsel %vm7495, %v7498, %v7501
      %v7503 = vsel %vm7493, nan, %v7502
      %v7504 = vand.u32 2147483647, %v2940
      %vm7505 = vcmp.le.f32.partialorder %v7504, 0.7853982
      %vm7506 = vcmp.lt.s32.totalorder %v2940, 0
      %v7507 = vand.u32 %v2940, 2139095040
      %v7508 = vshrl.u32 %v7507, 23
      %v7509 = vsub.s32 %v7508, 127
      %v7510 = vand.u32 2147483647, %v2940
      %v7511 = vand.u32 %v7510, 8388607
      %v7512 = vor.u32 %v7511, 8388608
      %v7513 = vsub.s32 0, %v7512
      %v7514 = vadd.s32 %v7509, 1
      %vm7515 = vcmp.gt.s32.totalorder %v7514, 0
      %v7516 = vsel %vm7515, %v7514, 0
      %v7517 = vshrl.u32 %v7516, 5
      %v7518 = vand.u32 %v7516, 31
      %v7519 = vsub.s32 32, %v7518
      %v7520 = vshrl.u32 683565275, %v7519
      %v7521 = vshll.u32 683565275, %v7518
      %v7522 = vshrl.u32 2475754826, %v7519
      %v7523 = vor.u32 %v7521, %v7522
      %v7524 = vshll.u32 2475754826, %v7518
      %v7525 = vshrl.u32 2131351028, %v7519
      %v7526 = vor.u32 %v7524, %v7525
      %v7527 = vshll.u32 2131351028, %v7518
      %v7528 = vshrl.u32 2102212464, %v7519
      %v7529 = vor.u32 %v7527, %v7528
      %v7530 = vshll.u32 2102212464, %v7518
      %v7531 = vshrl.u32 920167782, %v7519
      %v7532 = vor.u32 %v7530, %v7531
      %v7533 = vshll.u32 920167782, %v7518
      %v7534 = vshrl.u32 1326507024, %v7519
      %v7535 = vor.u32 %v7533, %v7534
      %vm7536 = vcmp.lt.s32.totalorder %v7517, 1
      %vm7537 = vcmp.lt.s32.totalorder %v7517, 2
      %vm7538 = vcmp.lt.s32.totalorder %v7517, 3
      %vm7539 = vcmp.lt.s32.totalorder %v7517, 4
      %v7540 = vsel %vm7536, %v7520, %v7523
      %v7541 = vsel %vm7539, %v7529, 2102212464
      %v7542 = vsel %vm7538, %v7526, %v7541
      %v7543 = vsel %vm7537, %v7540, %v7542
      %v7544 = vsel %vm7536, %v7523, %v7526
      %v7545 = vsel %vm7539, %v7532, 920167782
      %v7546 = vsel %vm7538, %v7529, %v7545
      %v7547 = vsel %vm7537, %v7544, %v7546
      %v7548 = vsel %vm7536, %v7526, %v7529
      %v7549 = vsel %vm7539, %v7535, 1326507024
      %v7550 = vsel %vm7538, %v7532, %v7549
      %v7551 = vsel %vm7537, %v7548, %v7550
      %v7552 = vshll.u32 %v7512, 8
      %v7553 = vand.u32 %v7552, 65535
      %v7554 = vshrl.u32 %v7552, 16
      %v7555 = vand.u32 %v7551, 65535
      %v7556 = vshrl.u32 %v7551, 16
      %v7557 = vmul.u32 %v7553, %v7555
      %v7558 = vmul.u32 %v7553, %v7556
      %v7559 = vmul.u32 %v7554, %v7555
      %v7560 = vmul.u32 %v7554, %v7556
      %v7561 = vshll.u32 %v7558, 16
      %v7562 = vshrl.u32 %v7558, 16
      %v7563 = vshll.u32 %v7559, 16
      %v7564 = vshrl.u32 %v7559, 16
      %vm7565 = vc.u32 %v7557, %v7561
      %v7566 = vsel %vm7565, 1, 0
      %v7567 = vadd.s32 %v7557, %v7561
      %v7568 = vadd.s32 %v7560, %v7566
      %vm7569 = vc.u32 %v7567, %v7563
      %v7570 = vsel %vm7569, 1, 0
      %v7571 = vadd.s32 %v7567, %v7563
      %v7572 = vadd.s32 %v7568, %v7570
      %v7573 = vadd.s32 %v7572, %v7562
      %v7574 = vadd.s32 %v7573, %v7564
      %v7575 = vand.u32 %v7552, 65535
      %v7576 = vshrl.u32 %v7552, 16
      %v7577 = vand.u32 %v7547, 65535
      %v7578 = vshrl.u32 %v7547, 16
      %v7579 = vmul.u32 %v7575, %v7577
      %v7580 = vmul.u32 %v7575, %v7578
      %v7581 = vmul.u32 %v7576, %v7577
      %v7582 = vmul.u32 %v7576, %v7578
      %v7583 = vshll.u32 %v7580, 16
      %v7584 = vshrl.u32 %v7580, 16
      %v7585 = vshll.u32 %v7581, 16
      %v7586 = vshrl.u32 %v7581, 16
      %vm7587 = vc.u32 %v7579, %v7583
      %v7588 = vsel %vm7587, 1, 0
      %v7589 = vadd.s32 %v7579, %v7583
      %v7590 = vadd.s32 %v7582, %v7588
      %vm7591 = vc.u32 %v7589, %v7585
      %v7592 = vsel %vm7591, 1, 0
      %v7593 = vadd.s32 %v7589, %v7585
      %v7594 = vadd.s32 %v7590, %v7592
      %v7595 = vadd.s32 %v7594, %v7584
      %v7596 = vadd.s32 %v7595, %v7586
      %v7597 = vmul.u32 %v7552, %v7543
      %v7598 = vadd.s32 %v7574, %v7593
      %vm7599 = vc.u32 %v7574, %v7593
      %v7600 = vadd.s32 %v7596, 1
      %v7601 = vsel %vm7599, %v7600, %v7596
      %v7602 = vadd.s32 %v7597, %v7601
      %v7603 = vadd.s32 %v7602, 536870912
      %v7604 = vshrl.u32 %v7603, 30
      %v7605 = vshll.u32 %v7604, 30
      %v7606 = vsub.s32 %v7602, %v7605
      %vm7607 = vcmp.lt.s32.totalorder %v7606, 0
      %v7608 = vsub.s32 0, %v7606
      %v7609 = vsel %vm7607, %v7608, %v7606
      %v7610 = vclz %v7609
      %v7611 = vsub.s32 %v7610, 2
      %vm7612 = vcmp.gt.s32.totalorder 0, %v7611
      %v7613 = vsel %vm7612, 0, %v7611
      %v7614 = vsub.s32 32, %v7613
      %v7615 = vshll.u32 %v7606, %v7613
      %v7616 = vshrl.u32 %v7598, %v7614
      %v7617 = vor.u32 %v7615, %v7616
      %v7618 = vsub.s32 4294967266, %v7613
      %v7619 = vadd.s32 %v7618, 127
      %v7620 = vshll.u32 %v7619, 23
      %v7621 = vor.u32 4788187, %v7620
      %v7622 = vand.u32 2147483647, %v7621
      %v7624 = vcvt.s32.f32 %v7617
      %v7625 = vmul.f32 %v7624, %v7622
      %v7626 = vxor.u32 %v7625, 2147483648
      %v7627 = vsel %vm7506, %v7626, %v7625
      %v7628 = vsub.s32 4, %v7604
      %v7629 = vsel %vm7506, %v7628, %v7604
      %v7630 = vsel %vm7505, %v2940, %v7627
      %v7631 = vsel %vm7505, 0, %v7629
      %v7632 = vmul.f32 %v7630, %v7630
      %v7633 = vmul.f32 %v7632, -0.001358992
      %v7634 = vadd.f32 %v7633, 0.041655596
      %v7635 = vmul.f32 %v7632, %v7634
      %v7636 = vadd.f32 %v7635, -0.4999988
      %v7637 = vmul.f32 %v7632, %v7636
      %v7638 = vadd.f32 1.0, %v7637
      %v7639 = vmul.f32 %v7630, %v7630
      %v7640 = vmul.f32 %v7639, -0.00019511016
      %v7641 = vadd.f32 %v7640, 0.008332121
      %v7642 = vmul.f32 %v7639, %v7641
      %v7643 = vadd.f32 %v7642, -0.16666654
      %v7644 = vmul.f32 %v7639, %v7643
      %v7645 = vadd.f32 %v7644, 1.0
      %v7646 = vmul.f32 %v7645, %v7630
      %vm7647 = vweird.f32 %v2940
      %v7648 = vand.u32 %v7631, 3
      %vm7649 = vcmp.lt.s32.totalorder %v7648, 2
      %vm7650 = vcmp.eq.s32.totalorder %v7648, 0
      %v7651 = vxor.u32 %v7646, 2147483648
      %v7652 = vsel %vm7650, %v7638, %v7651
      %vm7653 = vcmp.eq.s32.totalorder %v7648, 2
      %v7654 = vxor.u32 %v7638, 2147483648
      %v7655 = vsel %vm7653, %v7654, %v7646
      %v7656 = vsel %vm7649, %v7652, %v7655
      %v7657 = vsel %vm7647, nan, %v7656
      %v7658 = vand.u32 2147483647, %v2943
      %vm7659 = vcmp.le.f32.partialorder %v7658, 0.7853982
      %vm7660 = vcmp.lt.s32.totalorder %v2943, 0
      %v7661 = vand.u32 %v2943, 2139095040
      %v7662 = vshrl.u32 %v7661, 23
      %v7663 = vsub.s32 %v7662, 127
      %v7664 = vand.u32 2147483647, %v2943
      %v7665 = vand.u32 %v7664, 8388607
      %v7666 = vor.u32 %v7665, 8388608
      %v7667 = vsub.s32 0, %v7666
      %v7668 = vadd.s32 %v7663, 1
      %vm7669 = vcmp.gt.s32.totalorder %v7668, 0
      %v7670 = vsel %vm7669, %v7668, 0
      %v7671 = vshrl.u32 %v7670, 5
      %v7672 = vand.u32 %v7670, 31
      %v7673 = vsub.s32 32, %v7672
      %v7674 = vshrl.u32 683565275, %v7673
      %v7675 = vshll.u32 683565275, %v7672
      %v7676 = vshrl.u32 2475754826, %v7673
      %v7677 = vor.u32 %v7675, %v7676
      %v7678 = vshll.u32 2475754826, %v7672
      %v7679 = vshrl.u32 2131351028, %v7673
      %v7680 = vor.u32 %v7678, %v7679
      %v7681 = vshll.u32 2131351028, %v7672
      %v7682 = vshrl.u32 2102212464, %v7673
      %v7683 = vor.u32 %v7681, %v7682
      %v7684 = vshll.u32 2102212464, %v7672
      %v7685 = vshrl.u32 920167782, %v7673
      %v7686 = vor.u32 %v7684, %v7685
      %v7687 = vshll.u32 920167782, %v7672
      %v7688 = vshrl.u32 1326507024, %v7673
      %v7689 = vor.u32 %v7687, %v7688
      %vm7690 = vcmp.lt.s32.totalorder %v7671, 1
      %vm7691 = vcmp.lt.s32.totalorder %v7671, 2
      %vm7692 = vcmp.lt.s32.totalorder %v7671, 3
      %vm7693 = vcmp.lt.s32.totalorder %v7671, 4
      %v7694 = vsel %vm7690, %v7674, %v7677
      %v7695 = vsel %vm7693, %v7683, 2102212464
      %v7696 = vsel %vm7692, %v7680, %v7695
      %v7697 = vsel %vm7691, %v7694, %v7696
      %v7698 = vsel %vm7690, %v7677, %v7680
      %v7699 = vsel %vm7693, %v7686, 920167782
      %v7700 = vsel %vm7692, %v7683, %v7699
      %v7701 = vsel %vm7691, %v7698, %v7700
      %v7702 = vsel %vm7690, %v7680, %v7683
      %v7703 = vsel %vm7693, %v7689, 1326507024
      %v7704 = vsel %vm7692, %v7686, %v7703
      %v7705 = vsel %vm7691, %v7702, %v7704
      %v7706 = vshll.u32 %v7666, 8
      %v7707 = vand.u32 %v7706, 65535
      %v7708 = vshrl.u32 %v7706, 16
      %v7709 = vand.u32 %v7705, 65535
      %v7710 = vshrl.u32 %v7705, 16
      %v7711 = vmul.u32 %v7707, %v7709
      %v7712 = vmul.u32 %v7707, %v7710
      %v7713 = vmul.u32 %v7708, %v7709
      %v7714 = vmul.u32 %v7708, %v7710
      %v7715 = vshll.u32 %v7712, 16
      %v7716 = vshrl.u32 %v7712, 16
      %v7717 = vshll.u32 %v7713, 16
      %v7718 = vshrl.u32 %v7713, 16
      %vm7719 = vc.u32 %v7711, %v7715
      %v7720 = vsel %vm7719, 1, 0
      %v7721 = vadd.s32 %v7711, %v7715
      %v7722 = vadd.s32 %v7714, %v7720
      %vm7723 = vc.u32 %v7721, %v7717
      %v7724 = vsel %vm7723, 1, 0
      %v7725 = vadd.s32 %v7721, %v7717
      %v7726 = vadd.s32 %v7722, %v7724
      %v7727 = vadd.s32 %v7726, %v7716
      %v7728 = vadd.s32 %v7727, %v7718
      %v7729 = vand.u32 %v7706, 65535
      %v7730 = vshrl.u32 %v7706, 16
      %v7731 = vand.u32 %v7701, 65535
      %v7732 = vshrl.u32 %v7701, 16
      %v7733 = vmul.u32 %v7729, %v7731
      %v7734 = vmul.u32 %v7729, %v7732
      %v7735 = vmul.u32 %v7730, %v7731
      %v7736 = vmul.u32 %v7730, %v7732
      %v7737 = vshll.u32 %v7734, 16
      %v7738 = vshrl.u32 %v7734, 16
      %v7739 = vshll.u32 %v7735, 16
      %v7740 = vshrl.u32 %v7735, 16
      %vm7741 = vc.u32 %v7733, %v7737
      %v7742 = vsel %vm7741, 1, 0
      %v7743 = vadd.s32 %v7733, %v7737
      %v7744 = vadd.s32 %v7736, %v7742
      %vm7745 = vc.u32 %v7743, %v7739
      %v7746 = vsel %vm7745, 1, 0
      %v7747 = vadd.s32 %v7743, %v7739
      %v7748 = vadd.s32 %v7744, %v7746
      %v7749 = vadd.s32 %v7748, %v7738
      %v7750 = vadd.s32 %v7749, %v7740
      %v7751 = vmul.u32 %v7706, %v7697
      %v7752 = vadd.s32 %v7728, %v7747
      %vm7753 = vc.u32 %v7728, %v7747
      %v7754 = vadd.s32 %v7750, 1
      %v7755 = vsel %vm7753, %v7754, %v7750
      %v7756 = vadd.s32 %v7751, %v7755
      %v7757 = vadd.s32 %v7756, 536870912
      %v7758 = vshrl.u32 %v7757, 30
      %v7759 = vshll.u32 %v7758, 30
      %v7760 = vsub.s32 %v7756, %v7759
      %vm7761 = vcmp.lt.s32.totalorder %v7760, 0
      %v7762 = vsub.s32 0, %v7760
      %v7763 = vsel %vm7761, %v7762, %v7760
      %v7764 = vclz %v7763
      %v7765 = vsub.s32 %v7764, 2
      %vm7766 = vcmp.gt.s32.totalorder 0, %v7765
      %v7767 = vsel %vm7766, 0, %v7765
      %v7768 = vsub.s32 32, %v7767
      %v7769 = vshll.u32 %v7760, %v7767
      %v7770 = vshrl.u32 %v7752, %v7768
      %v7771 = vor.u32 %v7769, %v7770
      %v7772 = vsub.s32 4294967266, %v7767
      %v7773 = vadd.s32 %v7772, 127
      %v7774 = vshll.u32 %v7773, 23
      %v7775 = vor.u32 4788187, %v7774
      %v7776 = vand.u32 2147483647, %v7775
      %v7778 = vcvt.s32.f32 %v7771
      %v7779 = vmul.f32 %v7778, %v7776
      %v7780 = vxor.u32 %v7779, 2147483648
      %v7781 = vsel %vm7660, %v7780, %v7779
      %v7782 = vsub.s32 4, %v7758
      %v7783 = vsel %vm7660, %v7782, %v7758
      %v7784 = vsel %vm7659, %v2943, %v7781
      %v7785 = vsel %vm7659, 0, %v7783
      %v7786 = vmul.f32 %v7784, %v7784
      %v7787 = vmul.f32 %v7786, -0.001358992
      %v7788 = vadd.f32 %v7787, 0.041655596
      %v7789 = vmul.f32 %v7786, %v7788
      %v7790 = vadd.f32 %v7789, -0.4999988
      %v7791 = vmul.f32 %v7786, %v7790
      %v7792 = vadd.f32 1.0, %v7791
      %v7793 = vmul.f32 %v7784, %v7784
      %v7794 = vmul.f32 %v7793, -0.00019511016
      %v7795 = vadd.f32 %v7794, 0.008332121
      %v7796 = vmul.f32 %v7793, %v7795
      %v7797 = vadd.f32 %v7796, -0.16666654
      %v7798 = vmul.f32 %v7793, %v7797
      %v7799 = vadd.f32 %v7798, 1.0
      %v7800 = vmul.f32 %v7799, %v7784
      %vm7801 = vweird.f32 %v2943
      %v7802 = vand.u32 %v7785, 3
      %vm7803 = vcmp.lt.s32.totalorder %v7802, 2
      %vm7804 = vcmp.eq.s32.totalorder %v7802, 0
      %v7805 = vxor.u32 %v7800, 2147483648
      %v7806 = vsel %vm7804, %v7792, %v7805
      %vm7807 = vcmp.eq.s32.totalorder %v7802, 2
      %v7808 = vxor.u32 %v7792, 2147483648
      %v7809 = vsel %vm7807, %v7808, %v7800
      %v7810 = vsel %vm7803, %v7806, %v7809
      %v7811 = vsel %vm7801, nan, %v7810
      %v7812 = vand.u32 2147483647, %v2946
      %vm7813 = vcmp.le.f32.partialorder %v7812, 0.7853982
      %vm7814 = vcmp.lt.s32.totalorder %v2946, 0
      %v7815 = vand.u32 %v2946, 2139095040
      %v7816 = vshrl.u32 %v7815, 23
      %v7817 = vsub.s32 %v7816, 127
      %v7818 = vand.u32 2147483647, %v2946
      %v7819 = vand.u32 %v7818, 8388607
      %v7820 = vor.u32 %v7819, 8388608
      %v7821 = vsub.s32 0, %v7820
      %v7822 = vadd.s32 %v7817, 1
      %vm7823 = vcmp.gt.s32.totalorder %v7822, 0
      %v7824 = vsel %vm7823, %v7822, 0
      %v7825 = vshrl.u32 %v7824, 5
      %v7826 = vand.u32 %v7824, 31
      %v7827 = vsub.s32 32, %v7826
      %v7828 = vshrl.u32 683565275, %v7827
      %v7829 = vshll.u32 683565275, %v7826
      %v7830 = vshrl.u32 2475754826, %v7827
      %v7831 = vor.u32 %v7829, %v7830
      %v7832 = vshll.u32 2475754826, %v7826
      %v7833 = vshrl.u32 2131351028, %v7827
      %v7834 = vor.u32 %v7832, %v7833
      %v7835 = vshll.u32 2131351028, %v7826
      %v7836 = vshrl.u32 2102212464, %v7827
      %v7837 = vor.u32 %v7835, %v7836
      %v7838 = vshll.u32 2102212464, %v7826
      %v7839 = vshrl.u32 920167782, %v7827
      %v7840 = vor.u32 %v7838, %v7839
      %v7841 = vshll.u32 920167782, %v7826
      %v7842 = vshrl.u32 1326507024, %v7827
      %v7843 = vor.u32 %v7841, %v7842
      %vm7844 = vcmp.lt.s32.totalorder %v7825, 1
      %vm7845 = vcmp.lt.s32.totalorder %v7825, 2
      %vm7846 = vcmp.lt.s32.totalorder %v7825, 3
      %vm7847 = vcmp.lt.s32.totalorder %v7825, 4
      %v7848 = vsel %vm7844, %v7828, %v7831
      %v7849 = vsel %vm7847, %v7837, 2102212464
      %v7850 = vsel %vm7846, %v7834, %v7849
      %v7851 = vsel %vm7845, %v7848, %v7850
      %v7852 = vsel %vm7844, %v7831, %v7834
      %v7853 = vsel %vm7847, %v7840, 920167782
      %v7854 = vsel %vm7846, %v7837, %v7853
      %v7855 = vsel %vm7845, %v7852, %v7854
      %v7856 = vsel %vm7844, %v7834, %v7837
      %v7857 = vsel %vm7847, %v7843, 1326507024
      %v7858 = vsel %vm7846, %v7840, %v7857
      %v7859 = vsel %vm7845, %v7856, %v7858
      %v7860 = vshll.u32 %v7820, 8
      %v7861 = vand.u32 %v7860, 65535
      %v7862 = vshrl.u32 %v7860, 16
      %v7863 = vand.u32 %v7859, 65535
      %v7864 = vshrl.u32 %v7859, 16
      %v7865 = vmul.u32 %v7861, %v7863
      %v7866 = vmul.u32 %v7861, %v7864
      %v7867 = vmul.u32 %v7862, %v7863
      %v7868 = vmul.u32 %v7862, %v7864
      %v7869 = vshll.u32 %v7866, 16
      %v7870 = vshrl.u32 %v7866, 16
      %v7871 = vshll.u32 %v7867, 16
      %v7872 = vshrl.u32 %v7867, 16
      %vm7873 = vc.u32 %v7865, %v7869
      %v7874 = vsel %vm7873, 1, 0
      %v7875 = vadd.s32 %v7865, %v7869
      %v7876 = vadd.s32 %v7868, %v7874
      %vm7877 = vc.u32 %v7875, %v7871
      %v7878 = vsel %vm7877, 1, 0
      %v7879 = vadd.s32 %v7875, %v7871
      %v7880 = vadd.s32 %v7876, %v7878
      %v7881 = vadd.s32 %v7880, %v7870
      %v7882 = vadd.s32 %v7881, %v7872
      %v7883 = vand.u32 %v7860, 65535
      %v7884 = vshrl.u32 %v7860, 16
      %v7885 = vand.u32 %v7855, 65535
      %v7886 = vshrl.u32 %v7855, 16
      %v7887 = vmul.u32 %v7883, %v7885
      %v7888 = vmul.u32 %v7883, %v7886
      %v7889 = vmul.u32 %v7884, %v7885
      %v7890 = vmul.u32 %v7884, %v7886
      %v7891 = vshll.u32 %v7888, 16
      %v7892 = vshrl.u32 %v7888, 16
      %v7893 = vshll.u32 %v7889, 16
      %v7894 = vshrl.u32 %v7889, 16
      %vm7895 = vc.u32 %v7887, %v7891
      %v7896 = vsel %vm7895, 1, 0
      %v7897 = vadd.s32 %v7887, %v7891
      %v7898 = vadd.s32 %v7890, %v7896
      %vm7899 = vc.u32 %v7897, %v7893
      %v7900 = vsel %vm7899, 1, 0
      %v7901 = vadd.s32 %v7897, %v7893
      %v7902 = vadd.s32 %v7898, %v7900
      %v7903 = vadd.s32 %v7902, %v7892
      %v7904 = vadd.s32 %v7903, %v7894
      %v7905 = vmul.u32 %v7860, %v7851
      %v7906 = vadd.s32 %v7882, %v7901
      %vm7907 = vc.u32 %v7882, %v7901
      %v7908 = vadd.s32 %v7904, 1
      %v7909 = vsel %vm7907, %v7908, %v7904
      %v7910 = vadd.s32 %v7905, %v7909
      %v7911 = vadd.s32 %v7910, 536870912
      %v7912 = vshrl.u32 %v7911, 30
      %v7913 = vshll.u32 %v7912, 30
      %v7914 = vsub.s32 %v7910, %v7913
      %vm7915 = vcmp.lt.s32.totalorder %v7914, 0
      %v7916 = vsub.s32 0, %v7914
      %v7917 = vsel %vm7915, %v7916, %v7914
      %v7918 = vclz %v7917
      %v7919 = vsub.s32 %v7918, 2
      %vm7920 = vcmp.gt.s32.totalorder 0, %v7919
      %v7921 = vsel %vm7920, 0, %v7919
      %v7922 = vsub.s32 32, %v7921
      %v7923 = vshll.u32 %v7914, %v7921
      %v7924 = vshrl.u32 %v7906, %v7922
      %v7925 = vor.u32 %v7923, %v7924
      %v7926 = vsub.s32 4294967266, %v7921
      %v7927 = vadd.s32 %v7926, 127
      %v7928 = vshll.u32 %v7927, 23
      %v7929 = vor.u32 4788187, %v7928
      %v7930 = vand.u32 2147483647, %v7929
      %v7932 = vcvt.s32.f32 %v7925
      %v7933 = vmul.f32 %v7932, %v7930
      %v7934 = vxor.u32 %v7933, 2147483648
      %v7935 = vsel %vm7814, %v7934, %v7933
      %v7936 = vsub.s32 4, %v7912
      %v7937 = vsel %vm7814, %v7936, %v7912
      %v7938 = vsel %vm7813, %v2946, %v7935
      %v7939 = vsel %vm7813, 0, %v7937
      %v7940 = vmul.f32 %v7938, %v7938
      %v7941 = vmul.f32 %v7940, -0.001358992
      %v7942 = vadd.f32 %v7941, 0.041655596
      %v7943 = vmul.f32 %v7940, %v7942
      %v7944 = vadd.f32 %v7943, -0.4999988
      %v7945 = vmul.f32 %v7940, %v7944
      %v7946 = vadd.f32 1.0, %v7945
      %v7947 = vmul.f32 %v7938, %v7938
      %v7948 = vmul.f32 %v7947, -0.00019511016
      %v7949 = vadd.f32 %v7948, 0.008332121
      %v7950 = vmul.f32 %v7947, %v7949
      %v7951 = vadd.f32 %v7950, -0.16666654
      %v7952 = vmul.f32 %v7947, %v7951
      %v7953 = vadd.f32 %v7952, 1.0
      %v7954 = vmul.f32 %v7953, %v7938
      %vm7955 = vweird.f32 %v2946
      %v7956 = vand.u32 %v7939, 3
      %vm7957 = vcmp.lt.s32.totalorder %v7956, 2
      %vm7958 = vcmp.eq.s32.totalorder %v7956, 0
      %v7959 = vxor.u32 %v7954, 2147483648
      %v7960 = vsel %vm7958, %v7946, %v7959
      %vm7961 = vcmp.eq.s32.totalorder %v7956, 2
      %v7962 = vxor.u32 %v7946, 2147483648
      %v7963 = vsel %vm7961, %v7962, %v7954
      %v7964 = vsel %vm7957, %v7960, %v7963
      %v7965 = vsel %vm7955, nan, %v7964
      %7966 = vmatpush.msra.mxu0 %v7965
      %7967 = vmatpush.msra.mxu0 %v7811
      %7968 = vmatpush.msra.mxu0 %v7657
      %7969 = vmatpush.msra.mxu0 %v7503
      %7970 = vmatpush.msra.mxu0 %v7349
      %7971 = vmatpush.msra.mxu0 %v7195
      %7972 = vmatpush.msra.mxu0 %v7041
      %7973 = vmatpush.msra.mxu0 %v6887
      %7974 = vmatpush.msra.mxu0 %v6733
      %7975 = vmatpush.msra.mxu0 %v6579
      %7976 = vmatpush.msra.mxu0 %v6425
      %7977 = vmatpush.msra.mxu0 %v6271
      %7978 = vmatpush.msra.mxu0 %v6117
      %7979 = vmatpush.msra.mxu0 %v5963
      %7980 = vmatpush.msra.mxu0 %v5809
      %7981 = vmatpush.msra.mxu0 %v5655
      %7982 = vmatmul.f32.gmra.mxu0 %v2948
      %v7983 = vpop.f32.mrf.mxu0
      %v7984 = vadd.f32 0.0, %v7983
      %7985 = vdwg.mxu0
      %v7986 = vadd.f32 %v5501, %v7984
      %7987 = vst [vmem:[%s532] sm:$0x7] %v7986
      %p7988 = scmp.lt.s32.totalorder %s28, 1
      %s7989 = scalar_select %p7988, %s28, 1
      %s7990 = smul.addr %s7989, 2
      %s7991 = smul.addr %s7990, 4
      %s7992 = scalar_lea.vmem %s10, %s7991
      %p7993 = scmp.lt.s32.totalorder %s28, 1
      %s7994 = scalar_select %p7993, %s28, 1
      %s7995 = smul.addr %s7994, 4
      %s7996 = scalar_lea.vmem %s11, %s7995
      %p7997 = scmp.lt.s32.totalorder %s28, 1
      %s7998 = scalar_select %p7997, %s28, 1
      %s7999 = smul.addr %s7998, 4
      %s8000 = scalar_lea.vmem %s12, %s7999
      // Predicated region
      $region65: #{_lambda_.4} parent=59 // pred_check
        %p8001 = pneg %p291
      $region66: #{_lambda_.4} parent=59 // pred_check_branch
        %8003 = sbr.rel (%p8001) target = $region68
      $region67: #{_lambda_.4} parent=59 // pred_region
        _
      $region68: #{_lambda_.4} parent=59 // pred_fallthru
        _
      // Predicated region
      $region69: #{_lambda_.4} parent=59 // pred_check
        %p8004 = pneg %p317
      $region70: #{_lambda_.4} parent=59 // pred_check_branch
        %8006 = sbr.rel (%p8004) target = $region72
      $region71: #{_lambda_.4} parent=59 // pred_region
        _
      $region72: #{_lambda_.4} parent=59 // pred_fallthru
        _
      // Predicated region
      $region73: #{_lambda_.4} parent=59 // pred_check
        %p8007 = pneg %p343
      $region74: #{_lambda_.4} parent=59 // pred_check_branch
        %8009 = sbr.rel (%p8007) target = $region76
      $region75: #{_lambda_.4} parent=59 // pred_region
        _
      $region76: #{_lambda_.4} parent=59 // pred_fallthru
        _
    $region60: #{_lambda_.4} parent=5 // pred_fallthru
      _
    %p8010 = scmp.le.s32.totalorder 2, %s19
    // Predicated region
    $region77: #{_lambda_.4} parent=5 // pred_check
      %p8011 = pneg %p8010
    $region78: #{_lambda_.4} parent=5 // pred_check_branch
      %8013 = sbr.rel (%p8011) target = $region80
    $region79: #{_lambda_.4} parent=5 // pred_region
      %s8014 = ssub.s32 %s19, 2
      // Predicated region
      $region81: #{_lambda_.4} parent=79 // pred_check
        %p8015 = pneg %p297
      $region82: #{_lambda_.4} parent=79 // pred_check_branch
        %8017 = sbr.rel (%p8015) target = $region84
      $region83: #{_lambda_.4} parent=79 // pred_region
        %p8018 = scmp.lt.s32.totalorder %s30, 1
        %s8019 = scalar_select %p8018, %s30, 1
        %s8020 = smul.addr %s8019, 2
        %s8021 = smul.addr %s8020, 4
        %s8022 = scalar_lea.vmem %s10, %s8021
      $region84: #{_lambda_.4} parent=79 // pred_fallthru
        _
      // Predicated region
      $region85: #{_lambda_.4} parent=79 // pred_check
        %p8023 = pneg %p323
      $region86: #{_lambda_.4} parent=79 // pred_check_branch
        %8025 = sbr.rel (%p8023) target = $region88
      $region87: #{_lambda_.4} parent=79 // pred_region
        %p8026 = scmp.lt.s32.totalorder %s30, 1
        %s8027 = scalar_select %p8026, %s30, 1
        %s8028 = smul.addr %s8027, 4
        %s8029 = scalar_lea.vmem %s11, %s8028
      $region88: #{_lambda_.4} parent=79 // pred_fallthru
        _
      // Predicated region
      $region89: #{_lambda_.4} parent=79 // pred_check
        %p8030 = pneg %p349
      $region90: #{_lambda_.4} parent=79 // pred_check_branch
        %8032 = sbr.rel (%p8030) target = $region92
      $region91: #{_lambda_.4} parent=79 // pred_region
        %p8033 = scmp.lt.s32.totalorder %s30, 1
        %s8034 = scalar_select %p8033, %s30, 1
        %s8035 = smul.addr %s8034, 4
        %s8036 = scalar_lea.vmem %s12, %s8035
      $region92: #{_lambda_.4} parent=79 // pred_fallthru
        _
    $region80: #{_lambda_.4} parent=5 // pred_fallthru
      _
  $region6: #{_lambda_.4} parent=0 // loop_footer
    %s23 = sadd.s32 1, %s19
  $region7: #{_lambda_.4} parent=0 // loop_footer_branch
    %18 = sbr.rel target = $region3
  $region8: #{_lambda_.4} parent=0 // loop_exit
    _

</llo_original>
